<compile_context>
chip_gen: v6e
topology: v6e:2x2x1
jax: 0.10.0
libtpu: 0.0.40
codegen_flags: <defaults>
</compile_context>

<pallas_src>
import numpy as np
import jax
import jax.numpy as jnp
from jax import lax
from jax.experimental import pallas as pl
from jax.experimental.pallas import tpu as pltpu


# --------------------------------------------------------------------------
# Fused kernel: conv3x3 + ReLU + maxpool(2,2,pad=1) + fc1 + fc2 + log_softmax
# --------------------------------------------------------------------------
def _fused_forward_kernel(x_ref, cwf_ref, cb_ref, r_ref, m_ref,
                          w1_ref, b1_ref, w2_ref, b2_ref, o_ref):
    f32 = jnp.float32
    B, C, H, W = x_ref.shape
    KH = KW = 3
    OH, OW = H - KH + 1, W - KW + 1            # valid conv output (22, 22)
    PH, PW = OH // 2 + 1, OW // 2 + 1          # pool output (12, 12)
    FEAT_C = PH * PW                           # 144 features per channel

    def iota2(shape, dim):
        return lax.broadcasted_iota(jnp.int32, shape, dim)

    def onehot(cond):
        return jnp.where(cond, 1.0, 0.0).astype(f32)

    # Lane-shift matrices: (a @ Lk)[:, j] = a[:, j + k], zero past the end.
    rL, cL = iota2((W, W), 0), iota2((W, W), 1)
    L1 = onehot(rL == cL + 1)
    L2 = onehot(rL == cL + 2)

    # W-direction pool selectors (a zero column == zero padding; the pooled
    # values are post-ReLU >= 0, so 0-padding == PyTorch's -inf padding here).
    rS, cS = iota2((W, PW), 0), iota2((W, PW), 1)
    SA = onehot((rS == 2 * cS - 1) & (rS < OW))
    SB = onehot((rS == 2 * cS) & (rS < OW))

    # H-direction pool selectors.
    rT, cT = iota2((PH, OH), 0), iota2((PH, OH), 1)
    TA = onehot(cT == 2 * rT - 1)
    TB = onehot(cT == 2 * rT)

    spread = r_ref[...]        # (PW, PH*PW): spread[pw, ph*PW + pw] == 1
    place = m_ref[...]         # (PH, PH*PW): place[ph,  ph*PW + pw] == 1
    b1 = b1_ref[...]           # (1, 576)
    w2 = w2_ref[...]           # (576, num_classes)
    b2 = b2_ref[...]           # (1, num_classes)

    # Per-batch fc1 accumulators (1, 576) -- built channel by channel so the
    # flattened feature vector never has to be materialized/concatenated.
    h1 = [b1 for _ in range(B)]

    for co in range(C):
        # Conv accumulators, one per kw tap; the lane shift for kw is applied
        # afterwards (linearly) with L1/L2 so no unaligned lane slicing needed.
        accs = [jnp.zeros((B, OH, W), f32) for _ in range(KW)]
        for ci in range(C):
            for kh in range(KH):
                xs = x_ref[:, ci:ci + 1, kh:kh + OH, :][:, 0]   # (B, OH, W)
                for kw in range(KW):
                    w_s = cwf_ref[((co * C + ci) * KH + kh) * KW + kw]
                    accs[kw] = accs[kw] + w_s * xs
        bias = cb_ref[co]
        w1_blk = w1_ref[co * FEAT_C:(co + 1) * FEAT_C, :]        # (144, 576)

        for b in range(B):
            # conv output for (co, b); columns >= OW are junk and are never
            # selected by SA/SB below.
            a = (accs[0][b]
                 + jnp.dot(accs[1][b], L1, preferred_element_type=f32)
                 + jnp.dot(accs[2][b], L2, preferred_element_type=f32))
            a = jnp.maximum(a + bias, 0.0)                        # ReLU (OH, W)

            # MaxPool2d(2, 2, padding=1): W direction then H direction.
            cw = jnp.maximum(jnp.dot(a, SA, preferred_element_type=f32),
                             jnp.dot(a, SB, preferred_element_type=f32))  # (OH, PW)
            p = jnp.maximum(jnp.dot(TA, cw, preferred_element_type=f32),
                            jnp.dot(TB, cw, preferred_element_type=f32))  # (PH, PW)

            # Row-major flatten (PH, PW) -> (1, PH*PW) via spread/place masks.
            row = jnp.sum(jnp.dot(p, spread, preferred_element_type=f32) * place,
                          axis=0, keepdims=True)                           # (1, 144)

            # fc1 contribution of this channel block (torch flatten order:
            # feature index = co*144 + ph*12 + pw).
            h1[b] = h1[b] + jnp.dot(row, w1_blk, preferred_element_type=f32)

    # fc2 + log_softmax, written straight to the (tiny) output.
    for b in range(B):
        logits = jnp.dot(h1[b], w2, preferred_element_type=f32) + b2   # (1, NC)
        shifted = logits - jnp.max(logits, axis=-1, keepdims=True)
        lse = jnp.log(jnp.sum(jnp.exp(shifted), axis=-1, keepdims=True))
        o_ref[b:b + 1, :] = shifted - lse


# --------------------------------------------------------------------------
# Wrapper: one pallas_call, full arrays resident in VMEM (scalars in SMEM).
# --------------------------------------------------------------------------
def face_classifier_forward(x, params):
    B, C, H, W = x.shape
    OH, OW = H - 2, W - 2
    PH, PW = OH // 2 + 1, OW // 2 + 1
    feat = C * PH * PW
    num_classes = params["fc2_w"].shape[-1]
    assert params["fc1_w"].shape[0] == feat, (feat, params["fc1_w"].shape)

    # Constant 0/1 flatten helpers (baked into the program at trace time).
    j = np.arange(PH * PW)
    spread = (j[None, :] % PW == np.arange(PW)[:, None]).astype(np.float32)
    place = (j[None, :] // PW == np.arange(PH)[:, None]).astype(np.float32)

    vmem = pl.BlockSpec(memory_space=pltpu.MemorySpace.VMEM)
    smem = pl.BlockSpec(memory_space=pltpu.MemorySpace.SMEM)

    return pl.pallas_call(
        _fused_forward_kernel,
        in_specs=[vmem,          # x
                  smem, smem,    # conv weights (flat) / bias as SMEM scalars
                  vmem, vmem,    # spread / place constants
                  vmem, vmem,    # fc1 weight / bias
                  vmem, vmem],   # fc2 weight / bias
        out_specs=vmem,
        out_shape=jax.ShapeDtypeStruct((B, num_classes), jnp.float32),
    )(x,
      params["conv_w"].reshape(-1),
      params["conv_b"],
      jnp.asarray(spread), jnp.asarray(place),
      params["fc1_w"], params["fc1_b"],
      params["fc2_w"], params["fc2_b"])


# --------------------------------------------------------------------------
# Pure-JAX reference (for a numerical self-check only).
# --------------------------------------------------------------------------
def _reference_forward(x, params):
    conv = lax.conv_general_dilated(
        x, params["conv_w"], window_strides=(1, 1), padding="VALID",
        dimension_numbers=("NCHW", "OIHW", "NCHW"))
    conv = conv + params["conv_b"][None, :, None, None]
    act = jnp.maximum(conv, 0.0)
    pooled = lax.reduce_window(
        act, -jnp.inf, lax.max,
        window_dimensions=(1, 1, 2, 2), window_strides=(1, 1, 2, 2),
        padding=((0, 0), (0, 0), (1, 1), (1, 1)))
    feats = pooled.reshape(x.shape[0], -1)
    h1 = feats @ params["fc1_w"] + params["fc1_b"]
    logits = h1 @ params["fc2_w"] + params["fc2_b"]
    return jax.nn.log_softmax(logits, axis=-1)


# --------------------------------------------------------------------------
# Deterministic synthetic parameters (shapes from FaceClassifier.__init__).
# fc weights are stored pre-transposed as (in, out); PyTorch stores (out, in).
# --------------------------------------------------------------------------
def init_params(key, channels, feat=576, num_classes=7):
    ks = jax.random.split(key, 6)
    return {
        "conv_w": 0.1 * jax.random.normal(ks[0], (channels, channels, 3, 3),
                                          jnp.float32),
        "conv_b": 0.1 * jax.random.normal(ks[1], (channels,), jnp.float32),
        "fc1_w": jax.random.normal(ks[2], (feat, feat), jnp.float32) / jnp.sqrt(feat),
        "fc1_b": (0.1 * jax.random.normal(ks[3], (feat,), jnp.float32)
                  ).reshape(1, feat),
        "fc2_w": jax.random.normal(ks[4], (feat, num_classes),
                                   jnp.float32) / jnp.sqrt(feat),
        "fc2_b": (0.1 * jax.random.normal(ks[5], (num_classes,), jnp.float32)
                  ).reshape(1, num_classes),
    }


if __name__ == "__main__":
    # channels=4, spatial=24 -> conv: 22x22 -> pool(pad=1): 12x12 -> 4*12*12=576
    B, C, H, W = 2, 4, 24, 24
    key = jax.random.PRNGKey(0)
    kx, kp = jax.random.split(key)

    x = jax.random.normal(kx, (B, C, H, W), jnp.float32)
    params = init_params(kp, C)

    out = jax.jit(face_classifier_forward)(x, params)
    out = jax.block_until_ready(out)

    assert out.shape == (B, 7)
    assert bool(jnp.all(jnp.isfinite(out)))
    # log_softmax rows should (log-)sum to ~1
    assert bool(jnp.allclose(jnp.sum(jnp.exp(out), axis=-1), 1.0, atol=1e-4))
    # numerical check vs. pure-JAX reference (loose: MXU f32 matmul rounding)
    ref = _reference_forward(x, params)
    assert bool(jnp.max(jnp.abs(out - ref)) < 2e-2)
    print("KERNEL_OK")
</pallas_src>

<mosaic_0001>
module attributes {stable_mosaic.version = 11 : i64} {
  func.func @_fused_forward_kernel(%arg0: memref<2x4x24x24xf32, #tpu.memory_space<vmem>>, %arg1: memref<144xf32, #tpu.memory_space<smem>>, %arg2: memref<4xf32, #tpu.memory_space<smem>>, %arg3: memref<12x144xf32, #tpu.memory_space<vmem>>, %arg4: memref<12x144xf32, #tpu.memory_space<vmem>>, %arg5: memref<576x576xf32, #tpu.memory_space<vmem>>, %arg6: memref<1x576xf32, #tpu.memory_space<vmem>>, %arg7: memref<576x7xf32, #tpu.memory_space<vmem>>, %arg8: memref<1x7xf32, #tpu.memory_space<vmem>>, %arg9: memref<2x7xf32, #tpu.memory_space<vmem>>) attributes {dimension_semantics = [], scalar_prefetch = 0 : i64, scratch_operands = 0 : i64, tpu.core_type = #tpu.core_type<tc>} {
    %0 = tpu.iota {dimensions = array<i32: 0>} : vector<24x24xi32>
    %1 = tpu.iota {dimensions = array<i32: 1>} : vector<24x24xi32>
    %c1_i32 = arith.constant 1 : i32
    %2 = vector.broadcast %c1_i32 : i32 to vector<24x24xi32>
    %3 = arith.addi %1, %2 : vector<24x24xi32>
    %4 = arith.cmpi eq, %0, %3 : vector<24x24xi32>
    %cst = arith.constant 1.000000e+00 : f32
    %cst_0 = arith.constant 0.000000e+00 : f32
    %5 = vector.broadcast %cst : f32 to vector<24x24xf32>
    %6 = vector.broadcast %cst_0 : f32 to vector<24x24xf32>
    %7 = arith.select %4, %5, %6 : vector<24x24xi1>, vector<24x24xf32>
    %c2_i32 = arith.constant 2 : i32
    %8 = vector.broadcast %c2_i32 : i32 to vector<24x24xi32>
    %9 = arith.addi %1, %8 : vector<24x24xi32>
    %10 = arith.cmpi eq, %0, %9 : vector<24x24xi32>
    %cst_1 = arith.constant 1.000000e+00 : f32
    %cst_2 = arith.constant 0.000000e+00 : f32
    %11 = vector.broadcast %cst_1 : f32 to vector<24x24xf32>
    %12 = vector.broadcast %cst_2 : f32 to vector<24x24xf32>
    %13 = arith.select %10, %11, %12 : vector<24x24xi1>, vector<24x24xf32>
    %14 = tpu.iota {dimensions = array<i32: 0>} : vector<24x12xi32>
    %15 = tpu.iota {dimensions = array<i32: 1>} : vector<24x12xi32>
    %c2_i32_3 = arith.constant 2 : i32
    %16 = vector.broadcast %c2_i32_3 : i32 to vector<24x12xi32>
    %17 = arith.muli %16, %15 : vector<24x12xi32>
    %c1_i32_4 = arith.constant 1 : i32
    %18 = vector.broadcast %c1_i32_4 : i32 to vector<24x12xi32>
    %19 = arith.subi %17, %18 : vector<24x12xi32>
    %20 = arith.cmpi eq, %14, %19 : vector<24x12xi32>
    %c22_i32 = arith.constant 22 : i32
    %21 = vector.broadcast %c22_i32 : i32 to vector<24x12xi32>
    %22 = arith.cmpi slt, %14, %21 : vector<24x12xi32>
    %23 = arith.andi %20, %22 : vector<24x12xi1>
    %cst_5 = arith.constant 1.000000e+00 : f32
    %cst_6 = arith.constant 0.000000e+00 : f32
    %24 = vector.broadcast %cst_5 : f32 to vector<24x12xf32>
    %25 = vector.broadcast %cst_6 : f32 to vector<24x12xf32>
    %26 = arith.select %23, %24, %25 : vector<24x12xi1>, vector<24x12xf32>
    %c2_i32_7 = arith.constant 2 : i32
    %27 = vector.broadcast %c2_i32_7 : i32 to vector<24x12xi32>
    %28 = arith.muli %27, %15 : vector<24x12xi32>
    %29 = arith.cmpi eq, %14, %28 : vector<24x12xi32>
    %c22_i32_8 = arith.constant 22 : i32
    %30 = vector.broadcast %c22_i32_8 : i32 to vector<24x12xi32>
    %31 = arith.cmpi slt, %14, %30 : vector<24x12xi32>
    %32 = arith.andi %29, %31 : vector<24x12xi1>
    %cst_9 = arith.constant 1.000000e+00 : f32
    %cst_10 = arith.constant 0.000000e+00 : f32
    %33 = vector.broadcast %cst_9 : f32 to vector<24x12xf32>
    %34 = vector.broadcast %cst_10 : f32 to vector<24x12xf32>
    %35 = arith.select %32, %33, %34 : vector<24x12xi1>, vector<24x12xf32>
    %36 = tpu.iota {dimensions = array<i32: 0>} : vector<12x22xi32>
    %37 = tpu.iota {dimensions = array<i32: 1>} : vector<12x22xi32>
    %c2_i32_11 = arith.constant 2 : i32
    %38 = vector.broadcast %c2_i32_11 : i32 to vector<12x22xi32>
    %39 = arith.muli %38, %36 : vector<12x22xi32>
    %c1_i32_12 = arith.constant 1 : i32
    %40 = vector.broadcast %c1_i32_12 : i32 to vector<12x22xi32>
    %41 = arith.subi %39, %40 : vector<12x22xi32>
    %42 = arith.cmpi eq, %37, %41 : vector<12x22xi32>
    %cst_13 = arith.constant 1.000000e+00 : f32
    %cst_14 = arith.constant 0.000000e+00 : f32
    %43 = vector.broadcast %cst_13 : f32 to vector<12x22xf32>
    %44 = vector.broadcast %cst_14 : f32 to vector<12x22xf32>
    %45 = arith.select %42, %43, %44 : vector<12x22xi1>, vector<12x22xf32>
    %c2_i32_15 = arith.constant 2 : i32
    %46 = vector.broadcast %c2_i32_15 : i32 to vector<12x22xi32>
    %47 = arith.muli %46, %36 : vector<12x22xi32>
    %48 = arith.cmpi eq, %37, %47 : vector<12x22xi32>
    %cst_16 = arith.constant 1.000000e+00 : f32
    %cst_17 = arith.constant 0.000000e+00 : f32
    %49 = vector.broadcast %cst_16 : f32 to vector<12x22xf32>
    %50 = vector.broadcast %cst_17 : f32 to vector<12x22xf32>
    %51 = arith.select %48, %49, %50 : vector<12x22xi1>, vector<12x22xf32>
    %c0 = arith.constant 0 : index
    %c0_18 = arith.constant 0 : index
    %52 = vector.load %arg3[%c0, %c0_18] : memref<12x144xf32, #tpu.memory_space<vmem>>, vector<12x144xf32>
    %c0_19 = arith.constant 0 : index
    %c0_20 = arith.constant 0 : index
    %53 = vector.load %arg4[%c0_19, %c0_20] : memref<12x144xf32, #tpu.memory_space<vmem>>, vector<12x144xf32>
    %c0_21 = arith.constant 0 : index
    %c0_22 = arith.constant 0 : index
    %54 = vector.load %arg6[%c0_21, %c0_22] : memref<1x576xf32, #tpu.memory_space<vmem>>, vector<1x576xf32>
    %c0_23 = arith.constant 0 : index
    %c0_24 = arith.constant 0 : index
    %55 = vector.load %arg7[%c0_23, %c0_24] : memref<576x7xf32, #tpu.memory_space<vmem>>, vector<576x7xf32>
    %c0_25 = arith.constant 0 : index
    %c0_26 = arith.constant 0 : index
    %56 = vector.load %arg8[%c0_25, %c0_26] : memref<1x7xf32, #tpu.memory_space<vmem>>, vector<1x7xf32>
    %cst_27 = arith.constant 0.000000e+00 : f32
    %57 = vector.broadcast %cst_27 : f32 to vector<2x22x24xf32>
    %cst_28 = arith.constant 0.000000e+00 : f32
    %58 = vector.broadcast %cst_28 : f32 to vector<2x22x24xf32>
    %cst_29 = arith.constant 0.000000e+00 : f32
    %59 = vector.broadcast %cst_29 : f32 to vector<2x22x24xf32>
    %c0_30 = arith.constant 0 : index
    %c0_31 = arith.constant 0 : index
    %c0_32 = arith.constant 0 : index
    %c0_33 = arith.constant 0 : index
    %60 = vector.load %arg0[%c0_30, %c0_31, %c0_32, %c0_33] : memref<2x4x24x24xf32, #tpu.memory_space<vmem>>, vector<2x1x22x24xf32>
    %61 = vector.shape_cast %60 : vector<2x1x22x24xf32> to vector<2x22x24xf32>
    %c0_34 = arith.constant 0 : index
    %62 = memref.load %arg1[%c0_34] : memref<144xf32, #tpu.memory_space<smem>>
    %63 = vector.broadcast %62 : f32 to vector<2x22x24xf32>
    %64 = arith.mulf %63, %61 : vector<2x22x24xf32>
    %65 = arith.addf %57, %64 : vector<2x22x24xf32>
    %c1 = arith.constant 1 : index
    %66 = memref.load %arg1[%c1] : memref<144xf32, #tpu.memory_space<smem>>
    %67 = vector.broadcast %66 : f32 to vector<2x22x24xf32>
    %68 = arith.mulf %67, %61 : vector<2x22x24xf32>
    %69 = arith.addf %58, %68 : vector<2x22x24xf32>
    %c2 = arith.constant 2 : index
    %70 = memref.load %arg1[%c2] : memref<144xf32, #tpu.memory_space<smem>>
    %71 = vector.broadcast %70 : f32 to vector<2x22x24xf32>
    %72 = arith.mulf %71, %61 : vector<2x22x24xf32>
    %73 = arith.addf %59, %72 : vector<2x22x24xf32>
    %c0_35 = arith.constant 0 : index
    %c0_36 = arith.constant 0 : index
    %c1_37 = arith.constant 1 : index
    %c0_38 = arith.constant 0 : index
    %74 = vector.load %arg0[%c0_35, %c0_36, %c1_37, %c0_38] : memref<2x4x24x24xf32, #tpu.memory_space<vmem>>, vector<2x1x22x24xf32>
    %75 = vector.shape_cast %74 : vector<2x1x22x24xf32> to vector<2x22x24xf32>
    %c3 = arith.constant 3 : index
    %76 = memref.load %arg1[%c3] : memref<144xf32, #tpu.memory_space<smem>>
    %77 = vector.broadcast %76 : f32 to vector<2x22x24xf32>
    %78 = arith.mulf %77, %75 : vector<2x22x24xf32>
    %79 = arith.addf %65, %78 : vector<2x22x24xf32>
    %c4 = arith.constant 4 : index
    %80 = memref.load %arg1[%c4] : memref<144xf32, #tpu.memory_space<smem>>
    %81 = vector.broadcast %80 : f32 to vector<2x22x24xf32>
    %82 = arith.mulf %81, %75 : vector<2x22x24xf32>
    %83 = arith.addf %69, %82 : vector<2x22x24xf32>
    %c5 = arith.constant 5 : index
    %84 = memref.load %arg1[%c5] : memref<144xf32, #tpu.memory_space<smem>>
    %85 = vector.broadcast %84 : f32 to vector<2x22x24xf32>
    %86 = arith.mulf %85, %75 : vector<2x22x24xf32>
    %87 = arith.addf %73, %86 : vector<2x22x24xf32>
    %c0_39 = arith.constant 0 : index
    %c0_40 = arith.constant 0 : index
    %c2_41 = arith.constant 2 : index
    %c0_42 = arith.constant 0 : index
    %88 = vector.load %arg0[%c0_39, %c0_40, %c2_41, %c0_42] : memref<2x4x24x24xf32, #tpu.memory_space<vmem>>, vector<2x1x22x24xf32>
    %89 = vector.shape_cast %88 : vector<2x1x22x24xf32> to vector<2x22x24xf32>
    %c6 = arith.constant 6 : index
    %90 = memref.load %arg1[%c6] : memref<144xf32, #tpu.memory_space<smem>>
    %91 = vector.broadcast %90 : f32 to vector<2x22x24xf32>
    %92 = arith.mulf %91, %89 : vector<2x22x24xf32>
    %93 = arith.addf %79, %92 : vector<2x22x24xf32>
    %c7 = arith.constant 7 : index
    %94 = memref.load %arg1[%c7] : memref<144xf32, #tpu.memory_space<smem>>
    %95 = vector.broadcast %94 : f32 to vector<2x22x24xf32>
    %96 = arith.mulf %95, %89 : vector<2x22x24xf32>
    %97 = arith.addf %83, %96 : vector<2x22x24xf32>
    %c8 = arith.constant 8 : index
    %98 = memref.load %arg1[%c8] : memref<144xf32, #tpu.memory_space<smem>>
    %99 = vector.broadcast %98 : f32 to vector<2x22x24xf32>
    %100 = arith.mulf %99, %89 : vector<2x22x24xf32>
    %101 = arith.addf %87, %100 : vector<2x22x24xf32>
    %c0_43 = arith.constant 0 : index
    %c1_44 = arith.constant 1 : index
    %c0_45 = arith.constant 0 : index
    %c0_46 = arith.constant 0 : index
    %102 = vector.load %arg0[%c0_43, %c1_44, %c0_45, %c0_46] : memref<2x4x24x24xf32, #tpu.memory_space<vmem>>, vector<2x1x22x24xf32>
    %103 = vector.shape_cast %102 : vector<2x1x22x24xf32> to vector<2x22x24xf32>
    %c9 = arith.constant 9 : index
    %104 = memref.load %arg1[%c9] : memref<144xf32, #tpu.memory_space<smem>>
    %105 = vector.broadcast %104 : f32 to vector<2x22x24xf32>
    %106 = arith.mulf %105, %103 : vector<2x22x24xf32>
    %107 = arith.addf %93, %106 : vector<2x22x24xf32>
    %c10 = arith.constant 10 : index
    %108 = memref.load %arg1[%c10] : memref<144xf32, #tpu.memory_space<smem>>
    %109 = vector.broadcast %108 : f32 to vector<2x22x24xf32>
    %110 = arith.mulf %109, %103 : vector<2x22x24xf32>
    %111 = arith.addf %97, %110 : vector<2x22x24xf32>
    %c11 = arith.constant 11 : index
    %112 = memref.load %arg1[%c11] : memref<144xf32, #tpu.memory_space<smem>>
    %113 = vector.broadcast %112 : f32 to vector<2x22x24xf32>
    %114 = arith.mulf %113, %103 : vector<2x22x24xf32>
    %115 = arith.addf %101, %114 : vector<2x22x24xf32>
    %c0_47 = arith.constant 0 : index
    %c1_48 = arith.constant 1 : index
    %c1_49 = arith.constant 1 : index
    %c0_50 = arith.constant 0 : index
    %116 = vector.load %arg0[%c0_47, %c1_48, %c1_49, %c0_50] : memref<2x4x24x24xf32, #tpu.memory_space<vmem>>, vector<2x1x22x24xf32>
    %117 = vector.shape_cast %116 : vector<2x1x22x24xf32> to vector<2x22x24xf32>
    %c12 = arith.constant 12 : index
    %118 = memref.load %arg1[%c12] : memref<144xf32, #tpu.memory_space<smem>>
    %119 = vector.broadcast %118 : f32 to vector<2x22x24xf32>
    %120 = arith.mulf %119, %117 : vector<2x22x24xf32>
    %121 = arith.addf %107, %120 : vector<2x22x24xf32>
    %c13 = arith.constant 13 : index
    %122 = memref.load %arg1[%c13] : memref<144xf32, #tpu.memory_space<smem>>
    %123 = vector.broadcast %122 : f32 to vector<2x22x24xf32>
    %124 = arith.mulf %123, %117 : vector<2x22x24xf32>
    %125 = arith.addf %111, %124 : vector<2x22x24xf32>
    %c14 = arith.constant 14 : index
    %126 = memref.load %arg1[%c14] : memref<144xf32, #tpu.memory_space<smem>>
    %127 = vector.broadcast %126 : f32 to vector<2x22x24xf32>
    %128 = arith.mulf %127, %117 : vector<2x22x24xf32>
    %129 = arith.addf %115, %128 : vector<2x22x24xf32>
    %c0_51 = arith.constant 0 : index
    %c1_52 = arith.constant 1 : index
    %c2_53 = arith.constant 2 : index
    %c0_54 = arith.constant 0 : index
    %130 = vector.load %arg0[%c0_51, %c1_52, %c2_53, %c0_54] : memref<2x4x24x24xf32, #tpu.memory_space<vmem>>, vector<2x1x22x24xf32>
    %131 = vector.shape_cast %130 : vector<2x1x22x24xf32> to vector<2x22x24xf32>
    %c15 = arith.constant 15 : index
    %132 = memref.load %arg1[%c15] : memref<144xf32, #tpu.memory_space<smem>>
    %133 = vector.broadcast %132 : f32 to vector<2x22x24xf32>
    %134 = arith.mulf %133, %131 : vector<2x22x24xf32>
    %135 = arith.addf %121, %134 : vector<2x22x24xf32>
    %c16 = arith.constant 16 : index
    %136 = memref.load %arg1[%c16] : memref<144xf32, #tpu.memory_space<smem>>
    %137 = vector.broadcast %136 : f32 to vector<2x22x24xf32>
    %138 = arith.mulf %137, %131 : vector<2x22x24xf32>
    %139 = arith.addf %125, %138 : vector<2x22x24xf32>
    %c17 = arith.constant 17 : index
    %140 = memref.load %arg1[%c17] : memref<144xf32, #tpu.memory_space<smem>>
    %141 = vector.broadcast %140 : f32 to vector<2x22x24xf32>
    %142 = arith.mulf %141, %131 : vector<2x22x24xf32>
    %143 = arith.addf %129, %142 : vector<2x22x24xf32>
    %c0_55 = arith.constant 0 : index
    %c2_56 = arith.constant 2 : index
    %c0_57 = arith.constant 0 : index
    %c0_58 = arith.constant 0 : index
    %144 = vector.load %arg0[%c0_55, %c2_56, %c0_57, %c0_58] : memref<2x4x24x24xf32, #tpu.memory_space<vmem>>, vector<2x1x22x24xf32>
    %145 = vector.shape_cast %144 : vector<2x1x22x24xf32> to vector<2x22x24xf32>
    %c18 = arith.constant 18 : index
    %146 = memref.load %arg1[%c18] : memref<144xf32, #tpu.memory_space<smem>>
    %147 = vector.broadcast %146 : f32 to vector<2x22x24xf32>
    %148 = arith.mulf %147, %145 : vector<2x22x24xf32>
    %149 = arith.addf %135, %148 : vector<2x22x24xf32>
    %c19 = arith.constant 19 : index
    %150 = memref.load %arg1[%c19] : memref<144xf32, #tpu.memory_space<smem>>
    %151 = vector.broadcast %150 : f32 to vector<2x22x24xf32>
    %152 = arith.mulf %151, %145 : vector<2x22x24xf32>
    %153 = arith.addf %139, %152 : vector<2x22x24xf32>
    %c20 = arith.constant 20 : index
    %154 = memref.load %arg1[%c20] : memref<144xf32, #tpu.memory_space<smem>>
    %155 = vector.broadcast %154 : f32 to vector<2x22x24xf32>
    %156 = arith.mulf %155, %145 : vector<2x22x24xf32>
    %157 = arith.addf %143, %156 : vector<2x22x24xf32>
    %c0_59 = arith.constant 0 : index
    %c2_60 = arith.constant 2 : index
    %c1_61 = arith.constant 1 : index
    %c0_62 = arith.constant 0 : index
    %158 = vector.load %arg0[%c0_59, %c2_60, %c1_61, %c0_62] : memref<2x4x24x24xf32, #tpu.memory_space<vmem>>, vector<2x1x22x24xf32>
    %159 = vector.shape_cast %158 : vector<2x1x22x24xf32> to vector<2x22x24xf32>
    %c21 = arith.constant 21 : index
    %160 = memref.load %arg1[%c21] : memref<144xf32, #tpu.memory_space<smem>>
    %161 = vector.broadcast %160 : f32 to vector<2x22x24xf32>
    %162 = arith.mulf %161, %159 : vector<2x22x24xf32>
    %163 = arith.addf %149, %162 : vector<2x22x24xf32>
    %c22 = arith.constant 22 : index
    %164 = memref.load %arg1[%c22] : memref<144xf32, #tpu.memory_space<smem>>
    %165 = vector.broadcast %164 : f32 to vector<2x22x24xf32>
    %166 = arith.mulf %165, %159 : vector<2x22x24xf32>
    %167 = arith.addf %153, %166 : vector<2x22x24xf32>
    %c23 = arith.constant 23 : index
    %168 = memref.load %arg1[%c23] : memref<144xf32, #tpu.memory_space<smem>>
    %169 = vector.broadcast %168 : f32 to vector<2x22x24xf32>
    %170 = arith.mulf %169, %159 : vector<2x22x24xf32>
    %171 = arith.addf %157, %170 : vector<2x22x24xf32>
    %c0_63 = arith.constant 0 : index
    %c2_64 = arith.constant 2 : index
    %c2_65 = arith.constant 2 : index
    %c0_66 = arith.constant 0 : index
    %172 = vector.load %arg0[%c0_63, %c2_64, %c2_65, %c0_66] : memref<2x4x24x24xf32, #tpu.memory_space<vmem>>, vector<2x1x22x24xf32>
    %173 = vector.shape_cast %172 : vector<2x1x22x24xf32> to vector<2x22x24xf32>
    %c24 = arith.constant 24 : index
    %174 = memref.load %arg1[%c24] : memref<144xf32, #tpu.memory_space<smem>>
    %175 = vector.broadcast %174 : f32 to vector<2x22x24xf32>
    %176 = arith.mulf %175, %173 : vector<2x22x24xf32>
    %177 = arith.addf %163, %176 : vector<2x22x24xf32>
    %c25 = arith.constant 25 : index
    %178 = memref.load %arg1[%c25] : memref<144xf32, #tpu.memory_space<smem>>
    %179 = vector.broadcast %178 : f32 to vector<2x22x24xf32>
    %180 = arith.mulf %179, %173 : vector<2x22x24xf32>
    %181 = arith.addf %167, %180 : vector<2x22x24xf32>
    %c26 = arith.constant 26 : index
    %182 = memref.load %arg1[%c26] : memref<144xf32, #tpu.memory_space<smem>>
    %183 = vector.broadcast %182 : f32 to vector<2x22x24xf32>
    %184 = arith.mulf %183, %173 : vector<2x22x24xf32>
    %185 = arith.addf %171, %184 : vector<2x22x24xf32>
    %c0_67 = arith.constant 0 : index
    %c3_68 = arith.constant 3 : index
    %c0_69 = arith.constant 0 : index
    %c0_70 = arith.constant 0 : index
    %186 = vector.load %arg0[%c0_67, %c3_68, %c0_69, %c0_70] : memref<2x4x24x24xf32, #tpu.memory_space<vmem>>, vector<2x1x22x24xf32>
    %187 = vector.shape_cast %186 : vector<2x1x22x24xf32> to vector<2x22x24xf32>
    %c27 = arith.constant 27 : index
    %188 = memref.load %arg1[%c27] : memref<144xf32, #tpu.memory_space<smem>>
    %189 = vector.broadcast %188 : f32 to vector<2x22x24xf32>
    %190 = arith.mulf %189, %187 : vector<2x22x24xf32>
    %191 = arith.addf %177, %190 : vector<2x22x24xf32>
    %c28 = arith.constant 28 : index
    %192 = memref.load %arg1[%c28] : memref<144xf32, #tpu.memory_space<smem>>
    %193 = vector.broadcast %192 : f32 to vector<2x22x24xf32>
    %194 = arith.mulf %193, %187 : vector<2x22x24xf32>
    %195 = arith.addf %181, %194 : vector<2x22x24xf32>
    %c29 = arith.constant 29 : index
    %196 = memref.load %arg1[%c29] : memref<144xf32, #tpu.memory_space<smem>>
    %197 = vector.broadcast %196 : f32 to vector<2x22x24xf32>
    %198 = arith.mulf %197, %187 : vector<2x22x24xf32>
    %199 = arith.addf %185, %198 : vector<2x22x24xf32>
    %c0_71 = arith.constant 0 : index
    %c3_72 = arith.constant 3 : index
    %c1_73 = arith.constant 1 : index
    %c0_74 = arith.constant 0 : index
    %200 = vector.load %arg0[%c0_71, %c3_72, %c1_73, %c0_74] : memref<2x4x24x24xf32, #tpu.memory_space<vmem>>, vector<2x1x22x24xf32>
    %201 = vector.shape_cast %200 : vector<2x1x22x24xf32> to vector<2x22x24xf32>
    %c30 = arith.constant 30 : index
    %202 = memref.load %arg1[%c30] : memref<144xf32, #tpu.memory_space<smem>>
    %203 = vector.broadcast %202 : f32 to vector<2x22x24xf32>
    %204 = arith.mulf %203, %201 : vector<2x22x24xf32>
    %205 = arith.addf %191, %204 : vector<2x22x24xf32>
    %c31 = arith.constant 31 : index
    %206 = memref.load %arg1[%c31] : memref<144xf32, #tpu.memory_space<smem>>
    %207 = vector.broadcast %206 : f32 to vector<2x22x24xf32>
    %208 = arith.mulf %207, %201 : vector<2x22x24xf32>
    %209 = arith.addf %195, %208 : vector<2x22x24xf32>
    %c32 = arith.constant 32 : index
    %210 = memref.load %arg1[%c32] : memref<144xf32, #tpu.memory_space<smem>>
    %211 = vector.broadcast %210 : f32 to vector<2x22x24xf32>
    %212 = arith.mulf %211, %201 : vector<2x22x24xf32>
    %213 = arith.addf %199, %212 : vector<2x22x24xf32>
    %c0_75 = arith.constant 0 : index
    %c3_76 = arith.constant 3 : index
    %c2_77 = arith.constant 2 : index
    %c0_78 = arith.constant 0 : index
    %214 = vector.load %arg0[%c0_75, %c3_76, %c2_77, %c0_78] : memref<2x4x24x24xf32, #tpu.memory_space<vmem>>, vector<2x1x22x24xf32>
    %215 = vector.shape_cast %214 : vector<2x1x22x24xf32> to vector<2x22x24xf32>
    %c33 = arith.constant 33 : index
    %216 = memref.load %arg1[%c33] : memref<144xf32, #tpu.memory_space<smem>>
    %217 = vector.broadcast %216 : f32 to vector<2x22x24xf32>
    %218 = arith.mulf %217, %215 : vector<2x22x24xf32>
    %219 = arith.addf %205, %218 : vector<2x22x24xf32>
    %c34 = arith.constant 34 : index
    %220 = memref.load %arg1[%c34] : memref<144xf32, #tpu.memory_space<smem>>
    %221 = vector.broadcast %220 : f32 to vector<2x22x24xf32>
    %222 = arith.mulf %221, %215 : vector<2x22x24xf32>
    %223 = arith.addf %209, %222 : vector<2x22x24xf32>
    %c35 = arith.constant 35 : index
    %224 = memref.load %arg1[%c35] : memref<144xf32, #tpu.memory_space<smem>>
    %225 = vector.broadcast %224 : f32 to vector<2x22x24xf32>
    %226 = arith.mulf %225, %215 : vector<2x22x24xf32>
    %227 = arith.addf %213, %226 : vector<2x22x24xf32>
    %c0_79 = arith.constant 0 : index
    %228 = memref.load %arg2[%c0_79] : memref<4xf32, #tpu.memory_space<smem>>
    %c0_80 = arith.constant 0 : index
    %c0_81 = arith.constant 0 : index
    %229 = vector.load %arg5[%c0_80, %c0_81] : memref<576x576xf32, #tpu.memory_space<vmem>>, vector<144x576xf32>
    %230 = vector.extract_strided_slice %219 {offsets = [0, 0, 0], sizes = [1, 22, 24], strides = [1, 1, 1]} : vector<2x22x24xf32> to vector<1x22x24xf32>
    %231 = vector.shape_cast %230 : vector<1x22x24xf32> to vector<22x24xf32>
    %232 = vector.extract_strided_slice %223 {offsets = [0, 0, 0], sizes = [1, 22, 24], strides = [1, 1, 1]} : vector<2x22x24xf32> to vector<1x22x24xf32>
    %233 = vector.shape_cast %232 : vector<1x22x24xf32> to vector<22x24xf32>
    %cst_82 = arith.constant dense<0.000000e+00> : vector<22x24xf32>
    %234 = tpu.matmul %233, %7, %cst_82 {dimension_numbers = #tpu.dot_dimension_numbers<[1], [0], [0], [1], [0, 0, 1, 1], [], []>} : vector<22x24xf32>, vector<24x24xf32>, vector<22x24xf32> -> vector<22x24xf32>
    %235 = arith.addf %231, %234 : vector<22x24xf32>
    %236 = vector.extract_strided_slice %227 {offsets = [0, 0, 0], sizes = [1, 22, 24], strides = [1, 1, 1]} : vector<2x22x24xf32> to vector<1x22x24xf32>
    %237 = vector.shape_cast %236 : vector<1x22x24xf32> to vector<22x24xf32>
    %cst_83 = arith.constant dense<0.000000e+00> : vector<22x24xf32>
    %238 = tpu.matmul %237, %13, %cst_83 {dimension_numbers = #tpu.dot_dimension_numbers<[1], [0], [0], [1], [0, 0, 1, 1], [], []>} : vector<22x24xf32>, vector<24x24xf32>, vector<22x24xf32> -> vector<22x24xf32>
    %239 = arith.addf %235, %238 : vector<22x24xf32>
    %240 = vector.broadcast %228 : f32 to vector<22x24xf32>
    %241 = arith.addf %239, %240 : vector<22x24xf32>
    %cst_84 = arith.constant 0.000000e+00 : f32
    %242 = vector.broadcast %cst_84 : f32 to vector<22x24xf32>
    %243 = arith.maximumf %241, %242 : vector<22x24xf32>
    %cst_85 = arith.constant dense<0.000000e+00> : vector<22x12xf32>
    %244 = tpu.matmul %243, %26, %cst_85 {dimension_numbers = #tpu.dot_dimension_numbers<[1], [0], [0], [1], [0, 0, 1, 1], [], []>} : vector<22x24xf32>, vector<24x12xf32>, vector<22x12xf32> -> vector<22x12xf32>
    %cst_86 = arith.constant dense<0.000000e+00> : vector<22x12xf32>
    %245 = tpu.matmul %243, %35, %cst_86 {dimension_numbers = #tpu.dot_dimension_numbers<[1], [0], [0], [1], [0, 0, 1, 1], [], []>} : vector<22x24xf32>, vector<24x12xf32>, vector<22x12xf32> -> vector<22x12xf32>
    %246 = arith.maximumf %244, %245 : vector<22x12xf32>
    %cst_87 = arith.constant dense<0.000000e+00> : vector<12x12xf32>
    %247 = tpu.matmul %45, %246, %cst_87 {dimension_numbers = #tpu.dot_dimension_numbers<[1], [0], [0], [1], [0, 0, 1, 1], [], []>} : vector<12x22xf32>, vector<22x12xf32>, vector<12x12xf32> -> vector<12x12xf32>
    %cst_88 = arith.constant dense<0.000000e+00> : vector<12x12xf32>
    %248 = tpu.matmul %51, %246, %cst_88 {dimension_numbers = #tpu.dot_dimension_numbers<[1], [0], [0], [1], [0, 0, 1, 1], [], []>} : vector<12x22xf32>, vector<22x12xf32>, vector<12x12xf32> -> vector<12x12xf32>
    %249 = arith.maximumf %247, %248 : vector<12x12xf32>
    %cst_89 = arith.constant dense<0.000000e+00> : vector<12x144xf32>
    %250 = tpu.matmul %249, %52, %cst_89 {dimension_numbers = #tpu.dot_dimension_numbers<[1], [0], [0], [1], [0, 0, 1, 1], [], []>} : vector<12x12xf32>, vector<12x144xf32>, vector<12x144xf32> -> vector<12x144xf32>
    %251 = arith.mulf %250, %53 : vector<12x144xf32>
    %cst_90 = arith.constant dense<0.000000e+00> : vector<144xf32>
    %252 = vector.multi_reduction <add>, %251, %cst_90 [0] : vector<12x144xf32> to vector<144xf32>
    %253 = vector.shape_cast %252 : vector<144xf32> to vector<1x144xf32>
    %cst_91 = arith.constant dense<0.000000e+00> : vector<1x576xf32>
    %254 = tpu.matmul %253, %229, %cst_91 {dimension_numbers = #tpu.dot_dimension_numbers<[1], [0], [0], [1], [0, 0, 1, 1], [], []>} : vector<1x144xf32>, vector<144x576xf32>, vector<1x576xf32> -> vector<1x576xf32>
    %255 = arith.addf %54, %254 : vector<1x576xf32>
    %256 = vector.extract_strided_slice %219 {offsets = [1, 0, 0], sizes = [1, 22, 24], strides = [1, 1, 1]} : vector<2x22x24xf32> to vector<1x22x24xf32>
    %257 = vector.shape_cast %256 : vector<1x22x24xf32> to vector<22x24xf32>
    %258 = vector.extract_strided_slice %223 {offsets = [1, 0, 0], sizes = [1, 22, 24], strides = [1, 1, 1]} : vector<2x22x24xf32> to vector<1x22x24xf32>
    %259 = vector.shape_cast %258 : vector<1x22x24xf32> to vector<22x24xf32>
    %cst_92 = arith.constant dense<0.000000e+00> : vector<22x24xf32>
    %260 = tpu.matmul %259, %7, %cst_92 {dimension_numbers = #tpu.dot_dimension_numbers<[1], [0], [0], [1], [0, 0, 1, 1], [], []>} : vector<22x24xf32>, vector<24x24xf32>, vector<22x24xf32> -> vector<22x24xf32>
    %261 = arith.addf %257, %260 : vector<22x24xf32>
    %262 = vector.extract_strided_slice %227 {offsets = [1, 0, 0], sizes = [1, 22, 24], strides = [1, 1, 1]} : vector<2x22x24xf32> to vector<1x22x24xf32>
    %263 = vector.shape_cast %262 : vector<1x22x24xf32> to vector<22x24xf32>
    %cst_93 = arith.constant dense<0.000000e+00> : vector<22x24xf32>
    %264 = tpu.matmul %263, %13, %cst_93 {dimension_numbers = #tpu.dot_dimension_numbers<[1], [0], [0], [1], [0, 0, 1, 1], [], []>} : vector<22x24xf32>, vector<24x24xf32>, vector<22x24xf32> -> vector<22x24xf32>
    %265 = arith.addf %261, %264 : vector<22x24xf32>
    %266 = vector.broadcast %228 : f32 to vector<22x24xf32>
    %267 = arith.addf %265, %266 : vector<22x24xf32>
    %cst_94 = arith.constant 0.000000e+00 : f32
    %268 = vector.broadcast %cst_94 : f32 to vector<22x24xf32>
    %269 = arith.maximumf %267, %268 : vector<22x24xf32>
    %cst_95 = arith.constant dense<0.000000e+00> : vector<22x12xf32>
    %270 = tpu.matmul %269, %26, %cst_95 {dimension_numbers = #tpu.dot_dimension_numbers<[1], [0], [0], [1], [0, 0, 1, 1], [], []>} : vector<22x24xf32>, vector<24x12xf32>, vector<22x12xf32> -> vector<22x12xf32>
    %cst_96 = arith.constant dense<0.000000e+00> : vector<22x12xf32>
    %271 = tpu.matmul %269, %35, %cst_96 {dimension_numbers = #tpu.dot_dimension_numbers<[1], [0], [0], [1], [0, 0, 1, 1], [], []>} : vector<22x24xf32>, vector<24x12xf32>, vector<22x12xf32> -> vector<22x12xf32>
    %272 = arith.maximumf %270, %271 : vector<22x12xf32>
    %cst_97 = arith.constant dense<0.000000e+00> : vector<12x12xf32>
    %273 = tpu.matmul %45, %272, %cst_97 {dimension_numbers = #tpu.dot_dimension_numbers<[1], [0], [0], [1], [0, 0, 1, 1], [], []>} : vector<12x22xf32>, vector<22x12xf32>, vector<12x12xf32> -> vector<12x12xf32>
    %cst_98 = arith.constant dense<0.000000e+00> : vector<12x12xf32>
    %274 = tpu.matmul %51, %272, %cst_98 {dimension_numbers = #tpu.dot_dimension_numbers<[1], [0], [0], [1], [0, 0, 1, 1], [], []>} : vector<12x22xf32>, vector<22x12xf32>, vector<12x12xf32> -> vector<12x12xf32>
    %275 = arith.maximumf %273, %274 : vector<12x12xf32>
    %cst_99 = arith.constant dense<0.000000e+00> : vector<12x144xf32>
    %276 = tpu.matmul %275, %52, %cst_99 {dimension_numbers = #tpu.dot_dimension_numbers<[1], [0], [0], [1], [0, 0, 1, 1], [], []>} : vector<12x12xf32>, vector<12x144xf32>, vector<12x144xf32> -> vector<12x144xf32>
    %277 = arith.mulf %276, %53 : vector<12x144xf32>
    %cst_100 = arith.constant dense<0.000000e+00> : vector<144xf32>
    %278 = vector.multi_reduction <add>, %277, %cst_100 [0] : vector<12x144xf32> to vector<144xf32>
    %279 = vector.shape_cast %278 : vector<144xf32> to vector<1x144xf32>
    %cst_101 = arith.constant dense<0.000000e+00> : vector<1x576xf32>
    %280 = tpu.matmul %279, %229, %cst_101 {dimension_numbers = #tpu.dot_dimension_numbers<[1], [0], [0], [1], [0, 0, 1, 1], [], []>} : vector<1x144xf32>, vector<144x576xf32>, vector<1x576xf32> -> vector<1x576xf32>
    %281 = arith.addf %54, %280 : vector<1x576xf32>
    %cst_102 = arith.constant 0.000000e+00 : f32
    %282 = vector.broadcast %cst_102 : f32 to vector<2x22x24xf32>
    %cst_103 = arith.constant 0.000000e+00 : f32
    %283 = vector.broadcast %cst_103 : f32 to vector<2x22x24xf32>
    %cst_104 = arith.constant 0.000000e+00 : f32
    %284 = vector.broadcast %cst_104 : f32 to vector<2x22x24xf32>
    %c0_105 = arith.constant 0 : index
    %c0_106 = arith.constant 0 : index
    %c0_107 = arith.constant 0 : index
    %c0_108 = arith.constant 0 : index
    %285 = vector.load %arg0[%c0_105, %c0_106, %c0_107, %c0_108] : memref<2x4x24x24xf32, #tpu.memory_space<vmem>>, vector<2x1x22x24xf32>
    %286 = vector.shape_cast %285 : vector<2x1x22x24xf32> to vector<2x22x24xf32>
    %c36 = arith.constant 36 : index
    %287 = memref.load %arg1[%c36] : memref<144xf32, #tpu.memory_space<smem>>
    %288 = vector.broadcast %287 : f32 to vector<2x22x24xf32>
    %289 = arith.mulf %288, %286 : vector<2x22x24xf32>
    %290 = arith.addf %282, %289 : vector<2x22x24xf32>
    %c37 = arith.constant 37 : index
    %291 = memref.load %arg1[%c37] : memref<144xf32, #tpu.memory_space<smem>>
    %292 = vector.broadcast %291 : f32 to vector<2x22x24xf32>
    %293 = arith.mulf %292, %286 : vector<2x22x24xf32>
    %294 = arith.addf %283, %293 : vector<2x22x24xf32>
    %c38 = arith.constant 38 : index
    %295 = memref.load %arg1[%c38] : memref<144xf32, #tpu.memory_space<smem>>
    %296 = vector.broadcast %295 : f32 to vector<2x22x24xf32>
    %297 = arith.mulf %296, %286 : vector<2x22x24xf32>
    %298 = arith.addf %284, %297 : vector<2x22x24xf32>
    %c0_109 = arith.constant 0 : index
    %c0_110 = arith.constant 0 : index
    %c1_111 = arith.constant 1 : index
    %c0_112 = arith.constant 0 : index
    %299 = vector.load %arg0[%c0_109, %c0_110, %c1_111, %c0_112] : memref<2x4x24x24xf32, #tpu.memory_space<vmem>>, vector<2x1x22x24xf32>
    %300 = vector.shape_cast %299 : vector<2x1x22x24xf32> to vector<2x22x24xf32>
    %c39 = arith.constant 39 : index
    %301 = memref.load %arg1[%c39] : memref<144xf32, #tpu.memory_space<smem>>
    %302 = vector.broadcast %301 : f32 to vector<2x22x24xf32>
    %303 = arith.mulf %302, %300 : vector<2x22x24xf32>
    %304 = arith.addf %290, %303 : vector<2x22x24xf32>
    %c40 = arith.constant 40 : index
    %305 = memref.load %arg1[%c40] : memref<144xf32, #tpu.memory_space<smem>>
    %306 = vector.broadcast %305 : f32 to vector<2x22x24xf32>
    %307 = arith.mulf %306, %300 : vector<2x22x24xf32>
    %308 = arith.addf %294, %307 : vector<2x22x24xf32>
    %c41 = arith.constant 41 : index
    %309 = memref.load %arg1[%c41] : memref<144xf32, #tpu.memory_space<smem>>
    %310 = vector.broadcast %309 : f32 to vector<2x22x24xf32>
    %311 = arith.mulf %310, %300 : vector<2x22x24xf32>
    %312 = arith.addf %298, %311 : vector<2x22x24xf32>
    %c0_113 = arith.constant 0 : index
    %c0_114 = arith.constant 0 : index
    %c2_115 = arith.constant 2 : index
    %c0_116 = arith.constant 0 : index
    %313 = vector.load %arg0[%c0_113, %c0_114, %c2_115, %c0_116] : memref<2x4x24x24xf32, #tpu.memory_space<vmem>>, vector<2x1x22x24xf32>
    %314 = vector.shape_cast %313 : vector<2x1x22x24xf32> to vector<2x22x24xf32>
    %c42 = arith.constant 42 : index
    %315 = memref.load %arg1[%c42] : memref<144xf32, #tpu.memory_space<smem>>
    %316 = vector.broadcast %315 : f32 to vector<2x22x24xf32>
    %317 = arith.mulf %316, %314 : vector<2x22x24xf32>
    %318 = arith.addf %304, %317 : vector<2x22x24xf32>
    %c43 = arith.constant 43 : index
    %319 = memref.load %arg1[%c43] : memref<144xf32, #tpu.memory_space<smem>>
    %320 = vector.broadcast %319 : f32 to vector<2x22x24xf32>
    %321 = arith.mulf %320, %314 : vector<2x22x24xf32>
    %322 = arith.addf %308, %321 : vector<2x22x24xf32>
    %c44 = arith.constant 44 : index
    %323 = memref.load %arg1[%c44] : memref<144xf32, #tpu.memory_space<smem>>
    %324 = vector.broadcast %323 : f32 to vector<2x22x24xf32>
    %325 = arith.mulf %324, %314 : vector<2x22x24xf32>
    %326 = arith.addf %312, %325 : vector<2x22x24xf32>
    %c0_117 = arith.constant 0 : index
    %c1_118 = arith.constant 1 : index
    %c0_119 = arith.constant 0 : index
    %c0_120 = arith.constant 0 : index
    %327 = vector.load %arg0[%c0_117, %c1_118, %c0_119, %c0_120] : memref<2x4x24x24xf32, #tpu.memory_space<vmem>>, vector<2x1x22x24xf32>
    %328 = vector.shape_cast %327 : vector<2x1x22x24xf32> to vector<2x22x24xf32>
    %c45 = arith.constant 45 : index
    %329 = memref.load %arg1[%c45] : memref<144xf32, #tpu.memory_space<smem>>
    %330 = vector.broadcast %329 : f32 to vector<2x22x24xf32>
    %331 = arith.mulf %330, %328 : vector<2x22x24xf32>
    %332 = arith.addf %318, %331 : vector<2x22x24xf32>
    %c46 = arith.constant 46 : index
    %333 = memref.load %arg1[%c46] : memref<144xf32, #tpu.memory_space<smem>>
    %334 = vector.broadcast %333 : f32 to vector<2x22x24xf32>
    %335 = arith.mulf %334, %328 : vector<2x22x24xf32>
    %336 = arith.addf %322, %335 : vector<2x22x24xf32>
    %c47 = arith.constant 47 : index
    %337 = memref.load %arg1[%c47] : memref<144xf32, #tpu.memory_space<smem>>
    %338 = vector.broadcast %337 : f32 to vector<2x22x24xf32>
    %339 = arith.mulf %338, %328 : vector<2x22x24xf32>
    %340 = arith.addf %326, %339 : vector<2x22x24xf32>
    %c0_121 = arith.constant 0 : index
    %c1_122 = arith.constant 1 : index
    %c1_123 = arith.constant 1 : index
    %c0_124 = arith.constant 0 : index
    %341 = vector.load %arg0[%c0_121, %c1_122, %c1_123, %c0_124] : memref<2x4x24x24xf32, #tpu.memory_space<vmem>>, vector<2x1x22x24xf32>
    %342 = vector.shape_cast %341 : vector<2x1x22x24xf32> to vector<2x22x24xf32>
    %c48 = arith.constant 48 : index
    %343 = memref.load %arg1[%c48] : memref<144xf32, #tpu.memory_space<smem>>
    %344 = vector.broadcast %343 : f32 to vector<2x22x24xf32>
    %345 = arith.mulf %344, %342 : vector<2x22x24xf32>
    %346 = arith.addf %332, %345 : vector<2x22x24xf32>
    %c49 = arith.constant 49 : index
    %347 = memref.load %arg1[%c49] : memref<144xf32, #tpu.memory_space<smem>>
    %348 = vector.broadcast %347 : f32 to vector<2x22x24xf32>
    %349 = arith.mulf %348, %342 : vector<2x22x24xf32>
    %350 = arith.addf %336, %349 : vector<2x22x24xf32>
    %c50 = arith.constant 50 : index
    %351 = memref.load %arg1[%c50] : memref<144xf32, #tpu.memory_space<smem>>
    %352 = vector.broadcast %351 : f32 to vector<2x22x24xf32>
    %353 = arith.mulf %352, %342 : vector<2x22x24xf32>
    %354 = arith.addf %340, %353 : vector<2x22x24xf32>
    %c0_125 = arith.constant 0 : index
    %c1_126 = arith.constant 1 : index
    %c2_127 = arith.constant 2 : index
    %c0_128 = arith.constant 0 : index
    %355 = vector.load %arg0[%c0_125, %c1_126, %c2_127, %c0_128] : memref<2x4x24x24xf32, #tpu.memory_space<vmem>>, vector<2x1x22x24xf32>
    %356 = vector.shape_cast %355 : vector<2x1x22x24xf32> to vector<2x22x24xf32>
    %c51 = arith.constant 51 : index
    %357 = memref.load %arg1[%c51] : memref<144xf32, #tpu.memory_space<smem>>
    %358 = vector.broadcast %357 : f32 to vector<2x22x24xf32>
    %359 = arith.mulf %358, %356 : vector<2x22x24xf32>
    %360 = arith.addf %346, %359 : vector<2x22x24xf32>
    %c52 = arith.constant 52 : index
    %361 = memref.load %arg1[%c52] : memref<144xf32, #tpu.memory_space<smem>>
    %362 = vector.broadcast %361 : f32 to vector<2x22x24xf32>
    %363 = arith.mulf %362, %356 : vector<2x22x24xf32>
    %364 = arith.addf %350, %363 : vector<2x22x24xf32>
    %c53 = arith.constant 53 : index
    %365 = memref.load %arg1[%c53] : memref<144xf32, #tpu.memory_space<smem>>
    %366 = vector.broadcast %365 : f32 to vector<2x22x24xf32>
    %367 = arith.mulf %366, %356 : vector<2x22x24xf32>
    %368 = arith.addf %354, %367 : vector<2x22x24xf32>
    %c0_129 = arith.constant 0 : index
    %c2_130 = arith.constant 2 : index
    %c0_131 = arith.constant 0 : index
    %c0_132 = arith.constant 0 : index
    %369 = vector.load %arg0[%c0_129, %c2_130, %c0_131, %c0_132] : memref<2x4x24x24xf32, #tpu.memory_space<vmem>>, vector<2x1x22x24xf32>
    %370 = vector.shape_cast %369 : vector<2x1x22x24xf32> to vector<2x22x24xf32>
    %c54 = arith.constant 54 : index
    %371 = memref.load %arg1[%c54] : memref<144xf32, #tpu.memory_space<smem>>
    %372 = vector.broadcast %371 : f32 to vector<2x22x24xf32>
    %373 = arith.mulf %372, %370 : vector<2x22x24xf32>
    %374 = arith.addf %360, %373 : vector<2x22x24xf32>
    %c55 = arith.constant 55 : index
    %375 = memref.load %arg1[%c55] : memref<144xf32, #tpu.memory_space<smem>>
    %376 = vector.broadcast %375 : f32 to vector<2x22x24xf32>
    %377 = arith.mulf %376, %370 : vector<2x22x24xf32>
    %378 = arith.addf %364, %377 : vector<2x22x24xf32>
    %c56 = arith.constant 56 : index
    %379 = memref.load %arg1[%c56] : memref<144xf32, #tpu.memory_space<smem>>
    %380 = vector.broadcast %379 : f32 to vector<2x22x24xf32>
    %381 = arith.mulf %380, %370 : vector<2x22x24xf32>
    %382 = arith.addf %368, %381 : vector<2x22x24xf32>
    %c0_133 = arith.constant 0 : index
    %c2_134 = arith.constant 2 : index
    %c1_135 = arith.constant 1 : index
    %c0_136 = arith.constant 0 : index
    %383 = vector.load %arg0[%c0_133, %c2_134, %c1_135, %c0_136] : memref<2x4x24x24xf32, #tpu.memory_space<vmem>>, vector<2x1x22x24xf32>
    %384 = vector.shape_cast %383 : vector<2x1x22x24xf32> to vector<2x22x24xf32>
    %c57 = arith.constant 57 : index
    %385 = memref.load %arg1[%c57] : memref<144xf32, #tpu.memory_space<smem>>
    %386 = vector.broadcast %385 : f32 to vector<2x22x24xf32>
    %387 = arith.mulf %386, %384 : vector<2x22x24xf32>
    %388 = arith.addf %374, %387 : vector<2x22x24xf32>
    %c58 = arith.constant 58 : index
    %389 = memref.load %arg1[%c58] : memref<144xf32, #tpu.memory_space<smem>>
    %390 = vector.broadcast %389 : f32 to vector<2x22x24xf32>
    %391 = arith.mulf %390, %384 : vector<2x22x24xf32>
    %392 = arith.addf %378, %391 : vector<2x22x24xf32>
    %c59 = arith.constant 59 : index
    %393 = memref.load %arg1[%c59] : memref<144xf32, #tpu.memory_space<smem>>
    %394 = vector.broadcast %393 : f32 to vector<2x22x24xf32>
    %395 = arith.mulf %394, %384 : vector<2x22x24xf32>
    %396 = arith.addf %382, %395 : vector<2x22x24xf32>
    %c0_137 = arith.constant 0 : index
    %c2_138 = arith.constant 2 : index
    %c2_139 = arith.constant 2 : index
    %c0_140 = arith.constant 0 : index
    %397 = vector.load %arg0[%c0_137, %c2_138, %c2_139, %c0_140] : memref<2x4x24x24xf32, #tpu.memory_space<vmem>>, vector<2x1x22x24xf32>
    %398 = vector.shape_cast %397 : vector<2x1x22x24xf32> to vector<2x22x24xf32>
    %c60 = arith.constant 60 : index
    %399 = memref.load %arg1[%c60] : memref<144xf32, #tpu.memory_space<smem>>
    %400 = vector.broadcast %399 : f32 to vector<2x22x24xf32>
    %401 = arith.mulf %400, %398 : vector<2x22x24xf32>
    %402 = arith.addf %388, %401 : vector<2x22x24xf32>
    %c61 = arith.constant 61 : index
    %403 = memref.load %arg1[%c61] : memref<144xf32, #tpu.memory_space<smem>>
    %404 = vector.broadcast %403 : f32 to vector<2x22x24xf32>
    %405 = arith.mulf %404, %398 : vector<2x22x24xf32>
    %406 = arith.addf %392, %405 : vector<2x22x24xf32>
    %c62 = arith.constant 62 : index
    %407 = memref.load %arg1[%c62] : memref<144xf32, #tpu.memory_space<smem>>
    %408 = vector.broadcast %407 : f32 to vector<2x22x24xf32>
    %409 = arith.mulf %408, %398 : vector<2x22x24xf32>
    %410 = arith.addf %396, %409 : vector<2x22x24xf32>
    %c0_141 = arith.constant 0 : index
    %c3_142 = arith.constant 3 : index
    %c0_143 = arith.constant 0 : index
    %c0_144 = arith.constant 0 : index
    %411 = vector.load %arg0[%c0_141, %c3_142, %c0_143, %c0_144] : memref<2x4x24x24xf32, #tpu.memory_space<vmem>>, vector<2x1x22x24xf32>
    %412 = vector.shape_cast %411 : vector<2x1x22x24xf32> to vector<2x22x24xf32>
    %c63 = arith.constant 63 : index
    %413 = memref.load %arg1[%c63] : memref<144xf32, #tpu.memory_space<smem>>
    %414 = vector.broadcast %413 : f32 to vector<2x22x24xf32>
    %415 = arith.mulf %414, %412 : vector<2x22x24xf32>
    %416 = arith.addf %402, %415 : vector<2x22x24xf32>
    %c64 = arith.constant 64 : index
    %417 = memref.load %arg1[%c64] : memref<144xf32, #tpu.memory_space<smem>>
    %418 = vector.broadcast %417 : f32 to vector<2x22x24xf32>
    %419 = arith.mulf %418, %412 : vector<2x22x24xf32>
    %420 = arith.addf %406, %419 : vector<2x22x24xf32>
    %c65 = arith.constant 65 : index
    %421 = memref.load %arg1[%c65] : memref<144xf32, #tpu.memory_space<smem>>
    %422 = vector.broadcast %421 : f32 to vector<2x22x24xf32>
    %423 = arith.mulf %422, %412 : vector<2x22x24xf32>
    %424 = arith.addf %410, %423 : vector<2x22x24xf32>
    %c0_145 = arith.constant 0 : index
    %c3_146 = arith.constant 3 : index
    %c1_147 = arith.constant 1 : index
    %c0_148 = arith.constant 0 : index
    %425 = vector.load %arg0[%c0_145, %c3_146, %c1_147, %c0_148] : memref<2x4x24x24xf32, #tpu.memory_space<vmem>>, vector<2x1x22x24xf32>
    %426 = vector.shape_cast %425 : vector<2x1x22x24xf32> to vector<2x22x24xf32>
    %c66 = arith.constant 66 : index
    %427 = memref.load %arg1[%c66] : memref<144xf32, #tpu.memory_space<smem>>
    %428 = vector.broadcast %427 : f32 to vector<2x22x24xf32>
    %429 = arith.mulf %428, %426 : vector<2x22x24xf32>
    %430 = arith.addf %416, %429 : vector<2x22x24xf32>
    %c67 = arith.constant 67 : index
    %431 = memref.load %arg1[%c67] : memref<144xf32, #tpu.memory_space<smem>>
    %432 = vector.broadcast %431 : f32 to vector<2x22x24xf32>
    %433 = arith.mulf %432, %426 : vector<2x22x24xf32>
    %434 = arith.addf %420, %433 : vector<2x22x24xf32>
    %c68 = arith.constant 68 : index
    %435 = memref.load %arg1[%c68] : memref<144xf32, #tpu.memory_space<smem>>
    %436 = vector.broadcast %435 : f32 to vector<2x22x24xf32>
    %437 = arith.mulf %436, %426 : vector<2x22x24xf32>
    %438 = arith.addf %424, %437 : vector<2x22x24xf32>
    %c0_149 = arith.constant 0 : index
    %c3_150 = arith.constant 3 : index
    %c2_151 = arith.constant 2 : index
    %c0_152 = arith.constant 0 : index
    %439 = vector.load %arg0[%c0_149, %c3_150, %c2_151, %c0_152] : memref<2x4x24x24xf32, #tpu.memory_space<vmem>>, vector<2x1x22x24xf32>
    %440 = vector.shape_cast %439 : vector<2x1x22x24xf32> to vector<2x22x24xf32>
    %c69 = arith.constant 69 : index
    %441 = memref.load %arg1[%c69] : memref<144xf32, #tpu.memory_space<smem>>
    %442 = vector.broadcast %441 : f32 to vector<2x22x24xf32>
    %443 = arith.mulf %442, %440 : vector<2x22x24xf32>
    %444 = arith.addf %430, %443 : vector<2x22x24xf32>
    %c70 = arith.constant 70 : index
    %445 = memref.load %arg1[%c70] : memref<144xf32, #tpu.memory_space<smem>>
    %446 = vector.broadcast %445 : f32 to vector<2x22x24xf32>
    %447 = arith.mulf %446, %440 : vector<2x22x24xf32>
    %448 = arith.addf %434, %447 : vector<2x22x24xf32>
    %c71 = arith.constant 71 : index
    %449 = memref.load %arg1[%c71] : memref<144xf32, #tpu.memory_space<smem>>
    %450 = vector.broadcast %449 : f32 to vector<2x22x24xf32>
    %451 = arith.mulf %450, %440 : vector<2x22x24xf32>
    %452 = arith.addf %438, %451 : vector<2x22x24xf32>
    %c1_153 = arith.constant 1 : index
    %453 = memref.load %arg2[%c1_153] : memref<4xf32, #tpu.memory_space<smem>>
    %c144 = arith.constant 144 : index
    %c0_154 = arith.constant 0 : index
    %454 = vector.load %arg5[%c144, %c0_154] : memref<576x576xf32, #tpu.memory_space<vmem>>, vector<144x576xf32>
    %455 = vector.extract_strided_slice %444 {offsets = [0, 0, 0], sizes = [1, 22, 24], strides = [1, 1, 1]} : vector<2x22x24xf32> to vector<1x22x24xf32>
    %456 = vector.shape_cast %455 : vector<1x22x24xf32> to vector<22x24xf32>
    %457 = vector.extract_strided_slice %448 {offsets = [0, 0, 0], sizes = [1, 22, 24], strides = [1, 1, 1]} : vector<2x22x24xf32> to vector<1x22x24xf32>
    %458 = vector.shape_cast %457 : vector<1x22x24xf32> to vector<22x24xf32>
    %cst_155 = arith.constant dense<0.000000e+00> : vector<22x24xf32>
    %459 = tpu.matmul %458, %7, %cst_155 {dimension_numbers = #tpu.dot_dimension_numbers<[1], [0], [0], [1], [0, 0, 1, 1], [], []>} : vector<22x24xf32>, vector<24x24xf32>, vector<22x24xf32> -> vector<22x24xf32>
    %460 = arith.addf %456, %459 : vector<22x24xf32>
    %461 = vector.extract_strided_slice %452 {offsets = [0, 0, 0], sizes = [1, 22, 24], strides = [1, 1, 1]} : vector<2x22x24xf32> to vector<1x22x24xf32>
    %462 = vector.shape_cast %461 : vector<1x22x24xf32> to vector<22x24xf32>
    %cst_156 = arith.constant dense<0.000000e+00> : vector<22x24xf32>
    %463 = tpu.matmul %462, %13, %cst_156 {dimension_numbers = #tpu.dot_dimension_numbers<[1], [0], [0], [1], [0, 0, 1, 1], [], []>} : vector<22x24xf32>, vector<24x24xf32>, vector<22x24xf32> -> vector<22x24xf32>
    %464 = arith.addf %460, %463 : vector<22x24xf32>
    %465 = vector.broadcast %453 : f32 to vector<22x24xf32>
    %466 = arith.addf %464, %465 : vector<22x24xf32>
    %cst_157 = arith.constant 0.000000e+00 : f32
    %467 = vector.broadcast %cst_157 : f32 to vector<22x24xf32>
    %468 = arith.maximumf %466, %467 : vector<22x24xf32>
    %cst_158 = arith.constant dense<0.000000e+00> : vector<22x12xf32>
    %469 = tpu.matmul %468, %26, %cst_158 {dimension_numbers = #tpu.dot_dimension_numbers<[1], [0], [0], [1], [0, 0, 1, 1], [], []>} : vector<22x24xf32>, vector<24x12xf32>, vector<22x12xf32> -> vector<22x12xf32>
    %cst_159 = arith.constant dense<0.000000e+00> : vector<22x12xf32>
    %470 = tpu.matmul %468, %35, %cst_159 {dimension_numbers = #tpu.dot_dimension_numbers<[1], [0], [0], [1], [0, 0, 1, 1], [], []>} : vector<22x24xf32>, vector<24x12xf32>, vector<22x12xf32> -> vector<22x12xf32>
    %471 = arith.maximumf %469, %470 : vector<22x12xf32>
    %cst_160 = arith.constant dense<0.000000e+00> : vector<12x12xf32>
    %472 = tpu.matmul %45, %471, %cst_160 {dimension_numbers = #tpu.dot_dimension_numbers<[1], [0], [0], [1], [0, 0, 1, 1], [], []>} : vector<12x22xf32>, vector<22x12xf32>, vector<12x12xf32> -> vector<12x12xf32>
    %cst_161 = arith.constant dense<0.000000e+00> : vector<12x12xf32>
    %473 = tpu.matmul %51, %471, %cst_161 {dimension_numbers = #tpu.dot_dimension_numbers<[1], [0], [0], [1], [0, 0, 1, 1], [], []>} : vector<12x22xf32>, vector<22x12xf32>, vector<12x12xf32> -> vector<12x12xf32>
    %474 = arith.maximumf %472, %473 : vector<12x12xf32>
    %cst_162 = arith.constant dense<0.000000e+00> : vector<12x144xf32>
    %475 = tpu.matmul %474, %52, %cst_162 {dimension_numbers = #tpu.dot_dimension_numbers<[1], [0], [0], [1], [0, 0, 1, 1], [], []>} : vector<12x12xf32>, vector<12x144xf32>, vector<12x144xf32> -> vector<12x144xf32>
    %476 = arith.mulf %475, %53 : vector<12x144xf32>
    %cst_163 = arith.constant dense<0.000000e+00> : vector<144xf32>
    %477 = vector.multi_reduction <add>, %476, %cst_163 [0] : vector<12x144xf32> to vector<144xf32>
    %478 = vector.shape_cast %477 : vector<144xf32> to vector<1x144xf32>
    %cst_164 = arith.constant dense<0.000000e+00> : vector<1x576xf32>
    %479 = tpu.matmul %478, %454, %cst_164 {dimension_numbers = #tpu.dot_dimension_numbers<[1], [0], [0], [1], [0, 0, 1, 1], [], []>} : vector<1x144xf32>, vector<144x576xf32>, vector<1x576xf32> -> vector<1x576xf32>
    %480 = arith.addf %255, %479 : vector<1x576xf32>
    %481 = vector.extract_strided_slice %444 {offsets = [1, 0, 0], sizes = [1, 22, 24], strides = [1, 1, 1]} : vector<2x22x24xf32> to vector<1x22x24xf32>
    %482 = vector.shape_cast %481 : vector<1x22x24xf32> to vector<22x24xf32>
    %483 = vector.extract_strided_slice %448 {offsets = [1, 0, 0], sizes = [1, 22, 24], strides = [1, 1, 1]} : vector<2x22x24xf32> to vector<1x22x24xf32>
    %484 = vector.shape_cast %483 : vector<1x22x24xf32> to vector<22x24xf32>
    %cst_165 = arith.constant dense<0.000000e+00> : vector<22x24xf32>
    %485 = tpu.matmul %484, %7, %cst_165 {dimension_numbers = #tpu.dot_dimension_numbers<[1], [0], [0], [1], [0, 0, 1, 1], [], []>} : vector<22x24xf32>, vector<24x24xf32>, vector<22x24xf32> -> vector<22x24xf32>
    %486 = arith.addf %482, %485 : vector<22x24xf32>
    %487 = vector.extract_strided_slice %452 {offsets = [1, 0, 0], sizes = [1, 22, 24], strides = [1, 1, 1]} : vector<2x22x24xf32> to vector<1x22x24xf32>
    %488 = vector.shape_cast %487 : vector<1x22x24xf32> to vector<22x24xf32>
    %cst_166 = arith.constant dense<0.000000e+00> : vector<22x24xf32>
    %489 = tpu.matmul %488, %13, %cst_166 {dimension_numbers = #tpu.dot_dimension_numbers<[1], [0], [0], [1], [0, 0, 1, 1], [], []>} : vector<22x24xf32>, vector<24x24xf32>, vector<22x24xf32> -> vector<22x24xf32>
    %490 = arith.addf %486, %489 : vector<22x24xf32>
    %491 = vector.broadcast %453 : f32 to vector<22x24xf32>
    %492 = arith.addf %490, %491 : vector<22x24xf32>
    %cst_167 = arith.constant 0.000000e+00 : f32
    %493 = vector.broadcast %cst_167 : f32 to vector<22x24xf32>
    %494 = arith.maximumf %492, %493 : vector<22x24xf32>
    %cst_168 = arith.constant dense<0.000000e+00> : vector<22x12xf32>
    %495 = tpu.matmul %494, %26, %cst_168 {dimension_numbers = #tpu.dot_dimension_numbers<[1], [0], [0], [1], [0, 0, 1, 1], [], []>} : vector<22x24xf32>, vector<24x12xf32>, vector<22x12xf32> -> vector<22x12xf32>
    %cst_169 = arith.constant dense<0.000000e+00> : vector<22x12xf32>
    %496 = tpu.matmul %494, %35, %cst_169 {dimension_numbers = #tpu.dot_dimension_numbers<[1], [0], [0], [1], [0, 0, 1, 1], [], []>} : vector<22x24xf32>, vector<24x12xf32>, vector<22x12xf32> -> vector<22x12xf32>
    %497 = arith.maximumf %495, %496 : vector<22x12xf32>
    %cst_170 = arith.constant dense<0.000000e+00> : vector<12x12xf32>
    %498 = tpu.matmul %45, %497, %cst_170 {dimension_numbers = #tpu.dot_dimension_numbers<[1], [0], [0], [1], [0, 0, 1, 1], [], []>} : vector<12x22xf32>, vector<22x12xf32>, vector<12x12xf32> -> vector<12x12xf32>
    %cst_171 = arith.constant dense<0.000000e+00> : vector<12x12xf32>
    %499 = tpu.matmul %51, %497, %cst_171 {dimension_numbers = #tpu.dot_dimension_numbers<[1], [0], [0], [1], [0, 0, 1, 1], [], []>} : vector<12x22xf32>, vector<22x12xf32>, vector<12x12xf32> -> vector<12x12xf32>
    %500 = arith.maximumf %498, %499 : vector<12x12xf32>
    %cst_172 = arith.constant dense<0.000000e+00> : vector<12x144xf32>
    %501 = tpu.matmul %500, %52, %cst_172 {dimension_numbers = #tpu.dot_dimension_numbers<[1], [0], [0], [1], [0, 0, 1, 1], [], []>} : vector<12x12xf32>, vector<12x144xf32>, vector<12x144xf32> -> vector<12x144xf32>
    %502 = arith.mulf %501, %53 : vector<12x144xf32>
    %cst_173 = arith.constant dense<0.000000e+00> : vector<144xf32>
    %503 = vector.multi_reduction <add>, %502, %cst_173 [0] : vector<12x144xf32> to vector<144xf32>
    %504 = vector.shape_cast %503 : vector<144xf32> to vector<1x144xf32>
    %cst_174 = arith.constant dense<0.000000e+00> : vector<1x576xf32>
    %505 = tpu.matmul %504, %454, %cst_174 {dimension_numbers = #tpu.dot_dimension_numbers<[1], [0], [0], [1], [0, 0, 1, 1], [], []>} : vector<1x144xf32>, vector<144x576xf32>, vector<1x576xf32> -> vector<1x576xf32>
    %506 = arith.addf %281, %505 : vector<1x576xf32>
    %cst_175 = arith.constant 0.000000e+00 : f32
    %507 = vector.broadcast %cst_175 : f32 to vector<2x22x24xf32>
    %cst_176 = arith.constant 0.000000e+00 : f32
    %508 = vector.broadcast %cst_176 : f32 to vector<2x22x24xf32>
    %cst_177 = arith.constant 0.000000e+00 : f32
    %509 = vector.broadcast %cst_177 : f32 to vector<2x22x24xf32>
    %c0_178 = arith.constant 0 : index
    %c0_179 = arith.constant 0 : index
    %c0_180 = arith.constant 0 : index
    %c0_181 = arith.constant 0 : index
    %510 = vector.load %arg0[%c0_178, %c0_179, %c0_180, %c0_181] : memref<2x4x24x24xf32, #tpu.memory_space<vmem>>, vector<2x1x22x24xf32>
    %511 = vector.shape_cast %510 : vector<2x1x22x24xf32> to vector<2x22x24xf32>
    %c72 = arith.constant 72 : index
    %512 = memref.load %arg1[%c72] : memref<144xf32, #tpu.memory_space<smem>>
    %513 = vector.broadcast %512 : f32 to vector<2x22x24xf32>
    %514 = arith.mulf %513, %511 : vector<2x22x24xf32>
    %515 = arith.addf %507, %514 : vector<2x22x24xf32>
    %c73 = arith.constant 73 : index
    %516 = memref.load %arg1[%c73] : memref<144xf32, #tpu.memory_space<smem>>
    %517 = vector.broadcast %516 : f32 to vector<2x22x24xf32>
    %518 = arith.mulf %517, %511 : vector<2x22x24xf32>
    %519 = arith.addf %508, %518 : vector<2x22x24xf32>
    %c74 = arith.constant 74 : index
    %520 = memref.load %arg1[%c74] : memref<144xf32, #tpu.memory_space<smem>>
    %521 = vector.broadcast %520 : f32 to vector<2x22x24xf32>
    %522 = arith.mulf %521, %511 : vector<2x22x24xf32>
    %523 = arith.addf %509, %522 : vector<2x22x24xf32>
    %c0_182 = arith.constant 0 : index
    %c0_183 = arith.constant 0 : index
    %c1_184 = arith.constant 1 : index
    %c0_185 = arith.constant 0 : index
    %524 = vector.load %arg0[%c0_182, %c0_183, %c1_184, %c0_185] : memref<2x4x24x24xf32, #tpu.memory_space<vmem>>, vector<2x1x22x24xf32>
    %525 = vector.shape_cast %524 : vector<2x1x22x24xf32> to vector<2x22x24xf32>
    %c75 = arith.constant 75 : index
    %526 = memref.load %arg1[%c75] : memref<144xf32, #tpu.memory_space<smem>>
    %527 = vector.broadcast %526 : f32 to vector<2x22x24xf32>
    %528 = arith.mulf %527, %525 : vector<2x22x24xf32>
    %529 = arith.addf %515, %528 : vector<2x22x24xf32>
    %c76 = arith.constant 76 : index
    %530 = memref.load %arg1[%c76] : memref<144xf32, #tpu.memory_space<smem>>
    %531 = vector.broadcast %530 : f32 to vector<2x22x24xf32>
    %532 = arith.mulf %531, %525 : vector<2x22x24xf32>
    %533 = arith.addf %519, %532 : vector<2x22x24xf32>
    %c77 = arith.constant 77 : index
    %534 = memref.load %arg1[%c77] : memref<144xf32, #tpu.memory_space<smem>>
    %535 = vector.broadcast %534 : f32 to vector<2x22x24xf32>
    %536 = arith.mulf %535, %525 : vector<2x22x24xf32>
    %537 = arith.addf %523, %536 : vector<2x22x24xf32>
    %c0_186 = arith.constant 0 : index
    %c0_187 = arith.constant 0 : index
    %c2_188 = arith.constant 2 : index
    %c0_189 = arith.constant 0 : index
    %538 = vector.load %arg0[%c0_186, %c0_187, %c2_188, %c0_189] : memref<2x4x24x24xf32, #tpu.memory_space<vmem>>, vector<2x1x22x24xf32>
    %539 = vector.shape_cast %538 : vector<2x1x22x24xf32> to vector<2x22x24xf32>
    %c78 = arith.constant 78 : index
    %540 = memref.load %arg1[%c78] : memref<144xf32, #tpu.memory_space<smem>>
    %541 = vector.broadcast %540 : f32 to vector<2x22x24xf32>
    %542 = arith.mulf %541, %539 : vector<2x22x24xf32>
    %543 = arith.addf %529, %542 : vector<2x22x24xf32>
    %c79 = arith.constant 79 : index
    %544 = memref.load %arg1[%c79] : memref<144xf32, #tpu.memory_space<smem>>
    %545 = vector.broadcast %544 : f32 to vector<2x22x24xf32>
    %546 = arith.mulf %545, %539 : vector<2x22x24xf32>
    %547 = arith.addf %533, %546 : vector<2x22x24xf32>
    %c80 = arith.constant 80 : index
    %548 = memref.load %arg1[%c80] : memref<144xf32, #tpu.memory_space<smem>>
    %549 = vector.broadcast %548 : f32 to vector<2x22x24xf32>
    %550 = arith.mulf %549, %539 : vector<2x22x24xf32>
    %551 = arith.addf %537, %550 : vector<2x22x24xf32>
    %c0_190 = arith.constant 0 : index
    %c1_191 = arith.constant 1 : index
    %c0_192 = arith.constant 0 : index
    %c0_193 = arith.constant 0 : index
    %552 = vector.load %arg0[%c0_190, %c1_191, %c0_192, %c0_193] : memref<2x4x24x24xf32, #tpu.memory_space<vmem>>, vector<2x1x22x24xf32>
    %553 = vector.shape_cast %552 : vector<2x1x22x24xf32> to vector<2x22x24xf32>
    %c81 = arith.constant 81 : index
    %554 = memref.load %arg1[%c81] : memref<144xf32, #tpu.memory_space<smem>>
    %555 = vector.broadcast %554 : f32 to vector<2x22x24xf32>
    %556 = arith.mulf %555, %553 : vector<2x22x24xf32>
    %557 = arith.addf %543, %556 : vector<2x22x24xf32>
    %c82 = arith.constant 82 : index
    %558 = memref.load %arg1[%c82] : memref<144xf32, #tpu.memory_space<smem>>
    %559 = vector.broadcast %558 : f32 to vector<2x22x24xf32>
    %560 = arith.mulf %559, %553 : vector<2x22x24xf32>
    %561 = arith.addf %547, %560 : vector<2x22x24xf32>
    %c83 = arith.constant 83 : index
    %562 = memref.load %arg1[%c83] : memref<144xf32, #tpu.memory_space<smem>>
    %563 = vector.broadcast %562 : f32 to vector<2x22x24xf32>
    %564 = arith.mulf %563, %553 : vector<2x22x24xf32>
    %565 = arith.addf %551, %564 : vector<2x22x24xf32>
    %c0_194 = arith.constant 0 : index
    %c1_195 = arith.constant 1 : index
    %c1_196 = arith.constant 1 : index
    %c0_197 = arith.constant 0 : index
    %566 = vector.load %arg0[%c0_194, %c1_195, %c1_196, %c0_197] : memref<2x4x24x24xf32, #tpu.memory_space<vmem>>, vector<2x1x22x24xf32>
    %567 = vector.shape_cast %566 : vector<2x1x22x24xf32> to vector<2x22x24xf32>
    %c84 = arith.constant 84 : index
    %568 = memref.load %arg1[%c84] : memref<144xf32, #tpu.memory_space<smem>>
    %569 = vector.broadcast %568 : f32 to vector<2x22x24xf32>
    %570 = arith.mulf %569, %567 : vector<2x22x24xf32>
    %571 = arith.addf %557, %570 : vector<2x22x24xf32>
    %c85 = arith.constant 85 : index
    %572 = memref.load %arg1[%c85] : memref<144xf32, #tpu.memory_space<smem>>
    %573 = vector.broadcast %572 : f32 to vector<2x22x24xf32>
    %574 = arith.mulf %573, %567 : vector<2x22x24xf32>
    %575 = arith.addf %561, %574 : vector<2x22x24xf32>
    %c86 = arith.constant 86 : index
    %576 = memref.load %arg1[%c86] : memref<144xf32, #tpu.memory_space<smem>>
    %577 = vector.broadcast %576 : f32 to vector<2x22x24xf32>
    %578 = arith.mulf %577, %567 : vector<2x22x24xf32>
    %579 = arith.addf %565, %578 : vector<2x22x24xf32>
    %c0_198 = arith.constant 0 : index
    %c1_199 = arith.constant 1 : index
    %c2_200 = arith.constant 2 : index
    %c0_201 = arith.constant 0 : index
    %580 = vector.load %arg0[%c0_198, %c1_199, %c2_200, %c0_201] : memref<2x4x24x24xf32, #tpu.memory_space<vmem>>, vector<2x1x22x24xf32>
    %581 = vector.shape_cast %580 : vector<2x1x22x24xf32> to vector<2x22x24xf32>
    %c87 = arith.constant 87 : index
    %582 = memref.load %arg1[%c87] : memref<144xf32, #tpu.memory_space<smem>>
    %583 = vector.broadcast %582 : f32 to vector<2x22x24xf32>
    %584 = arith.mulf %583, %581 : vector<2x22x24xf32>
    %585 = arith.addf %571, %584 : vector<2x22x24xf32>
    %c88 = arith.constant 88 : index
    %586 = memref.load %arg1[%c88] : memref<144xf32, #tpu.memory_space<smem>>
    %587 = vector.broadcast %586 : f32 to vector<2x22x24xf32>
    %588 = arith.mulf %587, %581 : vector<2x22x24xf32>
    %589 = arith.addf %575, %588 : vector<2x22x24xf32>
    %c89 = arith.constant 89 : index
    %590 = memref.load %arg1[%c89] : memref<144xf32, #tpu.memory_space<smem>>
    %591 = vector.broadcast %590 : f32 to vector<2x22x24xf32>
    %592 = arith.mulf %591, %581 : vector<2x22x24xf32>
    %593 = arith.addf %579, %592 : vector<2x22x24xf32>
    %c0_202 = arith.constant 0 : index
    %c2_203 = arith.constant 2 : index
    %c0_204 = arith.constant 0 : index
    %c0_205 = arith.constant 0 : index
    %594 = vector.load %arg0[%c0_202, %c2_203, %c0_204, %c0_205] : memref<2x4x24x24xf32, #tpu.memory_space<vmem>>, vector<2x1x22x24xf32>
    %595 = vector.shape_cast %594 : vector<2x1x22x24xf32> to vector<2x22x24xf32>
    %c90 = arith.constant 90 : index
    %596 = memref.load %arg1[%c90] : memref<144xf32, #tpu.memory_space<smem>>
    %597 = vector.broadcast %596 : f32 to vector<2x22x24xf32>
    %598 = arith.mulf %597, %595 : vector<2x22x24xf32>
    %599 = arith.addf %585, %598 : vector<2x22x24xf32>
    %c91 = arith.constant 91 : index
    %600 = memref.load %arg1[%c91] : memref<144xf32, #tpu.memory_space<smem>>
    %601 = vector.broadcast %600 : f32 to vector<2x22x24xf32>
    %602 = arith.mulf %601, %595 : vector<2x22x24xf32>
    %603 = arith.addf %589, %602 : vector<2x22x24xf32>
    %c92 = arith.constant 92 : index
    %604 = memref.load %arg1[%c92] : memref<144xf32, #tpu.memory_space<smem>>
    %605 = vector.broadcast %604 : f32 to vector<2x22x24xf32>
    %606 = arith.mulf %605, %595 : vector<2x22x24xf32>
    %607 = arith.addf %593, %606 : vector<2x22x24xf32>
    %c0_206 = arith.constant 0 : index
    %c2_207 = arith.constant 2 : index
    %c1_208 = arith.constant 1 : index
    %c0_209 = arith.constant 0 : index
    %608 = vector.load %arg0[%c0_206, %c2_207, %c1_208, %c0_209] : memref<2x4x24x24xf32, #tpu.memory_space<vmem>>, vector<2x1x22x24xf32>
    %609 = vector.shape_cast %608 : vector<2x1x22x24xf32> to vector<2x22x24xf32>
    %c93 = arith.constant 93 : index
    %610 = memref.load %arg1[%c93] : memref<144xf32, #tpu.memory_space<smem>>
    %611 = vector.broadcast %610 : f32 to vector<2x22x24xf32>
    %612 = arith.mulf %611, %609 : vector<2x22x24xf32>
    %613 = arith.addf %599, %612 : vector<2x22x24xf32>
    %c94 = arith.constant 94 : index
    %614 = memref.load %arg1[%c94] : memref<144xf32, #tpu.memory_space<smem>>
    %615 = vector.broadcast %614 : f32 to vector<2x22x24xf32>
    %616 = arith.mulf %615, %609 : vector<2x22x24xf32>
    %617 = arith.addf %603, %616 : vector<2x22x24xf32>
    %c95 = arith.constant 95 : index
    %618 = memref.load %arg1[%c95] : memref<144xf32, #tpu.memory_space<smem>>
    %619 = vector.broadcast %618 : f32 to vector<2x22x24xf32>
    %620 = arith.mulf %619, %609 : vector<2x22x24xf32>
    %621 = arith.addf %607, %620 : vector<2x22x24xf32>
    %c0_210 = arith.constant 0 : index
    %c2_211 = arith.constant 2 : index
    %c2_212 = arith.constant 2 : index
    %c0_213 = arith.constant 0 : index
    %622 = vector.load %arg0[%c0_210, %c2_211, %c2_212, %c0_213] : memref<2x4x24x24xf32, #tpu.memory_space<vmem>>, vector<2x1x22x24xf32>
    %623 = vector.shape_cast %622 : vector<2x1x22x24xf32> to vector<2x22x24xf32>
    %c96 = arith.constant 96 : index
    %624 = memref.load %arg1[%c96] : memref<144xf32, #tpu.memory_space<smem>>
    %625 = vector.broadcast %624 : f32 to vector<2x22x24xf32>
    %626 = arith.mulf %625, %623 : vector<2x22x24xf32>
    %627 = arith.addf %613, %626 : vector<2x22x24xf32>
    %c97 = arith.constant 97 : index
    %628 = memref.load %arg1[%c97] : memref<144xf32, #tpu.memory_space<smem>>
    %629 = vector.broadcast %628 : f32 to vector<2x22x24xf32>
    %630 = arith.mulf %629, %623 : vector<2x22x24xf32>
    %631 = arith.addf %617, %630 : vector<2x22x24xf32>
    %c98 = arith.constant 98 : index
    %632 = memref.load %arg1[%c98] : memref<144xf32, #tpu.memory_space<smem>>
    %633 = vector.broadcast %632 : f32 to vector<2x22x24xf32>
    %634 = arith.mulf %633, %623 : vector<2x22x24xf32>
    %635 = arith.addf %621, %634 : vector<2x22x24xf32>
    %c0_214 = arith.constant 0 : index
    %c3_215 = arith.constant 3 : index
    %c0_216 = arith.constant 0 : index
    %c0_217 = arith.constant 0 : index
    %636 = vector.load %arg0[%c0_214, %c3_215, %c0_216, %c0_217] : memref<2x4x24x24xf32, #tpu.memory_space<vmem>>, vector<2x1x22x24xf32>
    %637 = vector.shape_cast %636 : vector<2x1x22x24xf32> to vector<2x22x24xf32>
    %c99 = arith.constant 99 : index
    %638 = memref.load %arg1[%c99] : memref<144xf32, #tpu.memory_space<smem>>
    %639 = vector.broadcast %638 : f32 to vector<2x22x24xf32>
    %640 = arith.mulf %639, %637 : vector<2x22x24xf32>
    %641 = arith.addf %627, %640 : vector<2x22x24xf32>
    %c100 = arith.constant 100 : index
    %642 = memref.load %arg1[%c100] : memref<144xf32, #tpu.memory_space<smem>>
    %643 = vector.broadcast %642 : f32 to vector<2x22x24xf32>
    %644 = arith.mulf %643, %637 : vector<2x22x24xf32>
    %645 = arith.addf %631, %644 : vector<2x22x24xf32>
    %c101 = arith.constant 101 : index
    %646 = memref.load %arg1[%c101] : memref<144xf32, #tpu.memory_space<smem>>
    %647 = vector.broadcast %646 : f32 to vector<2x22x24xf32>
    %648 = arith.mulf %647, %637 : vector<2x22x24xf32>
    %649 = arith.addf %635, %648 : vector<2x22x24xf32>
    %c0_218 = arith.constant 0 : index
    %c3_219 = arith.constant 3 : index
    %c1_220 = arith.constant 1 : index
    %c0_221 = arith.constant 0 : index
    %650 = vector.load %arg0[%c0_218, %c3_219, %c1_220, %c0_221] : memref<2x4x24x24xf32, #tpu.memory_space<vmem>>, vector<2x1x22x24xf32>
    %651 = vector.shape_cast %650 : vector<2x1x22x24xf32> to vector<2x22x24xf32>
    %c102 = arith.constant 102 : index
    %652 = memref.load %arg1[%c102] : memref<144xf32, #tpu.memory_space<smem>>
    %653 = vector.broadcast %652 : f32 to vector<2x22x24xf32>
    %654 = arith.mulf %653, %651 : vector<2x22x24xf32>
    %655 = arith.addf %641, %654 : vector<2x22x24xf32>
    %c103 = arith.constant 103 : index
    %656 = memref.load %arg1[%c103] : memref<144xf32, #tpu.memory_space<smem>>
    %657 = vector.broadcast %656 : f32 to vector<2x22x24xf32>
    %658 = arith.mulf %657, %651 : vector<2x22x24xf32>
    %659 = arith.addf %645, %658 : vector<2x22x24xf32>
    %c104 = arith.constant 104 : index
    %660 = memref.load %arg1[%c104] : memref<144xf32, #tpu.memory_space<smem>>
    %661 = vector.broadcast %660 : f32 to vector<2x22x24xf32>
    %662 = arith.mulf %661, %651 : vector<2x22x24xf32>
    %663 = arith.addf %649, %662 : vector<2x22x24xf32>
    %c0_222 = arith.constant 0 : index
    %c3_223 = arith.constant 3 : index
    %c2_224 = arith.constant 2 : index
    %c0_225 = arith.constant 0 : index
    %664 = vector.load %arg0[%c0_222, %c3_223, %c2_224, %c0_225] : memref<2x4x24x24xf32, #tpu.memory_space<vmem>>, vector<2x1x22x24xf32>
    %665 = vector.shape_cast %664 : vector<2x1x22x24xf32> to vector<2x22x24xf32>
    %c105 = arith.constant 105 : index
    %666 = memref.load %arg1[%c105] : memref<144xf32, #tpu.memory_space<smem>>
    %667 = vector.broadcast %666 : f32 to vector<2x22x24xf32>
    %668 = arith.mulf %667, %665 : vector<2x22x24xf32>
    %669 = arith.addf %655, %668 : vector<2x22x24xf32>
    %c106 = arith.constant 106 : index
    %670 = memref.load %arg1[%c106] : memref<144xf32, #tpu.memory_space<smem>>
    %671 = vector.broadcast %670 : f32 to vector<2x22x24xf32>
    %672 = arith.mulf %671, %665 : vector<2x22x24xf32>
    %673 = arith.addf %659, %672 : vector<2x22x24xf32>
    %c107 = arith.constant 107 : index
    %674 = memref.load %arg1[%c107] : memref<144xf32, #tpu.memory_space<smem>>
    %675 = vector.broadcast %674 : f32 to vector<2x22x24xf32>
    %676 = arith.mulf %675, %665 : vector<2x22x24xf32>
    %677 = arith.addf %663, %676 : vector<2x22x24xf32>
    %c2_226 = arith.constant 2 : index
    %678 = memref.load %arg2[%c2_226] : memref<4xf32, #tpu.memory_space<smem>>
    %c288 = arith.constant 288 : index
    %c0_227 = arith.constant 0 : index
    %679 = vector.load %arg5[%c288, %c0_227] : memref<576x576xf32, #tpu.memory_space<vmem>>, vector<144x576xf32>
    %680 = vector.extract_strided_slice %669 {offsets = [0, 0, 0], sizes = [1, 22, 24], strides = [1, 1, 1]} : vector<2x22x24xf32> to vector<1x22x24xf32>
    %681 = vector.shape_cast %680 : vector<1x22x24xf32> to vector<22x24xf32>
    %682 = vector.extract_strided_slice %673 {offsets = [0, 0, 0], sizes = [1, 22, 24], strides = [1, 1, 1]} : vector<2x22x24xf32> to vector<1x22x24xf32>
    %683 = vector.shape_cast %682 : vector<1x22x24xf32> to vector<22x24xf32>
    %cst_228 = arith.constant dense<0.000000e+00> : vector<22x24xf32>
    %684 = tpu.matmul %683, %7, %cst_228 {dimension_numbers = #tpu.dot_dimension_numbers<[1], [0], [0], [1], [0, 0, 1, 1], [], []>} : vector<22x24xf32>, vector<24x24xf32>, vector<22x24xf32> -> vector<22x24xf32>
    %685 = arith.addf %681, %684 : vector<22x24xf32>
    %686 = vector.extract_strided_slice %677 {offsets = [0, 0, 0], sizes = [1, 22, 24], strides = [1, 1, 1]} : vector<2x22x24xf32> to vector<1x22x24xf32>
    %687 = vector.shape_cast %686 : vector<1x22x24xf32> to vector<22x24xf32>
    %cst_229 = arith.constant dense<0.000000e+00> : vector<22x24xf32>
    %688 = tpu.matmul %687, %13, %cst_229 {dimension_numbers = #tpu.dot_dimension_numbers<[1], [0], [0], [1], [0, 0, 1, 1], [], []>} : vector<22x24xf32>, vector<24x24xf32>, vector<22x24xf32> -> vector<22x24xf32>
    %689 = arith.addf %685, %688 : vector<22x24xf32>
    %690 = vector.broadcast %678 : f32 to vector<22x24xf32>
    %691 = arith.addf %689, %690 : vector<22x24xf32>
    %cst_230 = arith.constant 0.000000e+00 : f32
    %692 = vector.broadcast %cst_230 : f32 to vector<22x24xf32>
    %693 = arith.maximumf %691, %692 : vector<22x24xf32>
    %cst_231 = arith.constant dense<0.000000e+00> : vector<22x12xf32>
    %694 = tpu.matmul %693, %26, %cst_231 {dimension_numbers = #tpu.dot_dimension_numbers<[1], [0], [0], [1], [0, 0, 1, 1], [], []>} : vector<22x24xf32>, vector<24x12xf32>, vector<22x12xf32> -> vector<22x12xf32>
    %cst_232 = arith.constant dense<0.000000e+00> : vector<22x12xf32>
    %695 = tpu.matmul %693, %35, %cst_232 {dimension_numbers = #tpu.dot_dimension_numbers<[1], [0], [0], [1], [0, 0, 1, 1], [], []>} : vector<22x24xf32>, vector<24x12xf32>, vector<22x12xf32> -> vector<22x12xf32>
    %696 = arith.maximumf %694, %695 : vector<22x12xf32>
    %cst_233 = arith.constant dense<0.000000e+00> : vector<12x12xf32>
    %697 = tpu.matmul %45, %696, %cst_233 {dimension_numbers = #tpu.dot_dimension_numbers<[1], [0], [0], [1], [0, 0, 1, 1], [], []>} : vector<12x22xf32>, vector<22x12xf32>, vector<12x12xf32> -> vector<12x12xf32>
    %cst_234 = arith.constant dense<0.000000e+00> : vector<12x12xf32>
    %698 = tpu.matmul %51, %696, %cst_234 {dimension_numbers = #tpu.dot_dimension_numbers<[1], [0], [0], [1], [0, 0, 1, 1], [], []>} : vector<12x22xf32>, vector<22x12xf32>, vector<12x12xf32> -> vector<12x12xf32>
    %699 = arith.maximumf %697, %698 : vector<12x12xf32>
    %cst_235 = arith.constant dense<0.000000e+00> : vector<12x144xf32>
    %700 = tpu.matmul %699, %52, %cst_235 {dimension_numbers = #tpu.dot_dimension_numbers<[1], [0], [0], [1], [0, 0, 1, 1], [], []>} : vector<12x12xf32>, vector<12x144xf32>, vector<12x144xf32> -> vector<12x144xf32>
    %701 = arith.mulf %700, %53 : vector<12x144xf32>
    %cst_236 = arith.constant dense<0.000000e+00> : vector<144xf32>
    %702 = vector.multi_reduction <add>, %701, %cst_236 [0] : vector<12x144xf32> to vector<144xf32>
    %703 = vector.shape_cast %702 : vector<144xf32> to vector<1x144xf32>
    %cst_237 = arith.constant dense<0.000000e+00> : vector<1x576xf32>
    %704 = tpu.matmul %703, %679, %cst_237 {dimension_numbers = #tpu.dot_dimension_numbers<[1], [0], [0], [1], [0, 0, 1, 1], [], []>} : vector<1x144xf32>, vector<144x576xf32>, vector<1x576xf32> -> vector<1x576xf32>
    %705 = arith.addf %480, %704 : vector<1x576xf32>
    %706 = vector.extract_strided_slice %669 {offsets = [1, 0, 0], sizes = [1, 22, 24], strides = [1, 1, 1]} : vector<2x22x24xf32> to vector<1x22x24xf32>
    %707 = vector.shape_cast %706 : vector<1x22x24xf32> to vector<22x24xf32>
    %708 = vector.extract_strided_slice %673 {offsets = [1, 0, 0], sizes = [1, 22, 24], strides = [1, 1, 1]} : vector<2x22x24xf32> to vector<1x22x24xf32>
    %709 = vector.shape_cast %708 : vector<1x22x24xf32> to vector<22x24xf32>
    %cst_238 = arith.constant dense<0.000000e+00> : vector<22x24xf32>
    %710 = tpu.matmul %709, %7, %cst_238 {dimension_numbers = #tpu.dot_dimension_numbers<[1], [0], [0], [1], [0, 0, 1, 1], [], []>} : vector<22x24xf32>, vector<24x24xf32>, vector<22x24xf32> -> vector<22x24xf32>
    %711 = arith.addf %707, %710 : vector<22x24xf32>
    %712 = vector.extract_strided_slice %677 {offsets = [1, 0, 0], sizes = [1, 22, 24], strides = [1, 1, 1]} : vector<2x22x24xf32> to vector<1x22x24xf32>
    %713 = vector.shape_cast %712 : vector<1x22x24xf32> to vector<22x24xf32>
    %cst_239 = arith.constant dense<0.000000e+00> : vector<22x24xf32>
    %714 = tpu.matmul %713, %13, %cst_239 {dimension_numbers = #tpu.dot_dimension_numbers<[1], [0], [0], [1], [0, 0, 1, 1], [], []>} : vector<22x24xf32>, vector<24x24xf32>, vector<22x24xf32> -> vector<22x24xf32>
    %715 = arith.addf %711, %714 : vector<22x24xf32>
    %716 = vector.broadcast %678 : f32 to vector<22x24xf32>
    %717 = arith.addf %715, %716 : vector<22x24xf32>
    %cst_240 = arith.constant 0.000000e+00 : f32
    %718 = vector.broadcast %cst_240 : f32 to vector<22x24xf32>
    %719 = arith.maximumf %717, %718 : vector<22x24xf32>
    %cst_241 = arith.constant dense<0.000000e+00> : vector<22x12xf32>
    %720 = tpu.matmul %719, %26, %cst_241 {dimension_numbers = #tpu.dot_dimension_numbers<[1], [0], [0], [1], [0, 0, 1, 1], [], []>} : vector<22x24xf32>, vector<24x12xf32>, vector<22x12xf32> -> vector<22x12xf32>
    %cst_242 = arith.constant dense<0.000000e+00> : vector<22x12xf32>
    %721 = tpu.matmul %719, %35, %cst_242 {dimension_numbers = #tpu.dot_dimension_numbers<[1], [0], [0], [1], [0, 0, 1, 1], [], []>} : vector<22x24xf32>, vector<24x12xf32>, vector<22x12xf32> -> vector<22x12xf32>
    %722 = arith.maximumf %720, %721 : vector<22x12xf32>
    %cst_243 = arith.constant dense<0.000000e+00> : vector<12x12xf32>
    %723 = tpu.matmul %45, %722, %cst_243 {dimension_numbers = #tpu.dot_dimension_numbers<[1], [0], [0], [1], [0, 0, 1, 1], [], []>} : vector<12x22xf32>, vector<22x12xf32>, vector<12x12xf32> -> vector<12x12xf32>
    %cst_244 = arith.constant dense<0.000000e+00> : vector<12x12xf32>
    %724 = tpu.matmul %51, %722, %cst_244 {dimension_numbers = #tpu.dot_dimension_numbers<[1], [0], [0], [1], [0, 0, 1, 1], [], []>} : vector<12x22xf32>, vector<22x12xf32>, vector<12x12xf32> -> vector<12x12xf32>
    %725 = arith.maximumf %723, %724 : vector<12x12xf32>
    %cst_245 = arith.constant dense<0.000000e+00> : vector<12x144xf32>
    %726 = tpu.matmul %725, %52, %cst_245 {dimension_numbers = #tpu.dot_dimension_numbers<[1], [0], [0], [1], [0, 0, 1, 1], [], []>} : vector<12x12xf32>, vector<12x144xf32>, vector<12x144xf32> -> vector<12x144xf32>
    %727 = arith.mulf %726, %53 : vector<12x144xf32>
    %cst_246 = arith.constant dense<0.000000e+00> : vector<144xf32>
    %728 = vector.multi_reduction <add>, %727, %cst_246 [0] : vector<12x144xf32> to vector<144xf32>
    %729 = vector.shape_cast %728 : vector<144xf32> to vector<1x144xf32>
    %cst_247 = arith.constant dense<0.000000e+00> : vector<1x576xf32>
    %730 = tpu.matmul %729, %679, %cst_247 {dimension_numbers = #tpu.dot_dimension_numbers<[1], [0], [0], [1], [0, 0, 1, 1], [], []>} : vector<1x144xf32>, vector<144x576xf32>, vector<1x576xf32> -> vector<1x576xf32>
    %731 = arith.addf %506, %730 : vector<1x576xf32>
    %cst_248 = arith.constant 0.000000e+00 : f32
    %732 = vector.broadcast %cst_248 : f32 to vector<2x22x24xf32>
    %cst_249 = arith.constant 0.000000e+00 : f32
    %733 = vector.broadcast %cst_249 : f32 to vector<2x22x24xf32>
    %cst_250 = arith.constant 0.000000e+00 : f32
    %734 = vector.broadcast %cst_250 : f32 to vector<2x22x24xf32>
    %c0_251 = arith.constant 0 : index
    %c0_252 = arith.constant 0 : index
    %c0_253 = arith.constant 0 : index
    %c0_254 = arith.constant 0 : index
    %735 = vector.load %arg0[%c0_251, %c0_252, %c0_253, %c0_254] : memref<2x4x24x24xf32, #tpu.memory_space<vmem>>, vector<2x1x22x24xf32>
    %736 = vector.shape_cast %735 : vector<2x1x22x24xf32> to vector<2x22x24xf32>
    %c108 = arith.constant 108 : index
    %737 = memref.load %arg1[%c108] : memref<144xf32, #tpu.memory_space<smem>>
    %738 = vector.broadcast %737 : f32 to vector<2x22x24xf32>
    %739 = arith.mulf %738, %736 : vector<2x22x24xf32>
    %740 = arith.addf %732, %739 : vector<2x22x24xf32>
    %c109 = arith.constant 109 : index
    %741 = memref.load %arg1[%c109] : memref<144xf32, #tpu.memory_space<smem>>
    %742 = vector.broadcast %741 : f32 to vector<2x22x24xf32>
    %743 = arith.mulf %742, %736 : vector<2x22x24xf32>
    %744 = arith.addf %733, %743 : vector<2x22x24xf32>
    %c110 = arith.constant 110 : index
    %745 = memref.load %arg1[%c110] : memref<144xf32, #tpu.memory_space<smem>>
    %746 = vector.broadcast %745 : f32 to vector<2x22x24xf32>
    %747 = arith.mulf %746, %736 : vector<2x22x24xf32>
    %748 = arith.addf %734, %747 : vector<2x22x24xf32>
    %c0_255 = arith.constant 0 : index
    %c0_256 = arith.constant 0 : index
    %c1_257 = arith.constant 1 : index
    %c0_258 = arith.constant 0 : index
    %749 = vector.load %arg0[%c0_255, %c0_256, %c1_257, %c0_258] : memref<2x4x24x24xf32, #tpu.memory_space<vmem>>, vector<2x1x22x24xf32>
    %750 = vector.shape_cast %749 : vector<2x1x22x24xf32> to vector<2x22x24xf32>
    %c111 = arith.constant 111 : index
    %751 = memref.load %arg1[%c111] : memref<144xf32, #tpu.memory_space<smem>>
    %752 = vector.broadcast %751 : f32 to vector<2x22x24xf32>
    %753 = arith.mulf %752, %750 : vector<2x22x24xf32>
    %754 = arith.addf %740, %753 : vector<2x22x24xf32>
    %c112 = arith.constant 112 : index
    %755 = memref.load %arg1[%c112] : memref<144xf32, #tpu.memory_space<smem>>
    %756 = vector.broadcast %755 : f32 to vector<2x22x24xf32>
    %757 = arith.mulf %756, %750 : vector<2x22x24xf32>
    %758 = arith.addf %744, %757 : vector<2x22x24xf32>
    %c113 = arith.constant 113 : index
    %759 = memref.load %arg1[%c113] : memref<144xf32, #tpu.memory_space<smem>>
    %760 = vector.broadcast %759 : f32 to vector<2x22x24xf32>
    %761 = arith.mulf %760, %750 : vector<2x22x24xf32>
    %762 = arith.addf %748, %761 : vector<2x22x24xf32>
    %c0_259 = arith.constant 0 : index
    %c0_260 = arith.constant 0 : index
    %c2_261 = arith.constant 2 : index
    %c0_262 = arith.constant 0 : index
    %763 = vector.load %arg0[%c0_259, %c0_260, %c2_261, %c0_262] : memref<2x4x24x24xf32, #tpu.memory_space<vmem>>, vector<2x1x22x24xf32>
    %764 = vector.shape_cast %763 : vector<2x1x22x24xf32> to vector<2x22x24xf32>
    %c114 = arith.constant 114 : index
    %765 = memref.load %arg1[%c114] : memref<144xf32, #tpu.memory_space<smem>>
    %766 = vector.broadcast %765 : f32 to vector<2x22x24xf32>
    %767 = arith.mulf %766, %764 : vector<2x22x24xf32>
    %768 = arith.addf %754, %767 : vector<2x22x24xf32>
    %c115 = arith.constant 115 : index
    %769 = memref.load %arg1[%c115] : memref<144xf32, #tpu.memory_space<smem>>
    %770 = vector.broadcast %769 : f32 to vector<2x22x24xf32>
    %771 = arith.mulf %770, %764 : vector<2x22x24xf32>
    %772 = arith.addf %758, %771 : vector<2x22x24xf32>
    %c116 = arith.constant 116 : index
    %773 = memref.load %arg1[%c116] : memref<144xf32, #tpu.memory_space<smem>>
    %774 = vector.broadcast %773 : f32 to vector<2x22x24xf32>
    %775 = arith.mulf %774, %764 : vector<2x22x24xf32>
    %776 = arith.addf %762, %775 : vector<2x22x24xf32>
    %c0_263 = arith.constant 0 : index
    %c1_264 = arith.constant 1 : index
    %c0_265 = arith.constant 0 : index
    %c0_266 = arith.constant 0 : index
    %777 = vector.load %arg0[%c0_263, %c1_264, %c0_265, %c0_266] : memref<2x4x24x24xf32, #tpu.memory_space<vmem>>, vector<2x1x22x24xf32>
    %778 = vector.shape_cast %777 : vector<2x1x22x24xf32> to vector<2x22x24xf32>
    %c117 = arith.constant 117 : index
    %779 = memref.load %arg1[%c117] : memref<144xf32, #tpu.memory_space<smem>>
    %780 = vector.broadcast %779 : f32 to vector<2x22x24xf32>
    %781 = arith.mulf %780, %778 : vector<2x22x24xf32>
    %782 = arith.addf %768, %781 : vector<2x22x24xf32>
    %c118 = arith.constant 118 : index
    %783 = memref.load %arg1[%c118] : memref<144xf32, #tpu.memory_space<smem>>
    %784 = vector.broadcast %783 : f32 to vector<2x22x24xf32>
    %785 = arith.mulf %784, %778 : vector<2x22x24xf32>
    %786 = arith.addf %772, %785 : vector<2x22x24xf32>
    %c119 = arith.constant 119 : index
    %787 = memref.load %arg1[%c119] : memref<144xf32, #tpu.memory_space<smem>>
    %788 = vector.broadcast %787 : f32 to vector<2x22x24xf32>
    %789 = arith.mulf %788, %778 : vector<2x22x24xf32>
    %790 = arith.addf %776, %789 : vector<2x22x24xf32>
    %c0_267 = arith.constant 0 : index
    %c1_268 = arith.constant 1 : index
    %c1_269 = arith.constant 1 : index
    %c0_270 = arith.constant 0 : index
    %791 = vector.load %arg0[%c0_267, %c1_268, %c1_269, %c0_270] : memref<2x4x24x24xf32, #tpu.memory_space<vmem>>, vector<2x1x22x24xf32>
    %792 = vector.shape_cast %791 : vector<2x1x22x24xf32> to vector<2x22x24xf32>
    %c120 = arith.constant 120 : index
    %793 = memref.load %arg1[%c120] : memref<144xf32, #tpu.memory_space<smem>>
    %794 = vector.broadcast %793 : f32 to vector<2x22x24xf32>
    %795 = arith.mulf %794, %792 : vector<2x22x24xf32>
    %796 = arith.addf %782, %795 : vector<2x22x24xf32>
    %c121 = arith.constant 121 : index
    %797 = memref.load %arg1[%c121] : memref<144xf32, #tpu.memory_space<smem>>
    %798 = vector.broadcast %797 : f32 to vector<2x22x24xf32>
    %799 = arith.mulf %798, %792 : vector<2x22x24xf32>
    %800 = arith.addf %786, %799 : vector<2x22x24xf32>
    %c122 = arith.constant 122 : index
    %801 = memref.load %arg1[%c122] : memref<144xf32, #tpu.memory_space<smem>>
    %802 = vector.broadcast %801 : f32 to vector<2x22x24xf32>
    %803 = arith.mulf %802, %792 : vector<2x22x24xf32>
    %804 = arith.addf %790, %803 : vector<2x22x24xf32>
    %c0_271 = arith.constant 0 : index
    %c1_272 = arith.constant 1 : index
    %c2_273 = arith.constant 2 : index
    %c0_274 = arith.constant 0 : index
    %805 = vector.load %arg0[%c0_271, %c1_272, %c2_273, %c0_274] : memref<2x4x24x24xf32, #tpu.memory_space<vmem>>, vector<2x1x22x24xf32>
    %806 = vector.shape_cast %805 : vector<2x1x22x24xf32> to vector<2x22x24xf32>
    %c123 = arith.constant 123 : index
    %807 = memref.load %arg1[%c123] : memref<144xf32, #tpu.memory_space<smem>>
    %808 = vector.broadcast %807 : f32 to vector<2x22x24xf32>
    %809 = arith.mulf %808, %806 : vector<2x22x24xf32>
    %810 = arith.addf %796, %809 : vector<2x22x24xf32>
    %c124 = arith.constant 124 : index
    %811 = memref.load %arg1[%c124] : memref<144xf32, #tpu.memory_space<smem>>
    %812 = vector.broadcast %811 : f32 to vector<2x22x24xf32>
    %813 = arith.mulf %812, %806 : vector<2x22x24xf32>
    %814 = arith.addf %800, %813 : vector<2x22x24xf32>
    %c125 = arith.constant 125 : index
    %815 = memref.load %arg1[%c125] : memref<144xf32, #tpu.memory_space<smem>>
    %816 = vector.broadcast %815 : f32 to vector<2x22x24xf32>
    %817 = arith.mulf %816, %806 : vector<2x22x24xf32>
    %818 = arith.addf %804, %817 : vector<2x22x24xf32>
    %c0_275 = arith.constant 0 : index
    %c2_276 = arith.constant 2 : index
    %c0_277 = arith.constant 0 : index
    %c0_278 = arith.constant 0 : index
    %819 = vector.load %arg0[%c0_275, %c2_276, %c0_277, %c0_278] : memref<2x4x24x24xf32, #tpu.memory_space<vmem>>, vector<2x1x22x24xf32>
    %820 = vector.shape_cast %819 : vector<2x1x22x24xf32> to vector<2x22x24xf32>
    %c126 = arith.constant 126 : index
    %821 = memref.load %arg1[%c126] : memref<144xf32, #tpu.memory_space<smem>>
    %822 = vector.broadcast %821 : f32 to vector<2x22x24xf32>
    %823 = arith.mulf %822, %820 : vector<2x22x24xf32>
    %824 = arith.addf %810, %823 : vector<2x22x24xf32>
    %c127 = arith.constant 127 : index
    %825 = memref.load %arg1[%c127] : memref<144xf32, #tpu.memory_space<smem>>
    %826 = vector.broadcast %825 : f32 to vector<2x22x24xf32>
    %827 = arith.mulf %826, %820 : vector<2x22x24xf32>
    %828 = arith.addf %814, %827 : vector<2x22x24xf32>
    %c128 = arith.constant 128 : index
    %829 = memref.load %arg1[%c128] : memref<144xf32, #tpu.memory_space<smem>>
    %830 = vector.broadcast %829 : f32 to vector<2x22x24xf32>
    %831 = arith.mulf %830, %820 : vector<2x22x24xf32>
    %832 = arith.addf %818, %831 : vector<2x22x24xf32>
    %c0_279 = arith.constant 0 : index
    %c2_280 = arith.constant 2 : index
    %c1_281 = arith.constant 1 : index
    %c0_282 = arith.constant 0 : index
    %833 = vector.load %arg0[%c0_279, %c2_280, %c1_281, %c0_282] : memref<2x4x24x24xf32, #tpu.memory_space<vmem>>, vector<2x1x22x24xf32>
    %834 = vector.shape_cast %833 : vector<2x1x22x24xf32> to vector<2x22x24xf32>
    %c129 = arith.constant 129 : index
    %835 = memref.load %arg1[%c129] : memref<144xf32, #tpu.memory_space<smem>>
    %836 = vector.broadcast %835 : f32 to vector<2x22x24xf32>
    %837 = arith.mulf %836, %834 : vector<2x22x24xf32>
    %838 = arith.addf %824, %837 : vector<2x22x24xf32>
    %c130 = arith.constant 130 : index
    %839 = memref.load %arg1[%c130] : memref<144xf32, #tpu.memory_space<smem>>
    %840 = vector.broadcast %839 : f32 to vector<2x22x24xf32>
    %841 = arith.mulf %840, %834 : vector<2x22x24xf32>
    %842 = arith.addf %828, %841 : vector<2x22x24xf32>
    %c131 = arith.constant 131 : index
    %843 = memref.load %arg1[%c131] : memref<144xf32, #tpu.memory_space<smem>>
    %844 = vector.broadcast %843 : f32 to vector<2x22x24xf32>
    %845 = arith.mulf %844, %834 : vector<2x22x24xf32>
    %846 = arith.addf %832, %845 : vector<2x22x24xf32>
    %c0_283 = arith.constant 0 : index
    %c2_284 = arith.constant 2 : index
    %c2_285 = arith.constant 2 : index
    %c0_286 = arith.constant 0 : index
    %847 = vector.load %arg0[%c0_283, %c2_284, %c2_285, %c0_286] : memref<2x4x24x24xf32, #tpu.memory_space<vmem>>, vector<2x1x22x24xf32>
    %848 = vector.shape_cast %847 : vector<2x1x22x24xf32> to vector<2x22x24xf32>
    %c132 = arith.constant 132 : index
    %849 = memref.load %arg1[%c132] : memref<144xf32, #tpu.memory_space<smem>>
    %850 = vector.broadcast %849 : f32 to vector<2x22x24xf32>
    %851 = arith.mulf %850, %848 : vector<2x22x24xf32>
    %852 = arith.addf %838, %851 : vector<2x22x24xf32>
    %c133 = arith.constant 133 : index
    %853 = memref.load %arg1[%c133] : memref<144xf32, #tpu.memory_space<smem>>
    %854 = vector.broadcast %853 : f32 to vector<2x22x24xf32>
    %855 = arith.mulf %854, %848 : vector<2x22x24xf32>
    %856 = arith.addf %842, %855 : vector<2x22x24xf32>
    %c134 = arith.constant 134 : index
    %857 = memref.load %arg1[%c134] : memref<144xf32, #tpu.memory_space<smem>>
    %858 = vector.broadcast %857 : f32 to vector<2x22x24xf32>
    %859 = arith.mulf %858, %848 : vector<2x22x24xf32>
    %860 = arith.addf %846, %859 : vector<2x22x24xf32>
    %c0_287 = arith.constant 0 : index
    %c3_288 = arith.constant 3 : index
    %c0_289 = arith.constant 0 : index
    %c0_290 = arith.constant 0 : index
    %861 = vector.load %arg0[%c0_287, %c3_288, %c0_289, %c0_290] : memref<2x4x24x24xf32, #tpu.memory_space<vmem>>, vector<2x1x22x24xf32>
    %862 = vector.shape_cast %861 : vector<2x1x22x24xf32> to vector<2x22x24xf32>
    %c135 = arith.constant 135 : index
    %863 = memref.load %arg1[%c135] : memref<144xf32, #tpu.memory_space<smem>>
    %864 = vector.broadcast %863 : f32 to vector<2x22x24xf32>
    %865 = arith.mulf %864, %862 : vector<2x22x24xf32>
    %866 = arith.addf %852, %865 : vector<2x22x24xf32>
    %c136 = arith.constant 136 : index
    %867 = memref.load %arg1[%c136] : memref<144xf32, #tpu.memory_space<smem>>
    %868 = vector.broadcast %867 : f32 to vector<2x22x24xf32>
    %869 = arith.mulf %868, %862 : vector<2x22x24xf32>
    %870 = arith.addf %856, %869 : vector<2x22x24xf32>
    %c137 = arith.constant 137 : index
    %871 = memref.load %arg1[%c137] : memref<144xf32, #tpu.memory_space<smem>>
    %872 = vector.broadcast %871 : f32 to vector<2x22x24xf32>
    %873 = arith.mulf %872, %862 : vector<2x22x24xf32>
    %874 = arith.addf %860, %873 : vector<2x22x24xf32>
    %c0_291 = arith.constant 0 : index
    %c3_292 = arith.constant 3 : index
    %c1_293 = arith.constant 1 : index
    %c0_294 = arith.constant 0 : index
    %875 = vector.load %arg0[%c0_291, %c3_292, %c1_293, %c0_294] : memref<2x4x24x24xf32, #tpu.memory_space<vmem>>, vector<2x1x22x24xf32>
    %876 = vector.shape_cast %875 : vector<2x1x22x24xf32> to vector<2x22x24xf32>
    %c138 = arith.constant 138 : index
    %877 = memref.load %arg1[%c138] : memref<144xf32, #tpu.memory_space<smem>>
    %878 = vector.broadcast %877 : f32 to vector<2x22x24xf32>
    %879 = arith.mulf %878, %876 : vector<2x22x24xf32>
    %880 = arith.addf %866, %879 : vector<2x22x24xf32>
    %c139 = arith.constant 139 : index
    %881 = memref.load %arg1[%c139] : memref<144xf32, #tpu.memory_space<smem>>
    %882 = vector.broadcast %881 : f32 to vector<2x22x24xf32>
    %883 = arith.mulf %882, %876 : vector<2x22x24xf32>
    %884 = arith.addf %870, %883 : vector<2x22x24xf32>
    %c140 = arith.constant 140 : index
    %885 = memref.load %arg1[%c140] : memref<144xf32, #tpu.memory_space<smem>>
    %886 = vector.broadcast %885 : f32 to vector<2x22x24xf32>
    %887 = arith.mulf %886, %876 : vector<2x22x24xf32>
    %888 = arith.addf %874, %887 : vector<2x22x24xf32>
    %c0_295 = arith.constant 0 : index
    %c3_296 = arith.constant 3 : index
    %c2_297 = arith.constant 2 : index
    %c0_298 = arith.constant 0 : index
    %889 = vector.load %arg0[%c0_295, %c3_296, %c2_297, %c0_298] : memref<2x4x24x24xf32, #tpu.memory_space<vmem>>, vector<2x1x22x24xf32>
    %890 = vector.shape_cast %889 : vector<2x1x22x24xf32> to vector<2x22x24xf32>
    %c141 = arith.constant 141 : index
    %891 = memref.load %arg1[%c141] : memref<144xf32, #tpu.memory_space<smem>>
    %892 = vector.broadcast %891 : f32 to vector<2x22x24xf32>
    %893 = arith.mulf %892, %890 : vector<2x22x24xf32>
    %894 = arith.addf %880, %893 : vector<2x22x24xf32>
    %c142 = arith.constant 142 : index
    %895 = memref.load %arg1[%c142] : memref<144xf32, #tpu.memory_space<smem>>
    %896 = vector.broadcast %895 : f32 to vector<2x22x24xf32>
    %897 = arith.mulf %896, %890 : vector<2x22x24xf32>
    %898 = arith.addf %884, %897 : vector<2x22x24xf32>
    %c143 = arith.constant 143 : index
    %899 = memref.load %arg1[%c143] : memref<144xf32, #tpu.memory_space<smem>>
    %900 = vector.broadcast %899 : f32 to vector<2x22x24xf32>
    %901 = arith.mulf %900, %890 : vector<2x22x24xf32>
    %902 = arith.addf %888, %901 : vector<2x22x24xf32>
    %c3_299 = arith.constant 3 : index
    %903 = memref.load %arg2[%c3_299] : memref<4xf32, #tpu.memory_space<smem>>
    %c432 = arith.constant 432 : index
    %c0_300 = arith.constant 0 : index
    %904 = vector.load %arg5[%c432, %c0_300] : memref<576x576xf32, #tpu.memory_space<vmem>>, vector<144x576xf32>
    %905 = vector.extract_strided_slice %894 {offsets = [0, 0, 0], sizes = [1, 22, 24], strides = [1, 1, 1]} : vector<2x22x24xf32> to vector<1x22x24xf32>
    %906 = vector.shape_cast %905 : vector<1x22x24xf32> to vector<22x24xf32>
    %907 = vector.extract_strided_slice %898 {offsets = [0, 0, 0], sizes = [1, 22, 24], strides = [1, 1, 1]} : vector<2x22x24xf32> to vector<1x22x24xf32>
    %908 = vector.shape_cast %907 : vector<1x22x24xf32> to vector<22x24xf32>
    %cst_301 = arith.constant dense<0.000000e+00> : vector<22x24xf32>
    %909 = tpu.matmul %908, %7, %cst_301 {dimension_numbers = #tpu.dot_dimension_numbers<[1], [0], [0], [1], [0, 0, 1, 1], [], []>} : vector<22x24xf32>, vector<24x24xf32>, vector<22x24xf32> -> vector<22x24xf32>
    %910 = arith.addf %906, %909 : vector<22x24xf32>
    %911 = vector.extract_strided_slice %902 {offsets = [0, 0, 0], sizes = [1, 22, 24], strides = [1, 1, 1]} : vector<2x22x24xf32> to vector<1x22x24xf32>
    %912 = vector.shape_cast %911 : vector<1x22x24xf32> to vector<22x24xf32>
    %cst_302 = arith.constant dense<0.000000e+00> : vector<22x24xf32>
    %913 = tpu.matmul %912, %13, %cst_302 {dimension_numbers = #tpu.dot_dimension_numbers<[1], [0], [0], [1], [0, 0, 1, 1], [], []>} : vector<22x24xf32>, vector<24x24xf32>, vector<22x24xf32> -> vector<22x24xf32>
    %914 = arith.addf %910, %913 : vector<22x24xf32>
    %915 = vector.broadcast %903 : f32 to vector<22x24xf32>
    %916 = arith.addf %914, %915 : vector<22x24xf32>
    %cst_303 = arith.constant 0.000000e+00 : f32
    %917 = vector.broadcast %cst_303 : f32 to vector<22x24xf32>
    %918 = arith.maximumf %916, %917 : vector<22x24xf32>
    %cst_304 = arith.constant dense<0.000000e+00> : vector<22x12xf32>
    %919 = tpu.matmul %918, %26, %cst_304 {dimension_numbers = #tpu.dot_dimension_numbers<[1], [0], [0], [1], [0, 0, 1, 1], [], []>} : vector<22x24xf32>, vector<24x12xf32>, vector<22x12xf32> -> vector<22x12xf32>
    %cst_305 = arith.constant dense<0.000000e+00> : vector<22x12xf32>
    %920 = tpu.matmul %918, %35, %cst_305 {dimension_numbers = #tpu.dot_dimension_numbers<[1], [0], [0], [1], [0, 0, 1, 1], [], []>} : vector<22x24xf32>, vector<24x12xf32>, vector<22x12xf32> -> vector<22x12xf32>
    %921 = arith.maximumf %919, %920 : vector<22x12xf32>
    %cst_306 = arith.constant dense<0.000000e+00> : vector<12x12xf32>
    %922 = tpu.matmul %45, %921, %cst_306 {dimension_numbers = #tpu.dot_dimension_numbers<[1], [0], [0], [1], [0, 0, 1, 1], [], []>} : vector<12x22xf32>, vector<22x12xf32>, vector<12x12xf32> -> vector<12x12xf32>
    %cst_307 = arith.constant dense<0.000000e+00> : vector<12x12xf32>
    %923 = tpu.matmul %51, %921, %cst_307 {dimension_numbers = #tpu.dot_dimension_numbers<[1], [0], [0], [1], [0, 0, 1, 1], [], []>} : vector<12x22xf32>, vector<22x12xf32>, vector<12x12xf32> -> vector<12x12xf32>
    %924 = arith.maximumf %922, %923 : vector<12x12xf32>
    %cst_308 = arith.constant dense<0.000000e+00> : vector<12x144xf32>
    %925 = tpu.matmul %924, %52, %cst_308 {dimension_numbers = #tpu.dot_dimension_numbers<[1], [0], [0], [1], [0, 0, 1, 1], [], []>} : vector<12x12xf32>, vector<12x144xf32>, vector<12x144xf32> -> vector<12x144xf32>
    %926 = arith.mulf %925, %53 : vector<12x144xf32>
    %cst_309 = arith.constant dense<0.000000e+00> : vector<144xf32>
    %927 = vector.multi_reduction <add>, %926, %cst_309 [0] : vector<12x144xf32> to vector<144xf32>
    %928 = vector.shape_cast %927 : vector<144xf32> to vector<1x144xf32>
    %cst_310 = arith.constant dense<0.000000e+00> : vector<1x576xf32>
    %929 = tpu.matmul %928, %904, %cst_310 {dimension_numbers = #tpu.dot_dimension_numbers<[1], [0], [0], [1], [0, 0, 1, 1], [], []>} : vector<1x144xf32>, vector<144x576xf32>, vector<1x576xf32> -> vector<1x576xf32>
    %930 = arith.addf %705, %929 : vector<1x576xf32>
    %931 = vector.extract_strided_slice %894 {offsets = [1, 0, 0], sizes = [1, 22, 24], strides = [1, 1, 1]} : vector<2x22x24xf32> to vector<1x22x24xf32>
    %932 = vector.shape_cast %931 : vector<1x22x24xf32> to vector<22x24xf32>
    %933 = vector.extract_strided_slice %898 {offsets = [1, 0, 0], sizes = [1, 22, 24], strides = [1, 1, 1]} : vector<2x22x24xf32> to vector<1x22x24xf32>
    %934 = vector.shape_cast %933 : vector<1x22x24xf32> to vector<22x24xf32>
    %cst_311 = arith.constant dense<0.000000e+00> : vector<22x24xf32>
    %935 = tpu.matmul %934, %7, %cst_311 {dimension_numbers = #tpu.dot_dimension_numbers<[1], [0], [0], [1], [0, 0, 1, 1], [], []>} : vector<22x24xf32>, vector<24x24xf32>, vector<22x24xf32> -> vector<22x24xf32>
    %936 = arith.addf %932, %935 : vector<22x24xf32>
    %937 = vector.extract_strided_slice %902 {offsets = [1, 0, 0], sizes = [1, 22, 24], strides = [1, 1, 1]} : vector<2x22x24xf32> to vector<1x22x24xf32>
    %938 = vector.shape_cast %937 : vector<1x22x24xf32> to vector<22x24xf32>
    %cst_312 = arith.constant dense<0.000000e+00> : vector<22x24xf32>
    %939 = tpu.matmul %938, %13, %cst_312 {dimension_numbers = #tpu.dot_dimension_numbers<[1], [0], [0], [1], [0, 0, 1, 1], [], []>} : vector<22x24xf32>, vector<24x24xf32>, vector<22x24xf32> -> vector<22x24xf32>
    %940 = arith.addf %936, %939 : vector<22x24xf32>
    %941 = vector.broadcast %903 : f32 to vector<22x24xf32>
    %942 = arith.addf %940, %941 : vector<22x24xf32>
    %cst_313 = arith.constant 0.000000e+00 : f32
    %943 = vector.broadcast %cst_313 : f32 to vector<22x24xf32>
    %944 = arith.maximumf %942, %943 : vector<22x24xf32>
    %cst_314 = arith.constant dense<0.000000e+00> : vector<22x12xf32>
    %945 = tpu.matmul %944, %26, %cst_314 {dimension_numbers = #tpu.dot_dimension_numbers<[1], [0], [0], [1], [0, 0, 1, 1], [], []>} : vector<22x24xf32>, vector<24x12xf32>, vector<22x12xf32> -> vector<22x12xf32>
    %cst_315 = arith.constant dense<0.000000e+00> : vector<22x12xf32>
    %946 = tpu.matmul %944, %35, %cst_315 {dimension_numbers = #tpu.dot_dimension_numbers<[1], [0], [0], [1], [0, 0, 1, 1], [], []>} : vector<22x24xf32>, vector<24x12xf32>, vector<22x12xf32> -> vector<22x12xf32>
    %947 = arith.maximumf %945, %946 : vector<22x12xf32>
    %cst_316 = arith.constant dense<0.000000e+00> : vector<12x12xf32>
    %948 = tpu.matmul %45, %947, %cst_316 {dimension_numbers = #tpu.dot_dimension_numbers<[1], [0], [0], [1], [0, 0, 1, 1], [], []>} : vector<12x22xf32>, vector<22x12xf32>, vector<12x12xf32> -> vector<12x12xf32>
    %cst_317 = arith.constant dense<0.000000e+00> : vector<12x12xf32>
    %949 = tpu.matmul %51, %947, %cst_317 {dimension_numbers = #tpu.dot_dimension_numbers<[1], [0], [0], [1], [0, 0, 1, 1], [], []>} : vector<12x22xf32>, vector<22x12xf32>, vector<12x12xf32> -> vector<12x12xf32>
    %950 = arith.maximumf %948, %949 : vector<12x12xf32>
    %cst_318 = arith.constant dense<0.000000e+00> : vector<12x144xf32>
    %951 = tpu.matmul %950, %52, %cst_318 {dimension_numbers = #tpu.dot_dimension_numbers<[1], [0], [0], [1], [0, 0, 1, 1], [], []>} : vector<12x12xf32>, vector<12x144xf32>, vector<12x144xf32> -> vector<12x144xf32>
    %952 = arith.mulf %951, %53 : vector<12x144xf32>
    %cst_319 = arith.constant dense<0.000000e+00> : vector<144xf32>
    %953 = vector.multi_reduction <add>, %952, %cst_319 [0] : vector<12x144xf32> to vector<144xf32>
    %954 = vector.shape_cast %953 : vector<144xf32> to vector<1x144xf32>
    %cst_320 = arith.constant dense<0.000000e+00> : vector<1x576xf32>
    %955 = tpu.matmul %954, %904, %cst_320 {dimension_numbers = #tpu.dot_dimension_numbers<[1], [0], [0], [1], [0, 0, 1, 1], [], []>} : vector<1x144xf32>, vector<144x576xf32>, vector<1x576xf32> -> vector<1x576xf32>
    %956 = arith.addf %731, %955 : vector<1x576xf32>
    %cst_321 = arith.constant dense<0.000000e+00> : vector<1x7xf32>
    %957 = tpu.matmul %930, %55, %cst_321 {dimension_numbers = #tpu.dot_dimension_numbers<[1], [0], [0], [1], [0, 0, 1, 1], [], []>} : vector<1x576xf32>, vector<576x7xf32>, vector<1x7xf32> -> vector<1x7xf32>
    %958 = arith.addf %957, %56 : vector<1x7xf32>
    %cst_322 = arith.constant dense<0xFF800000> : vector<1xf32>
    %959 = vector.multi_reduction <maximumf>, %958, %cst_322 [1] : vector<1x7xf32> to vector<1xf32>
    %960 = vector.shape_cast %959 : vector<1xf32> to vector<1x1xf32>
    %961 = vector.broadcast %960 : vector<1x1xf32> to vector<1x7xf32>
    %962 = arith.subf %958, %961 : vector<1x7xf32>
    %963 = math.exp %962 : vector<1x7xf32>
    %cst_323 = arith.constant dense<0.000000e+00> : vector<1xf32>
    %964 = vector.multi_reduction <add>, %963, %cst_323 [1] : vector<1x7xf32> to vector<1xf32>
    %965 = vector.shape_cast %964 : vector<1xf32> to vector<1x1xf32>
    %966 = math.log %965 : vector<1x1xf32>
    %967 = vector.broadcast %966 : vector<1x1xf32> to vector<1x7xf32>
    %968 = arith.subf %962, %967 : vector<1x7xf32>
    %c0_324 = arith.constant 0 : index
    %c0_325 = arith.constant 0 : index
    %969 = vector.load %arg9[%c0_324, %c0_325] : memref<2x7xf32, #tpu.memory_space<vmem>>, vector<1x7xf32>
    tpu.vector_store %arg9[%c0_324, %c0_325], %968 {strides = array<i32>} : memref<2x7xf32, #tpu.memory_space<vmem>>, vector<1x7xf32>,
    %cst_326 = arith.constant dense<0.000000e+00> : vector<1x7xf32>
    %970 = tpu.matmul %956, %55, %cst_326 {dimension_numbers = #tpu.dot_dimension_numbers<[1], [0], [0], [1], [0, 0, 1, 1], [], []>} : vector<1x576xf32>, vector<576x7xf32>, vector<1x7xf32> -> vector<1x7xf32>
    %971 = arith.addf %970, %56 : vector<1x7xf32>
    %cst_327 = arith.constant dense<0xFF800000> : vector<1xf32>
    %972 = vector.multi_reduction <maximumf>, %971, %cst_327 [1] : vector<1x7xf32> to vector<1xf32>
    %973 = vector.shape_cast %972 : vector<1xf32> to vector<1x1xf32>
    %974 = vector.broadcast %973 : vector<1x1xf32> to vector<1x7xf32>
    %975 = arith.subf %971, %974 : vector<1x7xf32>
    %976 = math.exp %975 : vector<1x7xf32>
    %cst_328 = arith.constant dense<0.000000e+00> : vector<1xf32>
    %977 = vector.multi_reduction <add>, %976, %cst_328 [1] : vector<1x7xf32> to vector<1xf32>
    %978 = vector.shape_cast %977 : vector<1xf32> to vector<1x1xf32>
    %979 = math.log %978 : vector<1x1xf32>
    %980 = vector.broadcast %979 : vector<1x1xf32> to vector<1x7xf32>
    %981 = arith.subf %975, %980 : vector<1x7xf32>
    %c1_329 = arith.constant 1 : index
    %c0_330 = arith.constant 0 : index
    %982 = vector.load %arg9[%c1_329, %c0_330] : memref<2x7xf32, #tpu.memory_space<vmem>>, vector<1x7xf32>
    tpu.vector_store %arg9[%c1_329, %c0_330], %981 {strides = array<i32>} : memref<2x7xf32, #tpu.memory_space<vmem>>, vector<1x7xf32>,
    return
  }
}

</mosaic_0001>

<llo_original>
// kernel: face_classifier_forward.1
$region0: #{face_classifier_forward.1}
  #allocation0 [shape = 'u32[]', space=smem, size = 0x4, offset = 0x4, fixed_abs, tag = 'smem constant byte address 0x4 - core index']
  #allocation1 [shape = 'u32[144,128]{1,0:T(1,128)}', space=vmem, size = 0x12000, scoped, tag = 'internal scratch']
  %s0 = inlined_call_operand.hbm [shape: f32[2,4,24,24], index: 0, kind: input, shape index: {}]
  %s1 = inlined_call_operand.vmem [shape: f32[144], index: 1, kind: input, shape index: {}]
  %s2 = inlined_call_operand.hbm [shape: f32[4], index: 2, kind: input, shape index: {}]
  %s3 = inlined_call_operand.hbm [shape: f32[12,144], index: 3, kind: input, shape index: {}]
  %s4 = inlined_call_operand.hbm [shape: f32[12,144], index: 4, kind: input, shape index: {}]
  %s5 = inlined_call_operand.hbm [shape: f32[576,576], index: 5, kind: input, shape index: {}]
  %s6 = inlined_call_operand.hbm [shape: f32[1,576], index: 6, kind: input, shape index: {}]
  %s7 = inlined_call_operand.vmem [shape: f32[576,7], index: 7, kind: input, shape index: {}]
  %s8 = inlined_call_operand.hbm [shape: f32[1,7], index: 8, kind: input, shape index: {}]
  %s9 = inlined_call_operand.hbm [shape: f32[2,7], index: 9, kind: output, shape index: {}]
  %s10 = sld [smem:[#allocation0]]
  $region78: #{face_classifier_forward.1} parent=0
    _
  %s12 = ssub.s32 1, %s10
  %s13 = scalar_select 0, %s12, %s10
  $region1: #{face_classifier_forward.1} parent=0
    #allocation2 [shape = 'u8[98304]{0}', space=vmem, size = 0x18000, scoped, tag = 'input window, operand 0, single buffered']
    #allocation3 [shape = 's32[1]{0}', space=sflag, size = 0x4, scoped, tag = 'scoped memory for face_classifier_forward.1']
    #allocation4 [shape = 's32[1]{0}', space=sflag, size = 0x4, scoped, tag = 'scoped memory for face_classifier_forward.1']
    #allocation5 [shape = 's32[1]{0}', space=sflag, size = 0x4, scoped, tag = 'scoped memory for face_classifier_forward.1']
    #allocation6 [shape = 's32[1]{0}', space=sflag, size = 0x4, scoped, tag = 'scoped memory for face_classifier_forward.1']
    #allocation7 [shape = 'u8[1024]{0}', space=smem, size = 0x400, scoped, tag = 'input window, operand 1, single buffered']
    #allocation8 [shape = 'u8[512]{0}', space=smem, size = 0x200, scoped, tag = 'input window, operand 2, single buffered']
    #allocation9 [shape = 'u8[16384]{0}', space=vmem, size = 0x4000, scoped, tag = 'input window, operand 3, single buffered']
    #allocation10 [shape = 's32[1]{0}', space=sflag, size = 0x4, scoped, tag = 'scoped memory for face_classifier_forward.1']
    #allocation11 [shape = 'u8[16384]{0}', space=vmem, size = 0x4000, scoped, tag = 'input window, operand 4, single buffered']
    #allocation12 [shape = 'u8[1474560]{0}', space=vmem, size = 0x168000, scoped, tag = 'input window, operand 5, single buffered']
    #allocation13 [shape = 's32[1]{0}', space=sflag, size = 0x4, scoped, tag = 'scoped memory for face_classifier_forward.1']
    #allocation14 [shape = 'u8[2560]{0}', space=vmem, size = 0xc00, scoped, tag = 'input window, operand 6, single buffered']
    #allocation15 [shape = 'u8[512]{0}', space=vmem, size = 0x400, scoped, tag = 'input window, operand 8, single buffered']
    #allocation16 [shape = 's32[1]{0}', space=sflag, size = 0x4, scoped, tag = 'scoped memory for face_classifier_forward.1']
    #allocation17 [shape = 'u8[1024]{0}', space=vmem, size = 0x400, scoped, tag = 'output window, operand 0, single buffered']
    %14 = vsyncpa [#allocation3], 0
    %15 = vsyncpa [#allocation6], 0
    %16 = vsyncpa [#allocation5], 0
    %17 = vsyncpa [#allocation10], 0
    %18 = vsyncpa [#allocation13], 0
    %19 = vsyncpa [#allocation16], 0
    %20 = vsyncpa [#allocation4], 0
    // Predicated region
    $region2: #{face_classifier_forward.1} parent=1 // pred_check
      _
    $region3: #{face_classifier_forward.1} parent=1 // pred_check_branch
      %22 = sbr.rel (0) target = $region5
    $region4: #{face_classifier_forward.1} parent=1 // pred_region
      %s24 = ssub.s32 3072, 3072
      %25 = vsyncadd [#allocation3], %s24
      %s26 = sshll.u32 [#allocation2], 4
      %s27 = int_to_ptr.vmem [resolvable:$true] %s26
      %32 = dma.hbm_to_vmem [thread:$0]  %s0, 3072, %s27, [#allocation3], 128, 128, 8
    $region5: #{face_classifier_forward.1} parent=1 // pred_fallthru
      _
    // Predicated region
    $region6: #{face_classifier_forward.1} parent=1 // pred_check
      _
    $region7: #{face_classifier_forward.1} parent=1 // pred_check_branch
      %34 = sbr.rel (0) target = $region9
    $region8: #{face_classifier_forward.1} parent=1 // pred_region
      %s36 = ssub.s32 32, 32
      %37 = vsyncadd [#allocation6], %s36
      %s39 = sshll.u32 %s1, 4
      %s40 = int_to_ptr.vmem [resolvable:$true] %s39
      %42 = dma.vmem_to_smem %s40, 32, [#allocation7], [#allocation6]
    $region9: #{face_classifier_forward.1} parent=1 // pred_fallthru
      _
    // Predicated region
    $region10: #{face_classifier_forward.1} parent=1 // pred_check
      _
    $region11: #{face_classifier_forward.1} parent=1 // pred_check_branch
      %44 = sbr.rel (0) target = $region13
    $region12: #{face_classifier_forward.1} parent=1 // pred_region
      %s46 = ssub.s32 16, 16
      %47 = vsyncadd [#allocation5], %s46
      %50 = dma.hbm_to_smem %s2, 16, [#allocation8], [#allocation5]
    $region13: #{face_classifier_forward.1} parent=1 // pred_fallthru
      _
    // Predicated region
    $region14: #{face_classifier_forward.1} parent=1 // pred_check
      _
    $region15: #{face_classifier_forward.1} parent=1 // pred_check_branch
      %52 = sbr.rel (0) target = $region17
    $region16: #{face_classifier_forward.1} parent=1 // pred_region
      %s54 = ssub.s32 512, 512
      %55 = vsyncadd [#allocation10], %s54
      %s56 = sshll.u32 [#allocation9], 4
      %s57 = int_to_ptr.vmem [resolvable:$true] %s56
      %62 = dma.hbm_to_vmem [thread:$0]  %s3, 512, %s57, [#allocation10], 256, 256, 16
    $region17: #{face_classifier_forward.1} parent=1 // pred_fallthru
      _
    // Predicated region
    $region18: #{face_classifier_forward.1} parent=1 // pred_check
      _
    $region19: #{face_classifier_forward.1} parent=1 // pred_check_branch
      %64 = sbr.rel (0) target = $region21
    $region20: #{face_classifier_forward.1} parent=1 // pred_region
      %s66 = ssub.s32 512, 512
      %67 = vsyncadd [#allocation10], %s66
      %s68 = sshll.u32 [#allocation11], 4
      %s69 = int_to_ptr.vmem [resolvable:$true] %s68
      %74 = dma.hbm_to_vmem [thread:$0]  %s4, 512, %s69, [#allocation10], 256, 256, 16
    $region21: #{face_classifier_forward.1} parent=1 // pred_fallthru
      _
    // Predicated region
    $region22: #{face_classifier_forward.1} parent=1 // pred_check
      _
    $region23: #{face_classifier_forward.1} parent=1 // pred_check_branch
      %76 = sbr.rel (0) target = $region25
    $region24: #{face_classifier_forward.1} parent=1 // pred_region
      %s78 = ssub.s32 46080, 46080
      %79 = vsyncadd [#allocation13], %s78
      %s80 = sshll.u32 [#allocation12], 4
      %s81 = int_to_ptr.vmem [resolvable:$true] %s80
      %86 = dma.hbm_to_vmem [thread:$0]  %s5, 46080, %s81, [#allocation13], 640, 640, 40
    $region25: #{face_classifier_forward.1} parent=1 // pred_fallthru
      _
    // Predicated region
    $region26: #{face_classifier_forward.1} parent=1 // pred_check
      _
    $region27: #{face_classifier_forward.1} parent=1 // pred_check_branch
      %88 = sbr.rel (0) target = $region29
    $region28: #{face_classifier_forward.1} parent=1 // pred_region
      %s90 = ssub.s32 80, 80
      %91 = vsyncadd [#allocation13], %s90
      %s93 = sshll.u32 [#allocation14], 4
      %s94 = int_to_ptr.vmem [resolvable:$true] %s93
      %96 = dma.hbm_to_vmem [thread:$0]  %s6, 80, %s94, [#allocation13]
    $region29: #{face_classifier_forward.1} parent=1 // pred_fallthru
      _
    // Predicated region
    $region30: #{face_classifier_forward.1} parent=1 // pred_check
      _
    $region31: #{face_classifier_forward.1} parent=1 // pred_check_branch
      %98 = sbr.rel (0) target = $region33
    $region32: #{face_classifier_forward.1} parent=1 // pred_region
      _
    $region33: #{face_classifier_forward.1} parent=1 // pred_fallthru
      _
    // Predicated region
    $region34: #{face_classifier_forward.1} parent=1 // pred_check
      _
    $region35: #{face_classifier_forward.1} parent=1 // pred_check_branch
      %100 = sbr.rel (0) target = $region37
    $region36: #{face_classifier_forward.1} parent=1 // pred_region
      %s102 = ssub.s32 16, 16
      %103 = vsyncadd [#allocation16], %s102
      %s105 = sshll.u32 [#allocation15], 4
      %s106 = int_to_ptr.vmem [resolvable:$true] %s105
      %108 = dma.hbm_to_vmem [thread:$0]  %s8, 16, %s106, [#allocation16]
    $region37: #{face_classifier_forward.1} parent=1 // pred_fallthru
      _
    // Predicated region
    $region38: #{face_classifier_forward.1} parent=1 // pred_check
      _
    $region39: #{face_classifier_forward.1} parent=1 // pred_check_branch
      %110 = sbr.rel (0) target = $region41
    $region40: #{face_classifier_forward.1} parent=1 // pred_region
      %111 = dma.done [#allocation3], 3072
    $region41: #{face_classifier_forward.1} parent=1 // pred_fallthru
      _
    // Predicated region
    $region42: #{face_classifier_forward.1} parent=1 // pred_check
      _
    $region43: #{face_classifier_forward.1} parent=1 // pred_check_branch
      %113 = sbr.rel (0) target = $region45
    $region44: #{face_classifier_forward.1} parent=1 // pred_region
      %114 = dma.done [#allocation6], 32
    $region45: #{face_classifier_forward.1} parent=1 // pred_fallthru
      _
    // Predicated region
    $region46: #{face_classifier_forward.1} parent=1 // pred_check
      _
    $region47: #{face_classifier_forward.1} parent=1 // pred_check_branch
      %116 = sbr.rel (0) target = $region49
    $region48: #{face_classifier_forward.1} parent=1 // pred_region
      %117 = dma.done [#allocation5], 16
    $region49: #{face_classifier_forward.1} parent=1 // pred_fallthru
      _
    // Predicated region
    $region50: #{face_classifier_forward.1} parent=1 // pred_check
      _
    $region51: #{face_classifier_forward.1} parent=1 // pred_check_branch
      %119 = sbr.rel (0) target = $region53
    $region52: #{face_classifier_forward.1} parent=1 // pred_region
      %120 = dma.done [#allocation10], 512
    $region53: #{face_classifier_forward.1} parent=1 // pred_fallthru
      _
    // Predicated region
    $region54: #{face_classifier_forward.1} parent=1 // pred_check
      _
    $region55: #{face_classifier_forward.1} parent=1 // pred_check_branch
      %122 = sbr.rel (0) target = $region57
    $region56: #{face_classifier_forward.1} parent=1 // pred_region
      %123 = dma.done [#allocation10], 512
    $region57: #{face_classifier_forward.1} parent=1 // pred_fallthru
      _
    // Predicated region
    $region58: #{face_classifier_forward.1} parent=1 // pred_check
      _
    $region59: #{face_classifier_forward.1} parent=1 // pred_check_branch
      %125 = sbr.rel (0) target = $region61
    $region60: #{face_classifier_forward.1} parent=1 // pred_region
      %126 = dma.done [#allocation13], 46080
    $region61: #{face_classifier_forward.1} parent=1 // pred_fallthru
      _
    // Predicated region
    $region62: #{face_classifier_forward.1} parent=1 // pred_check
      _
    $region63: #{face_classifier_forward.1} parent=1 // pred_check_branch
      %128 = sbr.rel (0) target = $region65
    $region64: #{face_classifier_forward.1} parent=1 // pred_region
      %129 = dma.done [#allocation13], 80
    $region65: #{face_classifier_forward.1} parent=1 // pred_fallthru
      _
    // Predicated region
    $region66: #{face_classifier_forward.1} parent=1 // pred_check
      _
    $region67: #{face_classifier_forward.1} parent=1 // pred_check_branch
      %131 = sbr.rel (0) target = $region69
    $region68: #{face_classifier_forward.1} parent=1 // pred_region
      %132 = dma.done [#allocation16], 16
    $region69: #{face_classifier_forward.1} parent=1 // pred_fallthru
      _
    %133 = sfence
    %v134 = vlaneseq
    %v135 = vshrl.u32 %v134, 7
    %v136 = vadd.s32 %v135, 8
    %v137 = vadd.s32 %v135, 16
    %v138 = vlaneseq
    %v139 = vand.u32 %v138, 127
    %v140 = vadd.s32 %v139, 1
    %vm141 = vcmp.eq.s32.totalorder %v135, %v140
    %vm142 = vcmp.eq.s32.totalorder %v136, %v140
    %vm143 = vcmp.eq.s32.totalorder %v137, %v140
    %v144 = vsel %vm141, 1.0, 0.0
    %v145 = vsel %vm142, 1.0, 0.0
    %v146 = vsel %vm143, 1.0, 0.0
    %v147 = vadd.s32 %v139, 2
    %vm148 = vcmp.eq.s32.totalorder %v135, %v147
    %vm149 = vcmp.eq.s32.totalorder %v136, %v147
    %vm150 = vcmp.eq.s32.totalorder %v137, %v147
    %v151 = vsel %vm148, 1.0, 0.0
    %v152 = vsel %vm149, 1.0, 0.0
    %v153 = vsel %vm150, 1.0, 0.0
    %v154 = vmul.u32 %v139, 2
    %v155 = vsub.s32 %v154, 1
    %vm156 = vcmp.eq.s32.totalorder %v135, %v155
    %vm157 = vcmp.eq.s32.totalorder %v136, %v155
    %vm158 = vcmp.eq.s32.totalorder %v137, %v155
    %vm159 = vcmp.lt.s32.totalorder %v135, 22
    %vm160 = vcmp.lt.s32.totalorder %v136, 22
    %vm161 = vcmp.lt.s32.totalorder %v137, 22
    %vm162 = vmand %vm156, %vm159
    %vm163 = vmand %vm157, %vm160
    %vm164 = vmand %vm158, %vm161
    %v165 = vsel %vm162, 1.0, 0.0
    %v166 = vsel %vm163, 1.0, 0.0
    %v167 = vsel %vm164, 1.0, 0.0
    %vm168 = vcmp.eq.s32.totalorder %v135, %v154
    %vm169 = vcmp.eq.s32.totalorder %v136, %v154
    %vm170 = vcmp.eq.s32.totalorder %v137, %v154
    %vm171 = vmand %vm168, %vm159
    %vm172 = vmand %vm169, %vm160
    %vm173 = vmand %vm170, %vm161
    %v174 = vsel %vm171, 1.0, 0.0
    %v175 = vsel %vm172, 1.0, 0.0
    %v176 = vsel %vm173, 1.0, 0.0
    %v177 = vmul.u32 %v135, 2
    %v178 = vmul.u32 %v136, 2
    %v179 = vsub.s32 %v177, 1
    %v180 = vsub.s32 %v178, 1
    %vm181 = vcmp.eq.s32.totalorder %v139, %v179
    %vm182 = vcmp.eq.s32.totalorder %v139, %v180
    %v183 = vsel %vm181, 1.0, 0.0
    %v184 = vsel %vm182, 1.0, 0.0
    %vm185 = vcmp.eq.s32.totalorder %v139, %v177
    %vm186 = vcmp.eq.s32.totalorder %v139, %v178
    %v187 = vsel %vm185, 1.0, 0.0
    %v188 = vsel %vm186, 1.0, 0.0
    %v189 = vld [vmem:[#allocation9] sm:$0xff]
    %v190 = vld [vmem:[#allocation9 + $0x8] sm:$0xff]
    %v191 = vld [vmem:[#allocation9 + $0x10] sm:$0xf]
    %v192 = vld [vmem:[#allocation9 + $0x18] sm:$0xf]
    %v193 = vld [vmem:[#allocation11] sm:$0xff]
    %v194 = vld [vmem:[#allocation11 + $0x8] sm:$0xff]
    %v195 = vld [vmem:[#allocation11 + $0x10] sm:$0xf]
    %v196 = vld [vmem:[#allocation11 + $0x18] sm:$0xf]
    %v197 = vld [vmem:[#allocation14] sm:$0x1f]
    %v198 = vld [vmem:[%s7] sm:$0xff]
    %v199 = vld [vmem:[%s7 + $0x8] sm:$0xff]
    %v200 = vld [vmem:[%s7 + $0x10] sm:$0xff]
    %v201 = vld [vmem:[%s7 + $0x18] sm:$0xff]
    %v202 = vld [vmem:[%s7 + $0x20] sm:$0xff]
    %v203 = vld [vmem:[%s7 + $0x28] sm:$0xff]
    %v204 = vld [vmem:[%s7 + $0x30] sm:$0xff]
    %v205 = vld [vmem:[%s7 + $0x38] sm:$0xff]
    %v206 = vld [vmem:[%s7 + $0x40] sm:$0xff]
    %v207 = vld [vmem:[%s7 + $0x48] sm:$0xff]
    %v208 = vld [vmem:[%s7 + $0x50] sm:$0xff]
    %v209 = vld [vmem:[%s7 + $0x58] sm:$0xff]
    %v210 = vld [vmem:[%s7 + $0x60] sm:$0xff]
    %v211 = vld [vmem:[%s7 + $0x68] sm:$0xff]
    %v212 = vld [vmem:[%s7 + $0x70] sm:$0xff]
    %v213 = vld [vmem:[%s7 + $0x78] sm:$0xff]
    %v214 = vld [vmem:[%s7 + $0x80] sm:$0xff]
    %v215 = vld [vmem:[%s7 + $0x88] sm:$0xff]
    %v216 = vld [vmem:[%s7 + $0x90] sm:$0xff]
    %v217 = vld [vmem:[%s7 + $0x98] sm:$0xff]
    %v218 = vld [vmem:[%s7 + $0xa0] sm:$0xff]
    %v219 = vld [vmem:[%s7 + $0xa8] sm:$0xff]
    %v220 = vld [vmem:[%s7 + $0xb0] sm:$0xff]
    %v221 = vld [vmem:[%s7 + $0xb8] sm:$0xff]
    %v222 = vld [vmem:[%s7 + $0xc0] sm:$0xff]
    %v223 = vld [vmem:[%s7 + $0xc8] sm:$0xff]
    %v224 = vld [vmem:[%s7 + $0xd0] sm:$0xff]
    %v225 = vld [vmem:[%s7 + $0xd8] sm:$0xff]
    %v226 = vld [vmem:[%s7 + $0xe0] sm:$0xff]
    %v227 = vld [vmem:[%s7 + $0xe8] sm:$0xff]
    %v228 = vld [vmem:[%s7 + $0xf0] sm:$0xff]
    %v229 = vld [vmem:[%s7 + $0xf8] sm:$0xff]
    %v230 = vld [vmem:[%s7 + $0x100] sm:$0xff]
    %v231 = vld [vmem:[%s7 + $0x108] sm:$0xff]
    %v232 = vld [vmem:[%s7 + $0x110] sm:$0xff]
    %v233 = vld [vmem:[%s7 + $0x118] sm:$0xff]
    %v234 = vld [vmem:[%s7 + $0x120] sm:$0xff]
    %v235 = vld [vmem:[%s7 + $0x128] sm:$0xff]
    %v236 = vld [vmem:[%s7 + $0x130] sm:$0xff]
    %v237 = vld [vmem:[%s7 + $0x138] sm:$0xff]
    %v238 = vld [vmem:[%s7 + $0x140] sm:$0xff]
    %v239 = vld [vmem:[%s7 + $0x148] sm:$0xff]
    %v240 = vld [vmem:[%s7 + $0x150] sm:$0xff]
    %v241 = vld [vmem:[%s7 + $0x158] sm:$0xff]
    %v242 = vld [vmem:[%s7 + $0x160] sm:$0xff]
    %v243 = vld [vmem:[%s7 + $0x168] sm:$0xff]
    %v244 = vld [vmem:[%s7 + $0x170] sm:$0xff]
    %v245 = vld [vmem:[%s7 + $0x178] sm:$0xff]
    %v246 = vld [vmem:[%s7 + $0x180] sm:$0xff]
    %v247 = vld [vmem:[%s7 + $0x188] sm:$0xff]
    %v248 = vld [vmem:[%s7 + $0x190] sm:$0xff]
    %v249 = vld [vmem:[%s7 + $0x198] sm:$0xff]
    %v250 = vld [vmem:[%s7 + $0x1a0] sm:$0xff]
    %v251 = vld [vmem:[%s7 + $0x1a8] sm:$0xff]
    %v252 = vld [vmem:[%s7 + $0x1b0] sm:$0xff]
    %v253 = vld [vmem:[%s7 + $0x1b8] sm:$0xff]
    %v254 = vld [vmem:[%s7 + $0x1c0] sm:$0xff]
    %v255 = vld [vmem:[%s7 + $0x1c8] sm:$0xff]
    %v256 = vld [vmem:[%s7 + $0x1d0] sm:$0xff]
    %v257 = vld [vmem:[%s7 + $0x1d8] sm:$0xff]
    %v258 = vld [vmem:[%s7 + $0x1e0] sm:$0xff]
    %v259 = vld [vmem:[%s7 + $0x1e8] sm:$0xff]
    %v260 = vld [vmem:[%s7 + $0x1f0] sm:$0xff]
    %v261 = vld [vmem:[%s7 + $0x1f8] sm:$0xff]
    %v262 = vld [vmem:[%s7 + $0x200] sm:$0xff]
    %v263 = vld [vmem:[%s7 + $0x208] sm:$0xff]
    %v264 = vld [vmem:[%s7 + $0x210] sm:$0xff]
    %v265 = vld [vmem:[%s7 + $0x218] sm:$0xff]
    %v266 = vld [vmem:[%s7 + $0x220] sm:$0xff]
    %v267 = vld [vmem:[%s7 + $0x228] sm:$0xff]
    %v268 = vld [vmem:[%s7 + $0x230] sm:$0xff]
    %v269 = vld [vmem:[%s7 + $0x238] sm:$0xff]
    %v270 = vld [vmem:[#allocation15] sm:$0x1]
    %v271 = vld [vmem:[#allocation2] sm:$0xff]
    %v272 = vld [vmem:[#allocation2 + $0x8] sm:$0xff]
    %v273 = vld [vmem:[#allocation2 + $0x10] sm:$0x3f]
    %v274 = vld [vmem:[#allocation2 + $0x60] sm:$0xff]
    %v275 = vld [vmem:[#allocation2 + $0x68] sm:$0xff]
    %v276 = vld [vmem:[#allocation2 + $0x70] sm:$0x3f]
    %s277 = sld [smem:[#allocation7]]
    %v278 = vstv %s277
    %v279 = vmul.f32 %v278, %v271
    %v280 = vmul.f32 %v278, %v272
    %v281 = vmul.f32 %v278, %v273
    %v282 = vmul.f32 %v278, %v274
    %v283 = vmul.f32 %v278, %v275
    %v284 = vmul.f32 %v278, %v276
    %v285 = vadd.f32 %v279, 0.0
    %v286 = vadd.f32 %v280, 0.0
    %v287 = vadd.f32 %v281, 0.0
    %v288 = vadd.f32 %v282, 0.0
    %v289 = vadd.f32 %v283, 0.0
    %v290 = vadd.f32 %v284, 0.0
    %s291 = sld [smem:[#allocation7 + $0x1]]
    %v292 = vstv %s291
    %v293 = vmul.f32 %v292, %v271
    %v294 = vmul.f32 %v292, %v272
    %v295 = vmul.f32 %v292, %v273
    %v296 = vmul.f32 %v292, %v274
    %v297 = vmul.f32 %v292, %v275
    %v298 = vmul.f32 %v292, %v276
    %v299 = vadd.f32 %v293, 0.0
    %v300 = vadd.f32 %v294, 0.0
    %v301 = vadd.f32 %v295, 0.0
    %v302 = vadd.f32 %v296, 0.0
    %v303 = vadd.f32 %v297, 0.0
    %v304 = vadd.f32 %v298, 0.0
    %s305 = sld [smem:[#allocation7 + $0x2]]
    %v306 = vstv %s305
    %v307 = vmul.f32 %v306, %v271
    %v308 = vmul.f32 %v306, %v272
    %v309 = vmul.f32 %v306, %v273
    %v310 = vmul.f32 %v306, %v274
    %v311 = vmul.f32 %v306, %v275
    %v312 = vmul.f32 %v306, %v276
    %v313 = vadd.f32 %v307, 0.0
    %v314 = vadd.f32 %v308, 0.0
    %v315 = vadd.f32 %v309, 0.0
    %v316 = vadd.f32 %v310, 0.0
    %v317 = vadd.f32 %v311, 0.0
    %v318 = vadd.f32 %v312, 0.0
    %v319 = vld [vmem:[#allocation2 + $0x1] sm:$0xff]
    %v320 = vld [vmem:[#allocation2 + $0x9] sm:$0xff]
    %v321 = vld [vmem:[#allocation2 + $0x11] sm:$0x3f]
    %v322 = vld [vmem:[#allocation2 + $0x61] sm:$0xff]
    %v323 = vld [vmem:[#allocation2 + $0x69] sm:$0xff]
    %v324 = vld [vmem:[#allocation2 + $0x71] sm:$0x3f]
    %s325 = sld [smem:[#allocation7 + $0x3]]
    %v326 = vstv %s325
    %v327 = vmul.f32 %v326, %v319
    %v328 = vmul.f32 %v326, %v320
    %v329 = vmul.f32 %v326, %v321
    %v330 = vmul.f32 %v326, %v322
    %v331 = vmul.f32 %v326, %v323
    %v332 = vmul.f32 %v326, %v324
    %v333 = vadd.f32 %v285, %v327
    %v334 = vadd.f32 %v286, %v328
    %v335 = vadd.f32 %v287, %v329
    %v336 = vadd.f32 %v288, %v330
    %v337 = vadd.f32 %v289, %v331
    %v338 = vadd.f32 %v290, %v332
    %s339 = sld [smem:[#allocation7 + $0x4]]
    %v340 = vstv %s339
    %v341 = vmul.f32 %v340, %v319
    %v342 = vmul.f32 %v340, %v320
    %v343 = vmul.f32 %v340, %v321
    %v344 = vmul.f32 %v340, %v322
    %v345 = vmul.f32 %v340, %v323
    %v346 = vmul.f32 %v340, %v324
    %v347 = vadd.f32 %v299, %v341
    %v348 = vadd.f32 %v300, %v342
    %v349 = vadd.f32 %v301, %v343
    %v350 = vadd.f32 %v302, %v344
    %v351 = vadd.f32 %v303, %v345
    %v352 = vadd.f32 %v304, %v346
    %s353 = sld [smem:[#allocation7 + $0x5]]
    %v354 = vstv %s353
    %v355 = vmul.f32 %v354, %v319
    %v356 = vmul.f32 %v354, %v320
    %v357 = vmul.f32 %v354, %v321
    %v358 = vmul.f32 %v354, %v322
    %v359 = vmul.f32 %v354, %v323
    %v360 = vmul.f32 %v354, %v324
    %v361 = vadd.f32 %v313, %v355
    %v362 = vadd.f32 %v314, %v356
    %v363 = vadd.f32 %v315, %v357
    %v364 = vadd.f32 %v316, %v358
    %v365 = vadd.f32 %v317, %v359
    %v366 = vadd.f32 %v318, %v360
    %v367 = vld [vmem:[#allocation2 + $0x2] sm:$0xff]
    %v368 = vld [vmem:[#allocation2 + $0xa] sm:$0xff]
    %v369 = vld [vmem:[#allocation2 + $0x12] sm:$0x3f]
    %v370 = vld [vmem:[#allocation2 + $0x62] sm:$0xff]
    %v371 = vld [vmem:[#allocation2 + $0x6a] sm:$0xff]
    %v372 = vld [vmem:[#allocation2 + $0x72] sm:$0x3f]
    %s373 = sld [smem:[#allocation7 + $0x6]]
    %v374 = vstv %s373
    %v375 = vmul.f32 %v374, %v367
    %v376 = vmul.f32 %v374, %v368
    %v377 = vmul.f32 %v374, %v369
    %v378 = vmul.f32 %v374, %v370
    %v379 = vmul.f32 %v374, %v371
    %v380 = vmul.f32 %v374, %v372
    %v381 = vadd.f32 %v333, %v375
    %v382 = vadd.f32 %v334, %v376
    %v383 = vadd.f32 %v335, %v377
    %v384 = vadd.f32 %v336, %v378
    %v385 = vadd.f32 %v337, %v379
    %v386 = vadd.f32 %v338, %v380
    %s387 = sld [smem:[#allocation7 + $0x7]]
    %v388 = vstv %s387
    %v389 = vmul.f32 %v388, %v367
    %v390 = vmul.f32 %v388, %v368
    %v391 = vmul.f32 %v388, %v369
    %v392 = vmul.f32 %v388, %v370
    %v393 = vmul.f32 %v388, %v371
    %v394 = vmul.f32 %v388, %v372
    %v395 = vadd.f32 %v347, %v389
    %v396 = vadd.f32 %v348, %v390
    %v397 = vadd.f32 %v349, %v391
    %v398 = vadd.f32 %v350, %v392
    %v399 = vadd.f32 %v351, %v393
    %v400 = vadd.f32 %v352, %v394
    %s401 = sld [smem:[#allocation7 + $0x8]]
    %v402 = vstv %s401
    %v403 = vmul.f32 %v402, %v367
    %v404 = vmul.f32 %v402, %v368
    %v405 = vmul.f32 %v402, %v369
    %v406 = vmul.f32 %v402, %v370
    %v407 = vmul.f32 %v402, %v371
    %v408 = vmul.f32 %v402, %v372
    %v409 = vadd.f32 %v361, %v403
    %v410 = vadd.f32 %v362, %v404
    %v411 = vadd.f32 %v363, %v405
    %v412 = vadd.f32 %v364, %v406
    %v413 = vadd.f32 %v365, %v407
    %v414 = vadd.f32 %v366, %v408
    %s415 = scalar_lea.vmem [#allocation2], 24
    %v416 = vld [vmem:[%s415] sm:$0xff]
    %v417 = vld [vmem:[%s415 + $0x8] sm:$0xff]
    %v418 = vld [vmem:[%s415 + $0x10] sm:$0x3f]
    %v419 = vld [vmem:[%s415 + $0x60] sm:$0xff]
    %v420 = vld [vmem:[%s415 + $0x68] sm:$0xff]
    %v421 = vld [vmem:[%s415 + $0x70] sm:$0x3f]
    %s422 = sld [smem:[#allocation7 + $0x9]]
    %v423 = vstv %s422
    %v424 = vmul.f32 %v423, %v416
    %v425 = vmul.f32 %v423, %v417
    %v426 = vmul.f32 %v423, %v418
    %v427 = vmul.f32 %v423, %v419
    %v428 = vmul.f32 %v423, %v420
    %v429 = vmul.f32 %v423, %v421
    %v430 = vadd.f32 %v381, %v424
    %v431 = vadd.f32 %v382, %v425
    %v432 = vadd.f32 %v383, %v426
    %v433 = vadd.f32 %v384, %v427
    %v434 = vadd.f32 %v385, %v428
    %v435 = vadd.f32 %v386, %v429
    %s436 = sld [smem:[#allocation7 + $0xa]]
    %v437 = vstv %s436
    %v438 = vmul.f32 %v437, %v416
    %v439 = vmul.f32 %v437, %v417
    %v440 = vmul.f32 %v437, %v418
    %v441 = vmul.f32 %v437, %v419
    %v442 = vmul.f32 %v437, %v420
    %v443 = vmul.f32 %v437, %v421
    %v444 = vadd.f32 %v395, %v438
    %v445 = vadd.f32 %v396, %v439
    %v446 = vadd.f32 %v397, %v440
    %v447 = vadd.f32 %v398, %v441
    %v448 = vadd.f32 %v399, %v442
    %v449 = vadd.f32 %v400, %v443
    %s450 = sld [smem:[#allocation7 + $0xb]]
    %v451 = vstv %s450
    %v452 = vmul.f32 %v451, %v416
    %v453 = vmul.f32 %v451, %v417
    %v454 = vmul.f32 %v451, %v418
    %v455 = vmul.f32 %v451, %v419
    %v456 = vmul.f32 %v451, %v420
    %v457 = vmul.f32 %v451, %v421
    %v458 = vadd.f32 %v409, %v452
    %v459 = vadd.f32 %v410, %v453
    %v460 = vadd.f32 %v411, %v454
    %v461 = vadd.f32 %v412, %v455
    %v462 = vadd.f32 %v413, %v456
    %v463 = vadd.f32 %v414, %v457
    %v464 = vld [vmem:[%s415 + $0x1] sm:$0xff]
    %v465 = vld [vmem:[%s415 + $0x9] sm:$0xff]
    %v466 = vld [vmem:[%s415 + $0x11] sm:$0x3f]
    %v467 = vld [vmem:[%s415 + $0x61] sm:$0xff]
    %v468 = vld [vmem:[%s415 + $0x69] sm:$0xff]
    %v469 = vld [vmem:[%s415 + $0x71] sm:$0x3f]
    %s470 = sld [smem:[#allocation7 + $0xc]]
    %v471 = vstv %s470
    %v472 = vmul.f32 %v471, %v464
    %v473 = vmul.f32 %v471, %v465
    %v474 = vmul.f32 %v471, %v466
    %v475 = vmul.f32 %v471, %v467
    %v476 = vmul.f32 %v471, %v468
    %v477 = vmul.f32 %v471, %v469
    %v478 = vadd.f32 %v430, %v472
    %v479 = vadd.f32 %v431, %v473
    %v480 = vadd.f32 %v432, %v474
    %v481 = vadd.f32 %v433, %v475
    %v482 = vadd.f32 %v434, %v476
    %v483 = vadd.f32 %v435, %v477
    %s484 = sld [smem:[#allocation7 + $0xd]]
    %v485 = vstv %s484
    %v486 = vmul.f32 %v485, %v464
    %v487 = vmul.f32 %v485, %v465
    %v488 = vmul.f32 %v485, %v466
    %v489 = vmul.f32 %v485, %v467
    %v490 = vmul.f32 %v485, %v468
    %v491 = vmul.f32 %v485, %v469
    %v492 = vadd.f32 %v444, %v486
    %v493 = vadd.f32 %v445, %v487
    %v494 = vadd.f32 %v446, %v488
    %v495 = vadd.f32 %v447, %v489
    %v496 = vadd.f32 %v448, %v490
    %v497 = vadd.f32 %v449, %v491
    %s498 = sld [smem:[#allocation7 + $0xe]]
    %v499 = vstv %s498
    %v500 = vmul.f32 %v499, %v464
    %v501 = vmul.f32 %v499, %v465
    %v502 = vmul.f32 %v499, %v466
    %v503 = vmul.f32 %v499, %v467
    %v504 = vmul.f32 %v499, %v468
    %v505 = vmul.f32 %v499, %v469
    %v506 = vadd.f32 %v458, %v500
    %v507 = vadd.f32 %v459, %v501
    %v508 = vadd.f32 %v460, %v502
    %v509 = vadd.f32 %v461, %v503
    %v510 = vadd.f32 %v462, %v504
    %v511 = vadd.f32 %v463, %v505
    %v512 = vld [vmem:[%s415 + $0x2] sm:$0xff]
    %v513 = vld [vmem:[%s415 + $0xa] sm:$0xff]
    %v514 = vld [vmem:[%s415 + $0x12] sm:$0x3f]
    %v515 = vld [vmem:[%s415 + $0x62] sm:$0xff]
    %v516 = vld [vmem:[%s415 + $0x6a] sm:$0xff]
    %v517 = vld [vmem:[%s415 + $0x72] sm:$0x3f]
    %s518 = sld [smem:[#allocation7 + $0xf]]
    %v519 = vstv %s518
    %v520 = vmul.f32 %v519, %v512
    %v521 = vmul.f32 %v519, %v513
    %v522 = vmul.f32 %v519, %v514
    %v523 = vmul.f32 %v519, %v515
    %v524 = vmul.f32 %v519, %v516
    %v525 = vmul.f32 %v519, %v517
    %v526 = vadd.f32 %v478, %v520
    %v527 = vadd.f32 %v479, %v521
    %v528 = vadd.f32 %v480, %v522
    %v529 = vadd.f32 %v481, %v523
    %v530 = vadd.f32 %v482, %v524
    %v531 = vadd.f32 %v483, %v525
    %s532 = sld [smem:[#allocation7 + $0x10]]
    %v533 = vstv %s532
    %v534 = vmul.f32 %v533, %v512
    %v535 = vmul.f32 %v533, %v513
    %v536 = vmul.f32 %v533, %v514
    %v537 = vmul.f32 %v533, %v515
    %v538 = vmul.f32 %v533, %v516
    %v539 = vmul.f32 %v533, %v517
    %v540 = vadd.f32 %v492, %v534
    %v541 = vadd.f32 %v493, %v535
    %v542 = vadd.f32 %v494, %v536
    %v543 = vadd.f32 %v495, %v537
    %v544 = vadd.f32 %v496, %v538
    %v545 = vadd.f32 %v497, %v539
    %s546 = sld [smem:[#allocation7 + $0x11]]
    %v547 = vstv %s546
    %v548 = vmul.f32 %v547, %v512
    %v549 = vmul.f32 %v547, %v513
    %v550 = vmul.f32 %v547, %v514
    %v551 = vmul.f32 %v547, %v515
    %v552 = vmul.f32 %v547, %v516
    %v553 = vmul.f32 %v547, %v517
    %v554 = vadd.f32 %v506, %v548
    %v555 = vadd.f32 %v507, %v549
    %v556 = vadd.f32 %v508, %v550
    %v557 = vadd.f32 %v509, %v551
    %v558 = vadd.f32 %v510, %v552
    %v559 = vadd.f32 %v511, %v553
    %s560 = scalar_lea.vmem [#allocation2], 48
    %v561 = vld [vmem:[%s560] sm:$0xff]
    %v562 = vld [vmem:[%s560 + $0x8] sm:$0xff]
    %v563 = vld [vmem:[%s560 + $0x10] sm:$0x3f]
    %v564 = vld [vmem:[%s560 + $0x60] sm:$0xff]
    %v565 = vld [vmem:[%s560 + $0x68] sm:$0xff]
    %v566 = vld [vmem:[%s560 + $0x70] sm:$0x3f]
    %s567 = sld [smem:[#allocation7 + $0x12]]
    %v568 = vstv %s567
    %v569 = vmul.f32 %v568, %v561
    %v570 = vmul.f32 %v568, %v562
    %v571 = vmul.f32 %v568, %v563
    %v572 = vmul.f32 %v568, %v564
    %v573 = vmul.f32 %v568, %v565
    %v574 = vmul.f32 %v568, %v566
    %v575 = vadd.f32 %v526, %v569
    %v576 = vadd.f32 %v527, %v570
    %v577 = vadd.f32 %v528, %v571
    %v578 = vadd.f32 %v529, %v572
    %v579 = vadd.f32 %v530, %v573
    %v580 = vadd.f32 %v531, %v574
    %s581 = sld [smem:[#allocation7 + $0x13]]
    %v582 = vstv %s581
    %v583 = vmul.f32 %v582, %v561
    %v584 = vmul.f32 %v582, %v562
    %v585 = vmul.f32 %v582, %v563
    %v586 = vmul.f32 %v582, %v564
    %v587 = vmul.f32 %v582, %v565
    %v588 = vmul.f32 %v582, %v566
    %v589 = vadd.f32 %v540, %v583
    %v590 = vadd.f32 %v541, %v584
    %v591 = vadd.f32 %v542, %v585
    %v592 = vadd.f32 %v543, %v586
    %v593 = vadd.f32 %v544, %v587
    %v594 = vadd.f32 %v545, %v588
    %s595 = sld [smem:[#allocation7 + $0x14]]
    %v596 = vstv %s595
    %v597 = vmul.f32 %v596, %v561
    %v598 = vmul.f32 %v596, %v562
    %v599 = vmul.f32 %v596, %v563
    %v600 = vmul.f32 %v596, %v564
    %v601 = vmul.f32 %v596, %v565
    %v602 = vmul.f32 %v596, %v566
    %v603 = vadd.f32 %v554, %v597
    %v604 = vadd.f32 %v555, %v598
    %v605 = vadd.f32 %v556, %v599
    %v606 = vadd.f32 %v557, %v600
    %v607 = vadd.f32 %v558, %v601
    %v608 = vadd.f32 %v559, %v602
    %v609 = vld [vmem:[%s560 + $0x1] sm:$0xff]
    %v610 = vld [vmem:[%s560 + $0x9] sm:$0xff]
    %v611 = vld [vmem:[%s560 + $0x11] sm:$0x3f]
    %v612 = vld [vmem:[%s560 + $0x61] sm:$0xff]
    %v613 = vld [vmem:[%s560 + $0x69] sm:$0xff]
    %v614 = vld [vmem:[%s560 + $0x71] sm:$0x3f]
    %s615 = sld [smem:[#allocation7 + $0x15]]
    %v616 = vstv %s615
    %v617 = vmul.f32 %v616, %v609
    %v618 = vmul.f32 %v616, %v610
    %v619 = vmul.f32 %v616, %v611
    %v620 = vmul.f32 %v616, %v612
    %v621 = vmul.f32 %v616, %v613
    %v622 = vmul.f32 %v616, %v614
    %v623 = vadd.f32 %v575, %v617
    %v624 = vadd.f32 %v576, %v618
    %v625 = vadd.f32 %v577, %v619
    %v626 = vadd.f32 %v578, %v620
    %v627 = vadd.f32 %v579, %v621
    %v628 = vadd.f32 %v580, %v622
    %s629 = sld [smem:[#allocation7 + $0x16]]
    %v630 = vstv %s629
    %v631 = vmul.f32 %v630, %v609
    %v632 = vmul.f32 %v630, %v610
    %v633 = vmul.f32 %v630, %v611
    %v634 = vmul.f32 %v630, %v612
    %v635 = vmul.f32 %v630, %v613
    %v636 = vmul.f32 %v630, %v614
    %v637 = vadd.f32 %v589, %v631
    %v638 = vadd.f32 %v590, %v632
    %v639 = vadd.f32 %v591, %v633
    %v640 = vadd.f32 %v592, %v634
    %v641 = vadd.f32 %v593, %v635
    %v642 = vadd.f32 %v594, %v636
    %s643 = sld [smem:[#allocation7 + $0x17]]
    %v644 = vstv %s643
    %v645 = vmul.f32 %v644, %v609
    %v646 = vmul.f32 %v644, %v610
    %v647 = vmul.f32 %v644, %v611
    %v648 = vmul.f32 %v644, %v612
    %v649 = vmul.f32 %v644, %v613
    %v650 = vmul.f32 %v644, %v614
    %v651 = vadd.f32 %v603, %v645
    %v652 = vadd.f32 %v604, %v646
    %v653 = vadd.f32 %v605, %v647
    %v654 = vadd.f32 %v606, %v648
    %v655 = vadd.f32 %v607, %v649
    %v656 = vadd.f32 %v608, %v650
    %v657 = vld [vmem:[%s560 + $0x2] sm:$0xff]
    %v658 = vld [vmem:[%s560 + $0xa] sm:$0xff]
    %v659 = vld [vmem:[%s560 + $0x12] sm:$0x3f]
    %v660 = vld [vmem:[%s560 + $0x62] sm:$0xff]
    %v661 = vld [vmem:[%s560 + $0x6a] sm:$0xff]
    %v662 = vld [vmem:[%s560 + $0x72] sm:$0x3f]
    %s663 = sld [smem:[#allocation7 + $0x18]]
    %v664 = vstv %s663
    %v665 = vmul.f32 %v664, %v657
    %v666 = vmul.f32 %v664, %v658
    %v667 = vmul.f32 %v664, %v659
    %v668 = vmul.f32 %v664, %v660
    %v669 = vmul.f32 %v664, %v661
    %v670 = vmul.f32 %v664, %v662
    %v671 = vadd.f32 %v623, %v665
    %v672 = vadd.f32 %v624, %v666
    %v673 = vadd.f32 %v625, %v667
    %v674 = vadd.f32 %v626, %v668
    %v675 = vadd.f32 %v627, %v669
    %v676 = vadd.f32 %v628, %v670
    %s677 = sld [smem:[#allocation7 + $0x19]]
    %v678 = vstv %s677
    %v679 = vmul.f32 %v678, %v657
    %v680 = vmul.f32 %v678, %v658
    %v681 = vmul.f32 %v678, %v659
    %v682 = vmul.f32 %v678, %v660
    %v683 = vmul.f32 %v678, %v661
    %v684 = vmul.f32 %v678, %v662
    %v685 = vadd.f32 %v637, %v679
    %v686 = vadd.f32 %v638, %v680
    %v687 = vadd.f32 %v639, %v681
    %v688 = vadd.f32 %v640, %v682
    %v689 = vadd.f32 %v641, %v683
    %v690 = vadd.f32 %v642, %v684
    %s691 = sld [smem:[#allocation7 + $0x1a]]
    %v692 = vstv %s691
    %v693 = vmul.f32 %v692, %v657
    %v694 = vmul.f32 %v692, %v658
    %v695 = vmul.f32 %v692, %v659
    %v696 = vmul.f32 %v692, %v660
    %v697 = vmul.f32 %v692, %v661
    %v698 = vmul.f32 %v692, %v662
    %v699 = vadd.f32 %v651, %v693
    %v700 = vadd.f32 %v652, %v694
    %v701 = vadd.f32 %v653, %v695
    %v702 = vadd.f32 %v654, %v696
    %v703 = vadd.f32 %v655, %v697
    %v704 = vadd.f32 %v656, %v698
    %s705 = scalar_lea.vmem [#allocation2], 72
    %v706 = vld [vmem:[%s705] sm:$0xff]
    %v707 = vld [vmem:[%s705 + $0x8] sm:$0xff]
    %v708 = vld [vmem:[%s705 + $0x10] sm:$0x3f]
    %v709 = vld [vmem:[%s705 + $0x60] sm:$0xff]
    %v710 = vld [vmem:[%s705 + $0x68] sm:$0xff]
    %v711 = vld [vmem:[%s705 + $0x70] sm:$0x3f]
    %s712 = sld [smem:[#allocation7 + $0x1b]]
    %v713 = vstv %s712
    %v714 = vmul.f32 %v713, %v706
    %v715 = vmul.f32 %v713, %v707
    %v716 = vmul.f32 %v713, %v708
    %v717 = vmul.f32 %v713, %v709
    %v718 = vmul.f32 %v713, %v710
    %v719 = vmul.f32 %v713, %v711
    %v720 = vadd.f32 %v671, %v714
    %v721 = vadd.f32 %v672, %v715
    %v722 = vadd.f32 %v673, %v716
    %v723 = vadd.f32 %v674, %v717
    %v724 = vadd.f32 %v675, %v718
    %v725 = vadd.f32 %v676, %v719
    %s726 = sld [smem:[#allocation7 + $0x1c]]
    %v727 = vstv %s726
    %v728 = vmul.f32 %v727, %v706
    %v729 = vmul.f32 %v727, %v707
    %v730 = vmul.f32 %v727, %v708
    %v731 = vmul.f32 %v727, %v709
    %v732 = vmul.f32 %v727, %v710
    %v733 = vmul.f32 %v727, %v711
    %v734 = vadd.f32 %v685, %v728
    %v735 = vadd.f32 %v686, %v729
    %v736 = vadd.f32 %v687, %v730
    %v737 = vadd.f32 %v688, %v731
    %v738 = vadd.f32 %v689, %v732
    %v739 = vadd.f32 %v690, %v733
    %s740 = sld [smem:[#allocation7 + $0x1d]]
    %v741 = vstv %s740
    %v742 = vmul.f32 %v741, %v706
    %v743 = vmul.f32 %v741, %v707
    %v744 = vmul.f32 %v741, %v708
    %v745 = vmul.f32 %v741, %v709
    %v746 = vmul.f32 %v741, %v710
    %v747 = vmul.f32 %v741, %v711
    %v748 = vadd.f32 %v699, %v742
    %v749 = vadd.f32 %v700, %v743
    %v750 = vadd.f32 %v701, %v744
    %v751 = vadd.f32 %v702, %v745
    %v752 = vadd.f32 %v703, %v746
    %v753 = vadd.f32 %v704, %v747
    %v754 = vld [vmem:[%s705 + $0x1] sm:$0xff]
    %v755 = vld [vmem:[%s705 + $0x9] sm:$0xff]
    %v756 = vld [vmem:[%s705 + $0x11] sm:$0x3f]
    %v757 = vld [vmem:[%s705 + $0x61] sm:$0xff]
    %v758 = vld [vmem:[%s705 + $0x69] sm:$0xff]
    %v759 = vld [vmem:[%s705 + $0x71] sm:$0x3f]
    %s760 = sld [smem:[#allocation7 + $0x1e]]
    %v761 = vstv %s760
    %v762 = vmul.f32 %v761, %v754
    %v763 = vmul.f32 %v761, %v755
    %v764 = vmul.f32 %v761, %v756
    %v765 = vmul.f32 %v761, %v757
    %v766 = vmul.f32 %v761, %v758
    %v767 = vmul.f32 %v761, %v759
    %v768 = vadd.f32 %v720, %v762
    %v769 = vadd.f32 %v721, %v763
    %v770 = vadd.f32 %v722, %v764
    %v771 = vadd.f32 %v723, %v765
    %v772 = vadd.f32 %v724, %v766
    %v773 = vadd.f32 %v725, %v767
    %s774 = sld [smem:[#allocation7 + $0x1f]]
    %v775 = vstv %s774
    %v776 = vmul.f32 %v775, %v754
    %v777 = vmul.f32 %v775, %v755
    %v778 = vmul.f32 %v775, %v756
    %v779 = vmul.f32 %v775, %v757
    %v780 = vmul.f32 %v775, %v758
    %v781 = vmul.f32 %v775, %v759
    %v782 = vadd.f32 %v734, %v776
    %v783 = vadd.f32 %v735, %v777
    %v784 = vadd.f32 %v736, %v778
    %v785 = vadd.f32 %v737, %v779
    %v786 = vadd.f32 %v738, %v780
    %v787 = vadd.f32 %v739, %v781
    %s788 = sld [smem:[#allocation7 + $0x20]]
    %v789 = vstv %s788
    %v790 = vmul.f32 %v789, %v754
    %v791 = vmul.f32 %v789, %v755
    %v792 = vmul.f32 %v789, %v756
    %v793 = vmul.f32 %v789, %v757
    %v794 = vmul.f32 %v789, %v758
    %v795 = vmul.f32 %v789, %v759
    %v796 = vadd.f32 %v748, %v790
    %v797 = vadd.f32 %v749, %v791
    %v798 = vadd.f32 %v750, %v792
    %v799 = vadd.f32 %v751, %v793
    %v800 = vadd.f32 %v752, %v794
    %v801 = vadd.f32 %v753, %v795
    %v802 = vld [vmem:[%s705 + $0x2] sm:$0xff]
    %v803 = vld [vmem:[%s705 + $0xa] sm:$0xff]
    %v804 = vld [vmem:[%s705 + $0x12] sm:$0x3f]
    %v805 = vld [vmem:[%s705 + $0x62] sm:$0xff]
    %v806 = vld [vmem:[%s705 + $0x6a] sm:$0xff]
    %v807 = vld [vmem:[%s705 + $0x72] sm:$0x3f]
    %s808 = sld [smem:[#allocation7 + $0x21]]
    %v809 = vstv %s808
    %v810 = vmul.f32 %v809, %v802
    %v811 = vmul.f32 %v809, %v803
    %v812 = vmul.f32 %v809, %v804
    %v813 = vmul.f32 %v809, %v805
    %v814 = vmul.f32 %v809, %v806
    %v815 = vmul.f32 %v809, %v807
    %v816 = vadd.f32 %v768, %v810
    %v817 = vadd.f32 %v769, %v811
    %v818 = vadd.f32 %v770, %v812
    %v819 = vadd.f32 %v771, %v813
    %v820 = vadd.f32 %v772, %v814
    %v821 = vadd.f32 %v773, %v815
    %s822 = sld [smem:[#allocation7 + $0x22]]
    %v823 = vstv %s822
    %v824 = vmul.f32 %v823, %v802
    %v825 = vmul.f32 %v823, %v803
    %v826 = vmul.f32 %v823, %v804
    %v827 = vmul.f32 %v823, %v805
    %v828 = vmul.f32 %v823, %v806
    %v829 = vmul.f32 %v823, %v807
    %v830 = vadd.f32 %v782, %v824
    %v831 = vadd.f32 %v783, %v825
    %v832 = vadd.f32 %v784, %v826
    %v833 = vadd.f32 %v785, %v827
    %v834 = vadd.f32 %v786, %v828
    %v835 = vadd.f32 %v787, %v829
    %s836 = sld [smem:[#allocation7 + $0x23]]
    %v837 = vstv %s836
    %v838 = vmul.f32 %v837, %v802
    %v839 = vmul.f32 %v837, %v803
    %v840 = vmul.f32 %v837, %v804
    %v841 = vmul.f32 %v837, %v805
    %v842 = vmul.f32 %v837, %v806
    %v843 = vmul.f32 %v837, %v807
    %v844 = vadd.f32 %v796, %v838
    %v845 = vadd.f32 %v797, %v839
    %v846 = vadd.f32 %v798, %v840
    %v847 = vadd.f32 %v799, %v841
    %v848 = vadd.f32 %v800, %v842
    %v849 = vadd.f32 %v801, %v843
    %s850 = sld [smem:[#allocation8]]
    %v851 = vld [vmem:[#allocation12] sm:$0xff]
    %v852 = vld [vmem:[#allocation12 + $0x8] sm:$0xff]
    %v853 = vld [vmem:[#allocation12 + $0x10] sm:$0xff]
    %v854 = vld [vmem:[#allocation12 + $0x18] sm:$0xff]
    %v855 = vld [vmem:[#allocation12 + $0x20] sm:$0xff]
    %v856 = vld [vmem:[#allocation12 + $0x28] sm:$0xff]
    %v857 = vld [vmem:[#allocation12 + $0x30] sm:$0xff]
    %v858 = vld [vmem:[#allocation12 + $0x38] sm:$0xff]
    %v859 = vld [vmem:[#allocation12 + $0x40] sm:$0xff]
    %v860 = vld [vmem:[#allocation12 + $0x48] sm:$0xff]
    %v861 = vld [vmem:[#allocation12 + $0x50] sm:$0xff]
    %v862 = vld [vmem:[#allocation12 + $0x58] sm:$0xff]
    %v863 = vld [vmem:[#allocation12 + $0x60] sm:$0xff]
    %v864 = vld [vmem:[#allocation12 + $0x68] sm:$0xff]
    %v865 = vld [vmem:[#allocation12 + $0x70] sm:$0xff]
    %v866 = vld [vmem:[#allocation12 + $0x78] sm:$0xff]
    %v867 = vld [vmem:[#allocation12 + $0x80] sm:$0xff]
    %v868 = vld [vmem:[#allocation12 + $0x88] sm:$0xff]
    %v869 = vld [vmem:[#allocation12 + $0x90] sm:$0xff]
    %v870 = vld [vmem:[#allocation12 + $0x98] sm:$0xff]
    %v871 = vld [vmem:[#allocation12 + $0xa0] sm:$0xff]
    %v872 = vld [vmem:[#allocation12 + $0xa8] sm:$0xff]
    %v873 = vld [vmem:[#allocation12 + $0xb0] sm:$0xff]
    %v874 = vld [vmem:[#allocation12 + $0xb8] sm:$0xff]
    %v875 = vld [vmem:[#allocation12 + $0xc0] sm:$0xff]
    %v876 = vld [vmem:[#allocation12 + $0xc8] sm:$0xff]
    %v877 = vld [vmem:[#allocation12 + $0xd0] sm:$0xff]
    %v878 = vld [vmem:[#allocation12 + $0xd8] sm:$0xff]
    %v879 = vld [vmem:[#allocation12 + $0xe0] sm:$0xff]
    %v880 = vld [vmem:[#allocation12 + $0xe8] sm:$0xff]
    %v881 = vld [vmem:[#allocation12 + $0xf0] sm:$0xff]
    %v882 = vld [vmem:[#allocation12 + $0xf8] sm:$0xff]
    %v883 = vld [vmem:[#allocation12 + $0x100] sm:$0xff]
    %v884 = vld [vmem:[#allocation12 + $0x108] sm:$0xff]
    %v885 = vld [vmem:[#allocation12 + $0x110] sm:$0xff]
    %v886 = vld [vmem:[#allocation12 + $0x118] sm:$0xff]
    %v887 = vld [vmem:[#allocation12 + $0x120] sm:$0xff]
    %v888 = vld [vmem:[#allocation12 + $0x128] sm:$0xff]
    %v889 = vld [vmem:[#allocation12 + $0x130] sm:$0xff]
    %v890 = vld [vmem:[#allocation12 + $0x138] sm:$0xff]
    %v891 = vld [vmem:[#allocation12 + $0x140] sm:$0xff]
    %v892 = vld [vmem:[#allocation12 + $0x148] sm:$0xff]
    %v893 = vld [vmem:[#allocation12 + $0x150] sm:$0xff]
    %v894 = vld [vmem:[#allocation12 + $0x158] sm:$0xff]
    %v895 = vld [vmem:[#allocation12 + $0x160] sm:$0xff]
    %v896 = vld [vmem:[#allocation12 + $0x168] sm:$0xff]
    %v897 = vld [vmem:[#allocation12 + $0x170] sm:$0xff]
    %v898 = vld [vmem:[#allocation12 + $0x178] sm:$0xff]
    %v899 = vld [vmem:[#allocation12 + $0x180] sm:$0xff]
    %v900 = vld [vmem:[#allocation12 + $0x188] sm:$0xff]
    %v901 = vld [vmem:[#allocation12 + $0x190] sm:$0xff]
    %v902 = vld [vmem:[#allocation12 + $0x198] sm:$0xff]
    %v903 = vld [vmem:[#allocation12 + $0x1a0] sm:$0xff]
    %v904 = vld [vmem:[#allocation12 + $0x1a8] sm:$0xff]
    %v905 = vld [vmem:[#allocation12 + $0x1b0] sm:$0xff]
    %v906 = vld [vmem:[#allocation12 + $0x1b8] sm:$0xff]
    %v907 = vld [vmem:[#allocation12 + $0x1c0] sm:$0xff]
    %v908 = vld [vmem:[#allocation12 + $0x1c8] sm:$0xff]
    %v909 = vld [vmem:[#allocation12 + $0x1d0] sm:$0xff]
    %v910 = vld [vmem:[#allocation12 + $0x1d8] sm:$0xff]
    %v911 = vld [vmem:[#allocation12 + $0x1e0] sm:$0xff]
    %v912 = vld [vmem:[#allocation12 + $0x1e8] sm:$0xff]
    %v913 = vld [vmem:[#allocation12 + $0x1f0] sm:$0xff]
    %v914 = vld [vmem:[#allocation12 + $0x1f8] sm:$0xff]
    %v915 = vld [vmem:[#allocation12 + $0x200] sm:$0xff]
    %v916 = vld [vmem:[#allocation12 + $0x208] sm:$0xff]
    %v917 = vld [vmem:[#allocation12 + $0x210] sm:$0xff]
    %v918 = vld [vmem:[#allocation12 + $0x218] sm:$0xff]
    %v919 = vld [vmem:[#allocation12 + $0x220] sm:$0xff]
    %v920 = vld [vmem:[#allocation12 + $0x228] sm:$0xff]
    %v921 = vld [vmem:[#allocation12 + $0x230] sm:$0xff]
    %v922 = vld [vmem:[#allocation12 + $0x238] sm:$0xff]
    %v923 = vld [vmem:[#allocation12 + $0x240] sm:$0xff]
    %v924 = vld [vmem:[#allocation12 + $0x248] sm:$0xff]
    %v925 = vld [vmem:[#allocation12 + $0x250] sm:$0xff]
    %v926 = vld [vmem:[#allocation12 + $0x258] sm:$0xff]
    %v927 = vld [vmem:[#allocation12 + $0x260] sm:$0xff]
    %v928 = vld [vmem:[#allocation12 + $0x268] sm:$0xff]
    %v929 = vld [vmem:[#allocation12 + $0x270] sm:$0xff]
    %v930 = vld [vmem:[#allocation12 + $0x278] sm:$0xff]
    %v931 = vld [vmem:[#allocation12 + $0x280] sm:$0xff]
    %v932 = vld [vmem:[#allocation12 + $0x288] sm:$0xff]
    %v933 = vld [vmem:[#allocation12 + $0x290] sm:$0xff]
    %v934 = vld [vmem:[#allocation12 + $0x298] sm:$0xff]
    %v935 = vld [vmem:[#allocation12 + $0x2a0] sm:$0xff]
    %v936 = vld [vmem:[#allocation12 + $0x2a8] sm:$0xff]
    %v937 = vld [vmem:[#allocation12 + $0x2b0] sm:$0xff]
    %v938 = vld [vmem:[#allocation12 + $0x2b8] sm:$0xff]
    %v939 = vld [vmem:[#allocation12 + $0x2c0] sm:$0xff]
    %v940 = vld [vmem:[#allocation12 + $0x2c8] sm:$0xff]
    %vm941 = vcmask 195584
    %v943 = vsel %vm941, %v830, 0
    %v946 = vsel %vm941, %v831, 0
    %v949 = vsel %vm941, %v832, 0
    %951 = vmatprep.subr.mxu0 0.0
    %952 = vmatpush1.msra.mxu0 0.0
    %953 = vmatprep.subr.mxu0 0.0
    %954 = vmatpush1.msra.mxu0 0.0
    %955 = vmatprep.subr.mxu0 0.0
    %956 = vmatpush1.msra.mxu0 0.0
    %957 = vmatprep.subr.mxu0 0.0
    %958 = vmatpush1.msra.mxu0 0.0
    %959 = vmatprep.subr.mxu0 0.0
    %960 = vmatpush1.msra.mxu0 0.0
    %961 = vmatprep.subr.mxu0 0.0
    %962 = vmatpush1.msra.mxu0 0.0
    %963 = vmatprep.subr.mxu0 0.0
    %964 = vmatpush1.msra.mxu0 0.0
    %965 = vmatprep.subr.mxu0 0.0
    %966 = vmatpush1.msra.mxu0 0.0
    %967 = vmatprep.subr.mxu0 0.0
    %968 = vmatpush1.msra.mxu0 0.0
    %969 = vmatprep.subr.mxu0 0.0
    %970 = vmatpush1.msra.mxu0 0.0
    %971 = vmatprep.subr.mxu0 0.0
    %972 = vmatpush1.msra.mxu0 0.0
    %973 = vmatprep.subr.mxu0 0.0
    %974 = vmatpush1.msra.mxu0 0.0
    %975 = vmatprep.subr.mxu0 0.0
    %976 = vmatpush1.msra.mxu0 0.0
    %977 = vmatprep.subr.mxu0 0.0
    %978 = vmatpush1.msra.mxu0 %v146
    %979 = vmatprep.subr.mxu0 0.0
    %980 = vmatpush1.msra.mxu0 %v145
    %981 = vmatprep.subr.mxu0 0.0
    %982 = vmatpush1.msra.mxu0 %v144
    %983 = vmatprep.subr.mxu0 0.0
    %984 = vmatpush2.msra.mxu0 0.0
    %985 = vmatprep.subr.mxu0 0.0
    %986 = vmatpush2.msra.mxu0 0.0
    %987 = vmatprep.subr.mxu0 0.0
    %988 = vmatpush2.msra.mxu0 0.0
    %989 = vmatprep.subr.mxu0 0.0
    %990 = vmatpush2.msra.mxu0 0.0
    %991 = vmatprep.subr.mxu0 0.0
    %992 = vmatpush2.msra.mxu0 0.0
    %993 = vmatprep.subr.mxu0 0.0
    %994 = vmatpush2.msra.mxu0 0.0
    %995 = vmatprep.subr.mxu0 0.0
    %996 = vmatpush2.msra.mxu0 0.0
    %997 = vmatprep.subr.mxu0 0.0
    %998 = vmatpush2.msra.mxu0 0.0
    %999 = vmatprep.subr.mxu0 0.0
    %1000 = vmatpush2.msra.mxu0 0.0
    %1001 = vmatprep.subr.mxu0 0.0
    %1002 = vmatpush2.msra.mxu0 0.0
    %1003 = vmatprep.subr.mxu0 0.0
    %1004 = vmatpush2.msra.mxu0 0.0
    %1005 = vmatprep.subr.mxu0 0.0
    %1006 = vmatpush2.msra.mxu0 0.0
    %1007 = vmatprep.subr.mxu0 0.0
    %1008 = vmatpush2.msra.mxu0 0.0
    %1009 = vmatprep.subr.mxu0 0.0
    %1010 = vmatpush2.msra.mxu0 0.0
    %1011 = vmatprep.subr.mxu0 0.0
    %1012 = vmatpush2.msra.mxu0 0.0
    %1013 = vmatprep.subr.mxu0 0.0
    %1014 = vmatpush2.msra.mxu0 0.0
    %1015 = vmatprep.mubr.f32.mxu0 0.0
    %1016 = vmatmul.mubr.f32.gmra.mxu0 %v943
    %v1017 = vpop.f32.mrf.mxu0
    %v1018 = vadd.f32 0.0, %v1017
    %v1019 = vpop.f32.mrf.mxu0
    %1020 = vmatprep.mubr.f32.mxu0 0.0
    %1021 = vmatmul.mubr.f32.gmra.mxu0 %v946
    %v1022 = vpop.f32.mrf.mxu0
    %v1023 = vadd.f32 0.0, %v1022
    %v1024 = vpop.f32.mrf.mxu0
    %1025 = vmatprep.mubr.f32.mxu0 0.0
    %1026 = vmatmul.mubr.f32.gmra.mxu0 %v949
    %v1027 = vpop.f32.mrf.mxu0
    %v1028 = vadd.f32 0.0, %v1027
    %v1029 = vpop.f32.mrf.mxu0
    %1030 = vdwg.mxu0
    %v1031 = vadd.f32 %v816, %v1018
    %v1032 = vadd.f32 %v817, %v1023
    %v1033 = vadd.f32 %v818, %v1028
    %v1035 = vsel %vm941, %v844, 0
    %v1038 = vsel %vm941, %v845, 0
    %v1041 = vsel %vm941, %v846, 0
    %1043 = vmatprep.subr.mxu0 0.0
    %1044 = vmatpush1.msra.mxu0 0.0
    %1045 = vmatprep.subr.mxu0 0.0
    %1046 = vmatpush1.msra.mxu0 0.0
    %1047 = vmatprep.subr.mxu0 0.0
    %1048 = vmatpush1.msra.mxu0 0.0
    %1049 = vmatprep.subr.mxu0 0.0
    %1050 = vmatpush1.msra.mxu0 0.0
    %1051 = vmatprep.subr.mxu0 0.0
    %1052 = vmatpush1.msra.mxu0 0.0
    %1053 = vmatprep.subr.mxu0 0.0
    %1054 = vmatpush1.msra.mxu0 0.0
    %1055 = vmatprep.subr.mxu0 0.0
    %1056 = vmatpush1.msra.mxu0 0.0
    %1057 = vmatprep.subr.mxu0 0.0
    %1058 = vmatpush1.msra.mxu0 0.0
    %1059 = vmatprep.subr.mxu0 0.0
    %1060 = vmatpush1.msra.mxu0 0.0
    %1061 = vmatprep.subr.mxu0 0.0
    %1062 = vmatpush1.msra.mxu0 0.0
    %1063 = vmatprep.subr.mxu0 0.0
    %1064 = vmatpush1.msra.mxu0 0.0
    %1065 = vmatprep.subr.mxu0 0.0
    %1066 = vmatpush1.msra.mxu0 0.0
    %1067 = vmatprep.subr.mxu0 0.0
    %1068 = vmatpush1.msra.mxu0 0.0
    %1069 = vmatprep.subr.mxu0 0.0
    %1070 = vmatpush1.msra.mxu0 %v153
    %1071 = vmatprep.subr.mxu0 0.0
    %1072 = vmatpush1.msra.mxu0 %v152
    %1073 = vmatprep.subr.mxu0 0.0
    %1074 = vmatpush1.msra.mxu0 %v151
    %1075 = vmatprep.subr.mxu0 0.0
    %1076 = vmatpush2.msra.mxu0 0.0
    %1077 = vmatprep.subr.mxu0 0.0
    %1078 = vmatpush2.msra.mxu0 0.0
    %1079 = vmatprep.subr.mxu0 0.0
    %1080 = vmatpush2.msra.mxu0 0.0
    %1081 = vmatprep.subr.mxu0 0.0
    %1082 = vmatpush2.msra.mxu0 0.0
    %1083 = vmatprep.subr.mxu0 0.0
    %1084 = vmatpush2.msra.mxu0 0.0
    %1085 = vmatprep.subr.mxu0 0.0
    %1086 = vmatpush2.msra.mxu0 0.0
    %1087 = vmatprep.subr.mxu0 0.0
    %1088 = vmatpush2.msra.mxu0 0.0
    %1089 = vmatprep.subr.mxu0 0.0
    %1090 = vmatpush2.msra.mxu0 0.0
    %1091 = vmatprep.subr.mxu0 0.0
    %1092 = vmatpush2.msra.mxu0 0.0
    %1093 = vmatprep.subr.mxu0 0.0
    %1094 = vmatpush2.msra.mxu0 0.0
    %1095 = vmatprep.subr.mxu0 0.0
    %1096 = vmatpush2.msra.mxu0 0.0
    %1097 = vmatprep.subr.mxu0 0.0
    %1098 = vmatpush2.msra.mxu0 0.0
    %1099 = vmatprep.subr.mxu0 0.0
    %1100 = vmatpush2.msra.mxu0 0.0
    %1101 = vmatprep.subr.mxu0 0.0
    %1102 = vmatpush2.msra.mxu0 0.0
    %1103 = vmatprep.subr.mxu0 0.0
    %1104 = vmatpush2.msra.mxu0 0.0
    %1105 = vmatprep.subr.mxu0 0.0
    %1106 = vmatpush2.msra.mxu0 0.0
    %1107 = vmatprep.mubr.f32.mxu0 0.0
    %1108 = vmatmul.mubr.f32.gmra.mxu0 %v1035
    %v1109 = vpop.f32.mrf.mxu0
    %v1110 = vadd.f32 0.0, %v1109
    %v1111 = vpop.f32.mrf.mxu0
    %1112 = vmatprep.mubr.f32.mxu0 0.0
    %1113 = vmatmul.mubr.f32.gmra.mxu0 %v1038
    %v1114 = vpop.f32.mrf.mxu0
    %v1115 = vadd.f32 0.0, %v1114
    %v1116 = vpop.f32.mrf.mxu0
    %1117 = vmatprep.mubr.f32.mxu0 0.0
    %1118 = vmatmul.mubr.f32.gmra.mxu0 %v1041
    %v1119 = vpop.f32.mrf.mxu0
    %v1120 = vadd.f32 0.0, %v1119
    %v1121 = vpop.f32.mrf.mxu0
    %1122 = vdwg.mxu0
    %v1123 = vadd.f32 %v1031, %v1110
    %v1124 = vadd.f32 %v1032, %v1115
    %v1125 = vadd.f32 %v1033, %v1120
    %v1126 = vstv %s850
    %v1127 = vadd.f32 %v1123, %v1126
    %v1128 = vadd.f32 %v1124, %v1126
    %v1129 = vadd.f32 %v1125, %v1126
    %v1130 = vmax.f32 %v1127, 0.0
    %v1131 = vmax.f32 %v1128, 0.0
    %v1132 = vmax.f32 %v1129, 0.0
    %v1134 = vsel %vm941, %v1130, 0
    %v1137 = vsel %vm941, %v1131, 0
    %v1140 = vsel %vm941, %v1132, 0
    %1142 = vmatprep.subr.mxu0 0.0
    %1143 = vmatpush1.msra.mxu0 0.0
    %1144 = vmatprep.subr.mxu0 0.0
    %1145 = vmatpush1.msra.mxu0 0.0
    %1146 = vmatprep.subr.mxu0 0.0
    %1147 = vmatpush1.msra.mxu0 0.0
    %1148 = vmatprep.subr.mxu0 0.0
    %1149 = vmatpush1.msra.mxu0 0.0
    %1150 = vmatprep.subr.mxu0 0.0
    %1151 = vmatpush1.msra.mxu0 0.0
    %1152 = vmatprep.subr.mxu0 0.0
    %1153 = vmatpush1.msra.mxu0 0.0
    %1154 = vmatprep.subr.mxu0 0.0
    %1155 = vmatpush1.msra.mxu0 0.0
    %1156 = vmatprep.subr.mxu0 0.0
    %1157 = vmatpush1.msra.mxu0 0.0
    %1158 = vmatprep.subr.mxu0 0.0
    %1159 = vmatpush1.msra.mxu0 0.0
    %1160 = vmatprep.subr.mxu0 0.0
    %1161 = vmatpush1.msra.mxu0 0.0
    %1162 = vmatprep.subr.mxu0 0.0
    %1163 = vmatpush1.msra.mxu0 0.0
    %1164 = vmatprep.subr.mxu0 0.0
    %1165 = vmatpush1.msra.mxu0 0.0
    %1166 = vmatprep.subr.mxu0 0.0
    %1167 = vmatpush1.msra.mxu0 0.0
    %1168 = vmatprep.subr.mxu0 0.0
    %1169 = vmatpush1.msra.mxu0 %v167
    %1170 = vmatprep.subr.mxu0 0.0
    %1171 = vmatpush1.msra.mxu0 %v166
    %1172 = vmatprep.subr.mxu0 0.0
    %1173 = vmatpush1.msra.mxu0 %v165
    %1174 = vmatprep.subr.mxu0 0.0
    %1175 = vmatpush2.msra.mxu0 0.0
    %1176 = vmatprep.subr.mxu0 0.0
    %1177 = vmatpush2.msra.mxu0 0.0
    %1178 = vmatprep.subr.mxu0 0.0
    %1179 = vmatpush2.msra.mxu0 0.0
    %1180 = vmatprep.subr.mxu0 0.0
    %1181 = vmatpush2.msra.mxu0 0.0
    %1182 = vmatprep.subr.mxu0 0.0
    %1183 = vmatpush2.msra.mxu0 0.0
    %1184 = vmatprep.subr.mxu0 0.0
    %1185 = vmatpush2.msra.mxu0 0.0
    %1186 = vmatprep.subr.mxu0 0.0
    %1187 = vmatpush2.msra.mxu0 0.0
    %1188 = vmatprep.subr.mxu0 0.0
    %1189 = vmatpush2.msra.mxu0 0.0
    %1190 = vmatprep.subr.mxu0 0.0
    %1191 = vmatpush2.msra.mxu0 0.0
    %1192 = vmatprep.subr.mxu0 0.0
    %1193 = vmatpush2.msra.mxu0 0.0
    %1194 = vmatprep.subr.mxu0 0.0
    %1195 = vmatpush2.msra.mxu0 0.0
    %1196 = vmatprep.subr.mxu0 0.0
    %1197 = vmatpush2.msra.mxu0 0.0
    %1198 = vmatprep.subr.mxu0 0.0
    %1199 = vmatpush2.msra.mxu0 0.0
    %1200 = vmatprep.subr.mxu0 0.0
    %1201 = vmatpush2.msra.mxu0 0.0
    %1202 = vmatprep.subr.mxu0 0.0
    %1203 = vmatpush2.msra.mxu0 0.0
    %1204 = vmatprep.subr.mxu0 0.0
    %1205 = vmatpush2.msra.mxu0 0.0
    %1206 = vmatprep.mubr.f32.mxu0 0.0
    %1207 = vmatmul.mubr.f32.gmra.mxu0 %v1134
    %v1208 = vpop.f32.mrf.mxu0
    %v1209 = vadd.f32 0.0, %v1208
    %v1210 = vpop.f32.mrf.mxu0
    %1211 = vmatprep.mubr.f32.mxu0 0.0
    %1212 = vmatmul.mubr.f32.gmra.mxu0 %v1137
    %v1213 = vpop.f32.mrf.mxu0
    %v1214 = vadd.f32 0.0, %v1213
    %v1215 = vpop.f32.mrf.mxu0
    %1216 = vmatprep.mubr.f32.mxu0 0.0
    %1217 = vmatmul.mubr.f32.gmra.mxu0 %v1140
    %v1218 = vpop.f32.mrf.mxu0
    %v1219 = vadd.f32 0.0, %v1218
    %v1220 = vpop.f32.mrf.mxu0
    %1221 = vdwg.mxu0
    %1222 = vmatprep.subr.mxu0 0.0
    %1223 = vmatpush1.msra.mxu0 0.0
    %1224 = vmatprep.subr.mxu0 0.0
    %1225 = vmatpush1.msra.mxu0 0.0
    %1226 = vmatprep.subr.mxu0 0.0
    %1227 = vmatpush1.msra.mxu0 0.0
    %1228 = vmatprep.subr.mxu0 0.0
    %1229 = vmatpush1.msra.mxu0 0.0
    %1230 = vmatprep.subr.mxu0 0.0
    %1231 = vmatpush1.msra.mxu0 0.0
    %1232 = vmatprep.subr.mxu0 0.0
    %1233 = vmatpush1.msra.mxu0 0.0
    %1234 = vmatprep.subr.mxu0 0.0
    %1235 = vmatpush1.msra.mxu0 0.0
    %1236 = vmatprep.subr.mxu0 0.0
    %1237 = vmatpush1.msra.mxu0 0.0
    %1238 = vmatprep.subr.mxu0 0.0
    %1239 = vmatpush1.msra.mxu0 0.0
    %1240 = vmatprep.subr.mxu0 0.0
    %1241 = vmatpush1.msra.mxu0 0.0
    %1242 = vmatprep.subr.mxu0 0.0
    %1243 = vmatpush1.msra.mxu0 0.0
    %1244 = vmatprep.subr.mxu0 0.0
    %1245 = vmatpush1.msra.mxu0 0.0
    %1246 = vmatprep.subr.mxu0 0.0
    %1247 = vmatpush1.msra.mxu0 0.0
    %1248 = vmatprep.subr.mxu0 0.0
    %1249 = vmatpush1.msra.mxu0 %v176
    %1250 = vmatprep.subr.mxu0 0.0
    %1251 = vmatpush1.msra.mxu0 %v175
    %1252 = vmatprep.subr.mxu0 0.0
    %1253 = vmatpush1.msra.mxu0 %v174
    %1254 = vmatprep.subr.mxu0 0.0
    %1255 = vmatpush2.msra.mxu0 0.0
    %1256 = vmatprep.subr.mxu0 0.0
    %1257 = vmatpush2.msra.mxu0 0.0
    %1258 = vmatprep.subr.mxu0 0.0
    %1259 = vmatpush2.msra.mxu0 0.0
    %1260 = vmatprep.subr.mxu0 0.0
    %1261 = vmatpush2.msra.mxu0 0.0
    %1262 = vmatprep.subr.mxu0 0.0
    %1263 = vmatpush2.msra.mxu0 0.0
    %1264 = vmatprep.subr.mxu0 0.0
    %1265 = vmatpush2.msra.mxu0 0.0
    %1266 = vmatprep.subr.mxu0 0.0
    %1267 = vmatpush2.msra.mxu0 0.0
    %1268 = vmatprep.subr.mxu0 0.0
    %1269 = vmatpush2.msra.mxu0 0.0
    %1270 = vmatprep.subr.mxu0 0.0
    %1271 = vmatpush2.msra.mxu0 0.0
    %1272 = vmatprep.subr.mxu0 0.0
    %1273 = vmatpush2.msra.mxu0 0.0
    %1274 = vmatprep.subr.mxu0 0.0
    %1275 = vmatpush2.msra.mxu0 0.0
    %1276 = vmatprep.subr.mxu0 0.0
    %1277 = vmatpush2.msra.mxu0 0.0
    %1278 = vmatprep.subr.mxu0 0.0
    %1279 = vmatpush2.msra.mxu0 0.0
    %1280 = vmatprep.subr.mxu0 0.0
    %1281 = vmatpush2.msra.mxu0 0.0
    %1282 = vmatprep.subr.mxu0 0.0
    %1283 = vmatpush2.msra.mxu0 0.0
    %1284 = vmatprep.subr.mxu0 0.0
    %1285 = vmatpush2.msra.mxu0 0.0
    %1286 = vmatprep.mubr.f32.mxu0 0.0
    %1287 = vmatmul.mubr.f32.gmra.mxu0 %v1134
    %v1288 = vpop.f32.mrf.mxu0
    %v1289 = vadd.f32 0.0, %v1288
    %v1290 = vpop.f32.mrf.mxu0
    %1291 = vmatprep.mubr.f32.mxu0 0.0
    %1292 = vmatmul.mubr.f32.gmra.mxu0 %v1137
    %v1293 = vpop.f32.mrf.mxu0
    %v1294 = vadd.f32 0.0, %v1293
    %v1295 = vpop.f32.mrf.mxu0
    %1296 = vmatprep.mubr.f32.mxu0 0.0
    %1297 = vmatmul.mubr.f32.gmra.mxu0 %v1140
    %v1298 = vpop.f32.mrf.mxu0
    %v1299 = vadd.f32 0.0, %v1298
    %v1300 = vpop.f32.mrf.mxu0
    %1301 = vdwg.mxu0
    %v1302 = vmax.f32 %v1209, %v1289
    %v1303 = vmax.f32 %v1214, %v1294
    %v1304 = vmax.f32 %v1219, %v1299
    %vm1305 = vcmask 179200
    %v1307 = vsel %vm1305, %v183, 0
    %v1310 = vsel %vm1305, %v184, 0
    %vm1312 = vcmask 1045504
    %v1314 = vsel %vm1312, %v1304, 0
    %1316 = vmatprep.subr.mxu0 0.0
    %1317 = vmatpush1.msra.mxu0 0.0
    %1318 = vmatprep.subr.mxu0 0.0
    %1319 = vmatpush1.msra.mxu0 0.0
    %1320 = vmatprep.subr.mxu0 0.0
    %1321 = vmatpush1.msra.mxu0 0.0
    %1322 = vmatprep.subr.mxu0 0.0
    %1323 = vmatpush1.msra.mxu0 0.0
    %1324 = vmatprep.subr.mxu0 0.0
    %1325 = vmatpush1.msra.mxu0 0.0
    %1326 = vmatprep.subr.mxu0 0.0
    %1327 = vmatpush1.msra.mxu0 0.0
    %1328 = vmatprep.subr.mxu0 0.0
    %1329 = vmatpush1.msra.mxu0 0.0
    %1330 = vmatprep.subr.mxu0 0.0
    %1331 = vmatpush1.msra.mxu0 0.0
    %1332 = vmatprep.subr.mxu0 0.0
    %1333 = vmatpush1.msra.mxu0 0.0
    %1334 = vmatprep.subr.mxu0 0.0
    %1335 = vmatpush1.msra.mxu0 0.0
    %1336 = vmatprep.subr.mxu0 0.0
    %1337 = vmatpush1.msra.mxu0 0.0
    %1338 = vmatprep.subr.mxu0 0.0
    %1339 = vmatpush1.msra.mxu0 0.0
    %1340 = vmatprep.subr.mxu0 0.0
    %1341 = vmatpush1.msra.mxu0 0.0
    %1342 = vmatprep.subr.mxu0 0.0
    %1343 = vmatpush1.msra.mxu0 %v1314
    %1344 = vmatprep.subr.mxu0 0.0
    %1345 = vmatpush1.msra.mxu0 %v1303
    %1346 = vmatprep.subr.mxu0 0.0
    %1347 = vmatpush1.msra.mxu0 %v1302
    %1348 = vmatprep.subr.mxu0 0.0
    %1349 = vmatpush2.msra.mxu0 0.0
    %1350 = vmatprep.subr.mxu0 0.0
    %1351 = vmatpush2.msra.mxu0 0.0
    %1352 = vmatprep.subr.mxu0 0.0
    %1353 = vmatpush2.msra.mxu0 0.0
    %1354 = vmatprep.subr.mxu0 0.0
    %1355 = vmatpush2.msra.mxu0 0.0
    %1356 = vmatprep.subr.mxu0 0.0
    %1357 = vmatpush2.msra.mxu0 0.0
    %1358 = vmatprep.subr.mxu0 0.0
    %1359 = vmatpush2.msra.mxu0 0.0
    %1360 = vmatprep.subr.mxu0 0.0
    %1361 = vmatpush2.msra.mxu0 0.0
    %1362 = vmatprep.subr.mxu0 0.0
    %1363 = vmatpush2.msra.mxu0 0.0
    %1364 = vmatprep.subr.mxu0 0.0
    %1365 = vmatpush2.msra.mxu0 0.0
    %1366 = vmatprep.subr.mxu0 0.0
    %1367 = vmatpush2.msra.mxu0 0.0
    %1368 = vmatprep.subr.mxu0 0.0
    %1369 = vmatpush2.msra.mxu0 0.0
    %1370 = vmatprep.subr.mxu0 0.0
    %1371 = vmatpush2.msra.mxu0 0.0
    %1372 = vmatprep.subr.mxu0 0.0
    %1373 = vmatpush2.msra.mxu0 0.0
    %1374 = vmatprep.subr.mxu0 0.0
    %1375 = vmatpush2.msra.mxu0 0.0
    %1376 = vmatprep.subr.mxu0 0.0
    %1377 = vmatpush2.msra.mxu0 0.0
    %1378 = vmatprep.subr.mxu0 0.0
    %1379 = vmatpush2.msra.mxu0 0.0
    %1380 = vmatprep.mubr.f32.mxu0 0.0
    %1381 = vmatmul.mubr.f32.gmra.mxu0 %v1307
    %v1382 = vpop.f32.mrf.mxu0
    %v1383 = vadd.f32 0.0, %v1382
    %v1384 = vpop.f32.mrf.mxu0
    %1385 = vmatprep.mubr.f32.mxu0 0.0
    %1386 = vmatmul.mubr.f32.gmra.mxu0 %v1310
    %v1387 = vpop.f32.mrf.mxu0
    %v1388 = vadd.f32 0.0, %v1387
    %v1389 = vpop.f32.mrf.mxu0
    %1390 = vdwg.mxu0
    %v1392 = vsel %vm1305, %v187, 0
    %v1395 = vsel %vm1305, %v188, 0
    %1397 = vmatprep.subr.mxu0 0.0
    %1398 = vmatpush1.msra.mxu0 0.0
    %1399 = vmatprep.subr.mxu0 0.0
    %1400 = vmatpush1.msra.mxu0 0.0
    %1401 = vmatprep.subr.mxu0 0.0
    %1402 = vmatpush1.msra.mxu0 0.0
    %1403 = vmatprep.subr.mxu0 0.0
    %1404 = vmatpush1.msra.mxu0 0.0
    %1405 = vmatprep.subr.mxu0 0.0
    %1406 = vmatpush1.msra.mxu0 0.0
    %1407 = vmatprep.subr.mxu0 0.0
    %1408 = vmatpush1.msra.mxu0 0.0
    %1409 = vmatprep.subr.mxu0 0.0
    %1410 = vmatpush1.msra.mxu0 0.0
    %1411 = vmatprep.subr.mxu0 0.0
    %1412 = vmatpush1.msra.mxu0 0.0
    %1413 = vmatprep.subr.mxu0 0.0
    %1414 = vmatpush1.msra.mxu0 0.0
    %1415 = vmatprep.subr.mxu0 0.0
    %1416 = vmatpush1.msra.mxu0 0.0
    %1417 = vmatprep.subr.mxu0 0.0
    %1418 = vmatpush1.msra.mxu0 0.0
    %1419 = vmatprep.subr.mxu0 0.0
    %1420 = vmatpush1.msra.mxu0 0.0
    %1421 = vmatprep.subr.mxu0 0.0
    %1422 = vmatpush1.msra.mxu0 0.0
    %1423 = vmatprep.subr.mxu0 0.0
    %1424 = vmatpush1.msra.mxu0 %v1314
    %1425 = vmatprep.subr.mxu0 0.0
    %1426 = vmatpush1.msra.mxu0 %v1303
    %1427 = vmatprep.subr.mxu0 0.0
    %1428 = vmatpush1.msra.mxu0 %v1302
    %1429 = vmatprep.subr.mxu0 0.0
    %1430 = vmatpush2.msra.mxu0 0.0
    %1431 = vmatprep.subr.mxu0 0.0
    %1432 = vmatpush2.msra.mxu0 0.0
    %1433 = vmatprep.subr.mxu0 0.0
    %1434 = vmatpush2.msra.mxu0 0.0
    %1435 = vmatprep.subr.mxu0 0.0
    %1436 = vmatpush2.msra.mxu0 0.0
    %1437 = vmatprep.subr.mxu0 0.0
    %1438 = vmatpush2.msra.mxu0 0.0
    %1439 = vmatprep.subr.mxu0 0.0
    %1440 = vmatpush2.msra.mxu0 0.0
    %1441 = vmatprep.subr.mxu0 0.0
    %1442 = vmatpush2.msra.mxu0 0.0
    %1443 = vmatprep.subr.mxu0 0.0
    %1444 = vmatpush2.msra.mxu0 0.0
    %1445 = vmatprep.subr.mxu0 0.0
    %1446 = vmatpush2.msra.mxu0 0.0
    %1447 = vmatprep.subr.mxu0 0.0
    %1448 = vmatpush2.msra.mxu0 0.0
    %1449 = vmatprep.subr.mxu0 0.0
    %1450 = vmatpush2.msra.mxu0 0.0
    %1451 = vmatprep.subr.mxu0 0.0
    %1452 = vmatpush2.msra.mxu0 0.0
    %1453 = vmatprep.subr.mxu0 0.0
    %1454 = vmatpush2.msra.mxu0 0.0
    %1455 = vmatprep.subr.mxu0 0.0
    %1456 = vmatpush2.msra.mxu0 0.0
    %1457 = vmatprep.subr.mxu0 0.0
    %1458 = vmatpush2.msra.mxu0 0.0
    %1459 = vmatprep.subr.mxu0 0.0
    %1460 = vmatpush2.msra.mxu0 0.0
    %1461 = vmatprep.mubr.f32.mxu0 0.0
    %1462 = vmatmul.mubr.f32.gmra.mxu0 %v1392
    %v1463 = vpop.f32.mrf.mxu0
    %v1464 = vadd.f32 0.0, %v1463
    %v1465 = vpop.f32.mrf.mxu0
    %1466 = vmatprep.mubr.f32.mxu0 0.0
    %1467 = vmatmul.mubr.f32.gmra.mxu0 %v1395
    %v1468 = vpop.f32.mrf.mxu0
    %v1469 = vadd.f32 0.0, %v1468
    %v1470 = vpop.f32.mrf.mxu0
    %1471 = vdwg.mxu0
    %v1472 = vmax.f32 %v1383, %v1464
    %v1473 = vmax.f32 %v1388, %v1469
    %vm1474 = vcmask 97280
    %v1476 = vsel %vm1474, %v1472, 0
    %v1479 = vsel %vm1474, %v1473, 0
    %vm1481 = vcmask 1043456
    %v1483 = vsel %vm1481, %v191, 0
    %v1486 = vsel %vm1481, %v192, 0
    %1488 = vmatprep.subr.mxu0 0.0
    %1489 = vmatpush1.msra.mxu0 0.0
    %1490 = vmatprep.subr.mxu0 0.0
    %1491 = vmatpush1.msra.mxu0 0.0
    %1492 = vmatprep.subr.mxu0 0.0
    %1493 = vmatpush1.msra.mxu0 0.0
    %1494 = vmatprep.subr.mxu0 0.0
    %1495 = vmatpush1.msra.mxu0 0.0
    %1496 = vmatprep.subr.mxu0 0.0
    %1497 = vmatpush1.msra.mxu0 0.0
    %1498 = vmatprep.subr.mxu0 0.0
    %1499 = vmatpush1.msra.mxu0 0.0
    %1500 = vmatprep.subr.mxu0 0.0
    %1501 = vmatpush1.msra.mxu0 0.0
    %1502 = vmatprep.subr.mxu0 0.0
    %1503 = vmatpush1.msra.mxu0 0.0
    %1504 = vmatprep.subr.mxu0 0.0
    %1505 = vmatpush1.msra.mxu0 0.0
    %1506 = vmatprep.subr.mxu0 0.0
    %1507 = vmatpush1.msra.mxu0 0.0
    %1508 = vmatprep.subr.mxu0 0.0
    %1509 = vmatpush1.msra.mxu0 0.0
    %1510 = vmatprep.subr.mxu0 0.0
    %1511 = vmatpush1.msra.mxu0 0.0
    %1512 = vmatprep.subr.mxu0 0.0
    %1513 = vmatpush1.msra.mxu0 0.0
    %1514 = vmatprep.subr.mxu0 0.0
    %1515 = vmatpush1.msra.mxu0 0.0
    %1516 = vmatprep.subr.mxu0 %v1486
    %1517 = vmatpush1.msra.mxu0 %v1483
    %1518 = vmatprep.subr.mxu0 %v190
    %1519 = vmatpush1.msra.mxu0 %v189
    %1520 = vmatprep.subr.mxu0 0.0
    %1521 = vmatpush2.msra.mxu0 0.0
    %1522 = vmatprep.subr.mxu0 0.0
    %1523 = vmatpush2.msra.mxu0 0.0
    %1524 = vmatprep.subr.mxu0 0.0
    %1525 = vmatpush2.msra.mxu0 0.0
    %1526 = vmatprep.subr.mxu0 0.0
    %1527 = vmatpush2.msra.mxu0 0.0
    %1528 = vmatprep.subr.mxu0 0.0
    %1529 = vmatpush2.msra.mxu0 0.0
    %1530 = vmatprep.subr.mxu0 0.0
    %1531 = vmatpush2.msra.mxu0 0.0
    %1532 = vmatprep.subr.mxu0 0.0
    %1533 = vmatpush2.msra.mxu0 0.0
    %1534 = vmatprep.subr.mxu0 0.0
    %1535 = vmatpush2.msra.mxu0 0.0
    %1536 = vmatprep.subr.mxu0 0.0
    %1537 = vmatpush2.msra.mxu0 0.0
    %1538 = vmatprep.subr.mxu0 0.0
    %1539 = vmatpush2.msra.mxu0 0.0
    %1540 = vmatprep.subr.mxu0 0.0
    %1541 = vmatpush2.msra.mxu0 0.0
    %1542 = vmatprep.subr.mxu0 0.0
    %1543 = vmatpush2.msra.mxu0 0.0
    %1544 = vmatprep.subr.mxu0 0.0
    %1545 = vmatpush2.msra.mxu0 0.0
    %1546 = vmatprep.subr.mxu0 0.0
    %1547 = vmatpush2.msra.mxu0 0.0
    %1548 = vmatprep.subr.mxu0 0.0
    %1549 = vmatpush2.msra.mxu0 0.0
    %1550 = vmatprep.subr.mxu0 0.0
    %1551 = vmatpush2.msra.mxu0 0.0
    %1552 = vmatprep.mubr.f32.mxu0 0.0
    %1553 = vmatmul.mubr.f32.gmra.mxu0 %v1476
    %v1554 = vpop.f32.mrf.mxu0
    %v1555 = vadd.f32 0.0, %v1554
    %v1556 = vpop.f32.mrf.mxu0
    %v1557 = vadd.f32 0.0, %v1556
    %1558 = vmatprep.mubr.f32.mxu0 0.0
    %1559 = vmatmul.mubr.f32.gmra.mxu0 %v1479
    %v1560 = vpop.f32.mrf.mxu0
    %v1561 = vadd.f32 0.0, %v1560
    %v1562 = vpop.f32.mrf.mxu0
    %v1563 = vadd.f32 0.0, %v1562
    %1564 = vdwg.mxu0
    %v1565 = vmul.f32 %v1555, %v193
    %v1566 = vmul.f32 %v1557, %v194
    %v1567 = vmul.f32 %v1561, %v195
    %v1568 = vmul.f32 %v1563, %v196
    %v1569 = vsel %vm1481, %v1567, 0.0
    %v1570 = vadd.f32 %v1565, %v1569
    %v1571 = vrot.slane %v1570, 4
    %v1572 = vadd.f32 %v1570, %v1571
    %v1573 = vrot.slane %v1572, 2
    %v1574 = vadd.f32 %v1572, %v1573
    %v1575 = vrot.slane %v1574, 1
    %v1576 = vadd.f32 %v1574, %v1575
    %vm1577 = vcmask 130048
    %v1578 = vsel %vm1577, %v1566, 0.0
    %vm1579 = vcmask 125952
    %v1580 = vsel %vm1579, %v1568, 0.0
    %v1581 = vadd.f32 %v1578, %v1580
    %v1582 = vrot.slane %v1581, 4
    %v1583 = vadd.f32 %v1581, %v1582
    %v1584 = vrot.slane %v1583, 2
    %v1585 = vadd.f32 %v1583, %v1584
    %v1586 = vrot.slane %v1585, 1
    %v1587 = vadd.f32 %v1585, %v1586
    %v1589 = vsel %vm1577, %v1587, 0
    %1591 = vmatprep.subr.mxu0 %v927
    %1592 = vmatpush1.msra.mxu0 %v926
    %1593 = vmatprep.subr.mxu0 %v922
    %1594 = vmatpush1.msra.mxu0 %v921
    %1595 = vmatprep.subr.mxu0 %v917
    %1596 = vmatpush1.msra.mxu0 %v916
    %1597 = vmatprep.subr.mxu0 %v912
    %1598 = vmatpush1.msra.mxu0 %v911
    %1599 = vmatprep.subr.mxu0 %v907
    %1600 = vmatpush1.msra.mxu0 %v906
    %1601 = vmatprep.subr.mxu0 %v902
    %1602 = vmatpush1.msra.mxu0 %v901
    %1603 = vmatprep.subr.mxu0 %v897
    %1604 = vmatpush1.msra.mxu0 %v896
    %1605 = vmatprep.subr.mxu0 %v892
    %1606 = vmatpush1.msra.mxu0 %v891
    %1607 = vmatprep.subr.mxu0 %v887
    %1608 = vmatpush1.msra.mxu0 %v886
    %1609 = vmatprep.subr.mxu0 %v882
    %1610 = vmatpush1.msra.mxu0 %v881
    %1611 = vmatprep.subr.mxu0 %v877
    %1612 = vmatpush1.msra.mxu0 %v876
    %1613 = vmatprep.subr.mxu0 %v872
    %1614 = vmatpush1.msra.mxu0 %v871
    %1615 = vmatprep.subr.mxu0 %v867
    %1616 = vmatpush1.msra.mxu0 %v866
    %1617 = vmatprep.subr.mxu0 %v862
    %1618 = vmatpush1.msra.mxu0 %v861
    %1619 = vmatprep.subr.mxu0 %v857
    %1620 = vmatpush1.msra.mxu0 %v856
    %1621 = vmatprep.subr.mxu0 %v852
    %1622 = vmatpush1.msra.mxu0 %v851
    %1623 = vmatprep.subr.mxu0 0.0
    %1624 = vmatpush2.msra.mxu0 0.0
    %1625 = vmatprep.subr.mxu0 0.0
    %1626 = vmatpush2.msra.mxu0 0.0
    %1627 = vmatprep.subr.mxu0 0.0
    %1628 = vmatpush2.msra.mxu0 0.0
    %1629 = vmatprep.subr.mxu0 0.0
    %1630 = vmatpush2.msra.mxu0 0.0
    %1631 = vmatprep.subr.mxu0 0.0
    %1632 = vmatpush2.msra.mxu0 0.0
    %1633 = vmatprep.subr.mxu0 0.0
    %1634 = vmatpush2.msra.mxu0 0.0
    %1635 = vmatprep.subr.mxu0 0.0
    %1636 = vmatpush2.msra.mxu0 0.0
    %1637 = vmatprep.subr.mxu0 0.0
    %1638 = vmatpush2.msra.mxu0 0.0
    %1639 = vmatprep.subr.mxu0 0.0
    %1640 = vmatpush2.msra.mxu0 0.0
    %1641 = vmatprep.subr.mxu0 0.0
    %1642 = vmatpush2.msra.mxu0 0.0
    %1643 = vmatprep.subr.mxu0 0.0
    %1644 = vmatpush2.msra.mxu0 0.0
    %1645 = vmatprep.subr.mxu0 0.0
    %1646 = vmatpush2.msra.mxu0 0.0
    %1647 = vmatprep.subr.mxu0 0.0
    %1648 = vmatpush2.msra.mxu0 0.0
    %1649 = vmatprep.subr.mxu0 0.0
    %1650 = vmatpush2.msra.mxu0 0.0
    %1651 = vmatprep.subr.mxu0 %v937
    %1652 = vmatpush2.msra.mxu0 %v936
    %1653 = vmatprep.subr.mxu0 %v932
    %1654 = vmatpush2.msra.mxu0 %v931
    %1655 = vmatprep.mubr.f32.mxu0 %v1589
    %1656 = vmatmul.mubr.f32.gmra.mxu0 %v1576
    %v1657 = vpop.f32.mrf.mxu0
    %v1658 = vadd.f32 0.0, %v1657
    %v1659 = vpop.f32.mrf.mxu0
    %v1660 = vadd.f32 0.0, %v1659
    %1661 = vdwg.mxu0
    %1662 = vmatprep.subr.mxu0 %v929
    %1663 = vmatpush1.msra.mxu0 %v928
    %1664 = vmatprep.subr.mxu0 %v924
    %1665 = vmatpush1.msra.mxu0 %v923
    %1666 = vmatprep.subr.mxu0 %v919
    %1667 = vmatpush1.msra.mxu0 %v918
    %1668 = vmatprep.subr.mxu0 %v914
    %1669 = vmatpush1.msra.mxu0 %v913
    %1670 = vmatprep.subr.mxu0 %v909
    %1671 = vmatpush1.msra.mxu0 %v908
    %1672 = vmatprep.subr.mxu0 %v904
    %1673 = vmatpush1.msra.mxu0 %v903
    %1674 = vmatprep.subr.mxu0 %v899
    %1675 = vmatpush1.msra.mxu0 %v898
    %1676 = vmatprep.subr.mxu0 %v894
    %1677 = vmatpush1.msra.mxu0 %v893
    %1678 = vmatprep.subr.mxu0 %v889
    %1679 = vmatpush1.msra.mxu0 %v888
    %1680 = vmatprep.subr.mxu0 %v884
    %1681 = vmatpush1.msra.mxu0 %v883
    %1682 = vmatprep.subr.mxu0 %v879
    %1683 = vmatpush1.msra.mxu0 %v878
    %1684 = vmatprep.subr.mxu0 %v874
    %1685 = vmatpush1.msra.mxu0 %v873
    %1686 = vmatprep.subr.mxu0 %v869
    %1687 = vmatpush1.msra.mxu0 %v868
    %1688 = vmatprep.subr.mxu0 %v864
    %1689 = vmatpush1.msra.mxu0 %v863
    %1690 = vmatprep.subr.mxu0 %v859
    %1691 = vmatpush1.msra.mxu0 %v858
    %1692 = vmatprep.subr.mxu0 %v854
    %1693 = vmatpush1.msra.mxu0 %v853
    %1694 = vmatprep.subr.mxu0 0.0
    %1695 = vmatpush2.msra.mxu0 0.0
    %1696 = vmatprep.subr.mxu0 0.0
    %1697 = vmatpush2.msra.mxu0 0.0
    %1698 = vmatprep.subr.mxu0 0.0
    %1699 = vmatpush2.msra.mxu0 0.0
    %1700 = vmatprep.subr.mxu0 0.0
    %1701 = vmatpush2.msra.mxu0 0.0
    %1702 = vmatprep.subr.mxu0 0.0
    %1703 = vmatpush2.msra.mxu0 0.0
    %1704 = vmatprep.subr.mxu0 0.0
    %1705 = vmatpush2.msra.mxu0 0.0
    %1706 = vmatprep.subr.mxu0 0.0
    %1707 = vmatpush2.msra.mxu0 0.0
    %1708 = vmatprep.subr.mxu0 0.0
    %1709 = vmatpush2.msra.mxu0 0.0
    %1710 = vmatprep.subr.mxu0 0.0
    %1711 = vmatpush2.msra.mxu0 0.0
    %1712 = vmatprep.subr.mxu0 0.0
    %1713 = vmatpush2.msra.mxu0 0.0
    %1714 = vmatprep.subr.mxu0 0.0
    %1715 = vmatpush2.msra.mxu0 0.0
    %1716 = vmatprep.subr.mxu0 0.0
    %1717 = vmatpush2.msra.mxu0 0.0
    %1718 = vmatprep.subr.mxu0 0.0
    %1719 = vmatpush2.msra.mxu0 0.0
    %1720 = vmatprep.subr.mxu0 0.0
    %1721 = vmatpush2.msra.mxu0 0.0
    %1722 = vmatprep.subr.mxu0 %v939
    %1723 = vmatpush2.msra.mxu0 %v938
    %1724 = vmatprep.subr.mxu0 %v934
    %1725 = vmatpush2.msra.mxu0 %v933
    %1726 = vmatprep.mubr.f32.mxu0 %v1589
    %1727 = vmatmul.mubr.f32.gmra.mxu0 %v1576
    %v1728 = vpop.f32.mrf.mxu0
    %v1729 = vadd.f32 0.0, %v1728
    %v1730 = vpop.f32.mrf.mxu0
    %v1731 = vadd.f32 0.0, %v1730
    %1732 = vdwg.mxu0
    %1733 = vmatprep.subr.mxu0 0.0
    %1734 = vmatpush1.msra.mxu0 %v930
    %1735 = vmatprep.subr.mxu0 0.0
    %1736 = vmatpush1.msra.mxu0 %v925
    %1737 = vmatprep.subr.mxu0 0.0
    %1738 = vmatpush1.msra.mxu0 %v920
    %1739 = vmatprep.subr.mxu0 0.0
    %1740 = vmatpush1.msra.mxu0 %v915
    %1741 = vmatprep.subr.mxu0 0.0
    %1742 = vmatpush1.msra.mxu0 %v910
    %1743 = vmatprep.subr.mxu0 0.0
    %1744 = vmatpush1.msra.mxu0 %v905
    %1745 = vmatprep.subr.mxu0 0.0
    %1746 = vmatpush1.msra.mxu0 %v900
    %1747 = vmatprep.subr.mxu0 0.0
    %1748 = vmatpush1.msra.mxu0 %v895
    %1749 = vmatprep.subr.mxu0 0.0
    %1750 = vmatpush1.msra.mxu0 %v890
    %1751 = vmatprep.subr.mxu0 0.0
    %1752 = vmatpush1.msra.mxu0 %v885
    %1753 = vmatprep.subr.mxu0 0.0
    %1754 = vmatpush1.msra.mxu0 %v880
    %1755 = vmatprep.subr.mxu0 0.0
    %1756 = vmatpush1.msra.mxu0 %v875
    %1757 = vmatprep.subr.mxu0 0.0
    %1758 = vmatpush1.msra.mxu0 %v870
    %1759 = vmatprep.subr.mxu0 0.0
    %1760 = vmatpush1.msra.mxu0 %v865
    %1761 = vmatprep.subr.mxu0 0.0
    %1762 = vmatpush1.msra.mxu0 %v860
    %1763 = vmatprep.subr.mxu0 0.0
    %1764 = vmatpush1.msra.mxu0 %v855
    %1765 = vmatprep.subr.mxu0 0.0
    %1766 = vmatpush2.msra.mxu0 0.0
    %1767 = vmatprep.subr.mxu0 0.0
    %1768 = vmatpush2.msra.mxu0 0.0
    %1769 = vmatprep.subr.mxu0 0.0
    %1770 = vmatpush2.msra.mxu0 0.0
    %1771 = vmatprep.subr.mxu0 0.0
    %1772 = vmatpush2.msra.mxu0 0.0
    %1773 = vmatprep.subr.mxu0 0.0
    %1774 = vmatpush2.msra.mxu0 0.0
    %1775 = vmatprep.subr.mxu0 0.0
    %1776 = vmatpush2.msra.mxu0 0.0
    %1777 = vmatprep.subr.mxu0 0.0
    %1778 = vmatpush2.msra.mxu0 0.0
    %1779 = vmatprep.subr.mxu0 0.0
    %1780 = vmatpush2.msra.mxu0 0.0
    %1781 = vmatprep.subr.mxu0 0.0
    %1782 = vmatpush2.msra.mxu0 0.0
    %1783 = vmatprep.subr.mxu0 0.0
    %1784 = vmatpush2.msra.mxu0 0.0
    %1785 = vmatprep.subr.mxu0 0.0
    %1786 = vmatpush2.msra.mxu0 0.0
    %1787 = vmatprep.subr.mxu0 0.0
    %1788 = vmatpush2.msra.mxu0 0.0
    %1789 = vmatprep.subr.mxu0 0.0
    %1790 = vmatpush2.msra.mxu0 0.0
    %1791 = vmatprep.subr.mxu0 0.0
    %1792 = vmatpush2.msra.mxu0 0.0
    %1793 = vmatprep.subr.mxu0 0.0
    %1794 = vmatpush2.msra.mxu0 %v940
    %1795 = vmatprep.subr.mxu0 0.0
    %1796 = vmatpush2.msra.mxu0 %v935
    %1797 = vmatprep.mubr.f32.mxu0 %v1589
    %1798 = vmatmul.mubr.f32.gmra.mxu0 %v1576
    %v1799 = vpop.f32.mrf.mxu0
    %v1800 = vadd.f32 0.0, %v1799
    %v1801 = vpop.f32.mrf.mxu0
    %1802 = vdwg.mxu0
    %v1808 = vcombine.low %v1658, %v1660
    %v1809 = vcombine.low %v1729, %v1731
    %v1811 = vunpack.c.l.s4 1966171168
    %v1812 = vunpack.c.0.s8 %v1811
    %v1813 = vlaneseq
    %v1814 = vshrl.u32 %v1813, 7
    %v1815 = vsub.s32 %v1812, %v1814
    %v1816 = vrot.slane %v1808, %v1815
    %v1818 = vunpack.c.l.s4 1966171168
    %v1819 = vunpack.c.0.s8 %v1818
    %v1820 = vlaneseq
    %v1821 = vshrl.u32 %v1820, 7
    %v1822 = vsub.s32 %v1819, %v1821
    %v1823 = vrot.slane %v1809, %v1822
    %v1825 = vunpack.c.l.s4 1966171168
    %v1826 = vunpack.c.0.s8 %v1825
    %v1827 = vlaneseq
    %v1828 = vshrl.u32 %v1827, 7
    %v1829 = vsub.s32 %v1826, %v1828
    %v1830 = vrot.slane %v1800, %v1829
    %v1831 = vcombine.low %v1816, %v1823
    %v1833 = vunpack.c.l.s4 1966171168
    %v1834 = vunpack.c.0.s8 %v1833
    %v1835 = vlaneseq
    %v1836 = vshrl.u32 %v1835, 7
    %v1837 = vsub.s32 %v1834, %v1836
    %v1838 = vrot.slane %v1831, %v1837
    %v1840 = vunpack.c.l.s4 1966171168
    %v1841 = vunpack.c.0.s8 %v1840
    %v1842 = vlaneseq
    %v1843 = vshrl.u32 %v1842, 7
    %v1844 = vsub.s32 %v1841, %v1843
    %v1845 = vrot.slane %v1830, %v1844
    %v1846 = vcombine.low %v1838, %v1845
    %v1848 = vadd.f32 %v197, %v1846
    %v1850 = vsel %vm941, %v833, 0
    %v1853 = vsel %vm941, %v834, 0
    %v1856 = vsel %vm941, %v835, 0
    %1858 = vmatprep.subr.mxu0 0.0
    %1859 = vmatpush1.msra.mxu0 0.0
    %1860 = vmatprep.subr.mxu0 0.0
    %1861 = vmatpush1.msra.mxu0 0.0
    %1862 = vmatprep.subr.mxu0 0.0
    %1863 = vmatpush1.msra.mxu0 0.0
    %1864 = vmatprep.subr.mxu0 0.0
    %1865 = vmatpush1.msra.mxu0 0.0
    %1866 = vmatprep.subr.mxu0 0.0
    %1867 = vmatpush1.msra.mxu0 0.0
    %1868 = vmatprep.subr.mxu0 0.0
    %1869 = vmatpush1.msra.mxu0 0.0
    %1870 = vmatprep.subr.mxu0 0.0
    %1871 = vmatpush1.msra.mxu0 0.0
    %1872 = vmatprep.subr.mxu0 0.0
    %1873 = vmatpush1.msra.mxu0 0.0
    %1874 = vmatprep.subr.mxu0 0.0
    %1875 = vmatpush1.msra.mxu0 0.0
    %1876 = vmatprep.subr.mxu0 0.0
    %1877 = vmatpush1.msra.mxu0 0.0
    %1878 = vmatprep.subr.mxu0 0.0
    %1879 = vmatpush1.msra.mxu0 0.0
    %1880 = vmatprep.subr.mxu0 0.0
    %1881 = vmatpush1.msra.mxu0 0.0
    %1882 = vmatprep.subr.mxu0 0.0
    %1883 = vmatpush1.msra.mxu0 0.0
    %1884 = vmatprep.subr.mxu0 0.0
    %1885 = vmatpush1.msra.mxu0 %v146
    %1886 = vmatprep.subr.mxu0 0.0
    %1887 = vmatpush1.msra.mxu0 %v145
    %1888 = vmatprep.subr.mxu0 0.0
    %1889 = vmatpush1.msra.mxu0 %v144
    %1890 = vmatprep.subr.mxu0 0.0
    %1891 = vmatpush2.msra.mxu0 0.0
    %1892 = vmatprep.subr.mxu0 0.0
    %1893 = vmatpush2.msra.mxu0 0.0
    %1894 = vmatprep.subr.mxu0 0.0
    %1895 = vmatpush2.msra.mxu0 0.0
    %1896 = vmatprep.subr.mxu0 0.0
    %1897 = vmatpush2.msra.mxu0 0.0
    %1898 = vmatprep.subr.mxu0 0.0
    %1899 = vmatpush2.msra.mxu0 0.0
    %1900 = vmatprep.subr.mxu0 0.0
    %1901 = vmatpush2.msra.mxu0 0.0
    %1902 = vmatprep.subr.mxu0 0.0
    %1903 = vmatpush2.msra.mxu0 0.0
    %1904 = vmatprep.subr.mxu0 0.0
    %1905 = vmatpush2.msra.mxu0 0.0
    %1906 = vmatprep.subr.mxu0 0.0
    %1907 = vmatpush2.msra.mxu0 0.0
    %1908 = vmatprep.subr.mxu0 0.0
    %1909 = vmatpush2.msra.mxu0 0.0
    %1910 = vmatprep.subr.mxu0 0.0
    %1911 = vmatpush2.msra.mxu0 0.0
    %1912 = vmatprep.subr.mxu0 0.0
    %1913 = vmatpush2.msra.mxu0 0.0
    %1914 = vmatprep.subr.mxu0 0.0
    %1915 = vmatpush2.msra.mxu0 0.0
    %1916 = vmatprep.subr.mxu0 0.0
    %1917 = vmatpush2.msra.mxu0 0.0
    %1918 = vmatprep.subr.mxu0 0.0
    %1919 = vmatpush2.msra.mxu0 0.0
    %1920 = vmatprep.subr.mxu0 0.0
    %1921 = vmatpush2.msra.mxu0 0.0
    %1922 = vmatprep.mubr.f32.mxu0 0.0
    %1923 = vmatmul.mubr.f32.gmra.mxu0 %v1850
    %v1924 = vpop.f32.mrf.mxu0
    %v1925 = vadd.f32 0.0, %v1924
    %v1926 = vpop.f32.mrf.mxu0
    %1927 = vmatprep.mubr.f32.mxu0 0.0
    %1928 = vmatmul.mubr.f32.gmra.mxu0 %v1853
    %v1929 = vpop.f32.mrf.mxu0
    %v1930 = vadd.f32 0.0, %v1929
    %v1931 = vpop.f32.mrf.mxu0
    %1932 = vmatprep.mubr.f32.mxu0 0.0
    %1933 = vmatmul.mubr.f32.gmra.mxu0 %v1856
    %v1934 = vpop.f32.mrf.mxu0
    %v1935 = vadd.f32 0.0, %v1934
    %v1936 = vpop.f32.mrf.mxu0
    %1937 = vdwg.mxu0
    %v1938 = vadd.f32 %v819, %v1925
    %v1939 = vadd.f32 %v820, %v1930
    %v1940 = vadd.f32 %v821, %v1935
    %v1942 = vsel %vm941, %v847, 0
    %v1945 = vsel %vm941, %v848, 0
    %v1948 = vsel %vm941, %v849, 0
    %1950 = vmatprep.subr.mxu0 0.0
    %1951 = vmatpush1.msra.mxu0 0.0
    %1952 = vmatprep.subr.mxu0 0.0
    %1953 = vmatpush1.msra.mxu0 0.0
    %1954 = vmatprep.subr.mxu0 0.0
    %1955 = vmatpush1.msra.mxu0 0.0
    %1956 = vmatprep.subr.mxu0 0.0
    %1957 = vmatpush1.msra.mxu0 0.0
    %1958 = vmatprep.subr.mxu0 0.0
    %1959 = vmatpush1.msra.mxu0 0.0
    %1960 = vmatprep.subr.mxu0 0.0
    %1961 = vmatpush1.msra.mxu0 0.0
    %1962 = vmatprep.subr.mxu0 0.0
    %1963 = vmatpush1.msra.mxu0 0.0
    %1964 = vmatprep.subr.mxu0 0.0
    %1965 = vmatpush1.msra.mxu0 0.0
    %1966 = vmatprep.subr.mxu0 0.0
    %1967 = vmatpush1.msra.mxu0 0.0
    %1968 = vmatprep.subr.mxu0 0.0
    %1969 = vmatpush1.msra.mxu0 0.0
    %1970 = vmatprep.subr.mxu0 0.0
    %1971 = vmatpush1.msra.mxu0 0.0
    %1972 = vmatprep.subr.mxu0 0.0
    %1973 = vmatpush1.msra.mxu0 0.0
    %1974 = vmatprep.subr.mxu0 0.0
    %1975 = vmatpush1.msra.mxu0 0.0
    %1976 = vmatprep.subr.mxu0 0.0
    %1977 = vmatpush1.msra.mxu0 %v153
    %1978 = vmatprep.subr.mxu0 0.0
    %1979 = vmatpush1.msra.mxu0 %v152
    %1980 = vmatprep.subr.mxu0 0.0
    %1981 = vmatpush1.msra.mxu0 %v151
    %1982 = vmatprep.subr.mxu0 0.0
    %1983 = vmatpush2.msra.mxu0 0.0
    %1984 = vmatprep.subr.mxu0 0.0
    %1985 = vmatpush2.msra.mxu0 0.0
    %1986 = vmatprep.subr.mxu0 0.0
    %1987 = vmatpush2.msra.mxu0 0.0
    %1988 = vmatprep.subr.mxu0 0.0
    %1989 = vmatpush2.msra.mxu0 0.0
    %1990 = vmatprep.subr.mxu0 0.0
    %1991 = vmatpush2.msra.mxu0 0.0
    %1992 = vmatprep.subr.mxu0 0.0
    %1993 = vmatpush2.msra.mxu0 0.0
    %1994 = vmatprep.subr.mxu0 0.0
    %1995 = vmatpush2.msra.mxu0 0.0
    %1996 = vmatprep.subr.mxu0 0.0
    %1997 = vmatpush2.msra.mxu0 0.0
    %1998 = vmatprep.subr.mxu0 0.0
    %1999 = vmatpush2.msra.mxu0 0.0
    %2000 = vmatprep.subr.mxu0 0.0
    %2001 = vmatpush2.msra.mxu0 0.0
    %2002 = vmatprep.subr.mxu0 0.0
    %2003 = vmatpush2.msra.mxu0 0.0
    %2004 = vmatprep.subr.mxu0 0.0
    %2005 = vmatpush2.msra.mxu0 0.0
    %2006 = vmatprep.subr.mxu0 0.0
    %2007 = vmatpush2.msra.mxu0 0.0
    %2008 = vmatprep.subr.mxu0 0.0
    %2009 = vmatpush2.msra.mxu0 0.0
    %2010 = vmatprep.subr.mxu0 0.0
    %2011 = vmatpush2.msra.mxu0 0.0
    %2012 = vmatprep.subr.mxu0 0.0
    %2013 = vmatpush2.msra.mxu0 0.0
    %2014 = vmatprep.mubr.f32.mxu0 0.0
    %2015 = vmatmul.mubr.f32.gmra.mxu0 %v1942
    %v2016 = vpop.f32.mrf.mxu0
    %v2017 = vadd.f32 0.0, %v2016
    %v2018 = vpop.f32.mrf.mxu0
    %2019 = vmatprep.mubr.f32.mxu0 0.0
    %2020 = vmatmul.mubr.f32.gmra.mxu0 %v1945
    %v2021 = vpop.f32.mrf.mxu0
    %v2022 = vadd.f32 0.0, %v2021
    %v2023 = vpop.f32.mrf.mxu0
    %2024 = vmatprep.mubr.f32.mxu0 0.0
    %2025 = vmatmul.mubr.f32.gmra.mxu0 %v1948
    %v2026 = vpop.f32.mrf.mxu0
    %v2027 = vadd.f32 0.0, %v2026
    %v2028 = vpop.f32.mrf.mxu0
    %2029 = vdwg.mxu0
    %v2030 = vadd.f32 %v1938, %v2017
    %v2031 = vadd.f32 %v1939, %v2022
    %v2032 = vadd.f32 %v1940, %v2027
    %v2033 = vadd.f32 %v2030, %v1126
    %v2034 = vadd.f32 %v2031, %v1126
    %v2035 = vadd.f32 %v2032, %v1126
    %v2036 = vmax.f32 %v2033, 0.0
    %v2037 = vmax.f32 %v2034, 0.0
    %v2038 = vmax.f32 %v2035, 0.0
    %v2040 = vsel %vm941, %v2036, 0
    %v2043 = vsel %vm941, %v2037, 0
    %v2046 = vsel %vm941, %v2038, 0
    %2048 = vmatprep.subr.mxu0 0.0
    %2049 = vmatpush1.msra.mxu0 0.0
    %2050 = vmatprep.subr.mxu0 0.0
    %2051 = vmatpush1.msra.mxu0 0.0
    %2052 = vmatprep.subr.mxu0 0.0
    %2053 = vmatpush1.msra.mxu0 0.0
    %2054 = vmatprep.subr.mxu0 0.0
    %2055 = vmatpush1.msra.mxu0 0.0
    %2056 = vmatprep.subr.mxu0 0.0
    %2057 = vmatpush1.msra.mxu0 0.0
    %2058 = vmatprep.subr.mxu0 0.0
    %2059 = vmatpush1.msra.mxu0 0.0
    %2060 = vmatprep.subr.mxu0 0.0
    %2061 = vmatpush1.msra.mxu0 0.0
    %2062 = vmatprep.subr.mxu0 0.0
    %2063 = vmatpush1.msra.mxu0 0.0
    %2064 = vmatprep.subr.mxu0 0.0
    %2065 = vmatpush1.msra.mxu0 0.0
    %2066 = vmatprep.subr.mxu0 0.0
    %2067 = vmatpush1.msra.mxu0 0.0
    %2068 = vmatprep.subr.mxu0 0.0
    %2069 = vmatpush1.msra.mxu0 0.0
    %2070 = vmatprep.subr.mxu0 0.0
    %2071 = vmatpush1.msra.mxu0 0.0
    %2072 = vmatprep.subr.mxu0 0.0
    %2073 = vmatpush1.msra.mxu0 0.0
    %2074 = vmatprep.subr.mxu0 0.0
    %2075 = vmatpush1.msra.mxu0 %v167
    %2076 = vmatprep.subr.mxu0 0.0
    %2077 = vmatpush1.msra.mxu0 %v166
    %2078 = vmatprep.subr.mxu0 0.0
    %2079 = vmatpush1.msra.mxu0 %v165
    %2080 = vmatprep.subr.mxu0 0.0
    %2081 = vmatpush2.msra.mxu0 0.0
    %2082 = vmatprep.subr.mxu0 0.0
    %2083 = vmatpush2.msra.mxu0 0.0
    %2084 = vmatprep.subr.mxu0 0.0
    %2085 = vmatpush2.msra.mxu0 0.0
    %2086 = vmatprep.subr.mxu0 0.0
    %2087 = vmatpush2.msra.mxu0 0.0
    %2088 = vmatprep.subr.mxu0 0.0
    %2089 = vmatpush2.msra.mxu0 0.0
    %2090 = vmatprep.subr.mxu0 0.0
    %2091 = vmatpush2.msra.mxu0 0.0
    %2092 = vmatprep.subr.mxu0 0.0
    %2093 = vmatpush2.msra.mxu0 0.0
    %2094 = vmatprep.subr.mxu0 0.0
    %2095 = vmatpush2.msra.mxu0 0.0
    %2096 = vmatprep.subr.mxu0 0.0
    %2097 = vmatpush2.msra.mxu0 0.0
    %2098 = vmatprep.subr.mxu0 0.0
    %2099 = vmatpush2.msra.mxu0 0.0
    %2100 = vmatprep.subr.mxu0 0.0
    %2101 = vmatpush2.msra.mxu0 0.0
    %2102 = vmatprep.subr.mxu0 0.0
    %2103 = vmatpush2.msra.mxu0 0.0
    %2104 = vmatprep.subr.mxu0 0.0
    %2105 = vmatpush2.msra.mxu0 0.0
    %2106 = vmatprep.subr.mxu0 0.0
    %2107 = vmatpush2.msra.mxu0 0.0
    %2108 = vmatprep.subr.mxu0 0.0
    %2109 = vmatpush2.msra.mxu0 0.0
    %2110 = vmatprep.subr.mxu0 0.0
    %2111 = vmatpush2.msra.mxu0 0.0
    %2112 = vmatprep.mubr.f32.mxu0 0.0
    %2113 = vmatmul.mubr.f32.gmra.mxu0 %v2040
    %v2114 = vpop.f32.mrf.mxu0
    %v2115 = vadd.f32 0.0, %v2114
    %v2116 = vpop.f32.mrf.mxu0
    %2117 = vmatprep.mubr.f32.mxu0 0.0
    %2118 = vmatmul.mubr.f32.gmra.mxu0 %v2043
    %v2119 = vpop.f32.mrf.mxu0
    %v2120 = vadd.f32 0.0, %v2119
    %v2121 = vpop.f32.mrf.mxu0
    %2122 = vmatprep.mubr.f32.mxu0 0.0
    %2123 = vmatmul.mubr.f32.gmra.mxu0 %v2046
    %v2124 = vpop.f32.mrf.mxu0
    %v2125 = vadd.f32 0.0, %v2124
    %v2126 = vpop.f32.mrf.mxu0
    %2127 = vdwg.mxu0
    %2128 = vmatprep.subr.mxu0 0.0
    %2129 = vmatpush1.msra.mxu0 0.0
    %2130 = vmatprep.subr.mxu0 0.0
    %2131 = vmatpush1.msra.mxu0 0.0
    %2132 = vmatprep.subr.mxu0 0.0
    %2133 = vmatpush1.msra.mxu0 0.0
    %2134 = vmatprep.subr.mxu0 0.0
    %2135 = vmatpush1.msra.mxu0 0.0
    %2136 = vmatprep.subr.mxu0 0.0
    %2137 = vmatpush1.msra.mxu0 0.0
    %2138 = vmatprep.subr.mxu0 0.0
    %2139 = vmatpush1.msra.mxu0 0.0
    %2140 = vmatprep.subr.mxu0 0.0
    %2141 = vmatpush1.msra.mxu0 0.0
    %2142 = vmatprep.subr.mxu0 0.0
    %2143 = vmatpush1.msra.mxu0 0.0
    %2144 = vmatprep.subr.mxu0 0.0
    %2145 = vmatpush1.msra.mxu0 0.0
    %2146 = vmatprep.subr.mxu0 0.0
    %2147 = vmatpush1.msra.mxu0 0.0
    %2148 = vmatprep.subr.mxu0 0.0
    %2149 = vmatpush1.msra.mxu0 0.0
    %2150 = vmatprep.subr.mxu0 0.0
    %2151 = vmatpush1.msra.mxu0 0.0
    %2152 = vmatprep.subr.mxu0 0.0
    %2153 = vmatpush1.msra.mxu0 0.0
    %2154 = vmatprep.subr.mxu0 0.0
    %2155 = vmatpush1.msra.mxu0 %v176
    %2156 = vmatprep.subr.mxu0 0.0
    %2157 = vmatpush1.msra.mxu0 %v175
    %2158 = vmatprep.subr.mxu0 0.0
    %2159 = vmatpush1.msra.mxu0 %v174
    %2160 = vmatprep.subr.mxu0 0.0
    %2161 = vmatpush2.msra.mxu0 0.0
    %2162 = vmatprep.subr.mxu0 0.0
    %2163 = vmatpush2.msra.mxu0 0.0
    %2164 = vmatprep.subr.mxu0 0.0
    %2165 = vmatpush2.msra.mxu0 0.0
    %2166 = vmatprep.subr.mxu0 0.0
    %2167 = vmatpush2.msra.mxu0 0.0
    %2168 = vmatprep.subr.mxu0 0.0
    %2169 = vmatpush2.msra.mxu0 0.0
    %2170 = vmatprep.subr.mxu0 0.0
    %2171 = vmatpush2.msra.mxu0 0.0
    %2172 = vmatprep.subr.mxu0 0.0
    %2173 = vmatpush2.msra.mxu0 0.0
    %2174 = vmatprep.subr.mxu0 0.0
    %2175 = vmatpush2.msra.mxu0 0.0
    %2176 = vmatprep.subr.mxu0 0.0
    %2177 = vmatpush2.msra.mxu0 0.0
    %2178 = vmatprep.subr.mxu0 0.0
    %2179 = vmatpush2.msra.mxu0 0.0
    %2180 = vmatprep.subr.mxu0 0.0
    %2181 = vmatpush2.msra.mxu0 0.0
    %2182 = vmatprep.subr.mxu0 0.0
    %2183 = vmatpush2.msra.mxu0 0.0
    %2184 = vmatprep.subr.mxu0 0.0
    %2185 = vmatpush2.msra.mxu0 0.0
    %2186 = vmatprep.subr.mxu0 0.0
    %2187 = vmatpush2.msra.mxu0 0.0
    %2188 = vmatprep.subr.mxu0 0.0
    %2189 = vmatpush2.msra.mxu0 0.0
    %2190 = vmatprep.subr.mxu0 0.0
    %2191 = vmatpush2.msra.mxu0 0.0
    %2192 = vmatprep.mubr.f32.mxu0 0.0
    %2193 = vmatmul.mubr.f32.gmra.mxu0 %v2040
    %v2194 = vpop.f32.mrf.mxu0
    %v2195 = vadd.f32 0.0, %v2194
    %v2196 = vpop.f32.mrf.mxu0
    %2197 = vmatprep.mubr.f32.mxu0 0.0
    %2198 = vmatmul.mubr.f32.gmra.mxu0 %v2043
    %v2199 = vpop.f32.mrf.mxu0
    %v2200 = vadd.f32 0.0, %v2199
    %v2201 = vpop.f32.mrf.mxu0
    %2202 = vmatprep.mubr.f32.mxu0 0.0
    %2203 = vmatmul.mubr.f32.gmra.mxu0 %v2046
    %v2204 = vpop.f32.mrf.mxu0
    %v2205 = vadd.f32 0.0, %v2204
    %v2206 = vpop.f32.mrf.mxu0
    %2207 = vdwg.mxu0
    %v2208 = vmax.f32 %v2115, %v2195
    %v2209 = vmax.f32 %v2120, %v2200
    %v2210 = vmax.f32 %v2125, %v2205
    %v2212 = vsel %vm1312, %v2210, 0
    %2214 = vmatprep.subr.mxu0 0.0
    %2215 = vmatpush1.msra.mxu0 0.0
    %2216 = vmatprep.subr.mxu0 0.0
    %2217 = vmatpush1.msra.mxu0 0.0
    %2218 = vmatprep.subr.mxu0 0.0
    %2219 = vmatpush1.msra.mxu0 0.0
    %2220 = vmatprep.subr.mxu0 0.0
    %2221 = vmatpush1.msra.mxu0 0.0
    %2222 = vmatprep.subr.mxu0 0.0
    %2223 = vmatpush1.msra.mxu0 0.0
    %2224 = vmatprep.subr.mxu0 0.0
    %2225 = vmatpush1.msra.mxu0 0.0
    %2226 = vmatprep.subr.mxu0 0.0
    %2227 = vmatpush1.msra.mxu0 0.0
    %2228 = vmatprep.subr.mxu0 0.0
    %2229 = vmatpush1.msra.mxu0 0.0
    %2230 = vmatprep.subr.mxu0 0.0
    %2231 = vmatpush1.msra.mxu0 0.0
    %2232 = vmatprep.subr.mxu0 0.0
    %2233 = vmatpush1.msra.mxu0 0.0
    %2234 = vmatprep.subr.mxu0 0.0
    %2235 = vmatpush1.msra.mxu0 0.0
    %2236 = vmatprep.subr.mxu0 0.0
    %2237 = vmatpush1.msra.mxu0 0.0
    %2238 = vmatprep.subr.mxu0 0.0
    %2239 = vmatpush1.msra.mxu0 0.0
    %2240 = vmatprep.subr.mxu0 0.0
    %2241 = vmatpush1.msra.mxu0 %v2212
    %2242 = vmatprep.subr.mxu0 0.0
    %2243 = vmatpush1.msra.mxu0 %v2209
    %2244 = vmatprep.subr.mxu0 0.0
    %2245 = vmatpush1.msra.mxu0 %v2208
    %2246 = vmatprep.subr.mxu0 0.0
    %2247 = vmatpush2.msra.mxu0 0.0
    %2248 = vmatprep.subr.mxu0 0.0
    %2249 = vmatpush2.msra.mxu0 0.0
    %2250 = vmatprep.subr.mxu0 0.0
    %2251 = vmatpush2.msra.mxu0 0.0
    %2252 = vmatprep.subr.mxu0 0.0
    %2253 = vmatpush2.msra.mxu0 0.0
    %2254 = vmatprep.subr.mxu0 0.0
    %2255 = vmatpush2.msra.mxu0 0.0
    %2256 = vmatprep.subr.mxu0 0.0
    %2257 = vmatpush2.msra.mxu0 0.0
    %2258 = vmatprep.subr.mxu0 0.0
    %2259 = vmatpush2.msra.mxu0 0.0
    %2260 = vmatprep.subr.mxu0 0.0
    %2261 = vmatpush2.msra.mxu0 0.0
    %2262 = vmatprep.subr.mxu0 0.0
    %2263 = vmatpush2.msra.mxu0 0.0
    %2264 = vmatprep.subr.mxu0 0.0
    %2265 = vmatpush2.msra.mxu0 0.0
    %2266 = vmatprep.subr.mxu0 0.0
    %2267 = vmatpush2.msra.mxu0 0.0
    %2268 = vmatprep.subr.mxu0 0.0
    %2269 = vmatpush2.msra.mxu0 0.0
    %2270 = vmatprep.subr.mxu0 0.0
    %2271 = vmatpush2.msra.mxu0 0.0
    %2272 = vmatprep.subr.mxu0 0.0
    %2273 = vmatpush2.msra.mxu0 0.0
    %2274 = vmatprep.subr.mxu0 0.0
    %2275 = vmatpush2.msra.mxu0 0.0
    %2276 = vmatprep.subr.mxu0 0.0
    %2277 = vmatpush2.msra.mxu0 0.0
    %2278 = vmatprep.mubr.f32.mxu0 0.0
    %2279 = vmatmul.mubr.f32.gmra.mxu0 %v1307
    %v2280 = vpop.f32.mrf.mxu0
    %v2281 = vadd.f32 0.0, %v2280
    %v2282 = vpop.f32.mrf.mxu0
    %2283 = vmatprep.mubr.f32.mxu0 0.0
    %2284 = vmatmul.mubr.f32.gmra.mxu0 %v1310
    %v2285 = vpop.f32.mrf.mxu0
    %v2286 = vadd.f32 0.0, %v2285
    %v2287 = vpop.f32.mrf.mxu0
    %2288 = vdwg.mxu0
    %2289 = vmatprep.subr.mxu0 0.0
    %2290 = vmatpush1.msra.mxu0 0.0
    %2291 = vmatprep.subr.mxu0 0.0
    %2292 = vmatpush1.msra.mxu0 0.0
    %2293 = vmatprep.subr.mxu0 0.0
    %2294 = vmatpush1.msra.mxu0 0.0
    %2295 = vmatprep.subr.mxu0 0.0
    %2296 = vmatpush1.msra.mxu0 0.0
    %2297 = vmatprep.subr.mxu0 0.0
    %2298 = vmatpush1.msra.mxu0 0.0
    %2299 = vmatprep.subr.mxu0 0.0
    %2300 = vmatpush1.msra.mxu0 0.0
    %2301 = vmatprep.subr.mxu0 0.0
    %2302 = vmatpush1.msra.mxu0 0.0
    %2303 = vmatprep.subr.mxu0 0.0
    %2304 = vmatpush1.msra.mxu0 0.0
    %2305 = vmatprep.subr.mxu0 0.0
    %2306 = vmatpush1.msra.mxu0 0.0
    %2307 = vmatprep.subr.mxu0 0.0
    %2308 = vmatpush1.msra.mxu0 0.0
    %2309 = vmatprep.subr.mxu0 0.0
    %2310 = vmatpush1.msra.mxu0 0.0
    %2311 = vmatprep.subr.mxu0 0.0
    %2312 = vmatpush1.msra.mxu0 0.0
    %2313 = vmatprep.subr.mxu0 0.0
    %2314 = vmatpush1.msra.mxu0 0.0
    %2315 = vmatprep.subr.mxu0 0.0
    %2316 = vmatpush1.msra.mxu0 %v2212
    %2317 = vmatprep.subr.mxu0 0.0
    %2318 = vmatpush1.msra.mxu0 %v2209
    %2319 = vmatprep.subr.mxu0 0.0
    %2320 = vmatpush1.msra.mxu0 %v2208
    %2321 = vmatprep.subr.mxu0 0.0
    %2322 = vmatpush2.msra.mxu0 0.0
    %2323 = vmatprep.subr.mxu0 0.0
    %2324 = vmatpush2.msra.mxu0 0.0
    %2325 = vmatprep.subr.mxu0 0.0
    %2326 = vmatpush2.msra.mxu0 0.0
    %2327 = vmatprep.subr.mxu0 0.0
    %2328 = vmatpush2.msra.mxu0 0.0
    %2329 = vmatprep.subr.mxu0 0.0
    %2330 = vmatpush2.msra.mxu0 0.0
    %2331 = vmatprep.subr.mxu0 0.0
    %2332 = vmatpush2.msra.mxu0 0.0
    %2333 = vmatprep.subr.mxu0 0.0
    %2334 = vmatpush2.msra.mxu0 0.0
    %2335 = vmatprep.subr.mxu0 0.0
    %2336 = vmatpush2.msra.mxu0 0.0
    %2337 = vmatprep.subr.mxu0 0.0
    %2338 = vmatpush2.msra.mxu0 0.0
    %2339 = vmatprep.subr.mxu0 0.0
    %2340 = vmatpush2.msra.mxu0 0.0
    %2341 = vmatprep.subr.mxu0 0.0
    %2342 = vmatpush2.msra.mxu0 0.0
    %2343 = vmatprep.subr.mxu0 0.0
    %2344 = vmatpush2.msra.mxu0 0.0
    %2345 = vmatprep.subr.mxu0 0.0
    %2346 = vmatpush2.msra.mxu0 0.0
    %2347 = vmatprep.subr.mxu0 0.0
    %2348 = vmatpush2.msra.mxu0 0.0
    %2349 = vmatprep.subr.mxu0 0.0
    %2350 = vmatpush2.msra.mxu0 0.0
    %2351 = vmatprep.subr.mxu0 0.0
    %2352 = vmatpush2.msra.mxu0 0.0
    %2353 = vmatprep.mubr.f32.mxu0 0.0
    %2354 = vmatmul.mubr.f32.gmra.mxu0 %v1392
    %v2355 = vpop.f32.mrf.mxu0
    %v2356 = vadd.f32 0.0, %v2355
    %v2357 = vpop.f32.mrf.mxu0
    %2358 = vmatprep.mubr.f32.mxu0 0.0
    %2359 = vmatmul.mubr.f32.gmra.mxu0 %v1395
    %v2360 = vpop.f32.mrf.mxu0
    %v2361 = vadd.f32 0.0, %v2360
    %v2362 = vpop.f32.mrf.mxu0
    %2363 = vdwg.mxu0
    %v2364 = vmax.f32 %v2281, %v2356
    %v2365 = vmax.f32 %v2286, %v2361
    %v2367 = vsel %vm1474, %v2364, 0
    %v2370 = vsel %vm1474, %v2365, 0
    %2372 = vmatprep.subr.mxu0 0.0
    %2373 = vmatpush1.msra.mxu0 0.0
    %2374 = vmatprep.subr.mxu0 0.0
    %2375 = vmatpush1.msra.mxu0 0.0
    %2376 = vmatprep.subr.mxu0 0.0
    %2377 = vmatpush1.msra.mxu0 0.0
    %2378 = vmatprep.subr.mxu0 0.0
    %2379 = vmatpush1.msra.mxu0 0.0
    %2380 = vmatprep.subr.mxu0 0.0
    %2381 = vmatpush1.msra.mxu0 0.0
    %2382 = vmatprep.subr.mxu0 0.0
    %2383 = vmatpush1.msra.mxu0 0.0
    %2384 = vmatprep.subr.mxu0 0.0
    %2385 = vmatpush1.msra.mxu0 0.0
    %2386 = vmatprep.subr.mxu0 0.0
    %2387 = vmatpush1.msra.mxu0 0.0
    %2388 = vmatprep.subr.mxu0 0.0
    %2389 = vmatpush1.msra.mxu0 0.0
    %2390 = vmatprep.subr.mxu0 0.0
    %2391 = vmatpush1.msra.mxu0 0.0
    %2392 = vmatprep.subr.mxu0 0.0
    %2393 = vmatpush1.msra.mxu0 0.0
    %2394 = vmatprep.subr.mxu0 0.0
    %2395 = vmatpush1.msra.mxu0 0.0
    %2396 = vmatprep.subr.mxu0 0.0
    %2397 = vmatpush1.msra.mxu0 0.0
    %2398 = vmatprep.subr.mxu0 0.0
    %2399 = vmatpush1.msra.mxu0 0.0
    %2400 = vmatprep.subr.mxu0 %v1486
    %2401 = vmatpush1.msra.mxu0 %v1483
    %2402 = vmatprep.subr.mxu0 %v190
    %2403 = vmatpush1.msra.mxu0 %v189
    %2404 = vmatprep.subr.mxu0 0.0
    %2405 = vmatpush2.msra.mxu0 0.0
    %2406 = vmatprep.subr.mxu0 0.0
    %2407 = vmatpush2.msra.mxu0 0.0
    %2408 = vmatprep.subr.mxu0 0.0
    %2409 = vmatpush2.msra.mxu0 0.0
    %2410 = vmatprep.subr.mxu0 0.0
    %2411 = vmatpush2.msra.mxu0 0.0
    %2412 = vmatprep.subr.mxu0 0.0
    %2413 = vmatpush2.msra.mxu0 0.0
    %2414 = vmatprep.subr.mxu0 0.0
    %2415 = vmatpush2.msra.mxu0 0.0
    %2416 = vmatprep.subr.mxu0 0.0
    %2417 = vmatpush2.msra.mxu0 0.0
    %2418 = vmatprep.subr.mxu0 0.0
    %2419 = vmatpush2.msra.mxu0 0.0
    %2420 = vmatprep.subr.mxu0 0.0
    %2421 = vmatpush2.msra.mxu0 0.0
    %2422 = vmatprep.subr.mxu0 0.0
    %2423 = vmatpush2.msra.mxu0 0.0
    %2424 = vmatprep.subr.mxu0 0.0
    %2425 = vmatpush2.msra.mxu0 0.0
    %2426 = vmatprep.subr.mxu0 0.0
    %2427 = vmatpush2.msra.mxu0 0.0
    %2428 = vmatprep.subr.mxu0 0.0
    %2429 = vmatpush2.msra.mxu0 0.0
    %2430 = vmatprep.subr.mxu0 0.0
    %2431 = vmatpush2.msra.mxu0 0.0
    %2432 = vmatprep.subr.mxu0 0.0
    %2433 = vmatpush2.msra.mxu0 0.0
    %2434 = vmatprep.subr.mxu0 0.0
    %2435 = vmatpush2.msra.mxu0 0.0
    %2436 = vmatprep.mubr.f32.mxu0 0.0
    %2437 = vmatmul.mubr.f32.gmra.mxu0 %v2367
    %v2438 = vpop.f32.mrf.mxu0
    %v2439 = vadd.f32 0.0, %v2438
    %v2440 = vpop.f32.mrf.mxu0
    %v2441 = vadd.f32 0.0, %v2440
    %2442 = vmatprep.mubr.f32.mxu0 0.0
    %2443 = vmatmul.mubr.f32.gmra.mxu0 %v2370
    %v2444 = vpop.f32.mrf.mxu0
    %v2445 = vadd.f32 0.0, %v2444
    %v2446 = vpop.f32.mrf.mxu0
    %v2447 = vadd.f32 0.0, %v2446
    %2448 = vdwg.mxu0
    %v2449 = vmul.f32 %v2439, %v193
    %v2450 = vmul.f32 %v2441, %v194
    %v2451 = vmul.f32 %v2445, %v195
    %v2452 = vmul.f32 %v2447, %v196
    %v2453 = vsel %vm1481, %v2451, 0.0
    %v2454 = vadd.f32 %v2449, %v2453
    %v2455 = vrot.slane %v2454, 4
    %v2456 = vadd.f32 %v2454, %v2455
    %v2457 = vrot.slane %v2456, 2
    %v2458 = vadd.f32 %v2456, %v2457
    %v2459 = vrot.slane %v2458, 1
    %v2460 = vadd.f32 %v2458, %v2459
    %v2461 = vsel %vm1577, %v2450, 0.0
    %v2462 = vsel %vm1579, %v2452, 0.0
    %v2463 = vadd.f32 %v2461, %v2462
    %v2464 = vrot.slane %v2463, 4
    %v2465 = vadd.f32 %v2463, %v2464
    %v2466 = vrot.slane %v2465, 2
    %v2467 = vadd.f32 %v2465, %v2466
    %v2468 = vrot.slane %v2467, 1
    %v2469 = vadd.f32 %v2467, %v2468
    %v2471 = vsel %vm1577, %v2469, 0
    %2473 = vmatprep.subr.mxu0 %v927
    %2474 = vmatpush1.msra.mxu0 %v926
    %2475 = vmatprep.subr.mxu0 %v922
    %2476 = vmatpush1.msra.mxu0 %v921
    %2477 = vmatprep.subr.mxu0 %v917
    %2478 = vmatpush1.msra.mxu0 %v916
    %2479 = vmatprep.subr.mxu0 %v912
    %2480 = vmatpush1.msra.mxu0 %v911
    %2481 = vmatprep.subr.mxu0 %v907
    %2482 = vmatpush1.msra.mxu0 %v906
    %2483 = vmatprep.subr.mxu0 %v902
    %2484 = vmatpush1.msra.mxu0 %v901
    %2485 = vmatprep.subr.mxu0 %v897
    %2486 = vmatpush1.msra.mxu0 %v896
    %2487 = vmatprep.subr.mxu0 %v892
    %2488 = vmatpush1.msra.mxu0 %v891
    %2489 = vmatprep.subr.mxu0 %v887
    %2490 = vmatpush1.msra.mxu0 %v886
    %2491 = vmatprep.subr.mxu0 %v882
    %2492 = vmatpush1.msra.mxu0 %v881
    %2493 = vmatprep.subr.mxu0 %v877
    %2494 = vmatpush1.msra.mxu0 %v876
    %2495 = vmatprep.subr.mxu0 %v872
    %2496 = vmatpush1.msra.mxu0 %v871
    %2497 = vmatprep.subr.mxu0 %v867
    %2498 = vmatpush1.msra.mxu0 %v866
    %2499 = vmatprep.subr.mxu0 %v862
    %2500 = vmatpush1.msra.mxu0 %v861
    %2501 = vmatprep.subr.mxu0 %v857
    %2502 = vmatpush1.msra.mxu0 %v856
    %2503 = vmatprep.subr.mxu0 %v852
    %2504 = vmatpush1.msra.mxu0 %v851
    %2505 = vmatprep.subr.mxu0 0.0
    %2506 = vmatpush2.msra.mxu0 0.0
    %2507 = vmatprep.subr.mxu0 0.0
    %2508 = vmatpush2.msra.mxu0 0.0
    %2509 = vmatprep.subr.mxu0 0.0
    %2510 = vmatpush2.msra.mxu0 0.0
    %2511 = vmatprep.subr.mxu0 0.0
    %2512 = vmatpush2.msra.mxu0 0.0
    %2513 = vmatprep.subr.mxu0 0.0
    %2514 = vmatpush2.msra.mxu0 0.0
    %2515 = vmatprep.subr.mxu0 0.0
    %2516 = vmatpush2.msra.mxu0 0.0
    %2517 = vmatprep.subr.mxu0 0.0
    %2518 = vmatpush2.msra.mxu0 0.0
    %2519 = vmatprep.subr.mxu0 0.0
    %2520 = vmatpush2.msra.mxu0 0.0
    %2521 = vmatprep.subr.mxu0 0.0
    %2522 = vmatpush2.msra.mxu0 0.0
    %2523 = vmatprep.subr.mxu0 0.0
    %2524 = vmatpush2.msra.mxu0 0.0
    %2525 = vmatprep.subr.mxu0 0.0
    %2526 = vmatpush2.msra.mxu0 0.0
    %2527 = vmatprep.subr.mxu0 0.0
    %2528 = vmatpush2.msra.mxu0 0.0
    %2529 = vmatprep.subr.mxu0 0.0
    %2530 = vmatpush2.msra.mxu0 0.0
    %2531 = vmatprep.subr.mxu0 0.0
    %2532 = vmatpush2.msra.mxu0 0.0
    %2533 = vmatprep.subr.mxu0 %v937
    %2534 = vmatpush2.msra.mxu0 %v936
    %2535 = vmatprep.subr.mxu0 %v932
    %2536 = vmatpush2.msra.mxu0 %v931
    %2537 = vmatprep.mubr.f32.mxu0 %v2471
    %2538 = vmatmul.mubr.f32.gmra.mxu0 %v2460
    %v2539 = vpop.f32.mrf.mxu0
    %v2540 = vadd.f32 0.0, %v2539
    %v2541 = vpop.f32.mrf.mxu0
    %v2542 = vadd.f32 0.0, %v2541
    %2543 = vdwg.mxu0
    %2544 = vmatprep.subr.mxu0 %v929
    %2545 = vmatpush1.msra.mxu0 %v928
    %2546 = vmatprep.subr.mxu0 %v924
    %2547 = vmatpush1.msra.mxu0 %v923
    %2548 = vmatprep.subr.mxu0 %v919
    %2549 = vmatpush1.msra.mxu0 %v918
    %2550 = vmatprep.subr.mxu0 %v914
    %2551 = vmatpush1.msra.mxu0 %v913
    %2552 = vmatprep.subr.mxu0 %v909
    %2553 = vmatpush1.msra.mxu0 %v908
    %2554 = vmatprep.subr.mxu0 %v904
    %2555 = vmatpush1.msra.mxu0 %v903
    %2556 = vmatprep.subr.mxu0 %v899
    %2557 = vmatpush1.msra.mxu0 %v898
    %2558 = vmatprep.subr.mxu0 %v894
    %2559 = vmatpush1.msra.mxu0 %v893
    %2560 = vmatprep.subr.mxu0 %v889
    %2561 = vmatpush1.msra.mxu0 %v888
    %2562 = vmatprep.subr.mxu0 %v884
    %2563 = vmatpush1.msra.mxu0 %v883
    %2564 = vmatprep.subr.mxu0 %v879
    %2565 = vmatpush1.msra.mxu0 %v878
    %2566 = vmatprep.subr.mxu0 %v874
    %2567 = vmatpush1.msra.mxu0 %v873
    %2568 = vmatprep.subr.mxu0 %v869
    %2569 = vmatpush1.msra.mxu0 %v868
    %2570 = vmatprep.subr.mxu0 %v864
    %2571 = vmatpush1.msra.mxu0 %v863
    %2572 = vmatprep.subr.mxu0 %v859
    %2573 = vmatpush1.msra.mxu0 %v858
    %2574 = vmatprep.subr.mxu0 %v854
    %2575 = vmatpush1.msra.mxu0 %v853
    %2576 = vmatprep.subr.mxu0 0.0
    %2577 = vmatpush2.msra.mxu0 0.0
    %2578 = vmatprep.subr.mxu0 0.0
    %2579 = vmatpush2.msra.mxu0 0.0
    %2580 = vmatprep.subr.mxu0 0.0
    %2581 = vmatpush2.msra.mxu0 0.0
    %2582 = vmatprep.subr.mxu0 0.0
    %2583 = vmatpush2.msra.mxu0 0.0
    %2584 = vmatprep.subr.mxu0 0.0
    %2585 = vmatpush2.msra.mxu0 0.0
    %2586 = vmatprep.subr.mxu0 0.0
    %2587 = vmatpush2.msra.mxu0 0.0
    %2588 = vmatprep.subr.mxu0 0.0
    %2589 = vmatpush2.msra.mxu0 0.0
    %2590 = vmatprep.subr.mxu0 0.0
    %2591 = vmatpush2.msra.mxu0 0.0
    %2592 = vmatprep.subr.mxu0 0.0
    %2593 = vmatpush2.msra.mxu0 0.0
    %2594 = vmatprep.subr.mxu0 0.0
    %2595 = vmatpush2.msra.mxu0 0.0
    %2596 = vmatprep.subr.mxu0 0.0
    %2597 = vmatpush2.msra.mxu0 0.0
    %2598 = vmatprep.subr.mxu0 0.0
    %2599 = vmatpush2.msra.mxu0 0.0
    %2600 = vmatprep.subr.mxu0 0.0
    %2601 = vmatpush2.msra.mxu0 0.0
    %2602 = vmatprep.subr.mxu0 0.0
    %2603 = vmatpush2.msra.mxu0 0.0
    %2604 = vmatprep.subr.mxu0 %v939
    %2605 = vmatpush2.msra.mxu0 %v938
    %2606 = vmatprep.subr.mxu0 %v934
    %2607 = vmatpush2.msra.mxu0 %v933
    %2608 = vmatprep.mubr.f32.mxu0 %v2471
    %2609 = vmatmul.mubr.f32.gmra.mxu0 %v2460
    %v2610 = vpop.f32.mrf.mxu0
    %v2611 = vadd.f32 0.0, %v2610
    %v2612 = vpop.f32.mrf.mxu0
    %v2613 = vadd.f32 0.0, %v2612
    %2614 = vdwg.mxu0
    %2615 = vmatprep.subr.mxu0 0.0
    %2616 = vmatpush1.msra.mxu0 %v930
    %2617 = vmatprep.subr.mxu0 0.0
    %2618 = vmatpush1.msra.mxu0 %v925
    %2619 = vmatprep.subr.mxu0 0.0
    %2620 = vmatpush1.msra.mxu0 %v920
    %2621 = vmatprep.subr.mxu0 0.0
    %2622 = vmatpush1.msra.mxu0 %v915
    %2623 = vmatprep.subr.mxu0 0.0
    %2624 = vmatpush1.msra.mxu0 %v910
    %2625 = vmatprep.subr.mxu0 0.0
    %2626 = vmatpush1.msra.mxu0 %v905
    %2627 = vmatprep.subr.mxu0 0.0
    %2628 = vmatpush1.msra.mxu0 %v900
    %2629 = vmatprep.subr.mxu0 0.0
    %2630 = vmatpush1.msra.mxu0 %v895
    %2631 = vmatprep.subr.mxu0 0.0
    %2632 = vmatpush1.msra.mxu0 %v890
    %2633 = vmatprep.subr.mxu0 0.0
    %2634 = vmatpush1.msra.mxu0 %v885
    %2635 = vmatprep.subr.mxu0 0.0
    %2636 = vmatpush1.msra.mxu0 %v880
    %2637 = vmatprep.subr.mxu0 0.0
    %2638 = vmatpush1.msra.mxu0 %v875
    %2639 = vmatprep.subr.mxu0 0.0
    %2640 = vmatpush1.msra.mxu0 %v870
    %2641 = vmatprep.subr.mxu0 0.0
    %2642 = vmatpush1.msra.mxu0 %v865
    %2643 = vmatprep.subr.mxu0 0.0
    %2644 = vmatpush1.msra.mxu0 %v860
    %2645 = vmatprep.subr.mxu0 0.0
    %2646 = vmatpush1.msra.mxu0 %v855
    %2647 = vmatprep.subr.mxu0 0.0
    %2648 = vmatpush2.msra.mxu0 0.0
    %2649 = vmatprep.subr.mxu0 0.0
    %2650 = vmatpush2.msra.mxu0 0.0
    %2651 = vmatprep.subr.mxu0 0.0
    %2652 = vmatpush2.msra.mxu0 0.0
    %2653 = vmatprep.subr.mxu0 0.0
    %2654 = vmatpush2.msra.mxu0 0.0
    %2655 = vmatprep.subr.mxu0 0.0
    %2656 = vmatpush2.msra.mxu0 0.0
    %2657 = vmatprep.subr.mxu0 0.0
    %2658 = vmatpush2.msra.mxu0 0.0
    %2659 = vmatprep.subr.mxu0 0.0
    %2660 = vmatpush2.msra.mxu0 0.0
    %2661 = vmatprep.subr.mxu0 0.0
    %2662 = vmatpush2.msra.mxu0 0.0
    %2663 = vmatprep.subr.mxu0 0.0
    %2664 = vmatpush2.msra.mxu0 0.0
    %2665 = vmatprep.subr.mxu0 0.0
    %2666 = vmatpush2.msra.mxu0 0.0
    %2667 = vmatprep.subr.mxu0 0.0
    %2668 = vmatpush2.msra.mxu0 0.0
    %2669 = vmatprep.subr.mxu0 0.0
    %2670 = vmatpush2.msra.mxu0 0.0
    %2671 = vmatprep.subr.mxu0 0.0
    %2672 = vmatpush2.msra.mxu0 0.0
    %2673 = vmatprep.subr.mxu0 0.0
    %2674 = vmatpush2.msra.mxu0 0.0
    %2675 = vmatprep.subr.mxu0 0.0
    %2676 = vmatpush2.msra.mxu0 %v940
    %2677 = vmatprep.subr.mxu0 0.0
    %2678 = vmatpush2.msra.mxu0 %v935
    %2679 = vmatprep.mubr.f32.mxu0 %v2471
    %2680 = vmatmul.mubr.f32.gmra.mxu0 %v2460
    %v2681 = vpop.f32.mrf.mxu0
    %v2682 = vadd.f32 0.0, %v2681
    %v2683 = vpop.f32.mrf.mxu0
    %2684 = vdwg.mxu0
    %v2690 = vcombine.low %v2540, %v2542
    %v2691 = vcombine.low %v2611, %v2613
    %v2693 = vunpack.c.l.s4 1966171168
    %v2694 = vunpack.c.0.s8 %v2693
    %v2695 = vlaneseq
    %v2696 = vshrl.u32 %v2695, 7
    %v2697 = vsub.s32 %v2694, %v2696
    %v2698 = vrot.slane %v2690, %v2697
    %v2700 = vunpack.c.l.s4 1966171168
    %v2701 = vunpack.c.0.s8 %v2700
    %v2702 = vlaneseq
    %v2703 = vshrl.u32 %v2702, 7
    %v2704 = vsub.s32 %v2701, %v2703
    %v2705 = vrot.slane %v2691, %v2704
    %v2707 = vunpack.c.l.s4 1966171168
    %v2708 = vunpack.c.0.s8 %v2707
    %v2709 = vlaneseq
    %v2710 = vshrl.u32 %v2709, 7
    %v2711 = vsub.s32 %v2708, %v2710
    %v2712 = vrot.slane %v2682, %v2711
    %v2713 = vcombine.low %v2698, %v2705
    %v2715 = vunpack.c.l.s4 1966171168
    %v2716 = vunpack.c.0.s8 %v2715
    %v2717 = vlaneseq
    %v2718 = vshrl.u32 %v2717, 7
    %v2719 = vsub.s32 %v2716, %v2718
    %v2720 = vrot.slane %v2713, %v2719
    %v2722 = vunpack.c.l.s4 1966171168
    %v2723 = vunpack.c.0.s8 %v2722
    %v2724 = vlaneseq
    %v2725 = vshrl.u32 %v2724, 7
    %v2726 = vsub.s32 %v2723, %v2725
    %v2727 = vrot.slane %v2712, %v2726
    %v2728 = vcombine.low %v2720, %v2727
    %v2730 = vadd.f32 %v197, %v2728
    %s2731 = sld [smem:[#allocation7 + $0x24]]
    %v2732 = vstv %s2731
    %v2733 = vmul.f32 %v2732, %v271
    %v2734 = vmul.f32 %v2732, %v272
    %v2735 = vmul.f32 %v2732, %v273
    %v2736 = vmul.f32 %v2732, %v274
    %v2737 = vmul.f32 %v2732, %v275
    %v2738 = vmul.f32 %v2732, %v276
    %v2739 = vadd.f32 %v2733, 0.0
    %v2740 = vadd.f32 %v2734, 0.0
    %v2741 = vadd.f32 %v2735, 0.0
    %v2742 = vadd.f32 %v2736, 0.0
    %v2743 = vadd.f32 %v2737, 0.0
    %v2744 = vadd.f32 %v2738, 0.0
    %s2745 = sld [smem:[#allocation7 + $0x25]]
    %v2746 = vstv %s2745
    %v2747 = vmul.f32 %v2746, %v271
    %v2748 = vmul.f32 %v2746, %v272
    %v2749 = vmul.f32 %v2746, %v273
    %v2750 = vmul.f32 %v2746, %v274
    %v2751 = vmul.f32 %v2746, %v275
    %v2752 = vmul.f32 %v2746, %v276
    %v2753 = vadd.f32 %v2747, 0.0
    %v2754 = vadd.f32 %v2748, 0.0
    %v2755 = vadd.f32 %v2749, 0.0
    %v2756 = vadd.f32 %v2750, 0.0
    %v2757 = vadd.f32 %v2751, 0.0
    %v2758 = vadd.f32 %v2752, 0.0
    %s2759 = sld [smem:[#allocation7 + $0x26]]
    %v2760 = vstv %s2759
    %v2761 = vmul.f32 %v2760, %v271
    %v2762 = vmul.f32 %v2760, %v272
    %v2763 = vmul.f32 %v2760, %v273
    %v2764 = vmul.f32 %v2760, %v274
    %v2765 = vmul.f32 %v2760, %v275
    %v2766 = vmul.f32 %v2760, %v276
    %v2767 = vadd.f32 %v2761, 0.0
    %v2768 = vadd.f32 %v2762, 0.0
    %v2769 = vadd.f32 %v2763, 0.0
    %v2770 = vadd.f32 %v2764, 0.0
    %v2771 = vadd.f32 %v2765, 0.0
    %v2772 = vadd.f32 %v2766, 0.0
    %s2773 = sld [smem:[#allocation7 + $0x27]]
    %v2774 = vstv %s2773
    %v2775 = vmul.f32 %v2774, %v319
    %v2776 = vmul.f32 %v2774, %v320
    %v2777 = vmul.f32 %v2774, %v321
    %v2778 = vmul.f32 %v2774, %v322
    %v2779 = vmul.f32 %v2774, %v323
    %v2780 = vmul.f32 %v2774, %v324
    %v2781 = vadd.f32 %v2739, %v2775
    %v2782 = vadd.f32 %v2740, %v2776
    %v2783 = vadd.f32 %v2741, %v2777
    %v2784 = vadd.f32 %v2742, %v2778
    %v2785 = vadd.f32 %v2743, %v2779
    %v2786 = vadd.f32 %v2744, %v2780
    %s2787 = sld [smem:[#allocation7 + $0x28]]
    %v2788 = vstv %s2787
    %v2789 = vmul.f32 %v2788, %v319
    %v2790 = vmul.f32 %v2788, %v320
    %v2791 = vmul.f32 %v2788, %v321
    %v2792 = vmul.f32 %v2788, %v322
    %v2793 = vmul.f32 %v2788, %v323
    %v2794 = vmul.f32 %v2788, %v324
    %v2795 = vadd.f32 %v2753, %v2789
    %v2796 = vadd.f32 %v2754, %v2790
    %v2797 = vadd.f32 %v2755, %v2791
    %v2798 = vadd.f32 %v2756, %v2792
    %v2799 = vadd.f32 %v2757, %v2793
    %v2800 = vadd.f32 %v2758, %v2794
    %s2801 = sld [smem:[#allocation7 + $0x29]]
    %v2802 = vstv %s2801
    %v2803 = vmul.f32 %v2802, %v319
    %v2804 = vmul.f32 %v2802, %v320
    %v2805 = vmul.f32 %v2802, %v321
    %v2806 = vmul.f32 %v2802, %v322
    %v2807 = vmul.f32 %v2802, %v323
    %v2808 = vmul.f32 %v2802, %v324
    %v2809 = vadd.f32 %v2767, %v2803
    %v2810 = vadd.f32 %v2768, %v2804
    %v2811 = vadd.f32 %v2769, %v2805
    %v2812 = vadd.f32 %v2770, %v2806
    %v2813 = vadd.f32 %v2771, %v2807
    %v2814 = vadd.f32 %v2772, %v2808
    %s2815 = sld [smem:[#allocation7 + $0x2a]]
    %v2816 = vstv %s2815
    %v2817 = vmul.f32 %v2816, %v367
    %v2818 = vmul.f32 %v2816, %v368
    %v2819 = vmul.f32 %v2816, %v369
    %v2820 = vmul.f32 %v2816, %v370
    %v2821 = vmul.f32 %v2816, %v371
    %v2822 = vmul.f32 %v2816, %v372
    %v2823 = vadd.f32 %v2781, %v2817
    %v2824 = vadd.f32 %v2782, %v2818
    %v2825 = vadd.f32 %v2783, %v2819
    %v2826 = vadd.f32 %v2784, %v2820
    %v2827 = vadd.f32 %v2785, %v2821
    %v2828 = vadd.f32 %v2786, %v2822
    %s2829 = sld [smem:[#allocation7 + $0x2b]]
    %v2830 = vstv %s2829
    %v2831 = vmul.f32 %v2830, %v367
    %v2832 = vmul.f32 %v2830, %v368
    %v2833 = vmul.f32 %v2830, %v369
    %v2834 = vmul.f32 %v2830, %v370
    %v2835 = vmul.f32 %v2830, %v371
    %v2836 = vmul.f32 %v2830, %v372
    %v2837 = vadd.f32 %v2795, %v2831
    %v2838 = vadd.f32 %v2796, %v2832
    %v2839 = vadd.f32 %v2797, %v2833
    %v2840 = vadd.f32 %v2798, %v2834
    %v2841 = vadd.f32 %v2799, %v2835
    %v2842 = vadd.f32 %v2800, %v2836
    %s2843 = sld [smem:[#allocation7 + $0x2c]]
    %v2844 = vstv %s2843
    %v2845 = vmul.f32 %v2844, %v367
    %v2846 = vmul.f32 %v2844, %v368
    %v2847 = vmul.f32 %v2844, %v369
    %v2848 = vmul.f32 %v2844, %v370
    %v2849 = vmul.f32 %v2844, %v371
    %v2850 = vmul.f32 %v2844, %v372
    %v2851 = vadd.f32 %v2809, %v2845
    %v2852 = vadd.f32 %v2810, %v2846
    %v2853 = vadd.f32 %v2811, %v2847
    %v2854 = vadd.f32 %v2812, %v2848
    %v2855 = vadd.f32 %v2813, %v2849
    %v2856 = vadd.f32 %v2814, %v2850
    %s2857 = sld [smem:[#allocation7 + $0x2d]]
    %v2858 = vstv %s2857
    %v2859 = vmul.f32 %v2858, %v416
    %v2860 = vmul.f32 %v2858, %v417
    %v2861 = vmul.f32 %v2858, %v418
    %v2862 = vmul.f32 %v2858, %v419
    %v2863 = vmul.f32 %v2858, %v420
    %v2864 = vmul.f32 %v2858, %v421
    %v2865 = vadd.f32 %v2823, %v2859
    %v2866 = vadd.f32 %v2824, %v2860
    %v2867 = vadd.f32 %v2825, %v2861
    %v2868 = vadd.f32 %v2826, %v2862
    %v2869 = vadd.f32 %v2827, %v2863
    %v2870 = vadd.f32 %v2828, %v2864
    %s2871 = sld [smem:[#allocation7 + $0x2e]]
    %v2872 = vstv %s2871
    %v2873 = vmul.f32 %v2872, %v416
    %v2874 = vmul.f32 %v2872, %v417
    %v2875 = vmul.f32 %v2872, %v418
    %v2876 = vmul.f32 %v2872, %v419
    %v2877 = vmul.f32 %v2872, %v420
    %v2878 = vmul.f32 %v2872, %v421
    %v2879 = vadd.f32 %v2837, %v2873
    %v2880 = vadd.f32 %v2838, %v2874
    %v2881 = vadd.f32 %v2839, %v2875
    %v2882 = vadd.f32 %v2840, %v2876
    %v2883 = vadd.f32 %v2841, %v2877
    %v2884 = vadd.f32 %v2842, %v2878
    %s2885 = sld [smem:[#allocation7 + $0x2f]]
    %v2886 = vstv %s2885
    %v2887 = vmul.f32 %v2886, %v416
    %v2888 = vmul.f32 %v2886, %v417
    %v2889 = vmul.f32 %v2886, %v418
    %v2890 = vmul.f32 %v2886, %v419
    %v2891 = vmul.f32 %v2886, %v420
    %v2892 = vmul.f32 %v2886, %v421
    %v2893 = vadd.f32 %v2851, %v2887
    %v2894 = vadd.f32 %v2852, %v2888
    %v2895 = vadd.f32 %v2853, %v2889
    %v2896 = vadd.f32 %v2854, %v2890
    %v2897 = vadd.f32 %v2855, %v2891
    %v2898 = vadd.f32 %v2856, %v2892
    %s2899 = sld [smem:[#allocation7 + $0x30]]
    %v2900 = vstv %s2899
    %v2901 = vmul.f32 %v2900, %v464
    %v2902 = vmul.f32 %v2900, %v465
    %v2903 = vmul.f32 %v2900, %v466
    %v2904 = vmul.f32 %v2900, %v467
    %v2905 = vmul.f32 %v2900, %v468
    %v2906 = vmul.f32 %v2900, %v469
    %v2907 = vadd.f32 %v2865, %v2901
    %v2908 = vadd.f32 %v2866, %v2902
    %v2909 = vadd.f32 %v2867, %v2903
    %v2910 = vadd.f32 %v2868, %v2904
    %v2911 = vadd.f32 %v2869, %v2905
    %v2912 = vadd.f32 %v2870, %v2906
    %s2913 = sld [smem:[#allocation7 + $0x31]]
    %v2914 = vstv %s2913
    %v2915 = vmul.f32 %v2914, %v464
    %v2916 = vmul.f32 %v2914, %v465
    %v2917 = vmul.f32 %v2914, %v466
    %v2918 = vmul.f32 %v2914, %v467
    %v2919 = vmul.f32 %v2914, %v468
    %v2920 = vmul.f32 %v2914, %v469
    %v2921 = vadd.f32 %v2879, %v2915
    %v2922 = vadd.f32 %v2880, %v2916
    %v2923 = vadd.f32 %v2881, %v2917
    %v2924 = vadd.f32 %v2882, %v2918
    %v2925 = vadd.f32 %v2883, %v2919
    %v2926 = vadd.f32 %v2884, %v2920
    %s2927 = sld [smem:[#allocation7 + $0x32]]
    %v2928 = vstv %s2927
    %v2929 = vmul.f32 %v2928, %v464
    %v2930 = vmul.f32 %v2928, %v465
    %v2931 = vmul.f32 %v2928, %v466
    %v2932 = vmul.f32 %v2928, %v467
    %v2933 = vmul.f32 %v2928, %v468
    %v2934 = vmul.f32 %v2928, %v469
    %v2935 = vadd.f32 %v2893, %v2929
    %v2936 = vadd.f32 %v2894, %v2930
    %v2937 = vadd.f32 %v2895, %v2931
    %v2938 = vadd.f32 %v2896, %v2932
    %v2939 = vadd.f32 %v2897, %v2933
    %v2940 = vadd.f32 %v2898, %v2934
    %s2941 = sld [smem:[#allocation7 + $0x33]]
    %v2942 = vstv %s2941
    %v2943 = vmul.f32 %v2942, %v512
    %v2944 = vmul.f32 %v2942, %v513
    %v2945 = vmul.f32 %v2942, %v514
    %v2946 = vmul.f32 %v2942, %v515
    %v2947 = vmul.f32 %v2942, %v516
    %v2948 = vmul.f32 %v2942, %v517
    %v2949 = vadd.f32 %v2907, %v2943
    %v2950 = vadd.f32 %v2908, %v2944
    %v2951 = vadd.f32 %v2909, %v2945
    %v2952 = vadd.f32 %v2910, %v2946
    %v2953 = vadd.f32 %v2911, %v2947
    %v2954 = vadd.f32 %v2912, %v2948
    %s2955 = sld [smem:[#allocation7 + $0x34]]
    %v2956 = vstv %s2955
    %v2957 = vmul.f32 %v2956, %v512
    %v2958 = vmul.f32 %v2956, %v513
    %v2959 = vmul.f32 %v2956, %v514
    %v2960 = vmul.f32 %v2956, %v515
    %v2961 = vmul.f32 %v2956, %v516
    %v2962 = vmul.f32 %v2956, %v517
    %v2963 = vadd.f32 %v2921, %v2957
    %v2964 = vadd.f32 %v2922, %v2958
    %v2965 = vadd.f32 %v2923, %v2959
    %v2966 = vadd.f32 %v2924, %v2960
    %v2967 = vadd.f32 %v2925, %v2961
    %v2968 = vadd.f32 %v2926, %v2962
    %s2969 = sld [smem:[#allocation7 + $0x35]]
    %v2970 = vstv %s2969
    %v2971 = vmul.f32 %v2970, %v512
    %v2972 = vmul.f32 %v2970, %v513
    %v2973 = vmul.f32 %v2970, %v514
    %v2974 = vmul.f32 %v2970, %v515
    %v2975 = vmul.f32 %v2970, %v516
    %v2976 = vmul.f32 %v2970, %v517
    %v2977 = vadd.f32 %v2935, %v2971
    %v2978 = vadd.f32 %v2936, %v2972
    %v2979 = vadd.f32 %v2937, %v2973
    %v2980 = vadd.f32 %v2938, %v2974
    %v2981 = vadd.f32 %v2939, %v2975
    %v2982 = vadd.f32 %v2940, %v2976
    %s2983 = sld [smem:[#allocation7 + $0x36]]
    %v2984 = vstv %s2983
    %v2985 = vmul.f32 %v2984, %v561
    %v2986 = vmul.f32 %v2984, %v562
    %v2987 = vmul.f32 %v2984, %v563
    %v2988 = vmul.f32 %v2984, %v564
    %v2989 = vmul.f32 %v2984, %v565
    %v2990 = vmul.f32 %v2984, %v566
    %v2991 = vadd.f32 %v2949, %v2985
    %v2992 = vadd.f32 %v2950, %v2986
    %v2993 = vadd.f32 %v2951, %v2987
    %v2994 = vadd.f32 %v2952, %v2988
    %v2995 = vadd.f32 %v2953, %v2989
    %v2996 = vadd.f32 %v2954, %v2990
    %s2997 = sld [smem:[#allocation7 + $0x37]]
    %v2998 = vstv %s2997
    %v2999 = vmul.f32 %v2998, %v561
    %v3000 = vmul.f32 %v2998, %v562
    %v3001 = vmul.f32 %v2998, %v563
    %v3002 = vmul.f32 %v2998, %v564
    %v3003 = vmul.f32 %v2998, %v565
    %v3004 = vmul.f32 %v2998, %v566
    %v3005 = vadd.f32 %v2963, %v2999
    %v3006 = vadd.f32 %v2964, %v3000
    %v3007 = vadd.f32 %v2965, %v3001
    %v3008 = vadd.f32 %v2966, %v3002
    %v3009 = vadd.f32 %v2967, %v3003
    %v3010 = vadd.f32 %v2968, %v3004
    %s3011 = sld [smem:[#allocation7 + $0x38]]
    %v3012 = vstv %s3011
    %v3013 = vmul.f32 %v3012, %v561
    %v3014 = vmul.f32 %v3012, %v562
    %v3015 = vmul.f32 %v3012, %v563
    %v3016 = vmul.f32 %v3012, %v564
    %v3017 = vmul.f32 %v3012, %v565
    %v3018 = vmul.f32 %v3012, %v566
    %v3019 = vadd.f32 %v2977, %v3013
    %v3020 = vadd.f32 %v2978, %v3014
    %v3021 = vadd.f32 %v2979, %v3015
    %v3022 = vadd.f32 %v2980, %v3016
    %v3023 = vadd.f32 %v2981, %v3017
    %v3024 = vadd.f32 %v2982, %v3018
    %s3025 = sld [smem:[#allocation7 + $0x39]]
    %v3026 = vstv %s3025
    %v3027 = vmul.f32 %v3026, %v609
    %v3028 = vmul.f32 %v3026, %v610
    %v3029 = vmul.f32 %v3026, %v611
    %v3030 = vmul.f32 %v3026, %v612
    %v3031 = vmul.f32 %v3026, %v613
    %v3032 = vmul.f32 %v3026, %v614
    %v3033 = vadd.f32 %v2991, %v3027
    %v3034 = vadd.f32 %v2992, %v3028
    %v3035 = vadd.f32 %v2993, %v3029
    %v3036 = vadd.f32 %v2994, %v3030
    %v3037 = vadd.f32 %v2995, %v3031
    %v3038 = vadd.f32 %v2996, %v3032
    %s3039 = sld [smem:[#allocation7 + $0x3a]]
    %v3040 = vstv %s3039
    %v3041 = vmul.f32 %v3040, %v609
    %v3042 = vmul.f32 %v3040, %v610
    %v3043 = vmul.f32 %v3040, %v611
    %v3044 = vmul.f32 %v3040, %v612
    %v3045 = vmul.f32 %v3040, %v613
    %v3046 = vmul.f32 %v3040, %v614
    %v3047 = vadd.f32 %v3005, %v3041
    %v3048 = vadd.f32 %v3006, %v3042
    %v3049 = vadd.f32 %v3007, %v3043
    %v3050 = vadd.f32 %v3008, %v3044
    %v3051 = vadd.f32 %v3009, %v3045
    %v3052 = vadd.f32 %v3010, %v3046
    %s3053 = sld [smem:[#allocation7 + $0x3b]]
    %v3054 = vstv %s3053
    %v3055 = vmul.f32 %v3054, %v609
    %v3056 = vmul.f32 %v3054, %v610
    %v3057 = vmul.f32 %v3054, %v611
    %v3058 = vmul.f32 %v3054, %v612
    %v3059 = vmul.f32 %v3054, %v613
    %v3060 = vmul.f32 %v3054, %v614
    %v3061 = vadd.f32 %v3019, %v3055
    %v3062 = vadd.f32 %v3020, %v3056
    %v3063 = vadd.f32 %v3021, %v3057
    %v3064 = vadd.f32 %v3022, %v3058
    %v3065 = vadd.f32 %v3023, %v3059
    %v3066 = vadd.f32 %v3024, %v3060
    %s3067 = sld [smem:[#allocation7 + $0x3c]]
    %v3068 = vstv %s3067
    %v3069 = vmul.f32 %v3068, %v657
    %v3070 = vmul.f32 %v3068, %v658
    %v3071 = vmul.f32 %v3068, %v659
    %v3072 = vmul.f32 %v3068, %v660
    %v3073 = vmul.f32 %v3068, %v661
    %v3074 = vmul.f32 %v3068, %v662
    %v3075 = vadd.f32 %v3033, %v3069
    %v3076 = vadd.f32 %v3034, %v3070
    %v3077 = vadd.f32 %v3035, %v3071
    %v3078 = vadd.f32 %v3036, %v3072
    %v3079 = vadd.f32 %v3037, %v3073
    %v3080 = vadd.f32 %v3038, %v3074
    %s3081 = sld [smem:[#allocation7 + $0x3d]]
    %v3082 = vstv %s3081
    %v3083 = vmul.f32 %v3082, %v657
    %v3084 = vmul.f32 %v3082, %v658
    %v3085 = vmul.f32 %v3082, %v659
    %v3086 = vmul.f32 %v3082, %v660
    %v3087 = vmul.f32 %v3082, %v661
    %v3088 = vmul.f32 %v3082, %v662
    %v3089 = vadd.f32 %v3047, %v3083
    %v3090 = vadd.f32 %v3048, %v3084
    %v3091 = vadd.f32 %v3049, %v3085
    %v3092 = vadd.f32 %v3050, %v3086
    %v3093 = vadd.f32 %v3051, %v3087
    %v3094 = vadd.f32 %v3052, %v3088
    %s3095 = sld [smem:[#allocation7 + $0x3e]]
    %v3096 = vstv %s3095
    %v3097 = vmul.f32 %v3096, %v657
    %v3098 = vmul.f32 %v3096, %v658
    %v3099 = vmul.f32 %v3096, %v659
    %v3100 = vmul.f32 %v3096, %v660
    %v3101 = vmul.f32 %v3096, %v661
    %v3102 = vmul.f32 %v3096, %v662
    %v3103 = vadd.f32 %v3061, %v3097
    %v3104 = vadd.f32 %v3062, %v3098
    %v3105 = vadd.f32 %v3063, %v3099
    %v3106 = vadd.f32 %v3064, %v3100
    %v3107 = vadd.f32 %v3065, %v3101
    %v3108 = vadd.f32 %v3066, %v3102
    %s3109 = sld [smem:[#allocation7 + $0x3f]]
    %v3110 = vstv %s3109
    %v3111 = vmul.f32 %v3110, %v706
    %v3112 = vmul.f32 %v3110, %v707
    %v3113 = vmul.f32 %v3110, %v708
    %v3114 = vmul.f32 %v3110, %v709
    %v3115 = vmul.f32 %v3110, %v710
    %v3116 = vmul.f32 %v3110, %v711
    %v3117 = vadd.f32 %v3075, %v3111
    %v3118 = vadd.f32 %v3076, %v3112
    %v3119 = vadd.f32 %v3077, %v3113
    %v3120 = vadd.f32 %v3078, %v3114
    %v3121 = vadd.f32 %v3079, %v3115
    %v3122 = vadd.f32 %v3080, %v3116
    %s3123 = sld [smem:[#allocation7 + $0x40]]
    %v3124 = vstv %s3123
    %v3125 = vmul.f32 %v3124, %v706
    %v3126 = vmul.f32 %v3124, %v707
    %v3127 = vmul.f32 %v3124, %v708
    %v3128 = vmul.f32 %v3124, %v709
    %v3129 = vmul.f32 %v3124, %v710
    %v3130 = vmul.f32 %v3124, %v711
    %v3131 = vadd.f32 %v3089, %v3125
    %v3132 = vadd.f32 %v3090, %v3126
    %v3133 = vadd.f32 %v3091, %v3127
    %v3134 = vadd.f32 %v3092, %v3128
    %v3135 = vadd.f32 %v3093, %v3129
    %v3136 = vadd.f32 %v3094, %v3130
    %s3137 = sld [smem:[#allocation7 + $0x41]]
    %v3138 = vstv %s3137
    %v3139 = vmul.f32 %v3138, %v706
    %v3140 = vmul.f32 %v3138, %v707
    %v3141 = vmul.f32 %v3138, %v708
    %v3142 = vmul.f32 %v3138, %v709
    %v3143 = vmul.f32 %v3138, %v710
    %v3144 = vmul.f32 %v3138, %v711
    %v3145 = vadd.f32 %v3103, %v3139
    %v3146 = vadd.f32 %v3104, %v3140
    %v3147 = vadd.f32 %v3105, %v3141
    %v3148 = vadd.f32 %v3106, %v3142
    %v3149 = vadd.f32 %v3107, %v3143
    %v3150 = vadd.f32 %v3108, %v3144
    %s3151 = sld [smem:[#allocation7 + $0x42]]
    %v3152 = vstv %s3151
    %v3153 = vmul.f32 %v3152, %v754
    %v3154 = vmul.f32 %v3152, %v755
    %v3155 = vmul.f32 %v3152, %v756
    %v3156 = vmul.f32 %v3152, %v757
    %v3157 = vmul.f32 %v3152, %v758
    %v3158 = vmul.f32 %v3152, %v759
    %v3159 = vadd.f32 %v3117, %v3153
    %v3160 = vadd.f32 %v3118, %v3154
    %v3161 = vadd.f32 %v3119, %v3155
    %v3162 = vadd.f32 %v3120, %v3156
    %v3163 = vadd.f32 %v3121, %v3157
    %v3164 = vadd.f32 %v3122, %v3158
    %s3165 = sld [smem:[#allocation7 + $0x43]]
    %v3166 = vstv %s3165
    %v3167 = vmul.f32 %v3166, %v754
    %v3168 = vmul.f32 %v3166, %v755
    %v3169 = vmul.f32 %v3166, %v756
    %v3170 = vmul.f32 %v3166, %v757
    %v3171 = vmul.f32 %v3166, %v758
    %v3172 = vmul.f32 %v3166, %v759
    %v3173 = vadd.f32 %v3131, %v3167
    %v3174 = vadd.f32 %v3132, %v3168
    %v3175 = vadd.f32 %v3133, %v3169
    %v3176 = vadd.f32 %v3134, %v3170
    %v3177 = vadd.f32 %v3135, %v3171
    %v3178 = vadd.f32 %v3136, %v3172
    %s3179 = sld [smem:[#allocation7 + $0x44]]
    %v3180 = vstv %s3179
    %v3181 = vmul.f32 %v3180, %v754
    %v3182 = vmul.f32 %v3180, %v755
    %v3183 = vmul.f32 %v3180, %v756
    %v3184 = vmul.f32 %v3180, %v757
    %v3185 = vmul.f32 %v3180, %v758
    %v3186 = vmul.f32 %v3180, %v759
    %v3187 = vadd.f32 %v3145, %v3181
    %v3188 = vadd.f32 %v3146, %v3182
    %v3189 = vadd.f32 %v3147, %v3183
    %v3190 = vadd.f32 %v3148, %v3184
    %v3191 = vadd.f32 %v3149, %v3185
    %v3192 = vadd.f32 %v3150, %v3186
    %s3193 = sld [smem:[#allocation7 + $0x45]]
    %v3194 = vstv %s3193
    %v3195 = vmul.f32 %v3194, %v802
    %v3196 = vmul.f32 %v3194, %v803
    %v3197 = vmul.f32 %v3194, %v804
    %v3198 = vmul.f32 %v3194, %v805
    %v3199 = vmul.f32 %v3194, %v806
    %v3200 = vmul.f32 %v3194, %v807
    %v3201 = vadd.f32 %v3159, %v3195
    %v3202 = vadd.f32 %v3160, %v3196
    %v3203 = vadd.f32 %v3161, %v3197
    %v3204 = vadd.f32 %v3162, %v3198
    %v3205 = vadd.f32 %v3163, %v3199
    %v3206 = vadd.f32 %v3164, %v3200
    %s3207 = sld [smem:[#allocation7 + $0x46]]
    %v3208 = vstv %s3207
    %v3209 = vmul.f32 %v3208, %v802
    %v3210 = vmul.f32 %v3208, %v803
    %v3211 = vmul.f32 %v3208, %v804
    %v3212 = vmul.f32 %v3208, %v805
    %v3213 = vmul.f32 %v3208, %v806
    %v3214 = vmul.f32 %v3208, %v807
    %v3215 = vadd.f32 %v3173, %v3209
    %v3216 = vadd.f32 %v3174, %v3210
    %v3217 = vadd.f32 %v3175, %v3211
    %v3218 = vadd.f32 %v3176, %v3212
    %v3219 = vadd.f32 %v3177, %v3213
    %v3220 = vadd.f32 %v3178, %v3214
    %s3221 = sld [smem:[#allocation7 + $0x47]]
    %v3222 = vstv %s3221
    %v3223 = vmul.f32 %v3222, %v802
    %v3224 = vmul.f32 %v3222, %v803
    %v3225 = vmul.f32 %v3222, %v804
    %v3226 = vmul.f32 %v3222, %v805
    %v3227 = vmul.f32 %v3222, %v806
    %v3228 = vmul.f32 %v3222, %v807
    %v3229 = vadd.f32 %v3187, %v3223
    %v3230 = vadd.f32 %v3188, %v3224
    %v3231 = vadd.f32 %v3189, %v3225
    %v3232 = vadd.f32 %v3190, %v3226
    %v3233 = vadd.f32 %v3191, %v3227
    %v3234 = vadd.f32 %v3192, %v3228
    %s3235 = sld [smem:[#allocation8 + $0x1]]
    %v3236 = vld [vmem:[#allocation12 + $0x2d0] sm:$0xff]
    %v3237 = vld [vmem:[#allocation12 + $0x2d8] sm:$0xff]
    %v3238 = vld [vmem:[#allocation12 + $0x2e0] sm:$0xff]
    %v3239 = vld [vmem:[#allocation12 + $0x2e8] sm:$0xff]
    %v3240 = vld [vmem:[#allocation12 + $0x2f0] sm:$0xff]
    %v3241 = vld [vmem:[#allocation12 + $0x2f8] sm:$0xff]
    %v3242 = vld [vmem:[#allocation12 + $0x300] sm:$0xff]
    %v3243 = vld [vmem:[#allocation12 + $0x308] sm:$0xff]
    %v3244 = vld [vmem:[#allocation12 + $0x310] sm:$0xff]
    %v3245 = vld [vmem:[#allocation12 + $0x318] sm:$0xff]
    %v3246 = vld [vmem:[#allocation12 + $0x320] sm:$0xff]
    %v3247 = vld [vmem:[#allocation12 + $0x328] sm:$0xff]
    %v3248 = vld [vmem:[#allocation12 + $0x330] sm:$0xff]
    %v3249 = vld [vmem:[#allocation12 + $0x338] sm:$0xff]
    %v3250 = vld [vmem:[#allocation12 + $0x340] sm:$0xff]
    %v3251 = vld [vmem:[#allocation12 + $0x348] sm:$0xff]
    %v3252 = vld [vmem:[#allocation12 + $0x350] sm:$0xff]
    %v3253 = vld [vmem:[#allocation12 + $0x358] sm:$0xff]
    %v3254 = vld [vmem:[#allocation12 + $0x360] sm:$0xff]
    %v3255 = vld [vmem:[#allocation12 + $0x368] sm:$0xff]
    %v3256 = vld [vmem:[#allocation12 + $0x370] sm:$0xff]
    %v3257 = vld [vmem:[#allocation12 + $0x378] sm:$0xff]
    %v3258 = vld [vmem:[#allocation12 + $0x380] sm:$0xff]
    %v3259 = vld [vmem:[#allocation12 + $0x388] sm:$0xff]
    %v3260 = vld [vmem:[#allocation12 + $0x390] sm:$0xff]
    %v3261 = vld [vmem:[#allocation12 + $0x398] sm:$0xff]
    %v3262 = vld [vmem:[#allocation12 + $0x3a0] sm:$0xff]
    %v3263 = vld [vmem:[#allocation12 + $0x3a8] sm:$0xff]
    %v3264 = vld [vmem:[#allocation12 + $0x3b0] sm:$0xff]
    %v3265 = vld [vmem:[#allocation12 + $0x3b8] sm:$0xff]
    %v3266 = vld [vmem:[#allocation12 + $0x3c0] sm:$0xff]
    %v3267 = vld [vmem:[#allocation12 + $0x3c8] sm:$0xff]
    %v3268 = vld [vmem:[#allocation12 + $0x3d0] sm:$0xff]
    %v3269 = vld [vmem:[#allocation12 + $0x3d8] sm:$0xff]
    %v3270 = vld [vmem:[#allocation12 + $0x3e0] sm:$0xff]
    %v3271 = vld [vmem:[#allocation12 + $0x3e8] sm:$0xff]
    %v3272 = vld [vmem:[#allocation12 + $0x3f0] sm:$0xff]
    %v3273 = vld [vmem:[#allocation12 + $0x3f8] sm:$0xff]
    %v3274 = vld [vmem:[#allocation12 + $0x400] sm:$0xff]
    %v3275 = vld [vmem:[#allocation12 + $0x408] sm:$0xff]
    %v3276 = vld [vmem:[#allocation12 + $0x410] sm:$0xff]
    %v3277 = vld [vmem:[#allocation12 + $0x418] sm:$0xff]
    %v3278 = vld [vmem:[#allocation12 + $0x420] sm:$0xff]
    %v3279 = vld [vmem:[#allocation12 + $0x428] sm:$0xff]
    %v3280 = vld [vmem:[#allocation12 + $0x430] sm:$0xff]
    %v3281 = vld [vmem:[#allocation12 + $0x438] sm:$0xff]
    %v3282 = vld [vmem:[#allocation12 + $0x440] sm:$0xff]
    %v3283 = vld [vmem:[#allocation12 + $0x448] sm:$0xff]
    %v3284 = vld [vmem:[#allocation12 + $0x450] sm:$0xff]
    %v3285 = vld [vmem:[#allocation12 + $0x458] sm:$0xff]
    %v3286 = vld [vmem:[#allocation12 + $0x460] sm:$0xff]
    %v3287 = vld [vmem:[#allocation12 + $0x468] sm:$0xff]
    %v3288 = vld [vmem:[#allocation12 + $0x470] sm:$0xff]
    %v3289 = vld [vmem:[#allocation12 + $0x478] sm:$0xff]
    %v3290 = vld [vmem:[#allocation12 + $0x480] sm:$0xff]
    %v3291 = vld [vmem:[#allocation12 + $0x488] sm:$0xff]
    %v3292 = vld [vmem:[#allocation12 + $0x490] sm:$0xff]
    %v3293 = vld [vmem:[#allocation12 + $0x498] sm:$0xff]
    %v3294 = vld [vmem:[#allocation12 + $0x4a0] sm:$0xff]
    %v3295 = vld [vmem:[#allocation12 + $0x4a8] sm:$0xff]
    %v3296 = vld [vmem:[#allocation12 + $0x4b0] sm:$0xff]
    %v3297 = vld [vmem:[#allocation12 + $0x4b8] sm:$0xff]
    %v3298 = vld [vmem:[#allocation12 + $0x4c0] sm:$0xff]
    %v3299 = vld [vmem:[#allocation12 + $0x4c8] sm:$0xff]
    %v3300 = vld [vmem:[#allocation12 + $0x4d0] sm:$0xff]
    %v3301 = vld [vmem:[#allocation12 + $0x4d8] sm:$0xff]
    %v3302 = vld [vmem:[#allocation12 + $0x4e0] sm:$0xff]
    %v3303 = vld [vmem:[#allocation12 + $0x4e8] sm:$0xff]
    %v3304 = vld [vmem:[#allocation12 + $0x4f0] sm:$0xff]
    %v3305 = vld [vmem:[#allocation12 + $0x4f8] sm:$0xff]
    %v3306 = vld [vmem:[#allocation12 + $0x500] sm:$0xff]
    %v3307 = vld [vmem:[#allocation12 + $0x508] sm:$0xff]
    %v3308 = vld [vmem:[#allocation12 + $0x510] sm:$0xff]
    %v3309 = vld [vmem:[#allocation12 + $0x518] sm:$0xff]
    %v3310 = vld [vmem:[#allocation12 + $0x520] sm:$0xff]
    %v3311 = vld [vmem:[#allocation12 + $0x528] sm:$0xff]
    %v3312 = vld [vmem:[#allocation12 + $0x530] sm:$0xff]
    %v3313 = vld [vmem:[#allocation12 + $0x538] sm:$0xff]
    %v3314 = vld [vmem:[#allocation12 + $0x540] sm:$0xff]
    %v3315 = vld [vmem:[#allocation12 + $0x548] sm:$0xff]
    %v3316 = vld [vmem:[#allocation12 + $0x550] sm:$0xff]
    %v3317 = vld [vmem:[#allocation12 + $0x558] sm:$0xff]
    %v3318 = vld [vmem:[#allocation12 + $0x560] sm:$0xff]
    %v3319 = vld [vmem:[#allocation12 + $0x568] sm:$0xff]
    %v3320 = vld [vmem:[#allocation12 + $0x570] sm:$0xff]
    %v3321 = vld [vmem:[#allocation12 + $0x578] sm:$0xff]
    %v3322 = vld [vmem:[#allocation12 + $0x580] sm:$0xff]
    %v3323 = vld [vmem:[#allocation12 + $0x588] sm:$0xff]
    %v3324 = vld [vmem:[#allocation12 + $0x590] sm:$0xff]
    %v3325 = vld [vmem:[#allocation12 + $0x598] sm:$0xff]
    %v3327 = vsel %vm941, %v3215, 0
    %v3330 = vsel %vm941, %v3216, 0
    %v3333 = vsel %vm941, %v3217, 0
    %3335 = vmatprep.subr.mxu0 0.0
    %3336 = vmatpush1.msra.mxu0 0.0
    %3337 = vmatprep.subr.mxu0 0.0
    %3338 = vmatpush1.msra.mxu0 0.0
    %3339 = vmatprep.subr.mxu0 0.0
    %3340 = vmatpush1.msra.mxu0 0.0
    %3341 = vmatprep.subr.mxu0 0.0
    %3342 = vmatpush1.msra.mxu0 0.0
    %3343 = vmatprep.subr.mxu0 0.0
    %3344 = vmatpush1.msra.mxu0 0.0
    %3345 = vmatprep.subr.mxu0 0.0
    %3346 = vmatpush1.msra.mxu0 0.0
    %3347 = vmatprep.subr.mxu0 0.0
    %3348 = vmatpush1.msra.mxu0 0.0
    %3349 = vmatprep.subr.mxu0 0.0
    %3350 = vmatpush1.msra.mxu0 0.0
    %3351 = vmatprep.subr.mxu0 0.0
    %3352 = vmatpush1.msra.mxu0 0.0
    %3353 = vmatprep.subr.mxu0 0.0
    %3354 = vmatpush1.msra.mxu0 0.0
    %3355 = vmatprep.subr.mxu0 0.0
    %3356 = vmatpush1.msra.mxu0 0.0
    %3357 = vmatprep.subr.mxu0 0.0
    %3358 = vmatpush1.msra.mxu0 0.0
    %3359 = vmatprep.subr.mxu0 0.0
    %3360 = vmatpush1.msra.mxu0 0.0
    %3361 = vmatprep.subr.mxu0 0.0
    %3362 = vmatpush1.msra.mxu0 %v146
    %3363 = vmatprep.subr.mxu0 0.0
    %3364 = vmatpush1.msra.mxu0 %v145
    %3365 = vmatprep.subr.mxu0 0.0
    %3366 = vmatpush1.msra.mxu0 %v144
    %3367 = vmatprep.subr.mxu0 0.0
    %3368 = vmatpush2.msra.mxu0 0.0
    %3369 = vmatprep.subr.mxu0 0.0
    %3370 = vmatpush2.msra.mxu0 0.0
    %3371 = vmatprep.subr.mxu0 0.0
    %3372 = vmatpush2.msra.mxu0 0.0
    %3373 = vmatprep.subr.mxu0 0.0
    %3374 = vmatpush2.msra.mxu0 0.0
    %3375 = vmatprep.subr.mxu0 0.0
    %3376 = vmatpush2.msra.mxu0 0.0
    %3377 = vmatprep.subr.mxu0 0.0
    %3378 = vmatpush2.msra.mxu0 0.0
    %3379 = vmatprep.subr.mxu0 0.0
    %3380 = vmatpush2.msra.mxu0 0.0
    %3381 = vmatprep.subr.mxu0 0.0
    %3382 = vmatpush2.msra.mxu0 0.0
    %3383 = vmatprep.subr.mxu0 0.0
    %3384 = vmatpush2.msra.mxu0 0.0
    %3385 = vmatprep.subr.mxu0 0.0
    %3386 = vmatpush2.msra.mxu0 0.0
    %3387 = vmatprep.subr.mxu0 0.0
    %3388 = vmatpush2.msra.mxu0 0.0
    %3389 = vmatprep.subr.mxu0 0.0
    %3390 = vmatpush2.msra.mxu0 0.0
    %3391 = vmatprep.subr.mxu0 0.0
    %3392 = vmatpush2.msra.mxu0 0.0
    %3393 = vmatprep.subr.mxu0 0.0
    %3394 = vmatpush2.msra.mxu0 0.0
    %3395 = vmatprep.subr.mxu0 0.0
    %3396 = vmatpush2.msra.mxu0 0.0
    %3397 = vmatprep.subr.mxu0 0.0
    %3398 = vmatpush2.msra.mxu0 0.0
    %3399 = vmatprep.mubr.f32.mxu0 0.0
    %3400 = vmatmul.mubr.f32.gmra.mxu0 %v3327
    %v3401 = vpop.f32.mrf.mxu0
    %v3402 = vadd.f32 0.0, %v3401
    %v3403 = vpop.f32.mrf.mxu0
    %3404 = vmatprep.mubr.f32.mxu0 0.0
    %3405 = vmatmul.mubr.f32.gmra.mxu0 %v3330
    %v3406 = vpop.f32.mrf.mxu0
    %v3407 = vadd.f32 0.0, %v3406
    %v3408 = vpop.f32.mrf.mxu0
    %3409 = vmatprep.mubr.f32.mxu0 0.0
    %3410 = vmatmul.mubr.f32.gmra.mxu0 %v3333
    %v3411 = vpop.f32.mrf.mxu0
    %v3412 = vadd.f32 0.0, %v3411
    %v3413 = vpop.f32.mrf.mxu0
    %3414 = vdwg.mxu0
    %v3415 = vadd.f32 %v3201, %v3402
    %v3416 = vadd.f32 %v3202, %v3407
    %v3417 = vadd.f32 %v3203, %v3412
    %v3419 = vsel %vm941, %v3229, 0
    %v3422 = vsel %vm941, %v3230, 0
    %v3425 = vsel %vm941, %v3231, 0
    %3427 = vmatprep.subr.mxu0 0.0
    %3428 = vmatpush1.msra.mxu0 0.0
    %3429 = vmatprep.subr.mxu0 0.0
    %3430 = vmatpush1.msra.mxu0 0.0
    %3431 = vmatprep.subr.mxu0 0.0
    %3432 = vmatpush1.msra.mxu0 0.0
    %3433 = vmatprep.subr.mxu0 0.0
    %3434 = vmatpush1.msra.mxu0 0.0
    %3435 = vmatprep.subr.mxu0 0.0
    %3436 = vmatpush1.msra.mxu0 0.0
    %3437 = vmatprep.subr.mxu0 0.0
    %3438 = vmatpush1.msra.mxu0 0.0
    %3439 = vmatprep.subr.mxu0 0.0
    %3440 = vmatpush1.msra.mxu0 0.0
    %3441 = vmatprep.subr.mxu0 0.0
    %3442 = vmatpush1.msra.mxu0 0.0
    %3443 = vmatprep.subr.mxu0 0.0
    %3444 = vmatpush1.msra.mxu0 0.0
    %3445 = vmatprep.subr.mxu0 0.0
    %3446 = vmatpush1.msra.mxu0 0.0
    %3447 = vmatprep.subr.mxu0 0.0
    %3448 = vmatpush1.msra.mxu0 0.0
    %3449 = vmatprep.subr.mxu0 0.0
    %3450 = vmatpush1.msra.mxu0 0.0
    %3451 = vmatprep.subr.mxu0 0.0
    %3452 = vmatpush1.msra.mxu0 0.0
    %3453 = vmatprep.subr.mxu0 0.0
    %3454 = vmatpush1.msra.mxu0 %v153
    %3455 = vmatprep.subr.mxu0 0.0
    %3456 = vmatpush1.msra.mxu0 %v152
    %3457 = vmatprep.subr.mxu0 0.0
    %3458 = vmatpush1.msra.mxu0 %v151
    %3459 = vmatprep.subr.mxu0 0.0
    %3460 = vmatpush2.msra.mxu0 0.0
    %3461 = vmatprep.subr.mxu0 0.0
    %3462 = vmatpush2.msra.mxu0 0.0
    %3463 = vmatprep.subr.mxu0 0.0
    %3464 = vmatpush2.msra.mxu0 0.0
    %3465 = vmatprep.subr.mxu0 0.0
    %3466 = vmatpush2.msra.mxu0 0.0
    %3467 = vmatprep.subr.mxu0 0.0
    %3468 = vmatpush2.msra.mxu0 0.0
    %3469 = vmatprep.subr.mxu0 0.0
    %3470 = vmatpush2.msra.mxu0 0.0
    %3471 = vmatprep.subr.mxu0 0.0
    %3472 = vmatpush2.msra.mxu0 0.0
    %3473 = vmatprep.subr.mxu0 0.0
    %3474 = vmatpush2.msra.mxu0 0.0
    %3475 = vmatprep.subr.mxu0 0.0
    %3476 = vmatpush2.msra.mxu0 0.0
    %3477 = vmatprep.subr.mxu0 0.0
    %3478 = vmatpush2.msra.mxu0 0.0
    %3479 = vmatprep.subr.mxu0 0.0
    %3480 = vmatpush2.msra.mxu0 0.0
    %3481 = vmatprep.subr.mxu0 0.0
    %3482 = vmatpush2.msra.mxu0 0.0
    %3483 = vmatprep.subr.mxu0 0.0
    %3484 = vmatpush2.msra.mxu0 0.0
    %3485 = vmatprep.subr.mxu0 0.0
    %3486 = vmatpush2.msra.mxu0 0.0
    %3487 = vmatprep.subr.mxu0 0.0
    %3488 = vmatpush2.msra.mxu0 0.0
    %3489 = vmatprep.subr.mxu0 0.0
    %3490 = vmatpush2.msra.mxu0 0.0
    %3491 = vmatprep.mubr.f32.mxu0 0.0
    %3492 = vmatmul.mubr.f32.gmra.mxu0 %v3419
    %v3493 = vpop.f32.mrf.mxu0
    %v3494 = vadd.f32 0.0, %v3493
    %v3495 = vpop.f32.mrf.mxu0
    %3496 = vmatprep.mubr.f32.mxu0 0.0
    %3497 = vmatmul.mubr.f32.gmra.mxu0 %v3422
    %v3498 = vpop.f32.mrf.mxu0
    %v3499 = vadd.f32 0.0, %v3498
    %v3500 = vpop.f32.mrf.mxu0
    %3501 = vmatprep.mubr.f32.mxu0 0.0
    %3502 = vmatmul.mubr.f32.gmra.mxu0 %v3425
    %v3503 = vpop.f32.mrf.mxu0
    %v3504 = vadd.f32 0.0, %v3503
    %v3505 = vpop.f32.mrf.mxu0
    %3506 = vdwg.mxu0
    %v3507 = vadd.f32 %v3415, %v3494
    %v3508 = vadd.f32 %v3416, %v3499
    %v3509 = vadd.f32 %v3417, %v3504
    %v3510 = vstv %s3235
    %v3511 = vadd.f32 %v3507, %v3510
    %v3512 = vadd.f32 %v3508, %v3510
    %v3513 = vadd.f32 %v3509, %v3510
    %v3514 = vmax.f32 %v3511, 0.0
    %v3515 = vmax.f32 %v3512, 0.0
    %v3516 = vmax.f32 %v3513, 0.0
    %v3518 = vsel %vm941, %v3514, 0
    %v3521 = vsel %vm941, %v3515, 0
    %v3524 = vsel %vm941, %v3516, 0
    %3526 = vmatprep.subr.mxu0 0.0
    %3527 = vmatpush1.msra.mxu0 0.0
    %3528 = vmatprep.subr.mxu0 0.0
    %3529 = vmatpush1.msra.mxu0 0.0
    %3530 = vmatprep.subr.mxu0 0.0
    %3531 = vmatpush1.msra.mxu0 0.0
    %3532 = vmatprep.subr.mxu0 0.0
    %3533 = vmatpush1.msra.mxu0 0.0
    %3534 = vmatprep.subr.mxu0 0.0
    %3535 = vmatpush1.msra.mxu0 0.0
    %3536 = vmatprep.subr.mxu0 0.0
    %3537 = vmatpush1.msra.mxu0 0.0
    %3538 = vmatprep.subr.mxu0 0.0
    %3539 = vmatpush1.msra.mxu0 0.0
    %3540 = vmatprep.subr.mxu0 0.0
    %3541 = vmatpush1.msra.mxu0 0.0
    %3542 = vmatprep.subr.mxu0 0.0
    %3543 = vmatpush1.msra.mxu0 0.0
    %3544 = vmatprep.subr.mxu0 0.0
    %3545 = vmatpush1.msra.mxu0 0.0
    %3546 = vmatprep.subr.mxu0 0.0
    %3547 = vmatpush1.msra.mxu0 0.0
    %3548 = vmatprep.subr.mxu0 0.0
    %3549 = vmatpush1.msra.mxu0 0.0
    %3550 = vmatprep.subr.mxu0 0.0
    %3551 = vmatpush1.msra.mxu0 0.0
    %3552 = vmatprep.subr.mxu0 0.0
    %3553 = vmatpush1.msra.mxu0 %v167
    %3554 = vmatprep.subr.mxu0 0.0
    %3555 = vmatpush1.msra.mxu0 %v166
    %3556 = vmatprep.subr.mxu0 0.0
    %3557 = vmatpush1.msra.mxu0 %v165
    %3558 = vmatprep.subr.mxu0 0.0
    %3559 = vmatpush2.msra.mxu0 0.0
    %3560 = vmatprep.subr.mxu0 0.0
    %3561 = vmatpush2.msra.mxu0 0.0
    %3562 = vmatprep.subr.mxu0 0.0
    %3563 = vmatpush2.msra.mxu0 0.0
    %3564 = vmatprep.subr.mxu0 0.0
    %3565 = vmatpush2.msra.mxu0 0.0
    %3566 = vmatprep.subr.mxu0 0.0
    %3567 = vmatpush2.msra.mxu0 0.0
    %3568 = vmatprep.subr.mxu0 0.0
    %3569 = vmatpush2.msra.mxu0 0.0
    %3570 = vmatprep.subr.mxu0 0.0
    %3571 = vmatpush2.msra.mxu0 0.0
    %3572 = vmatprep.subr.mxu0 0.0
    %3573 = vmatpush2.msra.mxu0 0.0
    %3574 = vmatprep.subr.mxu0 0.0
    %3575 = vmatpush2.msra.mxu0 0.0
    %3576 = vmatprep.subr.mxu0 0.0
    %3577 = vmatpush2.msra.mxu0 0.0
    %3578 = vmatprep.subr.mxu0 0.0
    %3579 = vmatpush2.msra.mxu0 0.0
    %3580 = vmatprep.subr.mxu0 0.0
    %3581 = vmatpush2.msra.mxu0 0.0
    %3582 = vmatprep.subr.mxu0 0.0
    %3583 = vmatpush2.msra.mxu0 0.0
    %3584 = vmatprep.subr.mxu0 0.0
    %3585 = vmatpush2.msra.mxu0 0.0
    %3586 = vmatprep.subr.mxu0 0.0
    %3587 = vmatpush2.msra.mxu0 0.0
    %3588 = vmatprep.subr.mxu0 0.0
    %3589 = vmatpush2.msra.mxu0 0.0
    %3590 = vmatprep.mubr.f32.mxu0 0.0
    %3591 = vmatmul.mubr.f32.gmra.mxu0 %v3518
    %v3592 = vpop.f32.mrf.mxu0
    %v3593 = vadd.f32 0.0, %v3592
    %v3594 = vpop.f32.mrf.mxu0
    %3595 = vmatprep.mubr.f32.mxu0 0.0
    %3596 = vmatmul.mubr.f32.gmra.mxu0 %v3521
    %v3597 = vpop.f32.mrf.mxu0
    %v3598 = vadd.f32 0.0, %v3597
    %v3599 = vpop.f32.mrf.mxu0
    %3600 = vmatprep.mubr.f32.mxu0 0.0
    %3601 = vmatmul.mubr.f32.gmra.mxu0 %v3524
    %v3602 = vpop.f32.mrf.mxu0
    %v3603 = vadd.f32 0.0, %v3602
    %v3604 = vpop.f32.mrf.mxu0
    %3605 = vdwg.mxu0
    %3606 = vmatprep.subr.mxu0 0.0
    %3607 = vmatpush1.msra.mxu0 0.0
    %3608 = vmatprep.subr.mxu0 0.0
    %3609 = vmatpush1.msra.mxu0 0.0
    %3610 = vmatprep.subr.mxu0 0.0
    %3611 = vmatpush1.msra.mxu0 0.0
    %3612 = vmatprep.subr.mxu0 0.0
    %3613 = vmatpush1.msra.mxu0 0.0
    %3614 = vmatprep.subr.mxu0 0.0
    %3615 = vmatpush1.msra.mxu0 0.0
    %3616 = vmatprep.subr.mxu0 0.0
    %3617 = vmatpush1.msra.mxu0 0.0
    %3618 = vmatprep.subr.mxu0 0.0
    %3619 = vmatpush1.msra.mxu0 0.0
    %3620 = vmatprep.subr.mxu0 0.0
    %3621 = vmatpush1.msra.mxu0 0.0
    %3622 = vmatprep.subr.mxu0 0.0
    %3623 = vmatpush1.msra.mxu0 0.0
    %3624 = vmatprep.subr.mxu0 0.0
    %3625 = vmatpush1.msra.mxu0 0.0
    %3626 = vmatprep.subr.mxu0 0.0
    %3627 = vmatpush1.msra.mxu0 0.0
    %3628 = vmatprep.subr.mxu0 0.0
    %3629 = vmatpush1.msra.mxu0 0.0
    %3630 = vmatprep.subr.mxu0 0.0
    %3631 = vmatpush1.msra.mxu0 0.0
    %3632 = vmatprep.subr.mxu0 0.0
    %3633 = vmatpush1.msra.mxu0 %v176
    %3634 = vmatprep.subr.mxu0 0.0
    %3635 = vmatpush1.msra.mxu0 %v175
    %3636 = vmatprep.subr.mxu0 0.0
    %3637 = vmatpush1.msra.mxu0 %v174
    %3638 = vmatprep.subr.mxu0 0.0
    %3639 = vmatpush2.msra.mxu0 0.0
    %3640 = vmatprep.subr.mxu0 0.0
    %3641 = vmatpush2.msra.mxu0 0.0
    %3642 = vmatprep.subr.mxu0 0.0
    %3643 = vmatpush2.msra.mxu0 0.0
    %3644 = vmatprep.subr.mxu0 0.0
    %3645 = vmatpush2.msra.mxu0 0.0
    %3646 = vmatprep.subr.mxu0 0.0
    %3647 = vmatpush2.msra.mxu0 0.0
    %3648 = vmatprep.subr.mxu0 0.0
    %3649 = vmatpush2.msra.mxu0 0.0
    %3650 = vmatprep.subr.mxu0 0.0
    %3651 = vmatpush2.msra.mxu0 0.0
    %3652 = vmatprep.subr.mxu0 0.0
    %3653 = vmatpush2.msra.mxu0 0.0
    %3654 = vmatprep.subr.mxu0 0.0
    %3655 = vmatpush2.msra.mxu0 0.0
    %3656 = vmatprep.subr.mxu0 0.0
    %3657 = vmatpush2.msra.mxu0 0.0
    %3658 = vmatprep.subr.mxu0 0.0
    %3659 = vmatpush2.msra.mxu0 0.0
    %3660 = vmatprep.subr.mxu0 0.0
    %3661 = vmatpush2.msra.mxu0 0.0
    %3662 = vmatprep.subr.mxu0 0.0
    %3663 = vmatpush2.msra.mxu0 0.0
    %3664 = vmatprep.subr.mxu0 0.0
    %3665 = vmatpush2.msra.mxu0 0.0
    %3666 = vmatprep.subr.mxu0 0.0
    %3667 = vmatpush2.msra.mxu0 0.0
    %3668 = vmatprep.subr.mxu0 0.0
    %3669 = vmatpush2.msra.mxu0 0.0
    %3670 = vmatprep.mubr.f32.mxu0 0.0
    %3671 = vmatmul.mubr.f32.gmra.mxu0 %v3518
    %v3672 = vpop.f32.mrf.mxu0
    %v3673 = vadd.f32 0.0, %v3672
    %v3674 = vpop.f32.mrf.mxu0
    %3675 = vmatprep.mubr.f32.mxu0 0.0
    %3676 = vmatmul.mubr.f32.gmra.mxu0 %v3521
    %v3677 = vpop.f32.mrf.mxu0
    %v3678 = vadd.f32 0.0, %v3677
    %v3679 = vpop.f32.mrf.mxu0
    %3680 = vmatprep.mubr.f32.mxu0 0.0
    %3681 = vmatmul.mubr.f32.gmra.mxu0 %v3524
    %v3682 = vpop.f32.mrf.mxu0
    %v3683 = vadd.f32 0.0, %v3682
    %v3684 = vpop.f32.mrf.mxu0
    %3685 = vdwg.mxu0
    %v3686 = vmax.f32 %v3593, %v3673
    %v3687 = vmax.f32 %v3598, %v3678
    %v3688 = vmax.f32 %v3603, %v3683
    %v3690 = vsel %vm1312, %v3688, 0
    %3692 = vmatprep.subr.mxu0 0.0
    %3693 = vmatpush1.msra.mxu0 0.0
    %3694 = vmatprep.subr.mxu0 0.0
    %3695 = vmatpush1.msra.mxu0 0.0
    %3696 = vmatprep.subr.mxu0 0.0
    %3697 = vmatpush1.msra.mxu0 0.0
    %3698 = vmatprep.subr.mxu0 0.0
    %3699 = vmatpush1.msra.mxu0 0.0
    %3700 = vmatprep.subr.mxu0 0.0
    %3701 = vmatpush1.msra.mxu0 0.0
    %3702 = vmatprep.subr.mxu0 0.0
    %3703 = vmatpush1.msra.mxu0 0.0
    %3704 = vmatprep.subr.mxu0 0.0
    %3705 = vmatpush1.msra.mxu0 0.0
    %3706 = vmatprep.subr.mxu0 0.0
    %3707 = vmatpush1.msra.mxu0 0.0
    %3708 = vmatprep.subr.mxu0 0.0
    %3709 = vmatpush1.msra.mxu0 0.0
    %3710 = vmatprep.subr.mxu0 0.0
    %3711 = vmatpush1.msra.mxu0 0.0
    %3712 = vmatprep.subr.mxu0 0.0
    %3713 = vmatpush1.msra.mxu0 0.0
    %3714 = vmatprep.subr.mxu0 0.0
    %3715 = vmatpush1.msra.mxu0 0.0
    %3716 = vmatprep.subr.mxu0 0.0
    %3717 = vmatpush1.msra.mxu0 0.0
    %3718 = vmatprep.subr.mxu0 0.0
    %3719 = vmatpush1.msra.mxu0 %v3690
    %3720 = vmatprep.subr.mxu0 0.0
    %3721 = vmatpush1.msra.mxu0 %v3687
    %3722 = vmatprep.subr.mxu0 0.0
    %3723 = vmatpush1.msra.mxu0 %v3686
    %3724 = vmatprep.subr.mxu0 0.0
    %3725 = vmatpush2.msra.mxu0 0.0
    %3726 = vmatprep.subr.mxu0 0.0
    %3727 = vmatpush2.msra.mxu0 0.0
    %3728 = vmatprep.subr.mxu0 0.0
    %3729 = vmatpush2.msra.mxu0 0.0
    %3730 = vmatprep.subr.mxu0 0.0
    %3731 = vmatpush2.msra.mxu0 0.0
    %3732 = vmatprep.subr.mxu0 0.0
    %3733 = vmatpush2.msra.mxu0 0.0
    %3734 = vmatprep.subr.mxu0 0.0
    %3735 = vmatpush2.msra.mxu0 0.0
    %3736 = vmatprep.subr.mxu0 0.0
    %3737 = vmatpush2.msra.mxu0 0.0
    %3738 = vmatprep.subr.mxu0 0.0
    %3739 = vmatpush2.msra.mxu0 0.0
    %3740 = vmatprep.subr.mxu0 0.0
    %3741 = vmatpush2.msra.mxu0 0.0
    %3742 = vmatprep.subr.mxu0 0.0
    %3743 = vmatpush2.msra.mxu0 0.0
    %3744 = vmatprep.subr.mxu0 0.0
    %3745 = vmatpush2.msra.mxu0 0.0
    %3746 = vmatprep.subr.mxu0 0.0
    %3747 = vmatpush2.msra.mxu0 0.0
    %3748 = vmatprep.subr.mxu0 0.0
    %3749 = vmatpush2.msra.mxu0 0.0
    %3750 = vmatprep.subr.mxu0 0.0
    %3751 = vmatpush2.msra.mxu0 0.0
    %3752 = vmatprep.subr.mxu0 0.0
    %3753 = vmatpush2.msra.mxu0 0.0
    %3754 = vmatprep.subr.mxu0 0.0
    %3755 = vmatpush2.msra.mxu0 0.0
    %3756 = vmatprep.mubr.f32.mxu0 0.0
    %3757 = vmatmul.mubr.f32.gmra.mxu0 %v1307
    %v3758 = vpop.f32.mrf.mxu0
    %v3759 = vadd.f32 0.0, %v3758
    %v3760 = vpop.f32.mrf.mxu0
    %3761 = vmatprep.mubr.f32.mxu0 0.0
    %3762 = vmatmul.mubr.f32.gmra.mxu0 %v1310
    %v3763 = vpop.f32.mrf.mxu0
    %v3764 = vadd.f32 0.0, %v3763
    %v3765 = vpop.f32.mrf.mxu0
    %3766 = vdwg.mxu0
    %3767 = vmatprep.subr.mxu0 0.0
    %3768 = vmatpush1.msra.mxu0 0.0
    %3769 = vmatprep.subr.mxu0 0.0
    %3770 = vmatpush1.msra.mxu0 0.0
    %3771 = vmatprep.subr.mxu0 0.0
    %3772 = vmatpush1.msra.mxu0 0.0
    %3773 = vmatprep.subr.mxu0 0.0
    %3774 = vmatpush1.msra.mxu0 0.0
    %3775 = vmatprep.subr.mxu0 0.0
    %3776 = vmatpush1.msra.mxu0 0.0
    %3777 = vmatprep.subr.mxu0 0.0
    %3778 = vmatpush1.msra.mxu0 0.0
    %3779 = vmatprep.subr.mxu0 0.0
    %3780 = vmatpush1.msra.mxu0 0.0
    %3781 = vmatprep.subr.mxu0 0.0
    %3782 = vmatpush1.msra.mxu0 0.0
    %3783 = vmatprep.subr.mxu0 0.0
    %3784 = vmatpush1.msra.mxu0 0.0
    %3785 = vmatprep.subr.mxu0 0.0
    %3786 = vmatpush1.msra.mxu0 0.0
    %3787 = vmatprep.subr.mxu0 0.0
    %3788 = vmatpush1.msra.mxu0 0.0
    %3789 = vmatprep.subr.mxu0 0.0
    %3790 = vmatpush1.msra.mxu0 0.0
    %3791 = vmatprep.subr.mxu0 0.0
    %3792 = vmatpush1.msra.mxu0 0.0
    %3793 = vmatprep.subr.mxu0 0.0
    %3794 = vmatpush1.msra.mxu0 %v3690
    %3795 = vmatprep.subr.mxu0 0.0
    %3796 = vmatpush1.msra.mxu0 %v3687
    %3797 = vmatprep.subr.mxu0 0.0
    %3798 = vmatpush1.msra.mxu0 %v3686
    %3799 = vmatprep.subr.mxu0 0.0
    %3800 = vmatpush2.msra.mxu0 0.0
    %3801 = vmatprep.subr.mxu0 0.0
    %3802 = vmatpush2.msra.mxu0 0.0
    %3803 = vmatprep.subr.mxu0 0.0
    %3804 = vmatpush2.msra.mxu0 0.0
    %3805 = vmatprep.subr.mxu0 0.0
    %3806 = vmatpush2.msra.mxu0 0.0
    %3807 = vmatprep.subr.mxu0 0.0
    %3808 = vmatpush2.msra.mxu0 0.0
    %3809 = vmatprep.subr.mxu0 0.0
    %3810 = vmatpush2.msra.mxu0 0.0
    %3811 = vmatprep.subr.mxu0 0.0
    %3812 = vmatpush2.msra.mxu0 0.0
    %3813 = vmatprep.subr.mxu0 0.0
    %3814 = vmatpush2.msra.mxu0 0.0
    %3815 = vmatprep.subr.mxu0 0.0
    %3816 = vmatpush2.msra.mxu0 0.0
    %3817 = vmatprep.subr.mxu0 0.0
    %3818 = vmatpush2.msra.mxu0 0.0
    %3819 = vmatprep.subr.mxu0 0.0
    %3820 = vmatpush2.msra.mxu0 0.0
    %3821 = vmatprep.subr.mxu0 0.0
    %3822 = vmatpush2.msra.mxu0 0.0
    %3823 = vmatprep.subr.mxu0 0.0
    %3824 = vmatpush2.msra.mxu0 0.0
    %3825 = vmatprep.subr.mxu0 0.0
    %3826 = vmatpush2.msra.mxu0 0.0
    %3827 = vmatprep.subr.mxu0 0.0
    %3828 = vmatpush2.msra.mxu0 0.0
    %3829 = vmatprep.subr.mxu0 0.0
    %3830 = vmatpush2.msra.mxu0 0.0
    %3831 = vmatprep.mubr.f32.mxu0 0.0
    %3832 = vmatmul.mubr.f32.gmra.mxu0 %v1392
    %v3833 = vpop.f32.mrf.mxu0
    %v3834 = vadd.f32 0.0, %v3833
    %v3835 = vpop.f32.mrf.mxu0
    %3836 = vmatprep.mubr.f32.mxu0 0.0
    %3837 = vmatmul.mubr.f32.gmra.mxu0 %v1395
    %v3838 = vpop.f32.mrf.mxu0
    %v3839 = vadd.f32 0.0, %v3838
    %v3840 = vpop.f32.mrf.mxu0
    %3841 = vdwg.mxu0
    %v3842 = vmax.f32 %v3759, %v3834
    %v3843 = vmax.f32 %v3764, %v3839
    %v3845 = vsel %vm1474, %v3842, 0
    %v3848 = vsel %vm1474, %v3843, 0
    %3850 = vmatprep.subr.mxu0 0.0
    %3851 = vmatpush1.msra.mxu0 0.0
    %3852 = vmatprep.subr.mxu0 0.0
    %3853 = vmatpush1.msra.mxu0 0.0
    %3854 = vmatprep.subr.mxu0 0.0
    %3855 = vmatpush1.msra.mxu0 0.0
    %3856 = vmatprep.subr.mxu0 0.0
    %3857 = vmatpush1.msra.mxu0 0.0
    %3858 = vmatprep.subr.mxu0 0.0
    %3859 = vmatpush1.msra.mxu0 0.0
    %3860 = vmatprep.subr.mxu0 0.0
    %3861 = vmatpush1.msra.mxu0 0.0
    %3862 = vmatprep.subr.mxu0 0.0
    %3863 = vmatpush1.msra.mxu0 0.0
    %3864 = vmatprep.subr.mxu0 0.0
    %3865 = vmatpush1.msra.mxu0 0.0
    %3866 = vmatprep.subr.mxu0 0.0
    %3867 = vmatpush1.msra.mxu0 0.0
    %3868 = vmatprep.subr.mxu0 0.0
    %3869 = vmatpush1.msra.mxu0 0.0
    %3870 = vmatprep.subr.mxu0 0.0
    %3871 = vmatpush1.msra.mxu0 0.0
    %3872 = vmatprep.subr.mxu0 0.0
    %3873 = vmatpush1.msra.mxu0 0.0
    %3874 = vmatprep.subr.mxu0 0.0
    %3875 = vmatpush1.msra.mxu0 0.0
    %3876 = vmatprep.subr.mxu0 0.0
    %3877 = vmatpush1.msra.mxu0 0.0
    %3878 = vmatprep.subr.mxu0 %v1486
    %3879 = vmatpush1.msra.mxu0 %v1483
    %3880 = vmatprep.subr.mxu0 %v190
    %3881 = vmatpush1.msra.mxu0 %v189
    %3882 = vmatprep.subr.mxu0 0.0
    %3883 = vmatpush2.msra.mxu0 0.0
    %3884 = vmatprep.subr.mxu0 0.0
    %3885 = vmatpush2.msra.mxu0 0.0
    %3886 = vmatprep.subr.mxu0 0.0
    %3887 = vmatpush2.msra.mxu0 0.0
    %3888 = vmatprep.subr.mxu0 0.0
    %3889 = vmatpush2.msra.mxu0 0.0
    %3890 = vmatprep.subr.mxu0 0.0
    %3891 = vmatpush2.msra.mxu0 0.0
    %3892 = vmatprep.subr.mxu0 0.0
    %3893 = vmatpush2.msra.mxu0 0.0
    %3894 = vmatprep.subr.mxu0 0.0
    %3895 = vmatpush2.msra.mxu0 0.0
    %3896 = vmatprep.subr.mxu0 0.0
    %3897 = vmatpush2.msra.mxu0 0.0
    %3898 = vmatprep.subr.mxu0 0.0
    %3899 = vmatpush2.msra.mxu0 0.0
    %3900 = vmatprep.subr.mxu0 0.0
    %3901 = vmatpush2.msra.mxu0 0.0
    %3902 = vmatprep.subr.mxu0 0.0
    %3903 = vmatpush2.msra.mxu0 0.0
    %3904 = vmatprep.subr.mxu0 0.0
    %3905 = vmatpush2.msra.mxu0 0.0
    %3906 = vmatprep.subr.mxu0 0.0
    %3907 = vmatpush2.msra.mxu0 0.0
    %3908 = vmatprep.subr.mxu0 0.0
    %3909 = vmatpush2.msra.mxu0 0.0
    %3910 = vmatprep.subr.mxu0 0.0
    %3911 = vmatpush2.msra.mxu0 0.0
    %3912 = vmatprep.subr.mxu0 0.0
    %3913 = vmatpush2.msra.mxu0 0.0
    %3914 = vmatprep.mubr.f32.mxu0 0.0
    %3915 = vmatmul.mubr.f32.gmra.mxu0 %v3845
    %v3916 = vpop.f32.mrf.mxu0
    %v3917 = vadd.f32 0.0, %v3916
    %v3918 = vpop.f32.mrf.mxu0
    %v3919 = vadd.f32 0.0, %v3918
    %3920 = vmatprep.mubr.f32.mxu0 0.0
    %3921 = vmatmul.mubr.f32.gmra.mxu0 %v3848
    %v3922 = vpop.f32.mrf.mxu0
    %v3923 = vadd.f32 0.0, %v3922
    %v3924 = vpop.f32.mrf.mxu0
    %v3925 = vadd.f32 0.0, %v3924
    %3926 = vdwg.mxu0
    %v3927 = vmul.f32 %v3917, %v193
    %v3928 = vmul.f32 %v3919, %v194
    %v3929 = vmul.f32 %v3923, %v195
    %v3930 = vmul.f32 %v3925, %v196
    %v3931 = vsel %vm1481, %v3929, 0.0
    %v3932 = vadd.f32 %v3927, %v3931
    %v3933 = vrot.slane %v3932, 4
    %v3934 = vadd.f32 %v3932, %v3933
    %v3935 = vrot.slane %v3934, 2
    %v3936 = vadd.f32 %v3934, %v3935
    %v3937 = vrot.slane %v3936, 1
    %v3938 = vadd.f32 %v3936, %v3937
    %v3939 = vsel %vm1577, %v3928, 0.0
    %v3940 = vsel %vm1579, %v3930, 0.0
    %v3941 = vadd.f32 %v3939, %v3940
    %v3942 = vrot.slane %v3941, 4
    %v3943 = vadd.f32 %v3941, %v3942
    %v3944 = vrot.slane %v3943, 2
    %v3945 = vadd.f32 %v3943, %v3944
    %v3946 = vrot.slane %v3945, 1
    %v3947 = vadd.f32 %v3945, %v3946
    %v3949 = vsel %vm1577, %v3947, 0
    %3951 = vmatprep.subr.mxu0 %v3312
    %3952 = vmatpush1.msra.mxu0 %v3311
    %3953 = vmatprep.subr.mxu0 %v3307
    %3954 = vmatpush1.msra.mxu0 %v3306
    %3955 = vmatprep.subr.mxu0 %v3302
    %3956 = vmatpush1.msra.mxu0 %v3301
    %3957 = vmatprep.subr.mxu0 %v3297
    %3958 = vmatpush1.msra.mxu0 %v3296
    %3959 = vmatprep.subr.mxu0 %v3292
    %3960 = vmatpush1.msra.mxu0 %v3291
    %3961 = vmatprep.subr.mxu0 %v3287
    %3962 = vmatpush1.msra.mxu0 %v3286
    %3963 = vmatprep.subr.mxu0 %v3282
    %3964 = vmatpush1.msra.mxu0 %v3281
    %3965 = vmatprep.subr.mxu0 %v3277
    %3966 = vmatpush1.msra.mxu0 %v3276
    %3967 = vmatprep.subr.mxu0 %v3272
    %3968 = vmatpush1.msra.mxu0 %v3271
    %3969 = vmatprep.subr.mxu0 %v3267
    %3970 = vmatpush1.msra.mxu0 %v3266
    %3971 = vmatprep.subr.mxu0 %v3262
    %3972 = vmatpush1.msra.mxu0 %v3261
    %3973 = vmatprep.subr.mxu0 %v3257
    %3974 = vmatpush1.msra.mxu0 %v3256
    %3975 = vmatprep.subr.mxu0 %v3252
    %3976 = vmatpush1.msra.mxu0 %v3251
    %3977 = vmatprep.subr.mxu0 %v3247
    %3978 = vmatpush1.msra.mxu0 %v3246
    %3979 = vmatprep.subr.mxu0 %v3242
    %3980 = vmatpush1.msra.mxu0 %v3241
    %3981 = vmatprep.subr.mxu0 %v3237
    %3982 = vmatpush1.msra.mxu0 %v3236
    %3983 = vmatprep.subr.mxu0 0.0
    %3984 = vmatpush2.msra.mxu0 0.0
    %3985 = vmatprep.subr.mxu0 0.0
    %3986 = vmatpush2.msra.mxu0 0.0
    %3987 = vmatprep.subr.mxu0 0.0
    %3988 = vmatpush2.msra.mxu0 0.0
    %3989 = vmatprep.subr.mxu0 0.0
    %3990 = vmatpush2.msra.mxu0 0.0
    %3991 = vmatprep.subr.mxu0 0.0
    %3992 = vmatpush2.msra.mxu0 0.0
    %3993 = vmatprep.subr.mxu0 0.0
    %3994 = vmatpush2.msra.mxu0 0.0
    %3995 = vmatprep.subr.mxu0 0.0
    %3996 = vmatpush2.msra.mxu0 0.0
    %3997 = vmatprep.subr.mxu0 0.0
    %3998 = vmatpush2.msra.mxu0 0.0
    %3999 = vmatprep.subr.mxu0 0.0
    %4000 = vmatpush2.msra.mxu0 0.0
    %4001 = vmatprep.subr.mxu0 0.0
    %4002 = vmatpush2.msra.mxu0 0.0
    %4003 = vmatprep.subr.mxu0 0.0
    %4004 = vmatpush2.msra.mxu0 0.0
    %4005 = vmatprep.subr.mxu0 0.0
    %4006 = vmatpush2.msra.mxu0 0.0
    %4007 = vmatprep.subr.mxu0 0.0
    %4008 = vmatpush2.msra.mxu0 0.0
    %4009 = vmatprep.subr.mxu0 0.0
    %4010 = vmatpush2.msra.mxu0 0.0
    %4011 = vmatprep.subr.mxu0 %v3322
    %4012 = vmatpush2.msra.mxu0 %v3321
    %4013 = vmatprep.subr.mxu0 %v3317
    %4014 = vmatpush2.msra.mxu0 %v3316
    %4015 = vmatprep.mubr.f32.mxu0 %v3949
    %4016 = vmatmul.mubr.f32.gmra.mxu0 %v3938
    %v4017 = vpop.f32.mrf.mxu0
    %v4018 = vadd.f32 0.0, %v4017
    %v4019 = vpop.f32.mrf.mxu0
    %v4020 = vadd.f32 0.0, %v4019
    %4021 = vdwg.mxu0
    %4022 = vmatprep.subr.mxu0 %v3314
    %4023 = vmatpush1.msra.mxu0 %v3313
    %4024 = vmatprep.subr.mxu0 %v3309
    %4025 = vmatpush1.msra.mxu0 %v3308
    %4026 = vmatprep.subr.mxu0 %v3304
    %4027 = vmatpush1.msra.mxu0 %v3303
    %4028 = vmatprep.subr.mxu0 %v3299
    %4029 = vmatpush1.msra.mxu0 %v3298
    %4030 = vmatprep.subr.mxu0 %v3294
    %4031 = vmatpush1.msra.mxu0 %v3293
    %4032 = vmatprep.subr.mxu0 %v3289
    %4033 = vmatpush1.msra.mxu0 %v3288
    %4034 = vmatprep.subr.mxu0 %v3284
    %4035 = vmatpush1.msra.mxu0 %v3283
    %4036 = vmatprep.subr.mxu0 %v3279
    %4037 = vmatpush1.msra.mxu0 %v3278
    %4038 = vmatprep.subr.mxu0 %v3274
    %4039 = vmatpush1.msra.mxu0 %v3273
    %4040 = vmatprep.subr.mxu0 %v3269
    %4041 = vmatpush1.msra.mxu0 %v3268
    %4042 = vmatprep.subr.mxu0 %v3264
    %4043 = vmatpush1.msra.mxu0 %v3263
    %4044 = vmatprep.subr.mxu0 %v3259
    %4045 = vmatpush1.msra.mxu0 %v3258
    %4046 = vmatprep.subr.mxu0 %v3254
    %4047 = vmatpush1.msra.mxu0 %v3253
    %4048 = vmatprep.subr.mxu0 %v3249
    %4049 = vmatpush1.msra.mxu0 %v3248
    %4050 = vmatprep.subr.mxu0 %v3244
    %4051 = vmatpush1.msra.mxu0 %v3243
    %4052 = vmatprep.subr.mxu0 %v3239
    %4053 = vmatpush1.msra.mxu0 %v3238
    %4054 = vmatprep.subr.mxu0 0.0
    %4055 = vmatpush2.msra.mxu0 0.0
    %4056 = vmatprep.subr.mxu0 0.0
    %4057 = vmatpush2.msra.mxu0 0.0
    %4058 = vmatprep.subr.mxu0 0.0
    %4059 = vmatpush2.msra.mxu0 0.0
    %4060 = vmatprep.subr.mxu0 0.0
    %4061 = vmatpush2.msra.mxu0 0.0
    %4062 = vmatprep.subr.mxu0 0.0
    %4063 = vmatpush2.msra.mxu0 0.0
    %4064 = vmatprep.subr.mxu0 0.0
    %4065 = vmatpush2.msra.mxu0 0.0
    %4066 = vmatprep.subr.mxu0 0.0
    %4067 = vmatpush2.msra.mxu0 0.0
    %4068 = vmatprep.subr.mxu0 0.0
    %4069 = vmatpush2.msra.mxu0 0.0
    %4070 = vmatprep.subr.mxu0 0.0
    %4071 = vmatpush2.msra.mxu0 0.0
    %4072 = vmatprep.subr.mxu0 0.0
    %4073 = vmatpush2.msra.mxu0 0.0
    %4074 = vmatprep.subr.mxu0 0.0
    %4075 = vmatpush2.msra.mxu0 0.0
    %4076 = vmatprep.subr.mxu0 0.0
    %4077 = vmatpush2.msra.mxu0 0.0
    %4078 = vmatprep.subr.mxu0 0.0
    %4079 = vmatpush2.msra.mxu0 0.0
    %4080 = vmatprep.subr.mxu0 0.0
    %4081 = vmatpush2.msra.mxu0 0.0
    %4082 = vmatprep.subr.mxu0 %v3324
    %4083 = vmatpush2.msra.mxu0 %v3323
    %4084 = vmatprep.subr.mxu0 %v3319
    %4085 = vmatpush2.msra.mxu0 %v3318
    %4086 = vmatprep.mubr.f32.mxu0 %v3949
    %4087 = vmatmul.mubr.f32.gmra.mxu0 %v3938
    %v4088 = vpop.f32.mrf.mxu0
    %v4089 = vadd.f32 0.0, %v4088
    %v4090 = vpop.f32.mrf.mxu0
    %v4091 = vadd.f32 0.0, %v4090
    %4092 = vdwg.mxu0
    %4093 = vmatprep.subr.mxu0 0.0
    %4094 = vmatpush1.msra.mxu0 %v3315
    %4095 = vmatprep.subr.mxu0 0.0
    %4096 = vmatpush1.msra.mxu0 %v3310
    %4097 = vmatprep.subr.mxu0 0.0
    %4098 = vmatpush1.msra.mxu0 %v3305
    %4099 = vmatprep.subr.mxu0 0.0
    %4100 = vmatpush1.msra.mxu0 %v3300
    %4101 = vmatprep.subr.mxu0 0.0
    %4102 = vmatpush1.msra.mxu0 %v3295
    %4103 = vmatprep.subr.mxu0 0.0
    %4104 = vmatpush1.msra.mxu0 %v3290
    %4105 = vmatprep.subr.mxu0 0.0
    %4106 = vmatpush1.msra.mxu0 %v3285
    %4107 = vmatprep.subr.mxu0 0.0
    %4108 = vmatpush1.msra.mxu0 %v3280
    %4109 = vmatprep.subr.mxu0 0.0
    %4110 = vmatpush1.msra.mxu0 %v3275
    %4111 = vmatprep.subr.mxu0 0.0
    %4112 = vmatpush1.msra.mxu0 %v3270
    %4113 = vmatprep.subr.mxu0 0.0
    %4114 = vmatpush1.msra.mxu0 %v3265
    %4115 = vmatprep.subr.mxu0 0.0
    %4116 = vmatpush1.msra.mxu0 %v3260
    %4117 = vmatprep.subr.mxu0 0.0
    %4118 = vmatpush1.msra.mxu0 %v3255
    %4119 = vmatprep.subr.mxu0 0.0
    %4120 = vmatpush1.msra.mxu0 %v3250
    %4121 = vmatprep.subr.mxu0 0.0
    %4122 = vmatpush1.msra.mxu0 %v3245
    %4123 = vmatprep.subr.mxu0 0.0
    %4124 = vmatpush1.msra.mxu0 %v3240
    %4125 = vmatprep.subr.mxu0 0.0
    %4126 = vmatpush2.msra.mxu0 0.0
    %4127 = vmatprep.subr.mxu0 0.0
    %4128 = vmatpush2.msra.mxu0 0.0
    %4129 = vmatprep.subr.mxu0 0.0
    %4130 = vmatpush2.msra.mxu0 0.0
    %4131 = vmatprep.subr.mxu0 0.0
    %4132 = vmatpush2.msra.mxu0 0.0
    %4133 = vmatprep.subr.mxu0 0.0
    %4134 = vmatpush2.msra.mxu0 0.0
    %4135 = vmatprep.subr.mxu0 0.0
    %4136 = vmatpush2.msra.mxu0 0.0
    %4137 = vmatprep.subr.mxu0 0.0
    %4138 = vmatpush2.msra.mxu0 0.0
    %4139 = vmatprep.subr.mxu0 0.0
    %4140 = vmatpush2.msra.mxu0 0.0
    %4141 = vmatprep.subr.mxu0 0.0
    %4142 = vmatpush2.msra.mxu0 0.0
    %4143 = vmatprep.subr.mxu0 0.0
    %4144 = vmatpush2.msra.mxu0 0.0
    %4145 = vmatprep.subr.mxu0 0.0
    %4146 = vmatpush2.msra.mxu0 0.0
    %4147 = vmatprep.subr.mxu0 0.0
    %4148 = vmatpush2.msra.mxu0 0.0
    %4149 = vmatprep.subr.mxu0 0.0
    %4150 = vmatpush2.msra.mxu0 0.0
    %4151 = vmatprep.subr.mxu0 0.0
    %4152 = vmatpush2.msra.mxu0 0.0
    %4153 = vmatprep.subr.mxu0 0.0
    %4154 = vmatpush2.msra.mxu0 %v3325
    %4155 = vmatprep.subr.mxu0 0.0
    %4156 = vmatpush2.msra.mxu0 %v3320
    %4157 = vmatprep.mubr.f32.mxu0 %v3949
    %4158 = vmatmul.mubr.f32.gmra.mxu0 %v3938
    %v4159 = vpop.f32.mrf.mxu0
    %v4160 = vadd.f32 0.0, %v4159
    %v4161 = vpop.f32.mrf.mxu0
    %4162 = vdwg.mxu0
    %v4168 = vcombine.low %v4018, %v4020
    %v4169 = vcombine.low %v4089, %v4091
    %v4171 = vunpack.c.l.s4 1966171168
    %v4172 = vunpack.c.0.s8 %v4171
    %v4173 = vlaneseq
    %v4174 = vshrl.u32 %v4173, 7
    %v4175 = vsub.s32 %v4172, %v4174
    %v4176 = vrot.slane %v4168, %v4175
    %v4178 = vunpack.c.l.s4 1966171168
    %v4179 = vunpack.c.0.s8 %v4178
    %v4180 = vlaneseq
    %v4181 = vshrl.u32 %v4180, 7
    %v4182 = vsub.s32 %v4179, %v4181
    %v4183 = vrot.slane %v4169, %v4182
    %v4185 = vunpack.c.l.s4 1966171168
    %v4186 = vunpack.c.0.s8 %v4185
    %v4187 = vlaneseq
    %v4188 = vshrl.u32 %v4187, 7
    %v4189 = vsub.s32 %v4186, %v4188
    %v4190 = vrot.slane %v4160, %v4189
    %v4191 = vcombine.low %v4176, %v4183
    %v4193 = vunpack.c.l.s4 1966171168
    %v4194 = vunpack.c.0.s8 %v4193
    %v4195 = vlaneseq
    %v4196 = vshrl.u32 %v4195, 7
    %v4197 = vsub.s32 %v4194, %v4196
    %v4198 = vrot.slane %v4191, %v4197
    %v4200 = vunpack.c.l.s4 1966171168
    %v4201 = vunpack.c.0.s8 %v4200
    %v4202 = vlaneseq
    %v4203 = vshrl.u32 %v4202, 7
    %v4204 = vsub.s32 %v4201, %v4203
    %v4205 = vrot.slane %v4190, %v4204
    %v4206 = vcombine.low %v4198, %v4205
    %v4208 = vadd.f32 %v1848, %v4206
    %v4210 = vsel %vm941, %v3218, 0
    %v4213 = vsel %vm941, %v3219, 0
    %v4216 = vsel %vm941, %v3220, 0
    %4218 = vmatprep.subr.mxu0 0.0
    %4219 = vmatpush1.msra.mxu0 0.0
    %4220 = vmatprep.subr.mxu0 0.0
    %4221 = vmatpush1.msra.mxu0 0.0
    %4222 = vmatprep.subr.mxu0 0.0
    %4223 = vmatpush1.msra.mxu0 0.0
    %4224 = vmatprep.subr.mxu0 0.0
    %4225 = vmatpush1.msra.mxu0 0.0
    %4226 = vmatprep.subr.mxu0 0.0
    %4227 = vmatpush1.msra.mxu0 0.0
    %4228 = vmatprep.subr.mxu0 0.0
    %4229 = vmatpush1.msra.mxu0 0.0
    %4230 = vmatprep.subr.mxu0 0.0
    %4231 = vmatpush1.msra.mxu0 0.0
    %4232 = vmatprep.subr.mxu0 0.0
    %4233 = vmatpush1.msra.mxu0 0.0
    %4234 = vmatprep.subr.mxu0 0.0
    %4235 = vmatpush1.msra.mxu0 0.0
    %4236 = vmatprep.subr.mxu0 0.0
    %4237 = vmatpush1.msra.mxu0 0.0
    %4238 = vmatprep.subr.mxu0 0.0
    %4239 = vmatpush1.msra.mxu0 0.0
    %4240 = vmatprep.subr.mxu0 0.0
    %4241 = vmatpush1.msra.mxu0 0.0
    %4242 = vmatprep.subr.mxu0 0.0
    %4243 = vmatpush1.msra.mxu0 0.0
    %4244 = vmatprep.subr.mxu0 0.0
    %4245 = vmatpush1.msra.mxu0 %v146
    %4246 = vmatprep.subr.mxu0 0.0
    %4247 = vmatpush1.msra.mxu0 %v145
    %4248 = vmatprep.subr.mxu0 0.0
    %4249 = vmatpush1.msra.mxu0 %v144
    %4250 = vmatprep.subr.mxu0 0.0
    %4251 = vmatpush2.msra.mxu0 0.0
    %4252 = vmatprep.subr.mxu0 0.0
    %4253 = vmatpush2.msra.mxu0 0.0
    %4254 = vmatprep.subr.mxu0 0.0
    %4255 = vmatpush2.msra.mxu0 0.0
    %4256 = vmatprep.subr.mxu0 0.0
    %4257 = vmatpush2.msra.mxu0 0.0
    %4258 = vmatprep.subr.mxu0 0.0
    %4259 = vmatpush2.msra.mxu0 0.0
    %4260 = vmatprep.subr.mxu0 0.0
    %4261 = vmatpush2.msra.mxu0 0.0
    %4262 = vmatprep.subr.mxu0 0.0
    %4263 = vmatpush2.msra.mxu0 0.0
    %4264 = vmatprep.subr.mxu0 0.0
    %4265 = vmatpush2.msra.mxu0 0.0
    %4266 = vmatprep.subr.mxu0 0.0
    %4267 = vmatpush2.msra.mxu0 0.0
    %4268 = vmatprep.subr.mxu0 0.0
    %4269 = vmatpush2.msra.mxu0 0.0
    %4270 = vmatprep.subr.mxu0 0.0
    %4271 = vmatpush2.msra.mxu0 0.0
    %4272 = vmatprep.subr.mxu0 0.0
    %4273 = vmatpush2.msra.mxu0 0.0
    %4274 = vmatprep.subr.mxu0 0.0
    %4275 = vmatpush2.msra.mxu0 0.0
    %4276 = vmatprep.subr.mxu0 0.0
    %4277 = vmatpush2.msra.mxu0 0.0
    %4278 = vmatprep.subr.mxu0 0.0
    %4279 = vmatpush2.msra.mxu0 0.0
    %4280 = vmatprep.subr.mxu0 0.0
    %4281 = vmatpush2.msra.mxu0 0.0
    %4282 = vmatprep.mubr.f32.mxu0 0.0
    %4283 = vmatmul.mubr.f32.gmra.mxu0 %v4210
    %v4284 = vpop.f32.mrf.mxu0
    %v4285 = vadd.f32 0.0, %v4284
    %v4286 = vpop.f32.mrf.mxu0
    %4287 = vmatprep.mubr.f32.mxu0 0.0
    %4288 = vmatmul.mubr.f32.gmra.mxu0 %v4213
    %v4289 = vpop.f32.mrf.mxu0
    %v4290 = vadd.f32 0.0, %v4289
    %v4291 = vpop.f32.mrf.mxu0
    %4292 = vmatprep.mubr.f32.mxu0 0.0
    %4293 = vmatmul.mubr.f32.gmra.mxu0 %v4216
    %v4294 = vpop.f32.mrf.mxu0
    %v4295 = vadd.f32 0.0, %v4294
    %v4296 = vpop.f32.mrf.mxu0
    %4297 = vdwg.mxu0
    %v4298 = vadd.f32 %v3204, %v4285
    %v4299 = vadd.f32 %v3205, %v4290
    %v4300 = vadd.f32 %v3206, %v4295
    %v4302 = vsel %vm941, %v3232, 0
    %v4305 = vsel %vm941, %v3233, 0
    %v4308 = vsel %vm941, %v3234, 0
    %4310 = vmatprep.subr.mxu0 0.0
    %4311 = vmatpush1.msra.mxu0 0.0
    %4312 = vmatprep.subr.mxu0 0.0
    %4313 = vmatpush1.msra.mxu0 0.0
    %4314 = vmatprep.subr.mxu0 0.0
    %4315 = vmatpush1.msra.mxu0 0.0
    %4316 = vmatprep.subr.mxu0 0.0
    %4317 = vmatpush1.msra.mxu0 0.0
    %4318 = vmatprep.subr.mxu0 0.0
    %4319 = vmatpush1.msra.mxu0 0.0
    %4320 = vmatprep.subr.mxu0 0.0
    %4321 = vmatpush1.msra.mxu0 0.0
    %4322 = vmatprep.subr.mxu0 0.0
    %4323 = vmatpush1.msra.mxu0 0.0
    %4324 = vmatprep.subr.mxu0 0.0
    %4325 = vmatpush1.msra.mxu0 0.0
    %4326 = vmatprep.subr.mxu0 0.0
    %4327 = vmatpush1.msra.mxu0 0.0
    %4328 = vmatprep.subr.mxu0 0.0
    %4329 = vmatpush1.msra.mxu0 0.0
    %4330 = vmatprep.subr.mxu0 0.0
    %4331 = vmatpush1.msra.mxu0 0.0
    %4332 = vmatprep.subr.mxu0 0.0
    %4333 = vmatpush1.msra.mxu0 0.0
    %4334 = vmatprep.subr.mxu0 0.0
    %4335 = vmatpush1.msra.mxu0 0.0
    %4336 = vmatprep.subr.mxu0 0.0
    %4337 = vmatpush1.msra.mxu0 %v153
    %4338 = vmatprep.subr.mxu0 0.0
    %4339 = vmatpush1.msra.mxu0 %v152
    %4340 = vmatprep.subr.mxu0 0.0
    %4341 = vmatpush1.msra.mxu0 %v151
    %4342 = vmatprep.subr.mxu0 0.0
    %4343 = vmatpush2.msra.mxu0 0.0
    %4344 = vmatprep.subr.mxu0 0.0
    %4345 = vmatpush2.msra.mxu0 0.0
    %4346 = vmatprep.subr.mxu0 0.0
    %4347 = vmatpush2.msra.mxu0 0.0
    %4348 = vmatprep.subr.mxu0 0.0
    %4349 = vmatpush2.msra.mxu0 0.0
    %4350 = vmatprep.subr.mxu0 0.0
    %4351 = vmatpush2.msra.mxu0 0.0
    %4352 = vmatprep.subr.mxu0 0.0
    %4353 = vmatpush2.msra.mxu0 0.0
    %4354 = vmatprep.subr.mxu0 0.0
    %4355 = vmatpush2.msra.mxu0 0.0
    %4356 = vmatprep.subr.mxu0 0.0
    %4357 = vmatpush2.msra.mxu0 0.0
    %4358 = vmatprep.subr.mxu0 0.0
    %4359 = vmatpush2.msra.mxu0 0.0
    %4360 = vmatprep.subr.mxu0 0.0
    %4361 = vmatpush2.msra.mxu0 0.0
    %4362 = vmatprep.subr.mxu0 0.0
    %4363 = vmatpush2.msra.mxu0 0.0
    %4364 = vmatprep.subr.mxu0 0.0
    %4365 = vmatpush2.msra.mxu0 0.0
    %4366 = vmatprep.subr.mxu0 0.0
    %4367 = vmatpush2.msra.mxu0 0.0
    %4368 = vmatprep.subr.mxu0 0.0
    %4369 = vmatpush2.msra.mxu0 0.0
    %4370 = vmatprep.subr.mxu0 0.0
    %4371 = vmatpush2.msra.mxu0 0.0
    %4372 = vmatprep.subr.mxu0 0.0
    %4373 = vmatpush2.msra.mxu0 0.0
    %4374 = vmatprep.mubr.f32.mxu0 0.0
    %4375 = vmatmul.mubr.f32.gmra.mxu0 %v4302
    %v4376 = vpop.f32.mrf.mxu0
    %v4377 = vadd.f32 0.0, %v4376
    %v4378 = vpop.f32.mrf.mxu0
    %4379 = vmatprep.mubr.f32.mxu0 0.0
    %4380 = vmatmul.mubr.f32.gmra.mxu0 %v4305
    %v4381 = vpop.f32.mrf.mxu0
    %v4382 = vadd.f32 0.0, %v4381
    %v4383 = vpop.f32.mrf.mxu0
    %4384 = vmatprep.mubr.f32.mxu0 0.0
    %4385 = vmatmul.mubr.f32.gmra.mxu0 %v4308
    %v4386 = vpop.f32.mrf.mxu0
    %v4387 = vadd.f32 0.0, %v4386
    %v4388 = vpop.f32.mrf.mxu0
    %4389 = vdwg.mxu0
    %v4390 = vadd.f32 %v4298, %v4377
    %v4391 = vadd.f32 %v4299, %v4382
    %v4392 = vadd.f32 %v4300, %v4387
    %v4393 = vadd.f32 %v4390, %v3510
    %v4394 = vadd.f32 %v4391, %v3510
    %v4395 = vadd.f32 %v4392, %v3510
    %v4396 = vmax.f32 %v4393, 0.0
    %v4397 = vmax.f32 %v4394, 0.0
    %v4398 = vmax.f32 %v4395, 0.0
    %v4400 = vsel %vm941, %v4396, 0
    %v4403 = vsel %vm941, %v4397, 0
    %v4406 = vsel %vm941, %v4398, 0
    %4408 = vmatprep.subr.mxu0 0.0
    %4409 = vmatpush1.msra.mxu0 0.0
    %4410 = vmatprep.subr.mxu0 0.0
    %4411 = vmatpush1.msra.mxu0 0.0
    %4412 = vmatprep.subr.mxu0 0.0
    %4413 = vmatpush1.msra.mxu0 0.0
    %4414 = vmatprep.subr.mxu0 0.0
    %4415 = vmatpush1.msra.mxu0 0.0
    %4416 = vmatprep.subr.mxu0 0.0
    %4417 = vmatpush1.msra.mxu0 0.0
    %4418 = vmatprep.subr.mxu0 0.0
    %4419 = vmatpush1.msra.mxu0 0.0
    %4420 = vmatprep.subr.mxu0 0.0
    %4421 = vmatpush1.msra.mxu0 0.0
    %4422 = vmatprep.subr.mxu0 0.0
    %4423 = vmatpush1.msra.mxu0 0.0
    %4424 = vmatprep.subr.mxu0 0.0
    %4425 = vmatpush1.msra.mxu0 0.0
    %4426 = vmatprep.subr.mxu0 0.0
    %4427 = vmatpush1.msra.mxu0 0.0
    %4428 = vmatprep.subr.mxu0 0.0
    %4429 = vmatpush1.msra.mxu0 0.0
    %4430 = vmatprep.subr.mxu0 0.0
    %4431 = vmatpush1.msra.mxu0 0.0
    %4432 = vmatprep.subr.mxu0 0.0
    %4433 = vmatpush1.msra.mxu0 0.0
    %4434 = vmatprep.subr.mxu0 0.0
    %4435 = vmatpush1.msra.mxu0 %v167
    %4436 = vmatprep.subr.mxu0 0.0
    %4437 = vmatpush1.msra.mxu0 %v166
    %4438 = vmatprep.subr.mxu0 0.0
    %4439 = vmatpush1.msra.mxu0 %v165
    %4440 = vmatprep.subr.mxu0 0.0
    %4441 = vmatpush2.msra.mxu0 0.0
    %4442 = vmatprep.subr.mxu0 0.0
    %4443 = vmatpush2.msra.mxu0 0.0
    %4444 = vmatprep.subr.mxu0 0.0
    %4445 = vmatpush2.msra.mxu0 0.0
    %4446 = vmatprep.subr.mxu0 0.0
    %4447 = vmatpush2.msra.mxu0 0.0
    %4448 = vmatprep.subr.mxu0 0.0
    %4449 = vmatpush2.msra.mxu0 0.0
    %4450 = vmatprep.subr.mxu0 0.0
    %4451 = vmatpush2.msra.mxu0 0.0
    %4452 = vmatprep.subr.mxu0 0.0
    %4453 = vmatpush2.msra.mxu0 0.0
    %4454 = vmatprep.subr.mxu0 0.0
    %4455 = vmatpush2.msra.mxu0 0.0
    %4456 = vmatprep.subr.mxu0 0.0
    %4457 = vmatpush2.msra.mxu0 0.0
    %4458 = vmatprep.subr.mxu0 0.0
    %4459 = vmatpush2.msra.mxu0 0.0
    %4460 = vmatprep.subr.mxu0 0.0
    %4461 = vmatpush2.msra.mxu0 0.0
    %4462 = vmatprep.subr.mxu0 0.0
    %4463 = vmatpush2.msra.mxu0 0.0
    %4464 = vmatprep.subr.mxu0 0.0
    %4465 = vmatpush2.msra.mxu0 0.0
    %4466 = vmatprep.subr.mxu0 0.0
    %4467 = vmatpush2.msra.mxu0 0.0
    %4468 = vmatprep.subr.mxu0 0.0
    %4469 = vmatpush2.msra.mxu0 0.0
    %4470 = vmatprep.subr.mxu0 0.0
    %4471 = vmatpush2.msra.mxu0 0.0
    %4472 = vmatprep.mubr.f32.mxu0 0.0
    %4473 = vmatmul.mubr.f32.gmra.mxu0 %v4400
    %v4474 = vpop.f32.mrf.mxu0
    %v4475 = vadd.f32 0.0, %v4474
    %v4476 = vpop.f32.mrf.mxu0
    %4477 = vmatprep.mubr.f32.mxu0 0.0
    %4478 = vmatmul.mubr.f32.gmra.mxu0 %v4403
    %v4479 = vpop.f32.mrf.mxu0
    %v4480 = vadd.f32 0.0, %v4479
    %v4481 = vpop.f32.mrf.mxu0
    %4482 = vmatprep.mubr.f32.mxu0 0.0
    %4483 = vmatmul.mubr.f32.gmra.mxu0 %v4406
    %v4484 = vpop.f32.mrf.mxu0
    %v4485 = vadd.f32 0.0, %v4484
    %v4486 = vpop.f32.mrf.mxu0
    %4487 = vdwg.mxu0
    %4488 = vmatprep.subr.mxu0 0.0
    %4489 = vmatpush1.msra.mxu0 0.0
    %4490 = vmatprep.subr.mxu0 0.0
    %4491 = vmatpush1.msra.mxu0 0.0
    %4492 = vmatprep.subr.mxu0 0.0
    %4493 = vmatpush1.msra.mxu0 0.0
    %4494 = vmatprep.subr.mxu0 0.0
    %4495 = vmatpush1.msra.mxu0 0.0
    %4496 = vmatprep.subr.mxu0 0.0
    %4497 = vmatpush1.msra.mxu0 0.0
    %4498 = vmatprep.subr.mxu0 0.0
    %4499 = vmatpush1.msra.mxu0 0.0
    %4500 = vmatprep.subr.mxu0 0.0
    %4501 = vmatpush1.msra.mxu0 0.0
    %4502 = vmatprep.subr.mxu0 0.0
    %4503 = vmatpush1.msra.mxu0 0.0
    %4504 = vmatprep.subr.mxu0 0.0
    %4505 = vmatpush1.msra.mxu0 0.0
    %4506 = vmatprep.subr.mxu0 0.0
    %4507 = vmatpush1.msra.mxu0 0.0
    %4508 = vmatprep.subr.mxu0 0.0
    %4509 = vmatpush1.msra.mxu0 0.0
    %4510 = vmatprep.subr.mxu0 0.0
    %4511 = vmatpush1.msra.mxu0 0.0
    %4512 = vmatprep.subr.mxu0 0.0
    %4513 = vmatpush1.msra.mxu0 0.0
    %4514 = vmatprep.subr.mxu0 0.0
    %4515 = vmatpush1.msra.mxu0 %v176
    %4516 = vmatprep.subr.mxu0 0.0
    %4517 = vmatpush1.msra.mxu0 %v175
    %4518 = vmatprep.subr.mxu0 0.0
    %4519 = vmatpush1.msra.mxu0 %v174
    %4520 = vmatprep.subr.mxu0 0.0
    %4521 = vmatpush2.msra.mxu0 0.0
    %4522 = vmatprep.subr.mxu0 0.0
    %4523 = vmatpush2.msra.mxu0 0.0
    %4524 = vmatprep.subr.mxu0 0.0
    %4525 = vmatpush2.msra.mxu0 0.0
    %4526 = vmatprep.subr.mxu0 0.0
    %4527 = vmatpush2.msra.mxu0 0.0
    %4528 = vmatprep.subr.mxu0 0.0
    %4529 = vmatpush2.msra.mxu0 0.0
    %4530 = vmatprep.subr.mxu0 0.0
    %4531 = vmatpush2.msra.mxu0 0.0
    %4532 = vmatprep.subr.mxu0 0.0
    %4533 = vmatpush2.msra.mxu0 0.0
    %4534 = vmatprep.subr.mxu0 0.0
    %4535 = vmatpush2.msra.mxu0 0.0
    %4536 = vmatprep.subr.mxu0 0.0
    %4537 = vmatpush2.msra.mxu0 0.0
    %4538 = vmatprep.subr.mxu0 0.0
    %4539 = vmatpush2.msra.mxu0 0.0
    %4540 = vmatprep.subr.mxu0 0.0
    %4541 = vmatpush2.msra.mxu0 0.0
    %4542 = vmatprep.subr.mxu0 0.0
    %4543 = vmatpush2.msra.mxu0 0.0
    %4544 = vmatprep.subr.mxu0 0.0
    %4545 = vmatpush2.msra.mxu0 0.0
    %4546 = vmatprep.subr.mxu0 0.0
    %4547 = vmatpush2.msra.mxu0 0.0
    %4548 = vmatprep.subr.mxu0 0.0
    %4549 = vmatpush2.msra.mxu0 0.0
    %4550 = vmatprep.subr.mxu0 0.0
    %4551 = vmatpush2.msra.mxu0 0.0
    %4552 = vmatprep.mubr.f32.mxu0 0.0
    %4553 = vmatmul.mubr.f32.gmra.mxu0 %v4400
    %v4554 = vpop.f32.mrf.mxu0
    %v4555 = vadd.f32 0.0, %v4554
    %v4556 = vpop.f32.mrf.mxu0
    %4557 = vmatprep.mubr.f32.mxu0 0.0
    %4558 = vmatmul.mubr.f32.gmra.mxu0 %v4403
    %v4559 = vpop.f32.mrf.mxu0
    %v4560 = vadd.f32 0.0, %v4559
    %v4561 = vpop.f32.mrf.mxu0
    %4562 = vmatprep.mubr.f32.mxu0 0.0
    %4563 = vmatmul.mubr.f32.gmra.mxu0 %v4406
    %v4564 = vpop.f32.mrf.mxu0
    %v4565 = vadd.f32 0.0, %v4564
    %v4566 = vpop.f32.mrf.mxu0
    %4567 = vdwg.mxu0
    %v4568 = vmax.f32 %v4475, %v4555
    %v4569 = vmax.f32 %v4480, %v4560
    %v4570 = vmax.f32 %v4485, %v4565
    %v4572 = vsel %vm1312, %v4570, 0
    %4574 = vmatprep.subr.mxu0 0.0
    %4575 = vmatpush1.msra.mxu0 0.0
    %4576 = vmatprep.subr.mxu0 0.0
    %4577 = vmatpush1.msra.mxu0 0.0
    %4578 = vmatprep.subr.mxu0 0.0
    %4579 = vmatpush1.msra.mxu0 0.0
    %4580 = vmatprep.subr.mxu0 0.0
    %4581 = vmatpush1.msra.mxu0 0.0
    %4582 = vmatprep.subr.mxu0 0.0
    %4583 = vmatpush1.msra.mxu0 0.0
    %4584 = vmatprep.subr.mxu0 0.0
    %4585 = vmatpush1.msra.mxu0 0.0
    %4586 = vmatprep.subr.mxu0 0.0
    %4587 = vmatpush1.msra.mxu0 0.0
    %4588 = vmatprep.subr.mxu0 0.0
    %4589 = vmatpush1.msra.mxu0 0.0
    %4590 = vmatprep.subr.mxu0 0.0
    %4591 = vmatpush1.msra.mxu0 0.0
    %4592 = vmatprep.subr.mxu0 0.0
    %4593 = vmatpush1.msra.mxu0 0.0
    %4594 = vmatprep.subr.mxu0 0.0
    %4595 = vmatpush1.msra.mxu0 0.0
    %4596 = vmatprep.subr.mxu0 0.0
    %4597 = vmatpush1.msra.mxu0 0.0
    %4598 = vmatprep.subr.mxu0 0.0
    %4599 = vmatpush1.msra.mxu0 0.0
    %4600 = vmatprep.subr.mxu0 0.0
    %4601 = vmatpush1.msra.mxu0 %v4572
    %4602 = vmatprep.subr.mxu0 0.0
    %4603 = vmatpush1.msra.mxu0 %v4569
    %4604 = vmatprep.subr.mxu0 0.0
    %4605 = vmatpush1.msra.mxu0 %v4568
    %4606 = vmatprep.subr.mxu0 0.0
    %4607 = vmatpush2.msra.mxu0 0.0
    %4608 = vmatprep.subr.mxu0 0.0
    %4609 = vmatpush2.msra.mxu0 0.0
    %4610 = vmatprep.subr.mxu0 0.0
    %4611 = vmatpush2.msra.mxu0 0.0
    %4612 = vmatprep.subr.mxu0 0.0
    %4613 = vmatpush2.msra.mxu0 0.0
    %4614 = vmatprep.subr.mxu0 0.0
    %4615 = vmatpush2.msra.mxu0 0.0
    %4616 = vmatprep.subr.mxu0 0.0
    %4617 = vmatpush2.msra.mxu0 0.0
    %4618 = vmatprep.subr.mxu0 0.0
    %4619 = vmatpush2.msra.mxu0 0.0
    %4620 = vmatprep.subr.mxu0 0.0
    %4621 = vmatpush2.msra.mxu0 0.0
    %4622 = vmatprep.subr.mxu0 0.0
    %4623 = vmatpush2.msra.mxu0 0.0
    %4624 = vmatprep.subr.mxu0 0.0
    %4625 = vmatpush2.msra.mxu0 0.0
    %4626 = vmatprep.subr.mxu0 0.0
    %4627 = vmatpush2.msra.mxu0 0.0
    %4628 = vmatprep.subr.mxu0 0.0
    %4629 = vmatpush2.msra.mxu0 0.0
    %4630 = vmatprep.subr.mxu0 0.0
    %4631 = vmatpush2.msra.mxu0 0.0
    %4632 = vmatprep.subr.mxu0 0.0
    %4633 = vmatpush2.msra.mxu0 0.0
    %4634 = vmatprep.subr.mxu0 0.0
    %4635 = vmatpush2.msra.mxu0 0.0
    %4636 = vmatprep.subr.mxu0 0.0
    %4637 = vmatpush2.msra.mxu0 0.0
    %4638 = vmatprep.mubr.f32.mxu0 0.0
    %4639 = vmatmul.mubr.f32.gmra.mxu0 %v1307
    %v4640 = vpop.f32.mrf.mxu0
    %v4641 = vadd.f32 0.0, %v4640
    %v4642 = vpop.f32.mrf.mxu0
    %4643 = vmatprep.mubr.f32.mxu0 0.0
    %4644 = vmatmul.mubr.f32.gmra.mxu0 %v1310
    %v4645 = vpop.f32.mrf.mxu0
    %v4646 = vadd.f32 0.0, %v4645
    %v4647 = vpop.f32.mrf.mxu0
    %4648 = vdwg.mxu0
    %4649 = vmatprep.subr.mxu0 0.0
    %4650 = vmatpush1.msra.mxu0 0.0
    %4651 = vmatprep.subr.mxu0 0.0
    %4652 = vmatpush1.msra.mxu0 0.0
    %4653 = vmatprep.subr.mxu0 0.0
    %4654 = vmatpush1.msra.mxu0 0.0
    %4655 = vmatprep.subr.mxu0 0.0
    %4656 = vmatpush1.msra.mxu0 0.0
    %4657 = vmatprep.subr.mxu0 0.0
    %4658 = vmatpush1.msra.mxu0 0.0
    %4659 = vmatprep.subr.mxu0 0.0
    %4660 = vmatpush1.msra.mxu0 0.0
    %4661 = vmatprep.subr.mxu0 0.0
    %4662 = vmatpush1.msra.mxu0 0.0
    %4663 = vmatprep.subr.mxu0 0.0
    %4664 = vmatpush1.msra.mxu0 0.0
    %4665 = vmatprep.subr.mxu0 0.0
    %4666 = vmatpush1.msra.mxu0 0.0
    %4667 = vmatprep.subr.mxu0 0.0
    %4668 = vmatpush1.msra.mxu0 0.0
    %4669 = vmatprep.subr.mxu0 0.0
    %4670 = vmatpush1.msra.mxu0 0.0
    %4671 = vmatprep.subr.mxu0 0.0
    %4672 = vmatpush1.msra.mxu0 0.0
    %4673 = vmatprep.subr.mxu0 0.0
    %4674 = vmatpush1.msra.mxu0 0.0
    %4675 = vmatprep.subr.mxu0 0.0
    %4676 = vmatpush1.msra.mxu0 %v4572
    %4677 = vmatprep.subr.mxu0 0.0
    %4678 = vmatpush1.msra.mxu0 %v4569
    %4679 = vmatprep.subr.mxu0 0.0
    %4680 = vmatpush1.msra.mxu0 %v4568
    %4681 = vmatprep.subr.mxu0 0.0
    %4682 = vmatpush2.msra.mxu0 0.0
    %4683 = vmatprep.subr.mxu0 0.0
    %4684 = vmatpush2.msra.mxu0 0.0
    %4685 = vmatprep.subr.mxu0 0.0
    %4686 = vmatpush2.msra.mxu0 0.0
    %4687 = vmatprep.subr.mxu0 0.0
    %4688 = vmatpush2.msra.mxu0 0.0
    %4689 = vmatprep.subr.mxu0 0.0
    %4690 = vmatpush2.msra.mxu0 0.0
    %4691 = vmatprep.subr.mxu0 0.0
    %4692 = vmatpush2.msra.mxu0 0.0
    %4693 = vmatprep.subr.mxu0 0.0
    %4694 = vmatpush2.msra.mxu0 0.0
    %4695 = vmatprep.subr.mxu0 0.0
    %4696 = vmatpush2.msra.mxu0 0.0
    %4697 = vmatprep.subr.mxu0 0.0
    %4698 = vmatpush2.msra.mxu0 0.0
    %4699 = vmatprep.subr.mxu0 0.0
    %4700 = vmatpush2.msra.mxu0 0.0
    %4701 = vmatprep.subr.mxu0 0.0
    %4702 = vmatpush2.msra.mxu0 0.0
    %4703 = vmatprep.subr.mxu0 0.0
    %4704 = vmatpush2.msra.mxu0 0.0
    %4705 = vmatprep.subr.mxu0 0.0
    %4706 = vmatpush2.msra.mxu0 0.0
    %4707 = vmatprep.subr.mxu0 0.0
    %4708 = vmatpush2.msra.mxu0 0.0
    %4709 = vmatprep.subr.mxu0 0.0
    %4710 = vmatpush2.msra.mxu0 0.0
    %4711 = vmatprep.subr.mxu0 0.0
    %4712 = vmatpush2.msra.mxu0 0.0
    %4713 = vmatprep.mubr.f32.mxu0 0.0
    %4714 = vmatmul.mubr.f32.gmra.mxu0 %v1392
    %v4715 = vpop.f32.mrf.mxu0
    %v4716 = vadd.f32 0.0, %v4715
    %v4717 = vpop.f32.mrf.mxu0
    %4718 = vmatprep.mubr.f32.mxu0 0.0
    %4719 = vmatmul.mubr.f32.gmra.mxu0 %v1395
    %v4720 = vpop.f32.mrf.mxu0
    %v4721 = vadd.f32 0.0, %v4720
    %v4722 = vpop.f32.mrf.mxu0
    %4723 = vdwg.mxu0
    %v4724 = vmax.f32 %v4641, %v4716
    %v4725 = vmax.f32 %v4646, %v4721
    %v4727 = vsel %vm1474, %v4724, 0
    %v4730 = vsel %vm1474, %v4725, 0
    %4732 = vmatprep.subr.mxu0 0.0
    %4733 = vmatpush1.msra.mxu0 0.0
    %4734 = vmatprep.subr.mxu0 0.0
    %4735 = vmatpush1.msra.mxu0 0.0
    %4736 = vmatprep.subr.mxu0 0.0
    %4737 = vmatpush1.msra.mxu0 0.0
    %4738 = vmatprep.subr.mxu0 0.0
    %4739 = vmatpush1.msra.mxu0 0.0
    %4740 = vmatprep.subr.mxu0 0.0
    %4741 = vmatpush1.msra.mxu0 0.0
    %4742 = vmatprep.subr.mxu0 0.0
    %4743 = vmatpush1.msra.mxu0 0.0
    %4744 = vmatprep.subr.mxu0 0.0
    %4745 = vmatpush1.msra.mxu0 0.0
    %4746 = vmatprep.subr.mxu0 0.0
    %4747 = vmatpush1.msra.mxu0 0.0
    %4748 = vmatprep.subr.mxu0 0.0
    %4749 = vmatpush1.msra.mxu0 0.0
    %4750 = vmatprep.subr.mxu0 0.0
    %4751 = vmatpush1.msra.mxu0 0.0
    %4752 = vmatprep.subr.mxu0 0.0
    %4753 = vmatpush1.msra.mxu0 0.0
    %4754 = vmatprep.subr.mxu0 0.0
    %4755 = vmatpush1.msra.mxu0 0.0
    %4756 = vmatprep.subr.mxu0 0.0
    %4757 = vmatpush1.msra.mxu0 0.0
    %4758 = vmatprep.subr.mxu0 0.0
    %4759 = vmatpush1.msra.mxu0 0.0
    %4760 = vmatprep.subr.mxu0 %v1486
    %4761 = vmatpush1.msra.mxu0 %v1483
    %4762 = vmatprep.subr.mxu0 %v190
    %4763 = vmatpush1.msra.mxu0 %v189
    %4764 = vmatprep.subr.mxu0 0.0
    %4765 = vmatpush2.msra.mxu0 0.0
    %4766 = vmatprep.subr.mxu0 0.0
    %4767 = vmatpush2.msra.mxu0 0.0
    %4768 = vmatprep.subr.mxu0 0.0
    %4769 = vmatpush2.msra.mxu0 0.0
    %4770 = vmatprep.subr.mxu0 0.0
    %4771 = vmatpush2.msra.mxu0 0.0
    %4772 = vmatprep.subr.mxu0 0.0
    %4773 = vmatpush2.msra.mxu0 0.0
    %4774 = vmatprep.subr.mxu0 0.0
    %4775 = vmatpush2.msra.mxu0 0.0
    %4776 = vmatprep.subr.mxu0 0.0
    %4777 = vmatpush2.msra.mxu0 0.0
    %4778 = vmatprep.subr.mxu0 0.0
    %4779 = vmatpush2.msra.mxu0 0.0
    %4780 = vmatprep.subr.mxu0 0.0
    %4781 = vmatpush2.msra.mxu0 0.0
    %4782 = vmatprep.subr.mxu0 0.0
    %4783 = vmatpush2.msra.mxu0 0.0
    %4784 = vmatprep.subr.mxu0 0.0
    %4785 = vmatpush2.msra.mxu0 0.0
    %4786 = vmatprep.subr.mxu0 0.0
    %4787 = vmatpush2.msra.mxu0 0.0
    %4788 = vmatprep.subr.mxu0 0.0
    %4789 = vmatpush2.msra.mxu0 0.0
    %4790 = vmatprep.subr.mxu0 0.0
    %4791 = vmatpush2.msra.mxu0 0.0
    %4792 = vmatprep.subr.mxu0 0.0
    %4793 = vmatpush2.msra.mxu0 0.0
    %4794 = vmatprep.subr.mxu0 0.0
    %4795 = vmatpush2.msra.mxu0 0.0
    %4796 = vmatprep.mubr.f32.mxu0 0.0
    %4797 = vmatmul.mubr.f32.gmra.mxu0 %v4727
    %v4798 = vpop.f32.mrf.mxu0
    %v4799 = vadd.f32 0.0, %v4798
    %v4800 = vpop.f32.mrf.mxu0
    %v4801 = vadd.f32 0.0, %v4800
    %4802 = vmatprep.mubr.f32.mxu0 0.0
    %4803 = vmatmul.mubr.f32.gmra.mxu0 %v4730
    %v4804 = vpop.f32.mrf.mxu0
    %v4805 = vadd.f32 0.0, %v4804
    %v4806 = vpop.f32.mrf.mxu0
    %v4807 = vadd.f32 0.0, %v4806
    %4808 = vdwg.mxu0
    %v4809 = vmul.f32 %v4799, %v193
    %v4810 = vmul.f32 %v4801, %v194
    %v4811 = vmul.f32 %v4805, %v195
    %v4812 = vmul.f32 %v4807, %v196
    %v4813 = vsel %vm1481, %v4811, 0.0
    %v4814 = vadd.f32 %v4809, %v4813
    %v4815 = vrot.slane %v4814, 4
    %v4816 = vadd.f32 %v4814, %v4815
    %v4817 = vrot.slane %v4816, 2
    %v4818 = vadd.f32 %v4816, %v4817
    %v4819 = vrot.slane %v4818, 1
    %v4820 = vadd.f32 %v4818, %v4819
    %v4821 = vsel %vm1577, %v4810, 0.0
    %v4822 = vsel %vm1579, %v4812, 0.0
    %v4823 = vadd.f32 %v4821, %v4822
    %v4824 = vrot.slane %v4823, 4
    %v4825 = vadd.f32 %v4823, %v4824
    %v4826 = vrot.slane %v4825, 2
    %v4827 = vadd.f32 %v4825, %v4826
    %v4828 = vrot.slane %v4827, 1
    %v4829 = vadd.f32 %v4827, %v4828
    %v4831 = vsel %vm1577, %v4829, 0
    %4833 = vmatprep.subr.mxu0 %v3312
    %4834 = vmatpush1.msra.mxu0 %v3311
    %4835 = vmatprep.subr.mxu0 %v3307
    %4836 = vmatpush1.msra.mxu0 %v3306
    %4837 = vmatprep.subr.mxu0 %v3302
    %4838 = vmatpush1.msra.mxu0 %v3301
    %4839 = vmatprep.subr.mxu0 %v3297
    %4840 = vmatpush1.msra.mxu0 %v3296
    %4841 = vmatprep.subr.mxu0 %v3292
    %4842 = vmatpush1.msra.mxu0 %v3291
    %4843 = vmatprep.subr.mxu0 %v3287
    %4844 = vmatpush1.msra.mxu0 %v3286
    %4845 = vmatprep.subr.mxu0 %v3282
    %4846 = vmatpush1.msra.mxu0 %v3281
    %4847 = vmatprep.subr.mxu0 %v3277
    %4848 = vmatpush1.msra.mxu0 %v3276
    %4849 = vmatprep.subr.mxu0 %v3272
    %4850 = vmatpush1.msra.mxu0 %v3271
    %4851 = vmatprep.subr.mxu0 %v3267
    %4852 = vmatpush1.msra.mxu0 %v3266
    %4853 = vmatprep.subr.mxu0 %v3262
    %4854 = vmatpush1.msra.mxu0 %v3261
    %4855 = vmatprep.subr.mxu0 %v3257
    %4856 = vmatpush1.msra.mxu0 %v3256
    %4857 = vmatprep.subr.mxu0 %v3252
    %4858 = vmatpush1.msra.mxu0 %v3251
    %4859 = vmatprep.subr.mxu0 %v3247
    %4860 = vmatpush1.msra.mxu0 %v3246
    %4861 = vmatprep.subr.mxu0 %v3242
    %4862 = vmatpush1.msra.mxu0 %v3241
    %4863 = vmatprep.subr.mxu0 %v3237
    %4864 = vmatpush1.msra.mxu0 %v3236
    %4865 = vmatprep.subr.mxu0 0.0
    %4866 = vmatpush2.msra.mxu0 0.0
    %4867 = vmatprep.subr.mxu0 0.0
    %4868 = vmatpush2.msra.mxu0 0.0
    %4869 = vmatprep.subr.mxu0 0.0
    %4870 = vmatpush2.msra.mxu0 0.0
    %4871 = vmatprep.subr.mxu0 0.0
    %4872 = vmatpush2.msra.mxu0 0.0
    %4873 = vmatprep.subr.mxu0 0.0
    %4874 = vmatpush2.msra.mxu0 0.0
    %4875 = vmatprep.subr.mxu0 0.0
    %4876 = vmatpush2.msra.mxu0 0.0
    %4877 = vmatprep.subr.mxu0 0.0
    %4878 = vmatpush2.msra.mxu0 0.0
    %4879 = vmatprep.subr.mxu0 0.0
    %4880 = vmatpush2.msra.mxu0 0.0
    %4881 = vmatprep.subr.mxu0 0.0
    %4882 = vmatpush2.msra.mxu0 0.0
    %4883 = vmatprep.subr.mxu0 0.0
    %4884 = vmatpush2.msra.mxu0 0.0
    %4885 = vmatprep.subr.mxu0 0.0
    %4886 = vmatpush2.msra.mxu0 0.0
    %4887 = vmatprep.subr.mxu0 0.0
    %4888 = vmatpush2.msra.mxu0 0.0
    %4889 = vmatprep.subr.mxu0 0.0
    %4890 = vmatpush2.msra.mxu0 0.0
    %4891 = vmatprep.subr.mxu0 0.0
    %4892 = vmatpush2.msra.mxu0 0.0
    %4893 = vmatprep.subr.mxu0 %v3322
    %4894 = vmatpush2.msra.mxu0 %v3321
    %4895 = vmatprep.subr.mxu0 %v3317
    %4896 = vmatpush2.msra.mxu0 %v3316
    %4897 = vmatprep.mubr.f32.mxu0 %v4831
    %4898 = vmatmul.mubr.f32.gmra.mxu0 %v4820
    %v4899 = vpop.f32.mrf.mxu0
    %v4900 = vadd.f32 0.0, %v4899
    %v4901 = vpop.f32.mrf.mxu0
    %v4902 = vadd.f32 0.0, %v4901
    %4903 = vdwg.mxu0
    %4904 = vmatprep.subr.mxu0 %v3314
    %4905 = vmatpush1.msra.mxu0 %v3313
    %4906 = vmatprep.subr.mxu0 %v3309
    %4907 = vmatpush1.msra.mxu0 %v3308
    %4908 = vmatprep.subr.mxu0 %v3304
    %4909 = vmatpush1.msra.mxu0 %v3303
    %4910 = vmatprep.subr.mxu0 %v3299
    %4911 = vmatpush1.msra.mxu0 %v3298
    %4912 = vmatprep.subr.mxu0 %v3294
    %4913 = vmatpush1.msra.mxu0 %v3293
    %4914 = vmatprep.subr.mxu0 %v3289
    %4915 = vmatpush1.msra.mxu0 %v3288
    %4916 = vmatprep.subr.mxu0 %v3284
    %4917 = vmatpush1.msra.mxu0 %v3283
    %4918 = vmatprep.subr.mxu0 %v3279
    %4919 = vmatpush1.msra.mxu0 %v3278
    %4920 = vmatprep.subr.mxu0 %v3274
    %4921 = vmatpush1.msra.mxu0 %v3273
    %4922 = vmatprep.subr.mxu0 %v3269
    %4923 = vmatpush1.msra.mxu0 %v3268
    %4924 = vmatprep.subr.mxu0 %v3264
    %4925 = vmatpush1.msra.mxu0 %v3263
    %4926 = vmatprep.subr.mxu0 %v3259
    %4927 = vmatpush1.msra.mxu0 %v3258
    %4928 = vmatprep.subr.mxu0 %v3254
    %4929 = vmatpush1.msra.mxu0 %v3253
    %4930 = vmatprep.subr.mxu0 %v3249
    %4931 = vmatpush1.msra.mxu0 %v3248
    %4932 = vmatprep.subr.mxu0 %v3244
    %4933 = vmatpush1.msra.mxu0 %v3243
    %4934 = vmatprep.subr.mxu0 %v3239
    %4935 = vmatpush1.msra.mxu0 %v3238
    %4936 = vmatprep.subr.mxu0 0.0
    %4937 = vmatpush2.msra.mxu0 0.0
    %4938 = vmatprep.subr.mxu0 0.0
    %4939 = vmatpush2.msra.mxu0 0.0
    %4940 = vmatprep.subr.mxu0 0.0
    %4941 = vmatpush2.msra.mxu0 0.0
    %4942 = vmatprep.subr.mxu0 0.0
    %4943 = vmatpush2.msra.mxu0 0.0
    %4944 = vmatprep.subr.mxu0 0.0
    %4945 = vmatpush2.msra.mxu0 0.0
    %4946 = vmatprep.subr.mxu0 0.0
    %4947 = vmatpush2.msra.mxu0 0.0
    %4948 = vmatprep.subr.mxu0 0.0
    %4949 = vmatpush2.msra.mxu0 0.0
    %4950 = vmatprep.subr.mxu0 0.0
    %4951 = vmatpush2.msra.mxu0 0.0
    %4952 = vmatprep.subr.mxu0 0.0
    %4953 = vmatpush2.msra.mxu0 0.0
    %4954 = vmatprep.subr.mxu0 0.0
    %4955 = vmatpush2.msra.mxu0 0.0
    %4956 = vmatprep.subr.mxu0 0.0
    %4957 = vmatpush2.msra.mxu0 0.0
    %4958 = vmatprep.subr.mxu0 0.0
    %4959 = vmatpush2.msra.mxu0 0.0
    %4960 = vmatprep.subr.mxu0 0.0
    %4961 = vmatpush2.msra.mxu0 0.0
    %4962 = vmatprep.subr.mxu0 0.0
    %4963 = vmatpush2.msra.mxu0 0.0
    %4964 = vmatprep.subr.mxu0 %v3324
    %4965 = vmatpush2.msra.mxu0 %v3323
    %4966 = vmatprep.subr.mxu0 %v3319
    %4967 = vmatpush2.msra.mxu0 %v3318
    %4968 = vmatprep.mubr.f32.mxu0 %v4831
    %4969 = vmatmul.mubr.f32.gmra.mxu0 %v4820
    %v4970 = vpop.f32.mrf.mxu0
    %v4971 = vadd.f32 0.0, %v4970
    %v4972 = vpop.f32.mrf.mxu0
    %v4973 = vadd.f32 0.0, %v4972
    %4974 = vdwg.mxu0
    %4975 = vmatprep.subr.mxu0 0.0
    %4976 = vmatpush1.msra.mxu0 %v3315
    %4977 = vmatprep.subr.mxu0 0.0
    %4978 = vmatpush1.msra.mxu0 %v3310
    %4979 = vmatprep.subr.mxu0 0.0
    %4980 = vmatpush1.msra.mxu0 %v3305
    %4981 = vmatprep.subr.mxu0 0.0
    %4982 = vmatpush1.msra.mxu0 %v3300
    %4983 = vmatprep.subr.mxu0 0.0
    %4984 = vmatpush1.msra.mxu0 %v3295
    %4985 = vmatprep.subr.mxu0 0.0
    %4986 = vmatpush1.msra.mxu0 %v3290
    %4987 = vmatprep.subr.mxu0 0.0
    %4988 = vmatpush1.msra.mxu0 %v3285
    %4989 = vmatprep.subr.mxu0 0.0
    %4990 = vmatpush1.msra.mxu0 %v3280
    %4991 = vmatprep.subr.mxu0 0.0
    %4992 = vmatpush1.msra.mxu0 %v3275
    %4993 = vmatprep.subr.mxu0 0.0
    %4994 = vmatpush1.msra.mxu0 %v3270
    %4995 = vmatprep.subr.mxu0 0.0
    %4996 = vmatpush1.msra.mxu0 %v3265
    %4997 = vmatprep.subr.mxu0 0.0
    %4998 = vmatpush1.msra.mxu0 %v3260
    %4999 = vmatprep.subr.mxu0 0.0
    %5000 = vmatpush1.msra.mxu0 %v3255
    %5001 = vmatprep.subr.mxu0 0.0
    %5002 = vmatpush1.msra.mxu0 %v3250
    %5003 = vmatprep.subr.mxu0 0.0
    %5004 = vmatpush1.msra.mxu0 %v3245
    %5005 = vmatprep.subr.mxu0 0.0
    %5006 = vmatpush1.msra.mxu0 %v3240
    %5007 = vmatprep.subr.mxu0 0.0
    %5008 = vmatpush2.msra.mxu0 0.0
    %5009 = vmatprep.subr.mxu0 0.0
    %5010 = vmatpush2.msra.mxu0 0.0
    %5011 = vmatprep.subr.mxu0 0.0
    %5012 = vmatpush2.msra.mxu0 0.0
    %5013 = vmatprep.subr.mxu0 0.0
    %5014 = vmatpush2.msra.mxu0 0.0
    %5015 = vmatprep.subr.mxu0 0.0
    %5016 = vmatpush2.msra.mxu0 0.0
    %5017 = vmatprep.subr.mxu0 0.0
    %5018 = vmatpush2.msra.mxu0 0.0
    %5019 = vmatprep.subr.mxu0 0.0
    %5020 = vmatpush2.msra.mxu0 0.0
    %5021 = vmatprep.subr.mxu0 0.0
    %5022 = vmatpush2.msra.mxu0 0.0
    %5023 = vmatprep.subr.mxu0 0.0
    %5024 = vmatpush2.msra.mxu0 0.0
    %5025 = vmatprep.subr.mxu0 0.0
    %5026 = vmatpush2.msra.mxu0 0.0
    %5027 = vmatprep.subr.mxu0 0.0
    %5028 = vmatpush2.msra.mxu0 0.0
    %5029 = vmatprep.subr.mxu0 0.0
    %5030 = vmatpush2.msra.mxu0 0.0
    %5031 = vmatprep.subr.mxu0 0.0
    %5032 = vmatpush2.msra.mxu0 0.0
    %5033 = vmatprep.subr.mxu0 0.0
    %5034 = vmatpush2.msra.mxu0 0.0
    %5035 = vmatprep.subr.mxu0 0.0
    %5036 = vmatpush2.msra.mxu0 %v3325
    %5037 = vmatprep.subr.mxu0 0.0
    %5038 = vmatpush2.msra.mxu0 %v3320
    %5039 = vmatprep.mubr.f32.mxu0 %v4831
    %5040 = vmatmul.mubr.f32.gmra.mxu0 %v4820
    %v5041 = vpop.f32.mrf.mxu0
    %v5042 = vadd.f32 0.0, %v5041
    %v5043 = vpop.f32.mrf.mxu0
    %5044 = vdwg.mxu0
    %v5050 = vcombine.low %v4900, %v4902
    %v5051 = vcombine.low %v4971, %v4973
    %v5053 = vunpack.c.l.s4 1966171168
    %v5054 = vunpack.c.0.s8 %v5053
    %v5055 = vlaneseq
    %v5056 = vshrl.u32 %v5055, 7
    %v5057 = vsub.s32 %v5054, %v5056
    %v5058 = vrot.slane %v5050, %v5057
    %v5060 = vunpack.c.l.s4 1966171168
    %v5061 = vunpack.c.0.s8 %v5060
    %v5062 = vlaneseq
    %v5063 = vshrl.u32 %v5062, 7
    %v5064 = vsub.s32 %v5061, %v5063
    %v5065 = vrot.slane %v5051, %v5064
    %v5067 = vunpack.c.l.s4 1966171168
    %v5068 = vunpack.c.0.s8 %v5067
    %v5069 = vlaneseq
    %v5070 = vshrl.u32 %v5069, 7
    %v5071 = vsub.s32 %v5068, %v5070
    %v5072 = vrot.slane %v5042, %v5071
    %v5073 = vcombine.low %v5058, %v5065
    %v5075 = vunpack.c.l.s4 1966171168
    %v5076 = vunpack.c.0.s8 %v5075
    %v5077 = vlaneseq
    %v5078 = vshrl.u32 %v5077, 7
    %v5079 = vsub.s32 %v5076, %v5078
    %v5080 = vrot.slane %v5073, %v5079
    %v5082 = vunpack.c.l.s4 1966171168
    %v5083 = vunpack.c.0.s8 %v5082
    %v5084 = vlaneseq
    %v5085 = vshrl.u32 %v5084, 7
    %v5086 = vsub.s32 %v5083, %v5085
    %v5087 = vrot.slane %v5072, %v5086
    %v5088 = vcombine.low %v5080, %v5087
    %v5090 = vadd.f32 %v2730, %v5088
    %s5091 = sld [smem:[#allocation7 + $0x48]]
    %v5092 = vstv %s5091
    %v5093 = vmul.f32 %v5092, %v271
    %v5094 = vmul.f32 %v5092, %v272
    %v5095 = vmul.f32 %v5092, %v273
    %v5096 = vmul.f32 %v5092, %v274
    %v5097 = vmul.f32 %v5092, %v275
    %v5098 = vmul.f32 %v5092, %v276
    %v5099 = vadd.f32 %v5093, 0.0
    %v5100 = vadd.f32 %v5094, 0.0
    %v5101 = vadd.f32 %v5095, 0.0
    %v5102 = vadd.f32 %v5096, 0.0
    %v5103 = vadd.f32 %v5097, 0.0
    %v5104 = vadd.f32 %v5098, 0.0
    %s5105 = sld [smem:[#allocation7 + $0x49]]
    %v5106 = vstv %s5105
    %v5107 = vmul.f32 %v5106, %v271
    %v5108 = vmul.f32 %v5106, %v272
    %v5109 = vmul.f32 %v5106, %v273
    %v5110 = vmul.f32 %v5106, %v274
    %v5111 = vmul.f32 %v5106, %v275
    %v5112 = vmul.f32 %v5106, %v276
    %v5113 = vadd.f32 %v5107, 0.0
    %v5114 = vadd.f32 %v5108, 0.0
    %v5115 = vadd.f32 %v5109, 0.0
    %v5116 = vadd.f32 %v5110, 0.0
    %v5117 = vadd.f32 %v5111, 0.0
    %v5118 = vadd.f32 %v5112, 0.0
    %s5119 = sld [smem:[#allocation7 + $0x4a]]
    %v5120 = vstv %s5119
    %v5121 = vmul.f32 %v5120, %v271
    %v5122 = vmul.f32 %v5120, %v272
    %v5123 = vmul.f32 %v5120, %v273
    %v5124 = vmul.f32 %v5120, %v274
    %v5125 = vmul.f32 %v5120, %v275
    %v5126 = vmul.f32 %v5120, %v276
    %v5127 = vadd.f32 %v5121, 0.0
    %v5128 = vadd.f32 %v5122, 0.0
    %v5129 = vadd.f32 %v5123, 0.0
    %v5130 = vadd.f32 %v5124, 0.0
    %v5131 = vadd.f32 %v5125, 0.0
    %v5132 = vadd.f32 %v5126, 0.0
    %s5133 = sld [smem:[#allocation7 + $0x4b]]
    %v5134 = vstv %s5133
    %v5135 = vmul.f32 %v5134, %v319
    %v5136 = vmul.f32 %v5134, %v320
    %v5137 = vmul.f32 %v5134, %v321
    %v5138 = vmul.f32 %v5134, %v322
    %v5139 = vmul.f32 %v5134, %v323
    %v5140 = vmul.f32 %v5134, %v324
    %v5141 = vadd.f32 %v5099, %v5135
    %v5142 = vadd.f32 %v5100, %v5136
    %v5143 = vadd.f32 %v5101, %v5137
    %v5144 = vadd.f32 %v5102, %v5138
    %v5145 = vadd.f32 %v5103, %v5139
    %v5146 = vadd.f32 %v5104, %v5140
    %s5147 = sld [smem:[#allocation7 + $0x4c]]
    %v5148 = vstv %s5147
    %v5149 = vmul.f32 %v5148, %v319
    %v5150 = vmul.f32 %v5148, %v320
    %v5151 = vmul.f32 %v5148, %v321
    %v5152 = vmul.f32 %v5148, %v322
    %v5153 = vmul.f32 %v5148, %v323
    %v5154 = vmul.f32 %v5148, %v324
    %v5155 = vadd.f32 %v5113, %v5149
    %v5156 = vadd.f32 %v5114, %v5150
    %v5157 = vadd.f32 %v5115, %v5151
    %v5158 = vadd.f32 %v5116, %v5152
    %v5159 = vadd.f32 %v5117, %v5153
    %v5160 = vadd.f32 %v5118, %v5154
    %s5161 = sld [smem:[#allocation7 + $0x4d]]
    %v5162 = vstv %s5161
    %v5163 = vmul.f32 %v5162, %v319
    %v5164 = vmul.f32 %v5162, %v320
    %v5165 = vmul.f32 %v5162, %v321
    %v5166 = vmul.f32 %v5162, %v322
    %v5167 = vmul.f32 %v5162, %v323
    %v5168 = vmul.f32 %v5162, %v324
    %v5169 = vadd.f32 %v5127, %v5163
    %v5170 = vadd.f32 %v5128, %v5164
    %v5171 = vadd.f32 %v5129, %v5165
    %v5172 = vadd.f32 %v5130, %v5166
    %v5173 = vadd.f32 %v5131, %v5167
    %v5174 = vadd.f32 %v5132, %v5168
    %s5175 = sld [smem:[#allocation7 + $0x4e]]
    %v5176 = vstv %s5175
    %v5177 = vmul.f32 %v5176, %v367
    %v5178 = vmul.f32 %v5176, %v368
    %v5179 = vmul.f32 %v5176, %v369
    %v5180 = vmul.f32 %v5176, %v370
    %v5181 = vmul.f32 %v5176, %v371
    %v5182 = vmul.f32 %v5176, %v372
    %v5183 = vadd.f32 %v5141, %v5177
    %v5184 = vadd.f32 %v5142, %v5178
    %v5185 = vadd.f32 %v5143, %v5179
    %v5186 = vadd.f32 %v5144, %v5180
    %v5187 = vadd.f32 %v5145, %v5181
    %v5188 = vadd.f32 %v5146, %v5182
    %s5189 = sld [smem:[#allocation7 + $0x4f]]
    %v5190 = vstv %s5189
    %v5191 = vmul.f32 %v5190, %v367
    %v5192 = vmul.f32 %v5190, %v368
    %v5193 = vmul.f32 %v5190, %v369
    %v5194 = vmul.f32 %v5190, %v370
    %v5195 = vmul.f32 %v5190, %v371
    %v5196 = vmul.f32 %v5190, %v372
    %v5197 = vadd.f32 %v5155, %v5191
    %v5198 = vadd.f32 %v5156, %v5192
    %v5199 = vadd.f32 %v5157, %v5193
    %v5200 = vadd.f32 %v5158, %v5194
    %v5201 = vadd.f32 %v5159, %v5195
    %v5202 = vadd.f32 %v5160, %v5196
    %s5203 = sld [smem:[#allocation7 + $0x50]]
    %v5204 = vstv %s5203
    %v5205 = vmul.f32 %v5204, %v367
    %v5206 = vmul.f32 %v5204, %v368
    %v5207 = vmul.f32 %v5204, %v369
    %v5208 = vmul.f32 %v5204, %v370
    %v5209 = vmul.f32 %v5204, %v371
    %v5210 = vmul.f32 %v5204, %v372
    %v5211 = vadd.f32 %v5169, %v5205
    %v5212 = vadd.f32 %v5170, %v5206
    %v5213 = vadd.f32 %v5171, %v5207
    %v5214 = vadd.f32 %v5172, %v5208
    %v5215 = vadd.f32 %v5173, %v5209
    %v5216 = vadd.f32 %v5174, %v5210
    %s5217 = sld [smem:[#allocation7 + $0x51]]
    %v5218 = vstv %s5217
    %v5219 = vmul.f32 %v5218, %v416
    %v5220 = vmul.f32 %v5218, %v417
    %v5221 = vmul.f32 %v5218, %v418
    %v5222 = vmul.f32 %v5218, %v419
    %v5223 = vmul.f32 %v5218, %v420
    %v5224 = vmul.f32 %v5218, %v421
    %v5225 = vadd.f32 %v5183, %v5219
    %v5226 = vadd.f32 %v5184, %v5220
    %v5227 = vadd.f32 %v5185, %v5221
    %v5228 = vadd.f32 %v5186, %v5222
    %v5229 = vadd.f32 %v5187, %v5223
    %v5230 = vadd.f32 %v5188, %v5224
    %s5231 = sld [smem:[#allocation7 + $0x52]]
    %v5232 = vstv %s5231
    %v5233 = vmul.f32 %v5232, %v416
    %v5234 = vmul.f32 %v5232, %v417
    %v5235 = vmul.f32 %v5232, %v418
    %v5236 = vmul.f32 %v5232, %v419
    %v5237 = vmul.f32 %v5232, %v420
    %v5238 = vmul.f32 %v5232, %v421
    %v5239 = vadd.f32 %v5197, %v5233
    %v5240 = vadd.f32 %v5198, %v5234
    %v5241 = vadd.f32 %v5199, %v5235
    %v5242 = vadd.f32 %v5200, %v5236
    %v5243 = vadd.f32 %v5201, %v5237
    %v5244 = vadd.f32 %v5202, %v5238
    %s5245 = sld [smem:[#allocation7 + $0x53]]
    %v5246 = vstv %s5245
    %v5247 = vmul.f32 %v5246, %v416
    %v5248 = vmul.f32 %v5246, %v417
    %v5249 = vmul.f32 %v5246, %v418
    %v5250 = vmul.f32 %v5246, %v419
    %v5251 = vmul.f32 %v5246, %v420
    %v5252 = vmul.f32 %v5246, %v421
    %v5253 = vadd.f32 %v5211, %v5247
    %v5254 = vadd.f32 %v5212, %v5248
    %v5255 = vadd.f32 %v5213, %v5249
    %v5256 = vadd.f32 %v5214, %v5250
    %v5257 = vadd.f32 %v5215, %v5251
    %v5258 = vadd.f32 %v5216, %v5252
    %s5259 = sld [smem:[#allocation7 + $0x54]]
    %v5260 = vstv %s5259
    %v5261 = vmul.f32 %v5260, %v464
    %v5262 = vmul.f32 %v5260, %v465
    %v5263 = vmul.f32 %v5260, %v466
    %v5264 = vmul.f32 %v5260, %v467
    %v5265 = vmul.f32 %v5260, %v468
    %v5266 = vmul.f32 %v5260, %v469
    %v5267 = vadd.f32 %v5225, %v5261
    %v5268 = vadd.f32 %v5226, %v5262
    %v5269 = vadd.f32 %v5227, %v5263
    %v5270 = vadd.f32 %v5228, %v5264
    %v5271 = vadd.f32 %v5229, %v5265
    %v5272 = vadd.f32 %v5230, %v5266
    %s5273 = sld [smem:[#allocation7 + $0x55]]
    %v5274 = vstv %s5273
    %v5275 = vmul.f32 %v5274, %v464
    %v5276 = vmul.f32 %v5274, %v465
    %v5277 = vmul.f32 %v5274, %v466
    %v5278 = vmul.f32 %v5274, %v467
    %v5279 = vmul.f32 %v5274, %v468
    %v5280 = vmul.f32 %v5274, %v469
    %v5281 = vadd.f32 %v5239, %v5275
    %v5282 = vadd.f32 %v5240, %v5276
    %v5283 = vadd.f32 %v5241, %v5277
    %v5284 = vadd.f32 %v5242, %v5278
    %v5285 = vadd.f32 %v5243, %v5279
    %v5286 = vadd.f32 %v5244, %v5280
    %s5287 = sld [smem:[#allocation7 + $0x56]]
    %v5288 = vstv %s5287
    %v5289 = vmul.f32 %v5288, %v464
    %v5290 = vmul.f32 %v5288, %v465
    %v5291 = vmul.f32 %v5288, %v466
    %v5292 = vmul.f32 %v5288, %v467
    %v5293 = vmul.f32 %v5288, %v468
    %v5294 = vmul.f32 %v5288, %v469
    %v5295 = vadd.f32 %v5253, %v5289
    %v5296 = vadd.f32 %v5254, %v5290
    %v5297 = vadd.f32 %v5255, %v5291
    %v5298 = vadd.f32 %v5256, %v5292
    %v5299 = vadd.f32 %v5257, %v5293
    %v5300 = vadd.f32 %v5258, %v5294
    %s5301 = sld [smem:[#allocation7 + $0x57]]
    %v5302 = vstv %s5301
    %v5303 = vmul.f32 %v5302, %v512
    %v5304 = vmul.f32 %v5302, %v513
    %v5305 = vmul.f32 %v5302, %v514
    %v5306 = vmul.f32 %v5302, %v515
    %v5307 = vmul.f32 %v5302, %v516
    %v5308 = vmul.f32 %v5302, %v517
    %v5309 = vadd.f32 %v5267, %v5303
    %v5310 = vadd.f32 %v5268, %v5304
    %v5311 = vadd.f32 %v5269, %v5305
    %v5312 = vadd.f32 %v5270, %v5306
    %v5313 = vadd.f32 %v5271, %v5307
    %v5314 = vadd.f32 %v5272, %v5308
    %s5315 = sld [smem:[#allocation7 + $0x58]]
    %v5316 = vstv %s5315
    %v5317 = vmul.f32 %v5316, %v512
    %v5318 = vmul.f32 %v5316, %v513
    %v5319 = vmul.f32 %v5316, %v514
    %v5320 = vmul.f32 %v5316, %v515
    %v5321 = vmul.f32 %v5316, %v516
    %v5322 = vmul.f32 %v5316, %v517
    %v5323 = vadd.f32 %v5281, %v5317
    %v5324 = vadd.f32 %v5282, %v5318
    %v5325 = vadd.f32 %v5283, %v5319
    %v5326 = vadd.f32 %v5284, %v5320
    %v5327 = vadd.f32 %v5285, %v5321
    %v5328 = vadd.f32 %v5286, %v5322
    %s5329 = sld [smem:[#allocation7 + $0x59]]
    %v5330 = vstv %s5329
    %v5331 = vmul.f32 %v5330, %v512
    %v5332 = vmul.f32 %v5330, %v513
    %v5333 = vmul.f32 %v5330, %v514
    %v5334 = vmul.f32 %v5330, %v515
    %v5335 = vmul.f32 %v5330, %v516
    %v5336 = vmul.f32 %v5330, %v517
    %v5337 = vadd.f32 %v5295, %v5331
    %v5338 = vadd.f32 %v5296, %v5332
    %v5339 = vadd.f32 %v5297, %v5333
    %v5340 = vadd.f32 %v5298, %v5334
    %v5341 = vadd.f32 %v5299, %v5335
    %v5342 = vadd.f32 %v5300, %v5336
    %s5343 = sld [smem:[#allocation7 + $0x5a]]
    %v5344 = vstv %s5343
    %v5345 = vmul.f32 %v5344, %v561
    %v5346 = vmul.f32 %v5344, %v562
    %v5347 = vmul.f32 %v5344, %v563
    %v5348 = vmul.f32 %v5344, %v564
    %v5349 = vmul.f32 %v5344, %v565
    %v5350 = vmul.f32 %v5344, %v566
    %v5351 = vadd.f32 %v5309, %v5345
    %v5352 = vadd.f32 %v5310, %v5346
    %v5353 = vadd.f32 %v5311, %v5347
    %v5354 = vadd.f32 %v5312, %v5348
    %v5355 = vadd.f32 %v5313, %v5349
    %v5356 = vadd.f32 %v5314, %v5350
    %s5357 = sld [smem:[#allocation7 + $0x5b]]
    %v5358 = vstv %s5357
    %v5359 = vmul.f32 %v5358, %v561
    %v5360 = vmul.f32 %v5358, %v562
    %v5361 = vmul.f32 %v5358, %v563
    %v5362 = vmul.f32 %v5358, %v564
    %v5363 = vmul.f32 %v5358, %v565
    %v5364 = vmul.f32 %v5358, %v566
    %v5365 = vadd.f32 %v5323, %v5359
    %v5366 = vadd.f32 %v5324, %v5360
    %v5367 = vadd.f32 %v5325, %v5361
    %v5368 = vadd.f32 %v5326, %v5362
    %v5369 = vadd.f32 %v5327, %v5363
    %v5370 = vadd.f32 %v5328, %v5364
    %s5371 = sld [smem:[#allocation7 + $0x5c]]
    %v5372 = vstv %s5371
    %v5373 = vmul.f32 %v5372, %v561
    %v5374 = vmul.f32 %v5372, %v562
    %v5375 = vmul.f32 %v5372, %v563
    %v5376 = vmul.f32 %v5372, %v564
    %v5377 = vmul.f32 %v5372, %v565
    %v5378 = vmul.f32 %v5372, %v566
    %v5379 = vadd.f32 %v5337, %v5373
    %v5380 = vadd.f32 %v5338, %v5374
    %v5381 = vadd.f32 %v5339, %v5375
    %v5382 = vadd.f32 %v5340, %v5376
    %v5383 = vadd.f32 %v5341, %v5377
    %v5384 = vadd.f32 %v5342, %v5378
    %s5385 = sld [smem:[#allocation7 + $0x5d]]
    %v5386 = vstv %s5385
    %v5387 = vmul.f32 %v5386, %v609
    %v5388 = vmul.f32 %v5386, %v610
    %v5389 = vmul.f32 %v5386, %v611
    %v5390 = vmul.f32 %v5386, %v612
    %v5391 = vmul.f32 %v5386, %v613
    %v5392 = vmul.f32 %v5386, %v614
    %v5393 = vadd.f32 %v5351, %v5387
    %v5394 = vadd.f32 %v5352, %v5388
    %v5395 = vadd.f32 %v5353, %v5389
    %v5396 = vadd.f32 %v5354, %v5390
    %v5397 = vadd.f32 %v5355, %v5391
    %v5398 = vadd.f32 %v5356, %v5392
    %s5399 = sld [smem:[#allocation7 + $0x5e]]
    %v5400 = vstv %s5399
    %v5401 = vmul.f32 %v5400, %v609
    %v5402 = vmul.f32 %v5400, %v610
    %v5403 = vmul.f32 %v5400, %v611
    %v5404 = vmul.f32 %v5400, %v612
    %v5405 = vmul.f32 %v5400, %v613
    %v5406 = vmul.f32 %v5400, %v614
    %v5407 = vadd.f32 %v5365, %v5401
    %v5408 = vadd.f32 %v5366, %v5402
    %v5409 = vadd.f32 %v5367, %v5403
    %v5410 = vadd.f32 %v5368, %v5404
    %v5411 = vadd.f32 %v5369, %v5405
    %v5412 = vadd.f32 %v5370, %v5406
    %s5413 = sld [smem:[#allocation7 + $0x5f]]
    %v5414 = vstv %s5413
    %v5415 = vmul.f32 %v5414, %v609
    %v5416 = vmul.f32 %v5414, %v610
    %v5417 = vmul.f32 %v5414, %v611
    %v5418 = vmul.f32 %v5414, %v612
    %v5419 = vmul.f32 %v5414, %v613
    %v5420 = vmul.f32 %v5414, %v614
    %v5421 = vadd.f32 %v5379, %v5415
    %v5422 = vadd.f32 %v5380, %v5416
    %v5423 = vadd.f32 %v5381, %v5417
    %v5424 = vadd.f32 %v5382, %v5418
    %v5425 = vadd.f32 %v5383, %v5419
    %v5426 = vadd.f32 %v5384, %v5420
    %s5427 = sld [smem:[#allocation7 + $0x60]]
    %v5428 = vstv %s5427
    %v5429 = vmul.f32 %v5428, %v657
    %v5430 = vmul.f32 %v5428, %v658
    %v5431 = vmul.f32 %v5428, %v659
    %v5432 = vmul.f32 %v5428, %v660
    %v5433 = vmul.f32 %v5428, %v661
    %v5434 = vmul.f32 %v5428, %v662
    %v5435 = vadd.f32 %v5393, %v5429
    %v5436 = vadd.f32 %v5394, %v5430
    %v5437 = vadd.f32 %v5395, %v5431
    %v5438 = vadd.f32 %v5396, %v5432
    %v5439 = vadd.f32 %v5397, %v5433
    %v5440 = vadd.f32 %v5398, %v5434
    %s5441 = sld [smem:[#allocation7 + $0x61]]
    %v5442 = vstv %s5441
    %v5443 = vmul.f32 %v5442, %v657
    %v5444 = vmul.f32 %v5442, %v658
    %v5445 = vmul.f32 %v5442, %v659
    %v5446 = vmul.f32 %v5442, %v660
    %v5447 = vmul.f32 %v5442, %v661
    %v5448 = vmul.f32 %v5442, %v662
    %v5449 = vadd.f32 %v5407, %v5443
    %v5450 = vadd.f32 %v5408, %v5444
    %v5451 = vadd.f32 %v5409, %v5445
    %v5452 = vadd.f32 %v5410, %v5446
    %v5453 = vadd.f32 %v5411, %v5447
    %v5454 = vadd.f32 %v5412, %v5448
    %s5455 = sld [smem:[#allocation7 + $0x62]]
    %v5456 = vstv %s5455
    %v5457 = vmul.f32 %v5456, %v657
    %v5458 = vmul.f32 %v5456, %v658
    %v5459 = vmul.f32 %v5456, %v659
    %v5460 = vmul.f32 %v5456, %v660
    %v5461 = vmul.f32 %v5456, %v661
    %v5462 = vmul.f32 %v5456, %v662
    %v5463 = vadd.f32 %v5421, %v5457
    %v5464 = vadd.f32 %v5422, %v5458
    %v5465 = vadd.f32 %v5423, %v5459
    %v5466 = vadd.f32 %v5424, %v5460
    %v5467 = vadd.f32 %v5425, %v5461
    %v5468 = vadd.f32 %v5426, %v5462
    %s5469 = sld [smem:[#allocation7 + $0x63]]
    %v5470 = vstv %s5469
    %v5471 = vmul.f32 %v5470, %v706
    %v5472 = vmul.f32 %v5470, %v707
    %v5473 = vmul.f32 %v5470, %v708
    %v5474 = vmul.f32 %v5470, %v709
    %v5475 = vmul.f32 %v5470, %v710
    %v5476 = vmul.f32 %v5470, %v711
    %v5477 = vadd.f32 %v5435, %v5471
    %v5478 = vadd.f32 %v5436, %v5472
    %v5479 = vadd.f32 %v5437, %v5473
    %v5480 = vadd.f32 %v5438, %v5474
    %v5481 = vadd.f32 %v5439, %v5475
    %v5482 = vadd.f32 %v5440, %v5476
    %s5483 = sld [smem:[#allocation7 + $0x64]]
    %v5484 = vstv %s5483
    %v5485 = vmul.f32 %v5484, %v706
    %v5486 = vmul.f32 %v5484, %v707
    %v5487 = vmul.f32 %v5484, %v708
    %v5488 = vmul.f32 %v5484, %v709
    %v5489 = vmul.f32 %v5484, %v710
    %v5490 = vmul.f32 %v5484, %v711
    %v5491 = vadd.f32 %v5449, %v5485
    %v5492 = vadd.f32 %v5450, %v5486
    %v5493 = vadd.f32 %v5451, %v5487
    %v5494 = vadd.f32 %v5452, %v5488
    %v5495 = vadd.f32 %v5453, %v5489
    %v5496 = vadd.f32 %v5454, %v5490
    %s5497 = sld [smem:[#allocation7 + $0x65]]
    %v5498 = vstv %s5497
    %v5499 = vmul.f32 %v5498, %v706
    %v5500 = vmul.f32 %v5498, %v707
    %v5501 = vmul.f32 %v5498, %v708
    %v5502 = vmul.f32 %v5498, %v709
    %v5503 = vmul.f32 %v5498, %v710
    %v5504 = vmul.f32 %v5498, %v711
    %v5505 = vadd.f32 %v5463, %v5499
    %v5506 = vadd.f32 %v5464, %v5500
    %v5507 = vadd.f32 %v5465, %v5501
    %v5508 = vadd.f32 %v5466, %v5502
    %v5509 = vadd.f32 %v5467, %v5503
    %v5510 = vadd.f32 %v5468, %v5504
    %s5511 = sld [smem:[#allocation7 + $0x66]]
    %v5512 = vstv %s5511
    %v5513 = vmul.f32 %v5512, %v754
    %v5514 = vmul.f32 %v5512, %v755
    %v5515 = vmul.f32 %v5512, %v756
    %v5516 = vmul.f32 %v5512, %v757
    %v5517 = vmul.f32 %v5512, %v758
    %v5518 = vmul.f32 %v5512, %v759
    %v5519 = vadd.f32 %v5477, %v5513
    %v5520 = vadd.f32 %v5478, %v5514
    %v5521 = vadd.f32 %v5479, %v5515
    %v5522 = vadd.f32 %v5480, %v5516
    %v5523 = vadd.f32 %v5481, %v5517
    %v5524 = vadd.f32 %v5482, %v5518
    %s5525 = sld [smem:[#allocation7 + $0x67]]
    %v5526 = vstv %s5525
    %v5527 = vmul.f32 %v5526, %v754
    %v5528 = vmul.f32 %v5526, %v755
    %v5529 = vmul.f32 %v5526, %v756
    %v5530 = vmul.f32 %v5526, %v757
    %v5531 = vmul.f32 %v5526, %v758
    %v5532 = vmul.f32 %v5526, %v759
    %v5533 = vadd.f32 %v5491, %v5527
    %v5534 = vadd.f32 %v5492, %v5528
    %v5535 = vadd.f32 %v5493, %v5529
    %v5536 = vadd.f32 %v5494, %v5530
    %v5537 = vadd.f32 %v5495, %v5531
    %v5538 = vadd.f32 %v5496, %v5532
    %s5539 = sld [smem:[#allocation7 + $0x68]]
    %v5540 = vstv %s5539
    %v5541 = vmul.f32 %v5540, %v754
    %v5542 = vmul.f32 %v5540, %v755
    %v5543 = vmul.f32 %v5540, %v756
    %v5544 = vmul.f32 %v5540, %v757
    %v5545 = vmul.f32 %v5540, %v758
    %v5546 = vmul.f32 %v5540, %v759
    %v5547 = vadd.f32 %v5505, %v5541
    %v5548 = vadd.f32 %v5506, %v5542
    %v5549 = vadd.f32 %v5507, %v5543
    %v5550 = vadd.f32 %v5508, %v5544
    %v5551 = vadd.f32 %v5509, %v5545
    %v5552 = vadd.f32 %v5510, %v5546
    %s5553 = sld [smem:[#allocation7 + $0x69]]
    %v5554 = vstv %s5553
    %v5555 = vmul.f32 %v5554, %v802
    %v5556 = vmul.f32 %v5554, %v803
    %v5557 = vmul.f32 %v5554, %v804
    %v5558 = vmul.f32 %v5554, %v805
    %v5559 = vmul.f32 %v5554, %v806
    %v5560 = vmul.f32 %v5554, %v807
    %v5561 = vadd.f32 %v5519, %v5555
    %v5562 = vadd.f32 %v5520, %v5556
    %v5563 = vadd.f32 %v5521, %v5557
    %v5564 = vadd.f32 %v5522, %v5558
    %v5565 = vadd.f32 %v5523, %v5559
    %v5566 = vadd.f32 %v5524, %v5560
    %s5567 = sld [smem:[#allocation7 + $0x6a]]
    %v5568 = vstv %s5567
    %v5569 = vmul.f32 %v5568, %v802
    %v5570 = vmul.f32 %v5568, %v803
    %v5571 = vmul.f32 %v5568, %v804
    %v5572 = vmul.f32 %v5568, %v805
    %v5573 = vmul.f32 %v5568, %v806
    %v5574 = vmul.f32 %v5568, %v807
    %v5575 = vadd.f32 %v5533, %v5569
    %v5576 = vadd.f32 %v5534, %v5570
    %v5577 = vadd.f32 %v5535, %v5571
    %v5578 = vadd.f32 %v5536, %v5572
    %v5579 = vadd.f32 %v5537, %v5573
    %v5580 = vadd.f32 %v5538, %v5574
    %s5581 = sld [smem:[#allocation7 + $0x6b]]
    %v5582 = vstv %s5581
    %v5583 = vmul.f32 %v5582, %v802
    %v5584 = vmul.f32 %v5582, %v803
    %v5585 = vmul.f32 %v5582, %v804
    %v5586 = vmul.f32 %v5582, %v805
    %v5587 = vmul.f32 %v5582, %v806
    %v5588 = vmul.f32 %v5582, %v807
    %v5589 = vadd.f32 %v5547, %v5583
    %v5590 = vadd.f32 %v5548, %v5584
    %v5591 = vadd.f32 %v5549, %v5585
    %v5592 = vadd.f32 %v5550, %v5586
    %v5593 = vadd.f32 %v5551, %v5587
    %v5594 = vadd.f32 %v5552, %v5588
    %s5595 = sld [smem:[#allocation8 + $0x2]]
    %v5596 = vld [vmem:[#allocation12 + $0x5a0] sm:$0xff]
    %v5597 = vld [vmem:[#allocation12 + $0x5a8] sm:$0xff]
    %v5598 = vld [vmem:[#allocation12 + $0x5b0] sm:$0xff]
    %v5599 = vld [vmem:[#allocation12 + $0x5b8] sm:$0xff]
    %v5600 = vld [vmem:[#allocation12 + $0x5c0] sm:$0xff]
    %v5601 = vld [vmem:[#allocation12 + $0x5c8] sm:$0xff]
    %v5602 = vld [vmem:[#allocation12 + $0x5d0] sm:$0xff]
    %v5603 = vld [vmem:[#allocation12 + $0x5d8] sm:$0xff]
    %v5604 = vld [vmem:[#allocation12 + $0x5e0] sm:$0xff]
    %v5605 = vld [vmem:[#allocation12 + $0x5e8] sm:$0xff]
    %v5606 = vld [vmem:[#allocation12 + $0x5f0] sm:$0xff]
    %v5607 = vld [vmem:[#allocation12 + $0x5f8] sm:$0xff]
    %v5608 = vld [vmem:[#allocation12 + $0x600] sm:$0xff]
    %v5609 = vld [vmem:[#allocation12 + $0x608] sm:$0xff]
    %v5610 = vld [vmem:[#allocation12 + $0x610] sm:$0xff]
    %v5611 = vld [vmem:[#allocation12 + $0x618] sm:$0xff]
    %v5612 = vld [vmem:[#allocation12 + $0x620] sm:$0xff]
    %v5613 = vld [vmem:[#allocation12 + $0x628] sm:$0xff]
    %v5614 = vld [vmem:[#allocation12 + $0x630] sm:$0xff]
    %v5615 = vld [vmem:[#allocation12 + $0x638] sm:$0xff]
    %v5616 = vld [vmem:[#allocation12 + $0x640] sm:$0xff]
    %v5617 = vld [vmem:[#allocation12 + $0x648] sm:$0xff]
    %v5618 = vld [vmem:[#allocation12 + $0x650] sm:$0xff]
    %v5619 = vld [vmem:[#allocation12 + $0x658] sm:$0xff]
    %v5620 = vld [vmem:[#allocation12 + $0x660] sm:$0xff]
    %v5621 = vld [vmem:[#allocation12 + $0x668] sm:$0xff]
    %v5622 = vld [vmem:[#allocation12 + $0x670] sm:$0xff]
    %v5623 = vld [vmem:[#allocation12 + $0x678] sm:$0xff]
    %v5624 = vld [vmem:[#allocation12 + $0x680] sm:$0xff]
    %v5625 = vld [vmem:[#allocation12 + $0x688] sm:$0xff]
    %v5626 = vld [vmem:[#allocation12 + $0x690] sm:$0xff]
    %v5627 = vld [vmem:[#allocation12 + $0x698] sm:$0xff]
    %v5628 = vld [vmem:[#allocation12 + $0x6a0] sm:$0xff]
    %v5629 = vld [vmem:[#allocation12 + $0x6a8] sm:$0xff]
    %v5630 = vld [vmem:[#allocation12 + $0x6b0] sm:$0xff]
    %v5631 = vld [vmem:[#allocation12 + $0x6b8] sm:$0xff]
    %v5632 = vld [vmem:[#allocation12 + $0x6c0] sm:$0xff]
    %v5633 = vld [vmem:[#allocation12 + $0x6c8] sm:$0xff]
    %v5634 = vld [vmem:[#allocation12 + $0x6d0] sm:$0xff]
    %v5635 = vld [vmem:[#allocation12 + $0x6d8] sm:$0xff]
    %v5636 = vld [vmem:[#allocation12 + $0x6e0] sm:$0xff]
    %v5637 = vld [vmem:[#allocation12 + $0x6e8] sm:$0xff]
    %v5638 = vld [vmem:[#allocation12 + $0x6f0] sm:$0xff]
    %v5639 = vld [vmem:[#allocation12 + $0x6f8] sm:$0xff]
    %v5640 = vld [vmem:[#allocation12 + $0x700] sm:$0xff]
    %v5641 = vld [vmem:[#allocation12 + $0x708] sm:$0xff]
    %v5642 = vld [vmem:[#allocation12 + $0x710] sm:$0xff]
    %v5643 = vld [vmem:[#allocation12 + $0x718] sm:$0xff]
    %v5644 = vld [vmem:[#allocation12 + $0x720] sm:$0xff]
    %v5645 = vld [vmem:[#allocation12 + $0x728] sm:$0xff]
    %v5646 = vld [vmem:[#allocation12 + $0x730] sm:$0xff]
    %v5647 = vld [vmem:[#allocation12 + $0x738] sm:$0xff]
    %v5648 = vld [vmem:[#allocation12 + $0x740] sm:$0xff]
    %v5649 = vld [vmem:[#allocation12 + $0x748] sm:$0xff]
    %v5650 = vld [vmem:[#allocation12 + $0x750] sm:$0xff]
    %v5651 = vld [vmem:[#allocation12 + $0x758] sm:$0xff]
    %v5652 = vld [vmem:[#allocation12 + $0x760] sm:$0xff]
    %v5653 = vld [vmem:[#allocation12 + $0x768] sm:$0xff]
    %v5654 = vld [vmem:[#allocation12 + $0x770] sm:$0xff]
    %v5655 = vld [vmem:[#allocation12 + $0x778] sm:$0xff]
    %v5656 = vld [vmem:[#allocation12 + $0x780] sm:$0xff]
    %v5657 = vld [vmem:[#allocation12 + $0x788] sm:$0xff]
    %v5658 = vld [vmem:[#allocation12 + $0x790] sm:$0xff]
    %v5659 = vld [vmem:[#allocation12 + $0x798] sm:$0xff]
    %v5660 = vld [vmem:[#allocation12 + $0x7a0] sm:$0xff]
    %v5661 = vld [vmem:[#allocation12 + $0x7a8] sm:$0xff]
    %v5662 = vld [vmem:[#allocation12 + $0x7b0] sm:$0xff]
    %v5663 = vld [vmem:[#allocation12 + $0x7b8] sm:$0xff]
    %v5664 = vld [vmem:[#allocation12 + $0x7c0] sm:$0xff]
    %v5665 = vld [vmem:[#allocation12 + $0x7c8] sm:$0xff]
    %v5666 = vld [vmem:[#allocation12 + $0x7d0] sm:$0xff]
    %v5667 = vld [vmem:[#allocation12 + $0x7d8] sm:$0xff]
    %v5668 = vld [vmem:[#allocation12 + $0x7e0] sm:$0xff]
    %v5669 = vld [vmem:[#allocation12 + $0x7e8] sm:$0xff]
    %v5670 = vld [vmem:[#allocation12 + $0x7f0] sm:$0xff]
    %v5671 = vld [vmem:[#allocation12 + $0x7f8] sm:$0xff]
    %v5672 = vld [vmem:[#allocation12 + $0x800] sm:$0xff]
    %v5673 = vld [vmem:[#allocation12 + $0x808] sm:$0xff]
    %v5674 = vld [vmem:[#allocation12 + $0x810] sm:$0xff]
    %v5675 = vld [vmem:[#allocation12 + $0x818] sm:$0xff]
    %v5676 = vld [vmem:[#allocation12 + $0x820] sm:$0xff]
    %v5677 = vld [vmem:[#allocation12 + $0x828] sm:$0xff]
    %v5678 = vld [vmem:[#allocation12 + $0x830] sm:$0xff]
    %v5679 = vld [vmem:[#allocation12 + $0x838] sm:$0xff]
    %v5680 = vld [vmem:[#allocation12 + $0x840] sm:$0xff]
    %v5681 = vld [vmem:[#allocation12 + $0x848] sm:$0xff]
    %v5682 = vld [vmem:[#allocation12 + $0x850] sm:$0xff]
    %v5683 = vld [vmem:[#allocation12 + $0x858] sm:$0xff]
    %v5684 = vld [vmem:[#allocation12 + $0x860] sm:$0xff]
    %v5685 = vld [vmem:[#allocation12 + $0x868] sm:$0xff]
    %v5687 = vsel %vm941, %v5575, 0
    %v5690 = vsel %vm941, %v5576, 0
    %v5693 = vsel %vm941, %v5577, 0
    %5695 = vmatprep.subr.mxu0 0.0
    %5696 = vmatpush1.msra.mxu0 0.0
    %5697 = vmatprep.subr.mxu0 0.0
    %5698 = vmatpush1.msra.mxu0 0.0
    %5699 = vmatprep.subr.mxu0 0.0
    %5700 = vmatpush1.msra.mxu0 0.0
    %5701 = vmatprep.subr.mxu0 0.0
    %5702 = vmatpush1.msra.mxu0 0.0
    %5703 = vmatprep.subr.mxu0 0.0
    %5704 = vmatpush1.msra.mxu0 0.0
    %5705 = vmatprep.subr.mxu0 0.0
    %5706 = vmatpush1.msra.mxu0 0.0
    %5707 = vmatprep.subr.mxu0 0.0
    %5708 = vmatpush1.msra.mxu0 0.0
    %5709 = vmatprep.subr.mxu0 0.0
    %5710 = vmatpush1.msra.mxu0 0.0
    %5711 = vmatprep.subr.mxu0 0.0
    %5712 = vmatpush1.msra.mxu0 0.0
    %5713 = vmatprep.subr.mxu0 0.0
    %5714 = vmatpush1.msra.mxu0 0.0
    %5715 = vmatprep.subr.mxu0 0.0
    %5716 = vmatpush1.msra.mxu0 0.0
    %5717 = vmatprep.subr.mxu0 0.0
    %5718 = vmatpush1.msra.mxu0 0.0
    %5719 = vmatprep.subr.mxu0 0.0
    %5720 = vmatpush1.msra.mxu0 0.0
    %5721 = vmatprep.subr.mxu0 0.0
    %5722 = vmatpush1.msra.mxu0 %v146
    %5723 = vmatprep.subr.mxu0 0.0
    %5724 = vmatpush1.msra.mxu0 %v145
    %5725 = vmatprep.subr.mxu0 0.0
    %5726 = vmatpush1.msra.mxu0 %v144
    %5727 = vmatprep.subr.mxu0 0.0
    %5728 = vmatpush2.msra.mxu0 0.0
    %5729 = vmatprep.subr.mxu0 0.0
    %5730 = vmatpush2.msra.mxu0 0.0
    %5731 = vmatprep.subr.mxu0 0.0
    %5732 = vmatpush2.msra.mxu0 0.0
    %5733 = vmatprep.subr.mxu0 0.0
    %5734 = vmatpush2.msra.mxu0 0.0
    %5735 = vmatprep.subr.mxu0 0.0
    %5736 = vmatpush2.msra.mxu0 0.0
    %5737 = vmatprep.subr.mxu0 0.0
    %5738 = vmatpush2.msra.mxu0 0.0
    %5739 = vmatprep.subr.mxu0 0.0
    %5740 = vmatpush2.msra.mxu0 0.0
    %5741 = vmatprep.subr.mxu0 0.0
    %5742 = vmatpush2.msra.mxu0 0.0
    %5743 = vmatprep.subr.mxu0 0.0
    %5744 = vmatpush2.msra.mxu0 0.0
    %5745 = vmatprep.subr.mxu0 0.0
    %5746 = vmatpush2.msra.mxu0 0.0
    %5747 = vmatprep.subr.mxu0 0.0
    %5748 = vmatpush2.msra.mxu0 0.0
    %5749 = vmatprep.subr.mxu0 0.0
    %5750 = vmatpush2.msra.mxu0 0.0
    %5751 = vmatprep.subr.mxu0 0.0
    %5752 = vmatpush2.msra.mxu0 0.0
    %5753 = vmatprep.subr.mxu0 0.0
    %5754 = vmatpush2.msra.mxu0 0.0
    %5755 = vmatprep.subr.mxu0 0.0
    %5756 = vmatpush2.msra.mxu0 0.0
    %5757 = vmatprep.subr.mxu0 0.0
    %5758 = vmatpush2.msra.mxu0 0.0
    %5759 = vmatprep.mubr.f32.mxu0 0.0
    %5760 = vmatmul.mubr.f32.gmra.mxu0 %v5687
    %v5761 = vpop.f32.mrf.mxu0
    %v5762 = vadd.f32 0.0, %v5761
    %v5763 = vpop.f32.mrf.mxu0
    %5764 = vmatprep.mubr.f32.mxu0 0.0
    %5765 = vmatmul.mubr.f32.gmra.mxu0 %v5690
    %v5766 = vpop.f32.mrf.mxu0
    %v5767 = vadd.f32 0.0, %v5766
    %v5768 = vpop.f32.mrf.mxu0
    %5769 = vmatprep.mubr.f32.mxu0 0.0
    %5770 = vmatmul.mubr.f32.gmra.mxu0 %v5693
    %v5771 = vpop.f32.mrf.mxu0
    %v5772 = vadd.f32 0.0, %v5771
    %v5773 = vpop.f32.mrf.mxu0
    %5774 = vdwg.mxu0
    %v5775 = vadd.f32 %v5561, %v5762
    %v5776 = vadd.f32 %v5562, %v5767
    %v5777 = vadd.f32 %v5563, %v5772
    %v5779 = vsel %vm941, %v5589, 0
    %v5782 = vsel %vm941, %v5590, 0
    %v5785 = vsel %vm941, %v5591, 0
    %5787 = vmatprep.subr.mxu0 0.0
    %5788 = vmatpush1.msra.mxu0 0.0
    %5789 = vmatprep.subr.mxu0 0.0
    %5790 = vmatpush1.msra.mxu0 0.0
    %5791 = vmatprep.subr.mxu0 0.0
    %5792 = vmatpush1.msra.mxu0 0.0
    %5793 = vmatprep.subr.mxu0 0.0
    %5794 = vmatpush1.msra.mxu0 0.0
    %5795 = vmatprep.subr.mxu0 0.0
    %5796 = vmatpush1.msra.mxu0 0.0
    %5797 = vmatprep.subr.mxu0 0.0
    %5798 = vmatpush1.msra.mxu0 0.0
    %5799 = vmatprep.subr.mxu0 0.0
    %5800 = vmatpush1.msra.mxu0 0.0
    %5801 = vmatprep.subr.mxu0 0.0
    %5802 = vmatpush1.msra.mxu0 0.0
    %5803 = vmatprep.subr.mxu0 0.0
    %5804 = vmatpush1.msra.mxu0 0.0
    %5805 = vmatprep.subr.mxu0 0.0
    %5806 = vmatpush1.msra.mxu0 0.0
    %5807 = vmatprep.subr.mxu0 0.0
    %5808 = vmatpush1.msra.mxu0 0.0
    %5809 = vmatprep.subr.mxu0 0.0
    %5810 = vmatpush1.msra.mxu0 0.0
    %5811 = vmatprep.subr.mxu0 0.0
    %5812 = vmatpush1.msra.mxu0 0.0
    %5813 = vmatprep.subr.mxu0 0.0
    %5814 = vmatpush1.msra.mxu0 %v153
    %5815 = vmatprep.subr.mxu0 0.0
    %5816 = vmatpush1.msra.mxu0 %v152
    %5817 = vmatprep.subr.mxu0 0.0
    %5818 = vmatpush1.msra.mxu0 %v151
    %5819 = vmatprep.subr.mxu0 0.0
    %5820 = vmatpush2.msra.mxu0 0.0
    %5821 = vmatprep.subr.mxu0 0.0
    %5822 = vmatpush2.msra.mxu0 0.0
    %5823 = vmatprep.subr.mxu0 0.0
    %5824 = vmatpush2.msra.mxu0 0.0
    %5825 = vmatprep.subr.mxu0 0.0
    %5826 = vmatpush2.msra.mxu0 0.0
    %5827 = vmatprep.subr.mxu0 0.0
    %5828 = vmatpush2.msra.mxu0 0.0
    %5829 = vmatprep.subr.mxu0 0.0
    %5830 = vmatpush2.msra.mxu0 0.0
    %5831 = vmatprep.subr.mxu0 0.0
    %5832 = vmatpush2.msra.mxu0 0.0
    %5833 = vmatprep.subr.mxu0 0.0
    %5834 = vmatpush2.msra.mxu0 0.0
    %5835 = vmatprep.subr.mxu0 0.0
    %5836 = vmatpush2.msra.mxu0 0.0
    %5837 = vmatprep.subr.mxu0 0.0
    %5838 = vmatpush2.msra.mxu0 0.0
    %5839 = vmatprep.subr.mxu0 0.0
    %5840 = vmatpush2.msra.mxu0 0.0
    %5841 = vmatprep.subr.mxu0 0.0
    %5842 = vmatpush2.msra.mxu0 0.0
    %5843 = vmatprep.subr.mxu0 0.0
    %5844 = vmatpush2.msra.mxu0 0.0
    %5845 = vmatprep.subr.mxu0 0.0
    %5846 = vmatpush2.msra.mxu0 0.0
    %5847 = vmatprep.subr.mxu0 0.0
    %5848 = vmatpush2.msra.mxu0 0.0
    %5849 = vmatprep.subr.mxu0 0.0
    %5850 = vmatpush2.msra.mxu0 0.0
    %5851 = vmatprep.mubr.f32.mxu0 0.0
    %5852 = vmatmul.mubr.f32.gmra.mxu0 %v5779
    %v5853 = vpop.f32.mrf.mxu0
    %v5854 = vadd.f32 0.0, %v5853
    %v5855 = vpop.f32.mrf.mxu0
    %5856 = vmatprep.mubr.f32.mxu0 0.0
    %5857 = vmatmul.mubr.f32.gmra.mxu0 %v5782
    %v5858 = vpop.f32.mrf.mxu0
    %v5859 = vadd.f32 0.0, %v5858
    %v5860 = vpop.f32.mrf.mxu0
    %5861 = vmatprep.mubr.f32.mxu0 0.0
    %5862 = vmatmul.mubr.f32.gmra.mxu0 %v5785
    %v5863 = vpop.f32.mrf.mxu0
    %v5864 = vadd.f32 0.0, %v5863
    %v5865 = vpop.f32.mrf.mxu0
    %5866 = vdwg.mxu0
    %v5867 = vadd.f32 %v5775, %v5854
    %v5868 = vadd.f32 %v5776, %v5859
    %v5869 = vadd.f32 %v5777, %v5864
    %v5870 = vstv %s5595
    %v5871 = vadd.f32 %v5867, %v5870
    %v5872 = vadd.f32 %v5868, %v5870
    %v5873 = vadd.f32 %v5869, %v5870
    %v5874 = vmax.f32 %v5871, 0.0
    %v5875 = vmax.f32 %v5872, 0.0
    %v5876 = vmax.f32 %v5873, 0.0
    %v5878 = vsel %vm941, %v5874, 0
    %v5881 = vsel %vm941, %v5875, 0
    %v5884 = vsel %vm941, %v5876, 0
    %5886 = vmatprep.subr.mxu0 0.0
    %5887 = vmatpush1.msra.mxu0 0.0
    %5888 = vmatprep.subr.mxu0 0.0
    %5889 = vmatpush1.msra.mxu0 0.0
    %5890 = vmatprep.subr.mxu0 0.0
    %5891 = vmatpush1.msra.mxu0 0.0
    %5892 = vmatprep.subr.mxu0 0.0
    %5893 = vmatpush1.msra.mxu0 0.0
    %5894 = vmatprep.subr.mxu0 0.0
    %5895 = vmatpush1.msra.mxu0 0.0
    %5896 = vmatprep.subr.mxu0 0.0
    %5897 = vmatpush1.msra.mxu0 0.0
    %5898 = vmatprep.subr.mxu0 0.0
    %5899 = vmatpush1.msra.mxu0 0.0
    %5900 = vmatprep.subr.mxu0 0.0
    %5901 = vmatpush1.msra.mxu0 0.0
    %5902 = vmatprep.subr.mxu0 0.0
    %5903 = vmatpush1.msra.mxu0 0.0
    %5904 = vmatprep.subr.mxu0 0.0
    %5905 = vmatpush1.msra.mxu0 0.0
    %5906 = vmatprep.subr.mxu0 0.0
    %5907 = vmatpush1.msra.mxu0 0.0
    %5908 = vmatprep.subr.mxu0 0.0
    %5909 = vmatpush1.msra.mxu0 0.0
    %5910 = vmatprep.subr.mxu0 0.0
    %5911 = vmatpush1.msra.mxu0 0.0
    %5912 = vmatprep.subr.mxu0 0.0
    %5913 = vmatpush1.msra.mxu0 %v167
    %5914 = vmatprep.subr.mxu0 0.0
    %5915 = vmatpush1.msra.mxu0 %v166
    %5916 = vmatprep.subr.mxu0 0.0
    %5917 = vmatpush1.msra.mxu0 %v165
    %5918 = vmatprep.subr.mxu0 0.0
    %5919 = vmatpush2.msra.mxu0 0.0
    %5920 = vmatprep.subr.mxu0 0.0
    %5921 = vmatpush2.msra.mxu0 0.0
    %5922 = vmatprep.subr.mxu0 0.0
    %5923 = vmatpush2.msra.mxu0 0.0
    %5924 = vmatprep.subr.mxu0 0.0
    %5925 = vmatpush2.msra.mxu0 0.0
    %5926 = vmatprep.subr.mxu0 0.0
    %5927 = vmatpush2.msra.mxu0 0.0
    %5928 = vmatprep.subr.mxu0 0.0
    %5929 = vmatpush2.msra.mxu0 0.0
    %5930 = vmatprep.subr.mxu0 0.0
    %5931 = vmatpush2.msra.mxu0 0.0
    %5932 = vmatprep.subr.mxu0 0.0
    %5933 = vmatpush2.msra.mxu0 0.0
    %5934 = vmatprep.subr.mxu0 0.0
    %5935 = vmatpush2.msra.mxu0 0.0
    %5936 = vmatprep.subr.mxu0 0.0
    %5937 = vmatpush2.msra.mxu0 0.0
    %5938 = vmatprep.subr.mxu0 0.0
    %5939 = vmatpush2.msra.mxu0 0.0
    %5940 = vmatprep.subr.mxu0 0.0
    %5941 = vmatpush2.msra.mxu0 0.0
    %5942 = vmatprep.subr.mxu0 0.0
    %5943 = vmatpush2.msra.mxu0 0.0
    %5944 = vmatprep.subr.mxu0 0.0
    %5945 = vmatpush2.msra.mxu0 0.0
    %5946 = vmatprep.subr.mxu0 0.0
    %5947 = vmatpush2.msra.mxu0 0.0
    %5948 = vmatprep.subr.mxu0 0.0
    %5949 = vmatpush2.msra.mxu0 0.0
    %5950 = vmatprep.mubr.f32.mxu0 0.0
    %5951 = vmatmul.mubr.f32.gmra.mxu0 %v5878
    %v5952 = vpop.f32.mrf.mxu0
    %v5953 = vadd.f32 0.0, %v5952
    %v5954 = vpop.f32.mrf.mxu0
    %5955 = vmatprep.mubr.f32.mxu0 0.0
    %5956 = vmatmul.mubr.f32.gmra.mxu0 %v5881
    %v5957 = vpop.f32.mrf.mxu0
    %v5958 = vadd.f32 0.0, %v5957
    %v5959 = vpop.f32.mrf.mxu0
    %5960 = vmatprep.mubr.f32.mxu0 0.0
    %5961 = vmatmul.mubr.f32.gmra.mxu0 %v5884
    %v5962 = vpop.f32.mrf.mxu0
    %v5963 = vadd.f32 0.0, %v5962
    %v5964 = vpop.f32.mrf.mxu0
    %5965 = vdwg.mxu0
    %5966 = vmatprep.subr.mxu0 0.0
    %5967 = vmatpush1.msra.mxu0 0.0
    %5968 = vmatprep.subr.mxu0 0.0
    %5969 = vmatpush1.msra.mxu0 0.0
    %5970 = vmatprep.subr.mxu0 0.0
    %5971 = vmatpush1.msra.mxu0 0.0
    %5972 = vmatprep.subr.mxu0 0.0
    %5973 = vmatpush1.msra.mxu0 0.0
    %5974 = vmatprep.subr.mxu0 0.0
    %5975 = vmatpush1.msra.mxu0 0.0
    %5976 = vmatprep.subr.mxu0 0.0
    %5977 = vmatpush1.msra.mxu0 0.0
    %5978 = vmatprep.subr.mxu0 0.0
    %5979 = vmatpush1.msra.mxu0 0.0
    %5980 = vmatprep.subr.mxu0 0.0
    %5981 = vmatpush1.msra.mxu0 0.0
    %5982 = vmatprep.subr.mxu0 0.0
    %5983 = vmatpush1.msra.mxu0 0.0
    %5984 = vmatprep.subr.mxu0 0.0
    %5985 = vmatpush1.msra.mxu0 0.0
    %5986 = vmatprep.subr.mxu0 0.0
    %5987 = vmatpush1.msra.mxu0 0.0
    %5988 = vmatprep.subr.mxu0 0.0
    %5989 = vmatpush1.msra.mxu0 0.0
    %5990 = vmatprep.subr.mxu0 0.0
    %5991 = vmatpush1.msra.mxu0 0.0
    %5992 = vmatprep.subr.mxu0 0.0
    %5993 = vmatpush1.msra.mxu0 %v176
    %5994 = vmatprep.subr.mxu0 0.0
    %5995 = vmatpush1.msra.mxu0 %v175
    %5996 = vmatprep.subr.mxu0 0.0
    %5997 = vmatpush1.msra.mxu0 %v174
    %5998 = vmatprep.subr.mxu0 0.0
    %5999 = vmatpush2.msra.mxu0 0.0
    %6000 = vmatprep.subr.mxu0 0.0
    %6001 = vmatpush2.msra.mxu0 0.0
    %6002 = vmatprep.subr.mxu0 0.0
    %6003 = vmatpush2.msra.mxu0 0.0
    %6004 = vmatprep.subr.mxu0 0.0
    %6005 = vmatpush2.msra.mxu0 0.0
    %6006 = vmatprep.subr.mxu0 0.0
    %6007 = vmatpush2.msra.mxu0 0.0
    %6008 = vmatprep.subr.mxu0 0.0
    %6009 = vmatpush2.msra.mxu0 0.0
    %6010 = vmatprep.subr.mxu0 0.0
    %6011 = vmatpush2.msra.mxu0 0.0
    %6012 = vmatprep.subr.mxu0 0.0
    %6013 = vmatpush2.msra.mxu0 0.0
    %6014 = vmatprep.subr.mxu0 0.0
    %6015 = vmatpush2.msra.mxu0 0.0
    %6016 = vmatprep.subr.mxu0 0.0
    %6017 = vmatpush2.msra.mxu0 0.0
    %6018 = vmatprep.subr.mxu0 0.0
    %6019 = vmatpush2.msra.mxu0 0.0
    %6020 = vmatprep.subr.mxu0 0.0
    %6021 = vmatpush2.msra.mxu0 0.0
    %6022 = vmatprep.subr.mxu0 0.0
    %6023 = vmatpush2.msra.mxu0 0.0
    %6024 = vmatprep.subr.mxu0 0.0
    %6025 = vmatpush2.msra.mxu0 0.0
    %6026 = vmatprep.subr.mxu0 0.0
    %6027 = vmatpush2.msra.mxu0 0.0
    %6028 = vmatprep.subr.mxu0 0.0
    %6029 = vmatpush2.msra.mxu0 0.0
    %6030 = vmatprep.mubr.f32.mxu0 0.0
    %6031 = vmatmul.mubr.f32.gmra.mxu0 %v5878
    %v6032 = vpop.f32.mrf.mxu0
    %v6033 = vadd.f32 0.0, %v6032
    %v6034 = vpop.f32.mrf.mxu0
    %6035 = vmatprep.mubr.f32.mxu0 0.0
    %6036 = vmatmul.mubr.f32.gmra.mxu0 %v5881
    %v6037 = vpop.f32.mrf.mxu0
    %v6038 = vadd.f32 0.0, %v6037
    %v6039 = vpop.f32.mrf.mxu0
    %6040 = vmatprep.mubr.f32.mxu0 0.0
    %6041 = vmatmul.mubr.f32.gmra.mxu0 %v5884
    %v6042 = vpop.f32.mrf.mxu0
    %v6043 = vadd.f32 0.0, %v6042
    %v6044 = vpop.f32.mrf.mxu0
    %6045 = vdwg.mxu0
    %v6046 = vmax.f32 %v5953, %v6033
    %v6047 = vmax.f32 %v5958, %v6038
    %v6048 = vmax.f32 %v5963, %v6043
    %v6050 = vsel %vm1312, %v6048, 0
    %6052 = vmatprep.subr.mxu0 0.0
    %6053 = vmatpush1.msra.mxu0 0.0
    %6054 = vmatprep.subr.mxu0 0.0
    %6055 = vmatpush1.msra.mxu0 0.0
    %6056 = vmatprep.subr.mxu0 0.0
    %6057 = vmatpush1.msra.mxu0 0.0
    %6058 = vmatprep.subr.mxu0 0.0
    %6059 = vmatpush1.msra.mxu0 0.0
    %6060 = vmatprep.subr.mxu0 0.0
    %6061 = vmatpush1.msra.mxu0 0.0
    %6062 = vmatprep.subr.mxu0 0.0
    %6063 = vmatpush1.msra.mxu0 0.0
    %6064 = vmatprep.subr.mxu0 0.0
    %6065 = vmatpush1.msra.mxu0 0.0
    %6066 = vmatprep.subr.mxu0 0.0
    %6067 = vmatpush1.msra.mxu0 0.0
    %6068 = vmatprep.subr.mxu0 0.0
    %6069 = vmatpush1.msra.mxu0 0.0
    %6070 = vmatprep.subr.mxu0 0.0
    %6071 = vmatpush1.msra.mxu0 0.0
    %6072 = vmatprep.subr.mxu0 0.0
    %6073 = vmatpush1.msra.mxu0 0.0
    %6074 = vmatprep.subr.mxu0 0.0
    %6075 = vmatpush1.msra.mxu0 0.0
    %6076 = vmatprep.subr.mxu0 0.0
    %6077 = vmatpush1.msra.mxu0 0.0
    %6078 = vmatprep.subr.mxu0 0.0
    %6079 = vmatpush1.msra.mxu0 %v6050
    %6080 = vmatprep.subr.mxu0 0.0
    %6081 = vmatpush1.msra.mxu0 %v6047
    %6082 = vmatprep.subr.mxu0 0.0
    %6083 = vmatpush1.msra.mxu0 %v6046
    %6084 = vmatprep.subr.mxu0 0.0
    %6085 = vmatpush2.msra.mxu0 0.0
    %6086 = vmatprep.subr.mxu0 0.0
    %6087 = vmatpush2.msra.mxu0 0.0
    %6088 = vmatprep.subr.mxu0 0.0
    %6089 = vmatpush2.msra.mxu0 0.0
    %6090 = vmatprep.subr.mxu0 0.0
    %6091 = vmatpush2.msra.mxu0 0.0
    %6092 = vmatprep.subr.mxu0 0.0
    %6093 = vmatpush2.msra.mxu0 0.0
    %6094 = vmatprep.subr.mxu0 0.0
    %6095 = vmatpush2.msra.mxu0 0.0
    %6096 = vmatprep.subr.mxu0 0.0
    %6097 = vmatpush2.msra.mxu0 0.0
    %6098 = vmatprep.subr.mxu0 0.0
    %6099 = vmatpush2.msra.mxu0 0.0
    %6100 = vmatprep.subr.mxu0 0.0
    %6101 = vmatpush2.msra.mxu0 0.0
    %6102 = vmatprep.subr.mxu0 0.0
    %6103 = vmatpush2.msra.mxu0 0.0
    %6104 = vmatprep.subr.mxu0 0.0
    %6105 = vmatpush2.msra.mxu0 0.0
    %6106 = vmatprep.subr.mxu0 0.0
    %6107 = vmatpush2.msra.mxu0 0.0
    %6108 = vmatprep.subr.mxu0 0.0
    %6109 = vmatpush2.msra.mxu0 0.0
    %6110 = vmatprep.subr.mxu0 0.0
    %6111 = vmatpush2.msra.mxu0 0.0
    %6112 = vmatprep.subr.mxu0 0.0
    %6113 = vmatpush2.msra.mxu0 0.0
    %6114 = vmatprep.subr.mxu0 0.0
    %6115 = vmatpush2.msra.mxu0 0.0
    %6116 = vmatprep.mubr.f32.mxu0 0.0
    %6117 = vmatmul.mubr.f32.gmra.mxu0 %v1307
    %v6118 = vpop.f32.mrf.mxu0
    %v6119 = vadd.f32 0.0, %v6118
    %v6120 = vpop.f32.mrf.mxu0
    %6121 = vmatprep.mubr.f32.mxu0 0.0
    %6122 = vmatmul.mubr.f32.gmra.mxu0 %v1310
    %v6123 = vpop.f32.mrf.mxu0
    %v6124 = vadd.f32 0.0, %v6123
    %v6125 = vpop.f32.mrf.mxu0
    %6126 = vdwg.mxu0
    %6127 = vmatprep.subr.mxu0 0.0
    %6128 = vmatpush1.msra.mxu0 0.0
    %6129 = vmatprep.subr.mxu0 0.0
    %6130 = vmatpush1.msra.mxu0 0.0
    %6131 = vmatprep.subr.mxu0 0.0
    %6132 = vmatpush1.msra.mxu0 0.0
    %6133 = vmatprep.subr.mxu0 0.0
    %6134 = vmatpush1.msra.mxu0 0.0
    %6135 = vmatprep.subr.mxu0 0.0
    %6136 = vmatpush1.msra.mxu0 0.0
    %6137 = vmatprep.subr.mxu0 0.0
    %6138 = vmatpush1.msra.mxu0 0.0
    %6139 = vmatprep.subr.mxu0 0.0
    %6140 = vmatpush1.msra.mxu0 0.0
    %6141 = vmatprep.subr.mxu0 0.0
    %6142 = vmatpush1.msra.mxu0 0.0
    %6143 = vmatprep.subr.mxu0 0.0
    %6144 = vmatpush1.msra.mxu0 0.0
    %6145 = vmatprep.subr.mxu0 0.0
    %6146 = vmatpush1.msra.mxu0 0.0
    %6147 = vmatprep.subr.mxu0 0.0
    %6148 = vmatpush1.msra.mxu0 0.0
    %6149 = vmatprep.subr.mxu0 0.0
    %6150 = vmatpush1.msra.mxu0 0.0
    %6151 = vmatprep.subr.mxu0 0.0
    %6152 = vmatpush1.msra.mxu0 0.0
    %6153 = vmatprep.subr.mxu0 0.0
    %6154 = vmatpush1.msra.mxu0 %v6050
    %6155 = vmatprep.subr.mxu0 0.0
    %6156 = vmatpush1.msra.mxu0 %v6047
    %6157 = vmatprep.subr.mxu0 0.0
    %6158 = vmatpush1.msra.mxu0 %v6046
    %6159 = vmatprep.subr.mxu0 0.0
    %6160 = vmatpush2.msra.mxu0 0.0
    %6161 = vmatprep.subr.mxu0 0.0
    %6162 = vmatpush2.msra.mxu0 0.0
    %6163 = vmatprep.subr.mxu0 0.0
    %6164 = vmatpush2.msra.mxu0 0.0
    %6165 = vmatprep.subr.mxu0 0.0
    %6166 = vmatpush2.msra.mxu0 0.0
    %6167 = vmatprep.subr.mxu0 0.0
    %6168 = vmatpush2.msra.mxu0 0.0
    %6169 = vmatprep.subr.mxu0 0.0
    %6170 = vmatpush2.msra.mxu0 0.0
    %6171 = vmatprep.subr.mxu0 0.0
    %6172 = vmatpush2.msra.mxu0 0.0
    %6173 = vmatprep.subr.mxu0 0.0
    %6174 = vmatpush2.msra.mxu0 0.0
    %6175 = vmatprep.subr.mxu0 0.0
    %6176 = vmatpush2.msra.mxu0 0.0
    %6177 = vmatprep.subr.mxu0 0.0
    %6178 = vmatpush2.msra.mxu0 0.0
    %6179 = vmatprep.subr.mxu0 0.0
    %6180 = vmatpush2.msra.mxu0 0.0
    %6181 = vmatprep.subr.mxu0 0.0
    %6182 = vmatpush2.msra.mxu0 0.0
    %6183 = vmatprep.subr.mxu0 0.0
    %6184 = vmatpush2.msra.mxu0 0.0
    %6185 = vmatprep.subr.mxu0 0.0
    %6186 = vmatpush2.msra.mxu0 0.0
    %6187 = vmatprep.subr.mxu0 0.0
    %6188 = vmatpush2.msra.mxu0 0.0
    %6189 = vmatprep.subr.mxu0 0.0
    %6190 = vmatpush2.msra.mxu0 0.0
    %6191 = vmatprep.mubr.f32.mxu0 0.0
    %6192 = vmatmul.mubr.f32.gmra.mxu0 %v1392
    %v6193 = vpop.f32.mrf.mxu0
    %v6194 = vadd.f32 0.0, %v6193
    %v6195 = vpop.f32.mrf.mxu0
    %6196 = vmatprep.mubr.f32.mxu0 0.0
    %6197 = vmatmul.mubr.f32.gmra.mxu0 %v1395
    %v6198 = vpop.f32.mrf.mxu0
    %v6199 = vadd.f32 0.0, %v6198
    %v6200 = vpop.f32.mrf.mxu0
    %6201 = vdwg.mxu0
    %v6202 = vmax.f32 %v6119, %v6194
    %v6203 = vmax.f32 %v6124, %v6199
    %v6205 = vsel %vm1474, %v6202, 0
    %v6208 = vsel %vm1474, %v6203, 0
    %6210 = vmatprep.subr.mxu0 0.0
    %6211 = vmatpush1.msra.mxu0 0.0
    %6212 = vmatprep.subr.mxu0 0.0
    %6213 = vmatpush1.msra.mxu0 0.0
    %6214 = vmatprep.subr.mxu0 0.0
    %6215 = vmatpush1.msra.mxu0 0.0
    %6216 = vmatprep.subr.mxu0 0.0
    %6217 = vmatpush1.msra.mxu0 0.0
    %6218 = vmatprep.subr.mxu0 0.0
    %6219 = vmatpush1.msra.mxu0 0.0
    %6220 = vmatprep.subr.mxu0 0.0
    %6221 = vmatpush1.msra.mxu0 0.0
    %6222 = vmatprep.subr.mxu0 0.0
    %6223 = vmatpush1.msra.mxu0 0.0
    %6224 = vmatprep.subr.mxu0 0.0
    %6225 = vmatpush1.msra.mxu0 0.0
    %6226 = vmatprep.subr.mxu0 0.0
    %6227 = vmatpush1.msra.mxu0 0.0
    %6228 = vmatprep.subr.mxu0 0.0
    %6229 = vmatpush1.msra.mxu0 0.0
    %6230 = vmatprep.subr.mxu0 0.0
    %6231 = vmatpush1.msra.mxu0 0.0
    %6232 = vmatprep.subr.mxu0 0.0
    %6233 = vmatpush1.msra.mxu0 0.0
    %6234 = vmatprep.subr.mxu0 0.0
    %6235 = vmatpush1.msra.mxu0 0.0
    %6236 = vmatprep.subr.mxu0 0.0
    %6237 = vmatpush1.msra.mxu0 0.0
    %6238 = vmatprep.subr.mxu0 %v1486
    %6239 = vmatpush1.msra.mxu0 %v1483
    %6240 = vmatprep.subr.mxu0 %v190
    %6241 = vmatpush1.msra.mxu0 %v189
    %6242 = vmatprep.subr.mxu0 0.0
    %6243 = vmatpush2.msra.mxu0 0.0
    %6244 = vmatprep.subr.mxu0 0.0
    %6245 = vmatpush2.msra.mxu0 0.0
    %6246 = vmatprep.subr.mxu0 0.0
    %6247 = vmatpush2.msra.mxu0 0.0
    %6248 = vmatprep.subr.mxu0 0.0
    %6249 = vmatpush2.msra.mxu0 0.0
    %6250 = vmatprep.subr.mxu0 0.0
    %6251 = vmatpush2.msra.mxu0 0.0
    %6252 = vmatprep.subr.mxu0 0.0
    %6253 = vmatpush2.msra.mxu0 0.0
    %6254 = vmatprep.subr.mxu0 0.0
    %6255 = vmatpush2.msra.mxu0 0.0
    %6256 = vmatprep.subr.mxu0 0.0
    %6257 = vmatpush2.msra.mxu0 0.0
    %6258 = vmatprep.subr.mxu0 0.0
    %6259 = vmatpush2.msra.mxu0 0.0
    %6260 = vmatprep.subr.mxu0 0.0
    %6261 = vmatpush2.msra.mxu0 0.0
    %6262 = vmatprep.subr.mxu0 0.0
    %6263 = vmatpush2.msra.mxu0 0.0
    %6264 = vmatprep.subr.mxu0 0.0
    %6265 = vmatpush2.msra.mxu0 0.0
    %6266 = vmatprep.subr.mxu0 0.0
    %6267 = vmatpush2.msra.mxu0 0.0
    %6268 = vmatprep.subr.mxu0 0.0
    %6269 = vmatpush2.msra.mxu0 0.0
    %6270 = vmatprep.subr.mxu0 0.0
    %6271 = vmatpush2.msra.mxu0 0.0
    %6272 = vmatprep.subr.mxu0 0.0
    %6273 = vmatpush2.msra.mxu0 0.0
    %6274 = vmatprep.mubr.f32.mxu0 0.0
    %6275 = vmatmul.mubr.f32.gmra.mxu0 %v6205
    %v6276 = vpop.f32.mrf.mxu0
    %v6277 = vadd.f32 0.0, %v6276
    %v6278 = vpop.f32.mrf.mxu0
    %v6279 = vadd.f32 0.0, %v6278
    %6280 = vmatprep.mubr.f32.mxu0 0.0
    %6281 = vmatmul.mubr.f32.gmra.mxu0 %v6208
    %v6282 = vpop.f32.mrf.mxu0
    %v6283 = vadd.f32 0.0, %v6282
    %v6284 = vpop.f32.mrf.mxu0
    %v6285 = vadd.f32 0.0, %v6284
    %6286 = vdwg.mxu0
    %v6287 = vmul.f32 %v6277, %v193
    %v6288 = vmul.f32 %v6279, %v194
    %v6289 = vmul.f32 %v6283, %v195
    %v6290 = vmul.f32 %v6285, %v196
    %v6291 = vsel %vm1481, %v6289, 0.0
    %v6292 = vadd.f32 %v6287, %v6291
    %v6293 = vrot.slane %v6292, 4
    %v6294 = vadd.f32 %v6292, %v6293
    %v6295 = vrot.slane %v6294, 2
    %v6296 = vadd.f32 %v6294, %v6295
    %v6297 = vrot.slane %v6296, 1
    %v6298 = vadd.f32 %v6296, %v6297
    %v6299 = vsel %vm1577, %v6288, 0.0
    %v6300 = vsel %vm1579, %v6290, 0.0
    %v6301 = vadd.f32 %v6299, %v6300
    %v6302 = vrot.slane %v6301, 4
    %v6303 = vadd.f32 %v6301, %v6302
    %v6304 = vrot.slane %v6303, 2
    %v6305 = vadd.f32 %v6303, %v6304
    %v6306 = vrot.slane %v6305, 1
    %v6307 = vadd.f32 %v6305, %v6306
    %v6309 = vsel %vm1577, %v6307, 0
    %6311 = vmatprep.subr.mxu0 %v5672
    %6312 = vmatpush1.msra.mxu0 %v5671
    %6313 = vmatprep.subr.mxu0 %v5667
    %6314 = vmatpush1.msra.mxu0 %v5666
    %6315 = vmatprep.subr.mxu0 %v5662
    %6316 = vmatpush1.msra.mxu0 %v5661
    %6317 = vmatprep.subr.mxu0 %v5657
    %6318 = vmatpush1.msra.mxu0 %v5656
    %6319 = vmatprep.subr.mxu0 %v5652
    %6320 = vmatpush1.msra.mxu0 %v5651
    %6321 = vmatprep.subr.mxu0 %v5647
    %6322 = vmatpush1.msra.mxu0 %v5646
    %6323 = vmatprep.subr.mxu0 %v5642
    %6324 = vmatpush1.msra.mxu0 %v5641
    %6325 = vmatprep.subr.mxu0 %v5637
    %6326 = vmatpush1.msra.mxu0 %v5636
    %6327 = vmatprep.subr.mxu0 %v5632
    %6328 = vmatpush1.msra.mxu0 %v5631
    %6329 = vmatprep.subr.mxu0 %v5627
    %6330 = vmatpush1.msra.mxu0 %v5626
    %6331 = vmatprep.subr.mxu0 %v5622
    %6332 = vmatpush1.msra.mxu0 %v5621
    %6333 = vmatprep.subr.mxu0 %v5617
    %6334 = vmatpush1.msra.mxu0 %v5616
    %6335 = vmatprep.subr.mxu0 %v5612
    %6336 = vmatpush1.msra.mxu0 %v5611
    %6337 = vmatprep.subr.mxu0 %v5607
    %6338 = vmatpush1.msra.mxu0 %v5606
    %6339 = vmatprep.subr.mxu0 %v5602
    %6340 = vmatpush1.msra.mxu0 %v5601
    %6341 = vmatprep.subr.mxu0 %v5597
    %6342 = vmatpush1.msra.mxu0 %v5596
    %6343 = vmatprep.subr.mxu0 0.0
    %6344 = vmatpush2.msra.mxu0 0.0
    %6345 = vmatprep.subr.mxu0 0.0
    %6346 = vmatpush2.msra.mxu0 0.0
    %6347 = vmatprep.subr.mxu0 0.0
    %6348 = vmatpush2.msra.mxu0 0.0
    %6349 = vmatprep.subr.mxu0 0.0
    %6350 = vmatpush2.msra.mxu0 0.0
    %6351 = vmatprep.subr.mxu0 0.0
    %6352 = vmatpush2.msra.mxu0 0.0
    %6353 = vmatprep.subr.mxu0 0.0
    %6354 = vmatpush2.msra.mxu0 0.0
    %6355 = vmatprep.subr.mxu0 0.0
    %6356 = vmatpush2.msra.mxu0 0.0
    %6357 = vmatprep.subr.mxu0 0.0
    %6358 = vmatpush2.msra.mxu0 0.0
    %6359 = vmatprep.subr.mxu0 0.0
    %6360 = vmatpush2.msra.mxu0 0.0
    %6361 = vmatprep.subr.mxu0 0.0
    %6362 = vmatpush2.msra.mxu0 0.0
    %6363 = vmatprep.subr.mxu0 0.0
    %6364 = vmatpush2.msra.mxu0 0.0
    %6365 = vmatprep.subr.mxu0 0.0
    %6366 = vmatpush2.msra.mxu0 0.0
    %6367 = vmatprep.subr.mxu0 0.0
    %6368 = vmatpush2.msra.mxu0 0.0
    %6369 = vmatprep.subr.mxu0 0.0
    %6370 = vmatpush2.msra.mxu0 0.0
    %6371 = vmatprep.subr.mxu0 %v5682
    %6372 = vmatpush2.msra.mxu0 %v5681
    %6373 = vmatprep.subr.mxu0 %v5677
    %6374 = vmatpush2.msra.mxu0 %v5676
    %6375 = vmatprep.mubr.f32.mxu0 %v6309
    %6376 = vmatmul.mubr.f32.gmra.mxu0 %v6298
    %v6377 = vpop.f32.mrf.mxu0
    %v6378 = vadd.f32 0.0, %v6377
    %v6379 = vpop.f32.mrf.mxu0
    %v6380 = vadd.f32 0.0, %v6379
    %6381 = vdwg.mxu0
    %6382 = vmatprep.subr.mxu0 %v5674
    %6383 = vmatpush1.msra.mxu0 %v5673
    %6384 = vmatprep.subr.mxu0 %v5669
    %6385 = vmatpush1.msra.mxu0 %v5668
    %6386 = vmatprep.subr.mxu0 %v5664
    %6387 = vmatpush1.msra.mxu0 %v5663
    %6388 = vmatprep.subr.mxu0 %v5659
    %6389 = vmatpush1.msra.mxu0 %v5658
    %6390 = vmatprep.subr.mxu0 %v5654
    %6391 = vmatpush1.msra.mxu0 %v5653
    %6392 = vmatprep.subr.mxu0 %v5649
    %6393 = vmatpush1.msra.mxu0 %v5648
    %6394 = vmatprep.subr.mxu0 %v5644
    %6395 = vmatpush1.msra.mxu0 %v5643
    %6396 = vmatprep.subr.mxu0 %v5639
    %6397 = vmatpush1.msra.mxu0 %v5638
    %6398 = vmatprep.subr.mxu0 %v5634
    %6399 = vmatpush1.msra.mxu0 %v5633
    %6400 = vmatprep.subr.mxu0 %v5629
    %6401 = vmatpush1.msra.mxu0 %v5628
    %6402 = vmatprep.subr.mxu0 %v5624
    %6403 = vmatpush1.msra.mxu0 %v5623
    %6404 = vmatprep.subr.mxu0 %v5619
    %6405 = vmatpush1.msra.mxu0 %v5618
    %6406 = vmatprep.subr.mxu0 %v5614
    %6407 = vmatpush1.msra.mxu0 %v5613
    %6408 = vmatprep.subr.mxu0 %v5609
    %6409 = vmatpush1.msra.mxu0 %v5608
    %6410 = vmatprep.subr.mxu0 %v5604
    %6411 = vmatpush1.msra.mxu0 %v5603
    %6412 = vmatprep.subr.mxu0 %v5599
    %6413 = vmatpush1.msra.mxu0 %v5598
    %6414 = vmatprep.subr.mxu0 0.0
    %6415 = vmatpush2.msra.mxu0 0.0
    %6416 = vmatprep.subr.mxu0 0.0
    %6417 = vmatpush2.msra.mxu0 0.0
    %6418 = vmatprep.subr.mxu0 0.0
    %6419 = vmatpush2.msra.mxu0 0.0
    %6420 = vmatprep.subr.mxu0 0.0
    %6421 = vmatpush2.msra.mxu0 0.0
    %6422 = vmatprep.subr.mxu0 0.0
    %6423 = vmatpush2.msra.mxu0 0.0
    %6424 = vmatprep.subr.mxu0 0.0
    %6425 = vmatpush2.msra.mxu0 0.0
    %6426 = vmatprep.subr.mxu0 0.0
    %6427 = vmatpush2.msra.mxu0 0.0
    %6428 = vmatprep.subr.mxu0 0.0
    %6429 = vmatpush2.msra.mxu0 0.0
    %6430 = vmatprep.subr.mxu0 0.0
    %6431 = vmatpush2.msra.mxu0 0.0
    %6432 = vmatprep.subr.mxu0 0.0
    %6433 = vmatpush2.msra.mxu0 0.0
    %6434 = vmatprep.subr.mxu0 0.0
    %6435 = vmatpush2.msra.mxu0 0.0
    %6436 = vmatprep.subr.mxu0 0.0
    %6437 = vmatpush2.msra.mxu0 0.0
    %6438 = vmatprep.subr.mxu0 0.0
    %6439 = vmatpush2.msra.mxu0 0.0
    %6440 = vmatprep.subr.mxu0 0.0
    %6441 = vmatpush2.msra.mxu0 0.0
    %6442 = vmatprep.subr.mxu0 %v5684
    %6443 = vmatpush2.msra.mxu0 %v5683
    %6444 = vmatprep.subr.mxu0 %v5679
    %6445 = vmatpush2.msra.mxu0 %v5678
    %6446 = vmatprep.mubr.f32.mxu0 %v6309
    %6447 = vmatmul.mubr.f32.gmra.mxu0 %v6298
    %v6448 = vpop.f32.mrf.mxu0
    %v6449 = vadd.f32 0.0, %v6448
    %v6450 = vpop.f32.mrf.mxu0
    %v6451 = vadd.f32 0.0, %v6450
    %6452 = vdwg.mxu0
    %6453 = vmatprep.subr.mxu0 0.0
    %6454 = vmatpush1.msra.mxu0 %v5675
    %6455 = vmatprep.subr.mxu0 0.0
    %6456 = vmatpush1.msra.mxu0 %v5670
    %6457 = vmatprep.subr.mxu0 0.0
    %6458 = vmatpush1.msra.mxu0 %v5665
    %6459 = vmatprep.subr.mxu0 0.0
    %6460 = vmatpush1.msra.mxu0 %v5660
    %6461 = vmatprep.subr.mxu0 0.0
    %6462 = vmatpush1.msra.mxu0 %v5655
    %6463 = vmatprep.subr.mxu0 0.0
    %6464 = vmatpush1.msra.mxu0 %v5650
    %6465 = vmatprep.subr.mxu0 0.0
    %6466 = vmatpush1.msra.mxu0 %v5645
    %6467 = vmatprep.subr.mxu0 0.0
    %6468 = vmatpush1.msra.mxu0 %v5640
    %6469 = vmatprep.subr.mxu0 0.0
    %6470 = vmatpush1.msra.mxu0 %v5635
    %6471 = vmatprep.subr.mxu0 0.0
    %6472 = vmatpush1.msra.mxu0 %v5630
    %6473 = vmatprep.subr.mxu0 0.0
    %6474 = vmatpush1.msra.mxu0 %v5625
    %6475 = vmatprep.subr.mxu0 0.0
    %6476 = vmatpush1.msra.mxu0 %v5620
    %6477 = vmatprep.subr.mxu0 0.0
    %6478 = vmatpush1.msra.mxu0 %v5615
    %6479 = vmatprep.subr.mxu0 0.0
    %6480 = vmatpush1.msra.mxu0 %v5610
    %6481 = vmatprep.subr.mxu0 0.0
    %6482 = vmatpush1.msra.mxu0 %v5605
    %6483 = vmatprep.subr.mxu0 0.0
    %6484 = vmatpush1.msra.mxu0 %v5600
    %6485 = vmatprep.subr.mxu0 0.0
    %6486 = vmatpush2.msra.mxu0 0.0
    %6487 = vmatprep.subr.mxu0 0.0
    %6488 = vmatpush2.msra.mxu0 0.0
    %6489 = vmatprep.subr.mxu0 0.0
    %6490 = vmatpush2.msra.mxu0 0.0
    %6491 = vmatprep.subr.mxu0 0.0
    %6492 = vmatpush2.msra.mxu0 0.0
    %6493 = vmatprep.subr.mxu0 0.0
    %6494 = vmatpush2.msra.mxu0 0.0
    %6495 = vmatprep.subr.mxu0 0.0
    %6496 = vmatpush2.msra.mxu0 0.0
    %6497 = vmatprep.subr.mxu0 0.0
    %6498 = vmatpush2.msra.mxu0 0.0
    %6499 = vmatprep.subr.mxu0 0.0
    %6500 = vmatpush2.msra.mxu0 0.0
    %6501 = vmatprep.subr.mxu0 0.0
    %6502 = vmatpush2.msra.mxu0 0.0
    %6503 = vmatprep.subr.mxu0 0.0
    %6504 = vmatpush2.msra.mxu0 0.0
    %6505 = vmatprep.subr.mxu0 0.0
    %6506 = vmatpush2.msra.mxu0 0.0
    %6507 = vmatprep.subr.mxu0 0.0
    %6508 = vmatpush2.msra.mxu0 0.0
    %6509 = vmatprep.subr.mxu0 0.0
    %6510 = vmatpush2.msra.mxu0 0.0
    %6511 = vmatprep.subr.mxu0 0.0
    %6512 = vmatpush2.msra.mxu0 0.0
    %6513 = vmatprep.subr.mxu0 0.0
    %6514 = vmatpush2.msra.mxu0 %v5685
    %6515 = vmatprep.subr.mxu0 0.0
    %6516 = vmatpush2.msra.mxu0 %v5680
    %6517 = vmatprep.mubr.f32.mxu0 %v6309
    %6518 = vmatmul.mubr.f32.gmra.mxu0 %v6298
    %v6519 = vpop.f32.mrf.mxu0
    %v6520 = vadd.f32 0.0, %v6519
    %v6521 = vpop.f32.mrf.mxu0
    %6522 = vdwg.mxu0
    %v6528 = vcombine.low %v6378, %v6380
    %v6529 = vcombine.low %v6449, %v6451
    %v6531 = vunpack.c.l.s4 1966171168
    %v6532 = vunpack.c.0.s8 %v6531
    %v6533 = vlaneseq
    %v6534 = vshrl.u32 %v6533, 7
    %v6535 = vsub.s32 %v6532, %v6534
    %v6536 = vrot.slane %v6528, %v6535
    %v6538 = vunpack.c.l.s4 1966171168
    %v6539 = vunpack.c.0.s8 %v6538
    %v6540 = vlaneseq
    %v6541 = vshrl.u32 %v6540, 7
    %v6542 = vsub.s32 %v6539, %v6541
    %v6543 = vrot.slane %v6529, %v6542
    %v6545 = vunpack.c.l.s4 1966171168
    %v6546 = vunpack.c.0.s8 %v6545
    %v6547 = vlaneseq
    %v6548 = vshrl.u32 %v6547, 7
    %v6549 = vsub.s32 %v6546, %v6548
    %v6550 = vrot.slane %v6520, %v6549
    %v6551 = vcombine.low %v6536, %v6543
    %v6553 = vunpack.c.l.s4 1966171168
    %v6554 = vunpack.c.0.s8 %v6553
    %v6555 = vlaneseq
    %v6556 = vshrl.u32 %v6555, 7
    %v6557 = vsub.s32 %v6554, %v6556
    %v6558 = vrot.slane %v6551, %v6557
    %v6560 = vunpack.c.l.s4 1966171168
    %v6561 = vunpack.c.0.s8 %v6560
    %v6562 = vlaneseq
    %v6563 = vshrl.u32 %v6562, 7
    %v6564 = vsub.s32 %v6561, %v6563
    %v6565 = vrot.slane %v6550, %v6564
    %v6566 = vcombine.low %v6558, %v6565
    %v6568 = vadd.f32 %v4208, %v6566
    %v6570 = vsel %vm941, %v5578, 0
    %v6573 = vsel %vm941, %v5579, 0
    %v6576 = vsel %vm941, %v5580, 0
    %6578 = vmatprep.subr.mxu0 0.0
    %6579 = vmatpush1.msra.mxu0 0.0
    %6580 = vmatprep.subr.mxu0 0.0
    %6581 = vmatpush1.msra.mxu0 0.0
    %6582 = vmatprep.subr.mxu0 0.0
    %6583 = vmatpush1.msra.mxu0 0.0
    %6584 = vmatprep.subr.mxu0 0.0
    %6585 = vmatpush1.msra.mxu0 0.0
    %6586 = vmatprep.subr.mxu0 0.0
    %6587 = vmatpush1.msra.mxu0 0.0
    %6588 = vmatprep.subr.mxu0 0.0
    %6589 = vmatpush1.msra.mxu0 0.0
    %6590 = vmatprep.subr.mxu0 0.0
    %6591 = vmatpush1.msra.mxu0 0.0
    %6592 = vmatprep.subr.mxu0 0.0
    %6593 = vmatpush1.msra.mxu0 0.0
    %6594 = vmatprep.subr.mxu0 0.0
    %6595 = vmatpush1.msra.mxu0 0.0
    %6596 = vmatprep.subr.mxu0 0.0
    %6597 = vmatpush1.msra.mxu0 0.0
    %6598 = vmatprep.subr.mxu0 0.0
    %6599 = vmatpush1.msra.mxu0 0.0
    %6600 = vmatprep.subr.mxu0 0.0
    %6601 = vmatpush1.msra.mxu0 0.0
    %6602 = vmatprep.subr.mxu0 0.0
    %6603 = vmatpush1.msra.mxu0 0.0
    %6604 = vmatprep.subr.mxu0 0.0
    %6605 = vmatpush1.msra.mxu0 %v146
    %6606 = vmatprep.subr.mxu0 0.0
    %6607 = vmatpush1.msra.mxu0 %v145
    %6608 = vmatprep.subr.mxu0 0.0
    %6609 = vmatpush1.msra.mxu0 %v144
    %6610 = vmatprep.subr.mxu0 0.0
    %6611 = vmatpush2.msra.mxu0 0.0
    %6612 = vmatprep.subr.mxu0 0.0
    %6613 = vmatpush2.msra.mxu0 0.0
    %6614 = vmatprep.subr.mxu0 0.0
    %6615 = vmatpush2.msra.mxu0 0.0
    %6616 = vmatprep.subr.mxu0 0.0
    %6617 = vmatpush2.msra.mxu0 0.0
    %6618 = vmatprep.subr.mxu0 0.0
    %6619 = vmatpush2.msra.mxu0 0.0
    %6620 = vmatprep.subr.mxu0 0.0
    %6621 = vmatpush2.msra.mxu0 0.0
    %6622 = vmatprep.subr.mxu0 0.0
    %6623 = vmatpush2.msra.mxu0 0.0
    %6624 = vmatprep.subr.mxu0 0.0
    %6625 = vmatpush2.msra.mxu0 0.0
    %6626 = vmatprep.subr.mxu0 0.0
    %6627 = vmatpush2.msra.mxu0 0.0
    %6628 = vmatprep.subr.mxu0 0.0
    %6629 = vmatpush2.msra.mxu0 0.0
    %6630 = vmatprep.subr.mxu0 0.0
    %6631 = vmatpush2.msra.mxu0 0.0
    %6632 = vmatprep.subr.mxu0 0.0
    %6633 = vmatpush2.msra.mxu0 0.0
    %6634 = vmatprep.subr.mxu0 0.0
    %6635 = vmatpush2.msra.mxu0 0.0
    %6636 = vmatprep.subr.mxu0 0.0
    %6637 = vmatpush2.msra.mxu0 0.0
    %6638 = vmatprep.subr.mxu0 0.0
    %6639 = vmatpush2.msra.mxu0 0.0
    %6640 = vmatprep.subr.mxu0 0.0
    %6641 = vmatpush2.msra.mxu0 0.0
    %6642 = vmatprep.mubr.f32.mxu0 0.0
    %6643 = vmatmul.mubr.f32.gmra.mxu0 %v6570
    %v6644 = vpop.f32.mrf.mxu0
    %v6645 = vadd.f32 0.0, %v6644
    %v6646 = vpop.f32.mrf.mxu0
    %6647 = vmatprep.mubr.f32.mxu0 0.0
    %6648 = vmatmul.mubr.f32.gmra.mxu0 %v6573
    %v6649 = vpop.f32.mrf.mxu0
    %v6650 = vadd.f32 0.0, %v6649
    %v6651 = vpop.f32.mrf.mxu0
    %6652 = vmatprep.mubr.f32.mxu0 0.0
    %6653 = vmatmul.mubr.f32.gmra.mxu0 %v6576
    %v6654 = vpop.f32.mrf.mxu0
    %v6655 = vadd.f32 0.0, %v6654
    %v6656 = vpop.f32.mrf.mxu0
    %6657 = vdwg.mxu0
    %v6658 = vadd.f32 %v5564, %v6645
    %v6659 = vadd.f32 %v5565, %v6650
    %v6660 = vadd.f32 %v5566, %v6655
    %v6662 = vsel %vm941, %v5592, 0
    %v6665 = vsel %vm941, %v5593, 0
    %v6668 = vsel %vm941, %v5594, 0
    %6670 = vmatprep.subr.mxu0 0.0
    %6671 = vmatpush1.msra.mxu0 0.0
    %6672 = vmatprep.subr.mxu0 0.0
    %6673 = vmatpush1.msra.mxu0 0.0
    %6674 = vmatprep.subr.mxu0 0.0
    %6675 = vmatpush1.msra.mxu0 0.0
    %6676 = vmatprep.subr.mxu0 0.0
    %6677 = vmatpush1.msra.mxu0 0.0
    %6678 = vmatprep.subr.mxu0 0.0
    %6679 = vmatpush1.msra.mxu0 0.0
    %6680 = vmatprep.subr.mxu0 0.0
    %6681 = vmatpush1.msra.mxu0 0.0
    %6682 = vmatprep.subr.mxu0 0.0
    %6683 = vmatpush1.msra.mxu0 0.0
    %6684 = vmatprep.subr.mxu0 0.0
    %6685 = vmatpush1.msra.mxu0 0.0
    %6686 = vmatprep.subr.mxu0 0.0
    %6687 = vmatpush1.msra.mxu0 0.0
    %6688 = vmatprep.subr.mxu0 0.0
    %6689 = vmatpush1.msra.mxu0 0.0
    %6690 = vmatprep.subr.mxu0 0.0
    %6691 = vmatpush1.msra.mxu0 0.0
    %6692 = vmatprep.subr.mxu0 0.0
    %6693 = vmatpush1.msra.mxu0 0.0
    %6694 = vmatprep.subr.mxu0 0.0
    %6695 = vmatpush1.msra.mxu0 0.0
    %6696 = vmatprep.subr.mxu0 0.0
    %6697 = vmatpush1.msra.mxu0 %v153
    %6698 = vmatprep.subr.mxu0 0.0
    %6699 = vmatpush1.msra.mxu0 %v152
    %6700 = vmatprep.subr.mxu0 0.0
    %6701 = vmatpush1.msra.mxu0 %v151
    %6702 = vmatprep.subr.mxu0 0.0
    %6703 = vmatpush2.msra.mxu0 0.0
    %6704 = vmatprep.subr.mxu0 0.0
    %6705 = vmatpush2.msra.mxu0 0.0
    %6706 = vmatprep.subr.mxu0 0.0
    %6707 = vmatpush2.msra.mxu0 0.0
    %6708 = vmatprep.subr.mxu0 0.0
    %6709 = vmatpush2.msra.mxu0 0.0
    %6710 = vmatprep.subr.mxu0 0.0
    %6711 = vmatpush2.msra.mxu0 0.0
    %6712 = vmatprep.subr.mxu0 0.0
    %6713 = vmatpush2.msra.mxu0 0.0
    %6714 = vmatprep.subr.mxu0 0.0
    %6715 = vmatpush2.msra.mxu0 0.0
    %6716 = vmatprep.subr.mxu0 0.0
    %6717 = vmatpush2.msra.mxu0 0.0
    %6718 = vmatprep.subr.mxu0 0.0
    %6719 = vmatpush2.msra.mxu0 0.0
    %6720 = vmatprep.subr.mxu0 0.0
    %6721 = vmatpush2.msra.mxu0 0.0
    %6722 = vmatprep.subr.mxu0 0.0
    %6723 = vmatpush2.msra.mxu0 0.0
    %6724 = vmatprep.subr.mxu0 0.0
    %6725 = vmatpush2.msra.mxu0 0.0
    %6726 = vmatprep.subr.mxu0 0.0
    %6727 = vmatpush2.msra.mxu0 0.0
    %6728 = vmatprep.subr.mxu0 0.0
    %6729 = vmatpush2.msra.mxu0 0.0
    %6730 = vmatprep.subr.mxu0 0.0
    %6731 = vmatpush2.msra.mxu0 0.0
    %6732 = vmatprep.subr.mxu0 0.0
    %6733 = vmatpush2.msra.mxu0 0.0
    %6734 = vmatprep.mubr.f32.mxu0 0.0
    %6735 = vmatmul.mubr.f32.gmra.mxu0 %v6662
    %v6736 = vpop.f32.mrf.mxu0
    %v6737 = vadd.f32 0.0, %v6736
    %v6738 = vpop.f32.mrf.mxu0
    %6739 = vmatprep.mubr.f32.mxu0 0.0
    %6740 = vmatmul.mubr.f32.gmra.mxu0 %v6665
    %v6741 = vpop.f32.mrf.mxu0
    %v6742 = vadd.f32 0.0, %v6741
    %v6743 = vpop.f32.mrf.mxu0
    %6744 = vmatprep.mubr.f32.mxu0 0.0
    %6745 = vmatmul.mubr.f32.gmra.mxu0 %v6668
    %v6746 = vpop.f32.mrf.mxu0
    %v6747 = vadd.f32 0.0, %v6746
    %v6748 = vpop.f32.mrf.mxu0
    %6749 = vdwg.mxu0
    %v6750 = vadd.f32 %v6658, %v6737
    %v6751 = vadd.f32 %v6659, %v6742
    %v6752 = vadd.f32 %v6660, %v6747
    %v6753 = vadd.f32 %v6750, %v5870
    %v6754 = vadd.f32 %v6751, %v5870
    %v6755 = vadd.f32 %v6752, %v5870
    %v6756 = vmax.f32 %v6753, 0.0
    %v6757 = vmax.f32 %v6754, 0.0
    %v6758 = vmax.f32 %v6755, 0.0
    %v6760 = vsel %vm941, %v6756, 0
    %v6763 = vsel %vm941, %v6757, 0
    %v6766 = vsel %vm941, %v6758, 0
    %6768 = vmatprep.subr.mxu0 0.0
    %6769 = vmatpush1.msra.mxu0 0.0
    %6770 = vmatprep.subr.mxu0 0.0
    %6771 = vmatpush1.msra.mxu0 0.0
    %6772 = vmatprep.subr.mxu0 0.0
    %6773 = vmatpush1.msra.mxu0 0.0
    %6774 = vmatprep.subr.mxu0 0.0
    %6775 = vmatpush1.msra.mxu0 0.0
    %6776 = vmatprep.subr.mxu0 0.0
    %6777 = vmatpush1.msra.mxu0 0.0
    %6778 = vmatprep.subr.mxu0 0.0
    %6779 = vmatpush1.msra.mxu0 0.0
    %6780 = vmatprep.subr.mxu0 0.0
    %6781 = vmatpush1.msra.mxu0 0.0
    %6782 = vmatprep.subr.mxu0 0.0
    %6783 = vmatpush1.msra.mxu0 0.0
    %6784 = vmatprep.subr.mxu0 0.0
    %6785 = vmatpush1.msra.mxu0 0.0
    %6786 = vmatprep.subr.mxu0 0.0
    %6787 = vmatpush1.msra.mxu0 0.0
    %6788 = vmatprep.subr.mxu0 0.0
    %6789 = vmatpush1.msra.mxu0 0.0
    %6790 = vmatprep.subr.mxu0 0.0
    %6791 = vmatpush1.msra.mxu0 0.0
    %6792 = vmatprep.subr.mxu0 0.0
    %6793 = vmatpush1.msra.mxu0 0.0
    %6794 = vmatprep.subr.mxu0 0.0
    %6795 = vmatpush1.msra.mxu0 %v167
    %6796 = vmatprep.subr.mxu0 0.0
    %6797 = vmatpush1.msra.mxu0 %v166
    %6798 = vmatprep.subr.mxu0 0.0
    %6799 = vmatpush1.msra.mxu0 %v165
    %6800 = vmatprep.subr.mxu0 0.0
    %6801 = vmatpush2.msra.mxu0 0.0
    %6802 = vmatprep.subr.mxu0 0.0
    %6803 = vmatpush2.msra.mxu0 0.0
    %6804 = vmatprep.subr.mxu0 0.0
    %6805 = vmatpush2.msra.mxu0 0.0
    %6806 = vmatprep.subr.mxu0 0.0
    %6807 = vmatpush2.msra.mxu0 0.0
    %6808 = vmatprep.subr.mxu0 0.0
    %6809 = vmatpush2.msra.mxu0 0.0
    %6810 = vmatprep.subr.mxu0 0.0
    %6811 = vmatpush2.msra.mxu0 0.0
    %6812 = vmatprep.subr.mxu0 0.0
    %6813 = vmatpush2.msra.mxu0 0.0
    %6814 = vmatprep.subr.mxu0 0.0
    %6815 = vmatpush2.msra.mxu0 0.0
    %6816 = vmatprep.subr.mxu0 0.0
    %6817 = vmatpush2.msra.mxu0 0.0
    %6818 = vmatprep.subr.mxu0 0.0
    %6819 = vmatpush2.msra.mxu0 0.0
    %6820 = vmatprep.subr.mxu0 0.0
    %6821 = vmatpush2.msra.mxu0 0.0
    %6822 = vmatprep.subr.mxu0 0.0
    %6823 = vmatpush2.msra.mxu0 0.0
    %6824 = vmatprep.subr.mxu0 0.0
    %6825 = vmatpush2.msra.mxu0 0.0
    %6826 = vmatprep.subr.mxu0 0.0
    %6827 = vmatpush2.msra.mxu0 0.0
    %6828 = vmatprep.subr.mxu0 0.0
    %6829 = vmatpush2.msra.mxu0 0.0
    %6830 = vmatprep.subr.mxu0 0.0
    %6831 = vmatpush2.msra.mxu0 0.0
    %6832 = vmatprep.mubr.f32.mxu0 0.0
    %6833 = vmatmul.mubr.f32.gmra.mxu0 %v6760
    %v6834 = vpop.f32.mrf.mxu0
    %v6835 = vadd.f32 0.0, %v6834
    %v6836 = vpop.f32.mrf.mxu0
    %6837 = vmatprep.mubr.f32.mxu0 0.0
    %6838 = vmatmul.mubr.f32.gmra.mxu0 %v6763
    %v6839 = vpop.f32.mrf.mxu0
    %v6840 = vadd.f32 0.0, %v6839
    %v6841 = vpop.f32.mrf.mxu0
    %6842 = vmatprep.mubr.f32.mxu0 0.0
    %6843 = vmatmul.mubr.f32.gmra.mxu0 %v6766
    %v6844 = vpop.f32.mrf.mxu0
    %v6845 = vadd.f32 0.0, %v6844
    %v6846 = vpop.f32.mrf.mxu0
    %6847 = vdwg.mxu0
    %6848 = vmatprep.subr.mxu0 0.0
    %6849 = vmatpush1.msra.mxu0 0.0
    %6850 = vmatprep.subr.mxu0 0.0
    %6851 = vmatpush1.msra.mxu0 0.0
    %6852 = vmatprep.subr.mxu0 0.0
    %6853 = vmatpush1.msra.mxu0 0.0
    %6854 = vmatprep.subr.mxu0 0.0
    %6855 = vmatpush1.msra.mxu0 0.0
    %6856 = vmatprep.subr.mxu0 0.0
    %6857 = vmatpush1.msra.mxu0 0.0
    %6858 = vmatprep.subr.mxu0 0.0
    %6859 = vmatpush1.msra.mxu0 0.0
    %6860 = vmatprep.subr.mxu0 0.0
    %6861 = vmatpush1.msra.mxu0 0.0
    %6862 = vmatprep.subr.mxu0 0.0
    %6863 = vmatpush1.msra.mxu0 0.0
    %6864 = vmatprep.subr.mxu0 0.0
    %6865 = vmatpush1.msra.mxu0 0.0
    %6866 = vmatprep.subr.mxu0 0.0
    %6867 = vmatpush1.msra.mxu0 0.0
    %6868 = vmatprep.subr.mxu0 0.0
    %6869 = vmatpush1.msra.mxu0 0.0
    %6870 = vmatprep.subr.mxu0 0.0
    %6871 = vmatpush1.msra.mxu0 0.0
    %6872 = vmatprep.subr.mxu0 0.0
    %6873 = vmatpush1.msra.mxu0 0.0
    %6874 = vmatprep.subr.mxu0 0.0
    %6875 = vmatpush1.msra.mxu0 %v176
    %6876 = vmatprep.subr.mxu0 0.0
    %6877 = vmatpush1.msra.mxu0 %v175
    %6878 = vmatprep.subr.mxu0 0.0
    %6879 = vmatpush1.msra.mxu0 %v174
    %6880 = vmatprep.subr.mxu0 0.0
    %6881 = vmatpush2.msra.mxu0 0.0
    %6882 = vmatprep.subr.mxu0 0.0
    %6883 = vmatpush2.msra.mxu0 0.0
    %6884 = vmatprep.subr.mxu0 0.0
    %6885 = vmatpush2.msra.mxu0 0.0
    %6886 = vmatprep.subr.mxu0 0.0
    %6887 = vmatpush2.msra.mxu0 0.0
    %6888 = vmatprep.subr.mxu0 0.0
    %6889 = vmatpush2.msra.mxu0 0.0
    %6890 = vmatprep.subr.mxu0 0.0
    %6891 = vmatpush2.msra.mxu0 0.0
    %6892 = vmatprep.subr.mxu0 0.0
    %6893 = vmatpush2.msra.mxu0 0.0
    %6894 = vmatprep.subr.mxu0 0.0
    %6895 = vmatpush2.msra.mxu0 0.0
    %6896 = vmatprep.subr.mxu0 0.0
    %6897 = vmatpush2.msra.mxu0 0.0
    %6898 = vmatprep.subr.mxu0 0.0
    %6899 = vmatpush2.msra.mxu0 0.0
    %6900 = vmatprep.subr.mxu0 0.0
    %6901 = vmatpush2.msra.mxu0 0.0
    %6902 = vmatprep.subr.mxu0 0.0
    %6903 = vmatpush2.msra.mxu0 0.0
    %6904 = vmatprep.subr.mxu0 0.0
    %6905 = vmatpush2.msra.mxu0 0.0
    %6906 = vmatprep.subr.mxu0 0.0
    %6907 = vmatpush2.msra.mxu0 0.0
    %6908 = vmatprep.subr.mxu0 0.0
    %6909 = vmatpush2.msra.mxu0 0.0
    %6910 = vmatprep.subr.mxu0 0.0
    %6911 = vmatpush2.msra.mxu0 0.0
    %6912 = vmatprep.mubr.f32.mxu0 0.0
    %6913 = vmatmul.mubr.f32.gmra.mxu0 %v6760
    %v6914 = vpop.f32.mrf.mxu0
    %v6915 = vadd.f32 0.0, %v6914
    %v6916 = vpop.f32.mrf.mxu0
    %6917 = vmatprep.mubr.f32.mxu0 0.0
    %6918 = vmatmul.mubr.f32.gmra.mxu0 %v6763
    %v6919 = vpop.f32.mrf.mxu0
    %v6920 = vadd.f32 0.0, %v6919
    %v6921 = vpop.f32.mrf.mxu0
    %6922 = vmatprep.mubr.f32.mxu0 0.0
    %6923 = vmatmul.mubr.f32.gmra.mxu0 %v6766
    %v6924 = vpop.f32.mrf.mxu0
    %v6925 = vadd.f32 0.0, %v6924
    %v6926 = vpop.f32.mrf.mxu0
    %6927 = vdwg.mxu0
    %v6928 = vmax.f32 %v6835, %v6915
    %v6929 = vmax.f32 %v6840, %v6920
    %v6930 = vmax.f32 %v6845, %v6925
    %v6932 = vsel %vm1312, %v6930, 0
    %6934 = vmatprep.subr.mxu0 0.0
    %6935 = vmatpush1.msra.mxu0 0.0
    %6936 = vmatprep.subr.mxu0 0.0
    %6937 = vmatpush1.msra.mxu0 0.0
    %6938 = vmatprep.subr.mxu0 0.0
    %6939 = vmatpush1.msra.mxu0 0.0
    %6940 = vmatprep.subr.mxu0 0.0
    %6941 = vmatpush1.msra.mxu0 0.0
    %6942 = vmatprep.subr.mxu0 0.0
    %6943 = vmatpush1.msra.mxu0 0.0
    %6944 = vmatprep.subr.mxu0 0.0
    %6945 = vmatpush1.msra.mxu0 0.0
    %6946 = vmatprep.subr.mxu0 0.0
    %6947 = vmatpush1.msra.mxu0 0.0
    %6948 = vmatprep.subr.mxu0 0.0
    %6949 = vmatpush1.msra.mxu0 0.0
    %6950 = vmatprep.subr.mxu0 0.0
    %6951 = vmatpush1.msra.mxu0 0.0
    %6952 = vmatprep.subr.mxu0 0.0
    %6953 = vmatpush1.msra.mxu0 0.0
    %6954 = vmatprep.subr.mxu0 0.0
    %6955 = vmatpush1.msra.mxu0 0.0
    %6956 = vmatprep.subr.mxu0 0.0
    %6957 = vmatpush1.msra.mxu0 0.0
    %6958 = vmatprep.subr.mxu0 0.0
    %6959 = vmatpush1.msra.mxu0 0.0
    %6960 = vmatprep.subr.mxu0 0.0
    %6961 = vmatpush1.msra.mxu0 %v6932
    %6962 = vmatprep.subr.mxu0 0.0
    %6963 = vmatpush1.msra.mxu0 %v6929
    %6964 = vmatprep.subr.mxu0 0.0
    %6965 = vmatpush1.msra.mxu0 %v6928
    %6966 = vmatprep.subr.mxu0 0.0
    %6967 = vmatpush2.msra.mxu0 0.0
    %6968 = vmatprep.subr.mxu0 0.0
    %6969 = vmatpush2.msra.mxu0 0.0
    %6970 = vmatprep.subr.mxu0 0.0
    %6971 = vmatpush2.msra.mxu0 0.0
    %6972 = vmatprep.subr.mxu0 0.0
    %6973 = vmatpush2.msra.mxu0 0.0
    %6974 = vmatprep.subr.mxu0 0.0
    %6975 = vmatpush2.msra.mxu0 0.0
    %6976 = vmatprep.subr.mxu0 0.0
    %6977 = vmatpush2.msra.mxu0 0.0
    %6978 = vmatprep.subr.mxu0 0.0
    %6979 = vmatpush2.msra.mxu0 0.0
    %6980 = vmatprep.subr.mxu0 0.0
    %6981 = vmatpush2.msra.mxu0 0.0
    %6982 = vmatprep.subr.mxu0 0.0
    %6983 = vmatpush2.msra.mxu0 0.0
    %6984 = vmatprep.subr.mxu0 0.0
    %6985 = vmatpush2.msra.mxu0 0.0
    %6986 = vmatprep.subr.mxu0 0.0
    %6987 = vmatpush2.msra.mxu0 0.0
    %6988 = vmatprep.subr.mxu0 0.0
    %6989 = vmatpush2.msra.mxu0 0.0
    %6990 = vmatprep.subr.mxu0 0.0
    %6991 = vmatpush2.msra.mxu0 0.0
    %6992 = vmatprep.subr.mxu0 0.0
    %6993 = vmatpush2.msra.mxu0 0.0
    %6994 = vmatprep.subr.mxu0 0.0
    %6995 = vmatpush2.msra.mxu0 0.0
    %6996 = vmatprep.subr.mxu0 0.0
    %6997 = vmatpush2.msra.mxu0 0.0
    %6998 = vmatprep.mubr.f32.mxu0 0.0
    %6999 = vmatmul.mubr.f32.gmra.mxu0 %v1307
    %v7000 = vpop.f32.mrf.mxu0
    %v7001 = vadd.f32 0.0, %v7000
    %v7002 = vpop.f32.mrf.mxu0
    %7003 = vmatprep.mubr.f32.mxu0 0.0
    %7004 = vmatmul.mubr.f32.gmra.mxu0 %v1310
    %v7005 = vpop.f32.mrf.mxu0
    %v7006 = vadd.f32 0.0, %v7005
    %v7007 = vpop.f32.mrf.mxu0
    %7008 = vdwg.mxu0
    %7009 = vmatprep.subr.mxu0 0.0
    %7010 = vmatpush1.msra.mxu0 0.0
    %7011 = vmatprep.subr.mxu0 0.0
    %7012 = vmatpush1.msra.mxu0 0.0
    %7013 = vmatprep.subr.mxu0 0.0
    %7014 = vmatpush1.msra.mxu0 0.0
    %7015 = vmatprep.subr.mxu0 0.0
    %7016 = vmatpush1.msra.mxu0 0.0
    %7017 = vmatprep.subr.mxu0 0.0
    %7018 = vmatpush1.msra.mxu0 0.0
    %7019 = vmatprep.subr.mxu0 0.0
    %7020 = vmatpush1.msra.mxu0 0.0
    %7021 = vmatprep.subr.mxu0 0.0
    %7022 = vmatpush1.msra.mxu0 0.0
    %7023 = vmatprep.subr.mxu0 0.0
    %7024 = vmatpush1.msra.mxu0 0.0
    %7025 = vmatprep.subr.mxu0 0.0
    %7026 = vmatpush1.msra.mxu0 0.0
    %7027 = vmatprep.subr.mxu0 0.0
    %7028 = vmatpush1.msra.mxu0 0.0
    %7029 = vmatprep.subr.mxu0 0.0
    %7030 = vmatpush1.msra.mxu0 0.0
    %7031 = vmatprep.subr.mxu0 0.0
    %7032 = vmatpush1.msra.mxu0 0.0
    %7033 = vmatprep.subr.mxu0 0.0
    %7034 = vmatpush1.msra.mxu0 0.0
    %7035 = vmatprep.subr.mxu0 0.0
    %7036 = vmatpush1.msra.mxu0 %v6932
    %7037 = vmatprep.subr.mxu0 0.0
    %7038 = vmatpush1.msra.mxu0 %v6929
    %7039 = vmatprep.subr.mxu0 0.0
    %7040 = vmatpush1.msra.mxu0 %v6928
    %7041 = vmatprep.subr.mxu0 0.0
    %7042 = vmatpush2.msra.mxu0 0.0
    %7043 = vmatprep.subr.mxu0 0.0
    %7044 = vmatpush2.msra.mxu0 0.0
    %7045 = vmatprep.subr.mxu0 0.0
    %7046 = vmatpush2.msra.mxu0 0.0
    %7047 = vmatprep.subr.mxu0 0.0
    %7048 = vmatpush2.msra.mxu0 0.0
    %7049 = vmatprep.subr.mxu0 0.0
    %7050 = vmatpush2.msra.mxu0 0.0
    %7051 = vmatprep.subr.mxu0 0.0
    %7052 = vmatpush2.msra.mxu0 0.0
    %7053 = vmatprep.subr.mxu0 0.0
    %7054 = vmatpush2.msra.mxu0 0.0
    %7055 = vmatprep.subr.mxu0 0.0
    %7056 = vmatpush2.msra.mxu0 0.0
    %7057 = vmatprep.subr.mxu0 0.0
    %7058 = vmatpush2.msra.mxu0 0.0
    %7059 = vmatprep.subr.mxu0 0.0
    %7060 = vmatpush2.msra.mxu0 0.0
    %7061 = vmatprep.subr.mxu0 0.0
    %7062 = vmatpush2.msra.mxu0 0.0
    %7063 = vmatprep.subr.mxu0 0.0
    %7064 = vmatpush2.msra.mxu0 0.0
    %7065 = vmatprep.subr.mxu0 0.0
    %7066 = vmatpush2.msra.mxu0 0.0
    %7067 = vmatprep.subr.mxu0 0.0
    %7068 = vmatpush2.msra.mxu0 0.0
    %7069 = vmatprep.subr.mxu0 0.0
    %7070 = vmatpush2.msra.mxu0 0.0
    %7071 = vmatprep.subr.mxu0 0.0
    %7072 = vmatpush2.msra.mxu0 0.0
    %7073 = vmatprep.mubr.f32.mxu0 0.0
    %7074 = vmatmul.mubr.f32.gmra.mxu0 %v1392
    %v7075 = vpop.f32.mrf.mxu0
    %v7076 = vadd.f32 0.0, %v7075
    %v7077 = vpop.f32.mrf.mxu0
    %7078 = vmatprep.mubr.f32.mxu0 0.0
    %7079 = vmatmul.mubr.f32.gmra.mxu0 %v1395
    %v7080 = vpop.f32.mrf.mxu0
    %v7081 = vadd.f32 0.0, %v7080
    %v7082 = vpop.f32.mrf.mxu0
    %7083 = vdwg.mxu0
    %v7084 = vmax.f32 %v7001, %v7076
    %v7085 = vmax.f32 %v7006, %v7081
    %v7087 = vsel %vm1474, %v7084, 0
    %v7090 = vsel %vm1474, %v7085, 0
    %7092 = vmatprep.subr.mxu0 0.0
    %7093 = vmatpush1.msra.mxu0 0.0
    %7094 = vmatprep.subr.mxu0 0.0
    %7095 = vmatpush1.msra.mxu0 0.0
    %7096 = vmatprep.subr.mxu0 0.0
    %7097 = vmatpush1.msra.mxu0 0.0
    %7098 = vmatprep.subr.mxu0 0.0
    %7099 = vmatpush1.msra.mxu0 0.0
    %7100 = vmatprep.subr.mxu0 0.0
    %7101 = vmatpush1.msra.mxu0 0.0
    %7102 = vmatprep.subr.mxu0 0.0
    %7103 = vmatpush1.msra.mxu0 0.0
    %7104 = vmatprep.subr.mxu0 0.0
    %7105 = vmatpush1.msra.mxu0 0.0
    %7106 = vmatprep.subr.mxu0 0.0
    %7107 = vmatpush1.msra.mxu0 0.0
    %7108 = vmatprep.subr.mxu0 0.0
    %7109 = vmatpush1.msra.mxu0 0.0
    %7110 = vmatprep.subr.mxu0 0.0
    %7111 = vmatpush1.msra.mxu0 0.0
    %7112 = vmatprep.subr.mxu0 0.0
    %7113 = vmatpush1.msra.mxu0 0.0
    %7114 = vmatprep.subr.mxu0 0.0
    %7115 = vmatpush1.msra.mxu0 0.0
    %7116 = vmatprep.subr.mxu0 0.0
    %7117 = vmatpush1.msra.mxu0 0.0
    %7118 = vmatprep.subr.mxu0 0.0
    %7119 = vmatpush1.msra.mxu0 0.0
    %7120 = vmatprep.subr.mxu0 %v1486
    %7121 = vmatpush1.msra.mxu0 %v1483
    %7122 = vmatprep.subr.mxu0 %v190
    %7123 = vmatpush1.msra.mxu0 %v189
    %7124 = vmatprep.subr.mxu0 0.0
    %7125 = vmatpush2.msra.mxu0 0.0
    %7126 = vmatprep.subr.mxu0 0.0
    %7127 = vmatpush2.msra.mxu0 0.0
    %7128 = vmatprep.subr.mxu0 0.0
    %7129 = vmatpush2.msra.mxu0 0.0
    %7130 = vmatprep.subr.mxu0 0.0
    %7131 = vmatpush2.msra.mxu0 0.0
    %7132 = vmatprep.subr.mxu0 0.0
    %7133 = vmatpush2.msra.mxu0 0.0
    %7134 = vmatprep.subr.mxu0 0.0
    %7135 = vmatpush2.msra.mxu0 0.0
    %7136 = vmatprep.subr.mxu0 0.0
    %7137 = vmatpush2.msra.mxu0 0.0
    %7138 = vmatprep.subr.mxu0 0.0
    %7139 = vmatpush2.msra.mxu0 0.0
    %7140 = vmatprep.subr.mxu0 0.0
    %7141 = vmatpush2.msra.mxu0 0.0
    %7142 = vmatprep.subr.mxu0 0.0
    %7143 = vmatpush2.msra.mxu0 0.0
    %7144 = vmatprep.subr.mxu0 0.0
    %7145 = vmatpush2.msra.mxu0 0.0
    %7146 = vmatprep.subr.mxu0 0.0
    %7147 = vmatpush2.msra.mxu0 0.0
    %7148 = vmatprep.subr.mxu0 0.0
    %7149 = vmatpush2.msra.mxu0 0.0
    %7150 = vmatprep.subr.mxu0 0.0
    %7151 = vmatpush2.msra.mxu0 0.0
    %7152 = vmatprep.subr.mxu0 0.0
    %7153 = vmatpush2.msra.mxu0 0.0
    %7154 = vmatprep.subr.mxu0 0.0
    %7155 = vmatpush2.msra.mxu0 0.0
    %7156 = vmatprep.mubr.f32.mxu0 0.0
    %7157 = vmatmul.mubr.f32.gmra.mxu0 %v7087
    %v7158 = vpop.f32.mrf.mxu0
    %v7159 = vadd.f32 0.0, %v7158
    %v7160 = vpop.f32.mrf.mxu0
    %v7161 = vadd.f32 0.0, %v7160
    %7162 = vmatprep.mubr.f32.mxu0 0.0
    %7163 = vmatmul.mubr.f32.gmra.mxu0 %v7090
    %v7164 = vpop.f32.mrf.mxu0
    %v7165 = vadd.f32 0.0, %v7164
    %v7166 = vpop.f32.mrf.mxu0
    %v7167 = vadd.f32 0.0, %v7166
    %7168 = vdwg.mxu0
    %v7169 = vmul.f32 %v7159, %v193
    %v7170 = vmul.f32 %v7161, %v194
    %v7171 = vmul.f32 %v7165, %v195
    %v7172 = vmul.f32 %v7167, %v196
    %v7173 = vsel %vm1481, %v7171, 0.0
    %v7174 = vadd.f32 %v7169, %v7173
    %v7175 = vrot.slane %v7174, 4
    %v7176 = vadd.f32 %v7174, %v7175
    %v7177 = vrot.slane %v7176, 2
    %v7178 = vadd.f32 %v7176, %v7177
    %v7179 = vrot.slane %v7178, 1
    %v7180 = vadd.f32 %v7178, %v7179
    %v7181 = vsel %vm1577, %v7170, 0.0
    %v7182 = vsel %vm1579, %v7172, 0.0
    %v7183 = vadd.f32 %v7181, %v7182
    %v7184 = vrot.slane %v7183, 4
    %v7185 = vadd.f32 %v7183, %v7184
    %v7186 = vrot.slane %v7185, 2
    %v7187 = vadd.f32 %v7185, %v7186
    %v7188 = vrot.slane %v7187, 1
    %v7189 = vadd.f32 %v7187, %v7188
    %v7191 = vsel %vm1577, %v7189, 0
    %7193 = vmatprep.subr.mxu0 %v5672
    %7194 = vmatpush1.msra.mxu0 %v5671
    %7195 = vmatprep.subr.mxu0 %v5667
    %7196 = vmatpush1.msra.mxu0 %v5666
    %7197 = vmatprep.subr.mxu0 %v5662
    %7198 = vmatpush1.msra.mxu0 %v5661
    %7199 = vmatprep.subr.mxu0 %v5657
    %7200 = vmatpush1.msra.mxu0 %v5656
    %7201 = vmatprep.subr.mxu0 %v5652
    %7202 = vmatpush1.msra.mxu0 %v5651
    %7203 = vmatprep.subr.mxu0 %v5647
    %7204 = vmatpush1.msra.mxu0 %v5646
    %7205 = vmatprep.subr.mxu0 %v5642
    %7206 = vmatpush1.msra.mxu0 %v5641
    %7207 = vmatprep.subr.mxu0 %v5637
    %7208 = vmatpush1.msra.mxu0 %v5636
    %7209 = vmatprep.subr.mxu0 %v5632
    %7210 = vmatpush1.msra.mxu0 %v5631
    %7211 = vmatprep.subr.mxu0 %v5627
    %7212 = vmatpush1.msra.mxu0 %v5626
    %7213 = vmatprep.subr.mxu0 %v5622
    %7214 = vmatpush1.msra.mxu0 %v5621
    %7215 = vmatprep.subr.mxu0 %v5617
    %7216 = vmatpush1.msra.mxu0 %v5616
    %7217 = vmatprep.subr.mxu0 %v5612
    %7218 = vmatpush1.msra.mxu0 %v5611
    %7219 = vmatprep.subr.mxu0 %v5607
    %7220 = vmatpush1.msra.mxu0 %v5606
    %7221 = vmatprep.subr.mxu0 %v5602
    %7222 = vmatpush1.msra.mxu0 %v5601
    %7223 = vmatprep.subr.mxu0 %v5597
    %7224 = vmatpush1.msra.mxu0 %v5596
    %7225 = vmatprep.subr.mxu0 0.0
    %7226 = vmatpush2.msra.mxu0 0.0
    %7227 = vmatprep.subr.mxu0 0.0
    %7228 = vmatpush2.msra.mxu0 0.0
    %7229 = vmatprep.subr.mxu0 0.0
    %7230 = vmatpush2.msra.mxu0 0.0
    %7231 = vmatprep.subr.mxu0 0.0
    %7232 = vmatpush2.msra.mxu0 0.0
    %7233 = vmatprep.subr.mxu0 0.0
    %7234 = vmatpush2.msra.mxu0 0.0
    %7235 = vmatprep.subr.mxu0 0.0
    %7236 = vmatpush2.msra.mxu0 0.0
    %7237 = vmatprep.subr.mxu0 0.0
    %7238 = vmatpush2.msra.mxu0 0.0
    %7239 = vmatprep.subr.mxu0 0.0
    %7240 = vmatpush2.msra.mxu0 0.0
    %7241 = vmatprep.subr.mxu0 0.0
    %7242 = vmatpush2.msra.mxu0 0.0
    %7243 = vmatprep.subr.mxu0 0.0
    %7244 = vmatpush2.msra.mxu0 0.0
    %7245 = vmatprep.subr.mxu0 0.0
    %7246 = vmatpush2.msra.mxu0 0.0
    %7247 = vmatprep.subr.mxu0 0.0
    %7248 = vmatpush2.msra.mxu0 0.0
    %7249 = vmatprep.subr.mxu0 0.0
    %7250 = vmatpush2.msra.mxu0 0.0
    %7251 = vmatprep.subr.mxu0 0.0
    %7252 = vmatpush2.msra.mxu0 0.0
    %7253 = vmatprep.subr.mxu0 %v5682
    %7254 = vmatpush2.msra.mxu0 %v5681
    %7255 = vmatprep.subr.mxu0 %v5677
    %7256 = vmatpush2.msra.mxu0 %v5676
    %7257 = vmatprep.mubr.f32.mxu0 %v7191
    %7258 = vmatmul.mubr.f32.gmra.mxu0 %v7180
    %v7259 = vpop.f32.mrf.mxu0
    %v7260 = vadd.f32 0.0, %v7259
    %v7261 = vpop.f32.mrf.mxu0
    %v7262 = vadd.f32 0.0, %v7261
    %7263 = vdwg.mxu0
    %7264 = vmatprep.subr.mxu0 %v5674
    %7265 = vmatpush1.msra.mxu0 %v5673
    %7266 = vmatprep.subr.mxu0 %v5669
    %7267 = vmatpush1.msra.mxu0 %v5668
    %7268 = vmatprep.subr.mxu0 %v5664
    %7269 = vmatpush1.msra.mxu0 %v5663
    %7270 = vmatprep.subr.mxu0 %v5659
    %7271 = vmatpush1.msra.mxu0 %v5658
    %7272 = vmatprep.subr.mxu0 %v5654
    %7273 = vmatpush1.msra.mxu0 %v5653
    %7274 = vmatprep.subr.mxu0 %v5649
    %7275 = vmatpush1.msra.mxu0 %v5648
    %7276 = vmatprep.subr.mxu0 %v5644
    %7277 = vmatpush1.msra.mxu0 %v5643
    %7278 = vmatprep.subr.mxu0 %v5639
    %7279 = vmatpush1.msra.mxu0 %v5638
    %7280 = vmatprep.subr.mxu0 %v5634
    %7281 = vmatpush1.msra.mxu0 %v5633
    %7282 = vmatprep.subr.mxu0 %v5629
    %7283 = vmatpush1.msra.mxu0 %v5628
    %7284 = vmatprep.subr.mxu0 %v5624
    %7285 = vmatpush1.msra.mxu0 %v5623
    %7286 = vmatprep.subr.mxu0 %v5619
    %7287 = vmatpush1.msra.mxu0 %v5618
    %7288 = vmatprep.subr.mxu0 %v5614
    %7289 = vmatpush1.msra.mxu0 %v5613
    %7290 = vmatprep.subr.mxu0 %v5609
    %7291 = vmatpush1.msra.mxu0 %v5608
    %7292 = vmatprep.subr.mxu0 %v5604
    %7293 = vmatpush1.msra.mxu0 %v5603
    %7294 = vmatprep.subr.mxu0 %v5599
    %7295 = vmatpush1.msra.mxu0 %v5598
    %7296 = vmatprep.subr.mxu0 0.0
    %7297 = vmatpush2.msra.mxu0 0.0
    %7298 = vmatprep.subr.mxu0 0.0
    %7299 = vmatpush2.msra.mxu0 0.0
    %7300 = vmatprep.subr.mxu0 0.0
    %7301 = vmatpush2.msra.mxu0 0.0
    %7302 = vmatprep.subr.mxu0 0.0
    %7303 = vmatpush2.msra.mxu0 0.0
    %7304 = vmatprep.subr.mxu0 0.0
    %7305 = vmatpush2.msra.mxu0 0.0
    %7306 = vmatprep.subr.mxu0 0.0
    %7307 = vmatpush2.msra.mxu0 0.0
    %7308 = vmatprep.subr.mxu0 0.0
    %7309 = vmatpush2.msra.mxu0 0.0
    %7310 = vmatprep.subr.mxu0 0.0
    %7311 = vmatpush2.msra.mxu0 0.0
    %7312 = vmatprep.subr.mxu0 0.0
    %7313 = vmatpush2.msra.mxu0 0.0
    %7314 = vmatprep.subr.mxu0 0.0
    %7315 = vmatpush2.msra.mxu0 0.0
    %7316 = vmatprep.subr.mxu0 0.0
    %7317 = vmatpush2.msra.mxu0 0.0
    %7318 = vmatprep.subr.mxu0 0.0
    %7319 = vmatpush2.msra.mxu0 0.0
    %7320 = vmatprep.subr.mxu0 0.0
    %7321 = vmatpush2.msra.mxu0 0.0
    %7322 = vmatprep.subr.mxu0 0.0
    %7323 = vmatpush2.msra.mxu0 0.0
    %7324 = vmatprep.subr.mxu0 %v5684
    %7325 = vmatpush2.msra.mxu0 %v5683
    %7326 = vmatprep.subr.mxu0 %v5679
    %7327 = vmatpush2.msra.mxu0 %v5678
    %7328 = vmatprep.mubr.f32.mxu0 %v7191
    %7329 = vmatmul.mubr.f32.gmra.mxu0 %v7180
    %v7330 = vpop.f32.mrf.mxu0
    %v7331 = vadd.f32 0.0, %v7330
    %v7332 = vpop.f32.mrf.mxu0
    %v7333 = vadd.f32 0.0, %v7332
    %7334 = vdwg.mxu0
    %7335 = vmatprep.subr.mxu0 0.0
    %7336 = vmatpush1.msra.mxu0 %v5675
    %7337 = vmatprep.subr.mxu0 0.0
    %7338 = vmatpush1.msra.mxu0 %v5670
    %7339 = vmatprep.subr.mxu0 0.0
    %7340 = vmatpush1.msra.mxu0 %v5665
    %7341 = vmatprep.subr.mxu0 0.0
    %7342 = vmatpush1.msra.mxu0 %v5660
    %7343 = vmatprep.subr.mxu0 0.0
    %7344 = vmatpush1.msra.mxu0 %v5655
    %7345 = vmatprep.subr.mxu0 0.0
    %7346 = vmatpush1.msra.mxu0 %v5650
    %7347 = vmatprep.subr.mxu0 0.0
    %7348 = vmatpush1.msra.mxu0 %v5645
    %7349 = vmatprep.subr.mxu0 0.0
    %7350 = vmatpush1.msra.mxu0 %v5640
    %7351 = vmatprep.subr.mxu0 0.0
    %7352 = vmatpush1.msra.mxu0 %v5635
    %7353 = vmatprep.subr.mxu0 0.0
    %7354 = vmatpush1.msra.mxu0 %v5630
    %7355 = vmatprep.subr.mxu0 0.0
    %7356 = vmatpush1.msra.mxu0 %v5625
    %7357 = vmatprep.subr.mxu0 0.0
    %7358 = vmatpush1.msra.mxu0 %v5620
    %7359 = vmatprep.subr.mxu0 0.0
    %7360 = vmatpush1.msra.mxu0 %v5615
    %7361 = vmatprep.subr.mxu0 0.0
    %7362 = vmatpush1.msra.mxu0 %v5610
    %7363 = vmatprep.subr.mxu0 0.0
    %7364 = vmatpush1.msra.mxu0 %v5605
    %7365 = vmatprep.subr.mxu0 0.0
    %7366 = vmatpush1.msra.mxu0 %v5600
    %7367 = vmatprep.subr.mxu0 0.0
    %7368 = vmatpush2.msra.mxu0 0.0
    %7369 = vmatprep.subr.mxu0 0.0
    %7370 = vmatpush2.msra.mxu0 0.0
    %7371 = vmatprep.subr.mxu0 0.0
    %7372 = vmatpush2.msra.mxu0 0.0
    %7373 = vmatprep.subr.mxu0 0.0
    %7374 = vmatpush2.msra.mxu0 0.0
    %7375 = vmatprep.subr.mxu0 0.0
    %7376 = vmatpush2.msra.mxu0 0.0
    %7377 = vmatprep.subr.mxu0 0.0
    %7378 = vmatpush2.msra.mxu0 0.0
    %7379 = vmatprep.subr.mxu0 0.0
    %7380 = vmatpush2.msra.mxu0 0.0
    %7381 = vmatprep.subr.mxu0 0.0
    %7382 = vmatpush2.msra.mxu0 0.0
    %7383 = vmatprep.subr.mxu0 0.0
    %7384 = vmatpush2.msra.mxu0 0.0
    %7385 = vmatprep.subr.mxu0 0.0
    %7386 = vmatpush2.msra.mxu0 0.0
    %7387 = vmatprep.subr.mxu0 0.0
    %7388 = vmatpush2.msra.mxu0 0.0
    %7389 = vmatprep.subr.mxu0 0.0
    %7390 = vmatpush2.msra.mxu0 0.0
    %7391 = vmatprep.subr.mxu0 0.0
    %7392 = vmatpush2.msra.mxu0 0.0
    %7393 = vmatprep.subr.mxu0 0.0
    %7394 = vmatpush2.msra.mxu0 0.0
    %7395 = vmatprep.subr.mxu0 0.0
    %7396 = vmatpush2.msra.mxu0 %v5685
    %7397 = vmatprep.subr.mxu0 0.0
    %7398 = vmatpush2.msra.mxu0 %v5680
    %7399 = vmatprep.mubr.f32.mxu0 %v7191
    %7400 = vmatmul.mubr.f32.gmra.mxu0 %v7180
    %v7401 = vpop.f32.mrf.mxu0
    %v7402 = vadd.f32 0.0, %v7401
    %v7403 = vpop.f32.mrf.mxu0
    %7404 = vdwg.mxu0
    %v7410 = vcombine.low %v7260, %v7262
    %v7411 = vcombine.low %v7331, %v7333
    %v7413 = vunpack.c.l.s4 1966171168
    %v7414 = vunpack.c.0.s8 %v7413
    %v7415 = vlaneseq
    %v7416 = vshrl.u32 %v7415, 7
    %v7417 = vsub.s32 %v7414, %v7416
    %v7418 = vrot.slane %v7410, %v7417
    %v7420 = vunpack.c.l.s4 1966171168
    %v7421 = vunpack.c.0.s8 %v7420
    %v7422 = vlaneseq
    %v7423 = vshrl.u32 %v7422, 7
    %v7424 = vsub.s32 %v7421, %v7423
    %v7425 = vrot.slane %v7411, %v7424
    %v7427 = vunpack.c.l.s4 1966171168
    %v7428 = vunpack.c.0.s8 %v7427
    %v7429 = vlaneseq
    %v7430 = vshrl.u32 %v7429, 7
    %v7431 = vsub.s32 %v7428, %v7430
    %v7432 = vrot.slane %v7402, %v7431
    %v7433 = vcombine.low %v7418, %v7425
    %v7435 = vunpack.c.l.s4 1966171168
    %v7436 = vunpack.c.0.s8 %v7435
    %v7437 = vlaneseq
    %v7438 = vshrl.u32 %v7437, 7
    %v7439 = vsub.s32 %v7436, %v7438
    %v7440 = vrot.slane %v7433, %v7439
    %v7442 = vunpack.c.l.s4 1966171168
    %v7443 = vunpack.c.0.s8 %v7442
    %v7444 = vlaneseq
    %v7445 = vshrl.u32 %v7444, 7
    %v7446 = vsub.s32 %v7443, %v7445
    %v7447 = vrot.slane %v7432, %v7446
    %v7448 = vcombine.low %v7440, %v7447
    %v7450 = vadd.f32 %v5090, %v7448
    %s7451 = sld [smem:[#allocation7 + $0x6c]]
    %v7452 = vstv %s7451
    %v7453 = vmul.f32 %v7452, %v271
    %v7454 = vmul.f32 %v7452, %v272
    %v7455 = vmul.f32 %v7452, %v273
    %v7456 = vmul.f32 %v7452, %v274
    %v7457 = vmul.f32 %v7452, %v275
    %v7458 = vmul.f32 %v7452, %v276
    %v7459 = vadd.f32 %v7453, 0.0
    %v7460 = vadd.f32 %v7454, 0.0
    %v7461 = vadd.f32 %v7455, 0.0
    %v7462 = vadd.f32 %v7456, 0.0
    %v7463 = vadd.f32 %v7457, 0.0
    %v7464 = vadd.f32 %v7458, 0.0
    %s7465 = sld [smem:[#allocation7 + $0x6d]]
    %v7466 = vstv %s7465
    %v7467 = vmul.f32 %v7466, %v271
    %v7468 = vmul.f32 %v7466, %v272
    %v7469 = vmul.f32 %v7466, %v273
    %v7470 = vmul.f32 %v7466, %v274
    %v7471 = vmul.f32 %v7466, %v275
    %v7472 = vmul.f32 %v7466, %v276
    %v7473 = vadd.f32 %v7467, 0.0
    %v7474 = vadd.f32 %v7468, 0.0
    %v7475 = vadd.f32 %v7469, 0.0
    %v7476 = vadd.f32 %v7470, 0.0
    %v7477 = vadd.f32 %v7471, 0.0
    %v7478 = vadd.f32 %v7472, 0.0
    %s7479 = sld [smem:[#allocation7 + $0x6e]]
    %v7480 = vstv %s7479
    %v7481 = vmul.f32 %v7480, %v271
    %v7482 = vmul.f32 %v7480, %v272
    %v7483 = vmul.f32 %v7480, %v273
    %v7484 = vmul.f32 %v7480, %v274
    %v7485 = vmul.f32 %v7480, %v275
    %v7486 = vmul.f32 %v7480, %v276
    %v7487 = vadd.f32 %v7481, 0.0
    %v7488 = vadd.f32 %v7482, 0.0
    %v7489 = vadd.f32 %v7483, 0.0
    %v7490 = vadd.f32 %v7484, 0.0
    %v7491 = vadd.f32 %v7485, 0.0
    %v7492 = vadd.f32 %v7486, 0.0
    %s7493 = sld [smem:[#allocation7 + $0x6f]]
    %v7494 = vstv %s7493
    %v7495 = vmul.f32 %v7494, %v319
    %v7496 = vmul.f32 %v7494, %v320
    %v7497 = vmul.f32 %v7494, %v321
    %v7498 = vmul.f32 %v7494, %v322
    %v7499 = vmul.f32 %v7494, %v323
    %v7500 = vmul.f32 %v7494, %v324
    %v7501 = vadd.f32 %v7459, %v7495
    %v7502 = vadd.f32 %v7460, %v7496
    %v7503 = vadd.f32 %v7461, %v7497
    %v7504 = vadd.f32 %v7462, %v7498
    %v7505 = vadd.f32 %v7463, %v7499
    %v7506 = vadd.f32 %v7464, %v7500
    %s7507 = sld [smem:[#allocation7 + $0x70]]
    %v7508 = vstv %s7507
    %v7509 = vmul.f32 %v7508, %v319
    %v7510 = vmul.f32 %v7508, %v320
    %v7511 = vmul.f32 %v7508, %v321
    %v7512 = vmul.f32 %v7508, %v322
    %v7513 = vmul.f32 %v7508, %v323
    %v7514 = vmul.f32 %v7508, %v324
    %v7515 = vadd.f32 %v7473, %v7509
    %v7516 = vadd.f32 %v7474, %v7510
    %v7517 = vadd.f32 %v7475, %v7511
    %v7518 = vadd.f32 %v7476, %v7512
    %v7519 = vadd.f32 %v7477, %v7513
    %v7520 = vadd.f32 %v7478, %v7514
    %s7521 = sld [smem:[#allocation7 + $0x71]]
    %v7522 = vstv %s7521
    %v7523 = vmul.f32 %v7522, %v319
    %v7524 = vmul.f32 %v7522, %v320
    %v7525 = vmul.f32 %v7522, %v321
    %v7526 = vmul.f32 %v7522, %v322
    %v7527 = vmul.f32 %v7522, %v323
    %v7528 = vmul.f32 %v7522, %v324
    %v7529 = vadd.f32 %v7487, %v7523
    %v7530 = vadd.f32 %v7488, %v7524
    %v7531 = vadd.f32 %v7489, %v7525
    %v7532 = vadd.f32 %v7490, %v7526
    %v7533 = vadd.f32 %v7491, %v7527
    %v7534 = vadd.f32 %v7492, %v7528
    %s7535 = sld [smem:[#allocation7 + $0x72]]
    %v7536 = vstv %s7535
    %v7537 = vmul.f32 %v7536, %v367
    %v7538 = vmul.f32 %v7536, %v368
    %v7539 = vmul.f32 %v7536, %v369
    %v7540 = vmul.f32 %v7536, %v370
    %v7541 = vmul.f32 %v7536, %v371
    %v7542 = vmul.f32 %v7536, %v372
    %v7543 = vadd.f32 %v7501, %v7537
    %v7544 = vadd.f32 %v7502, %v7538
    %v7545 = vadd.f32 %v7503, %v7539
    %v7546 = vadd.f32 %v7504, %v7540
    %v7547 = vadd.f32 %v7505, %v7541
    %v7548 = vadd.f32 %v7506, %v7542
    %s7549 = sld [smem:[#allocation7 + $0x73]]
    %v7550 = vstv %s7549
    %v7551 = vmul.f32 %v7550, %v367
    %v7552 = vmul.f32 %v7550, %v368
    %v7553 = vmul.f32 %v7550, %v369
    %v7554 = vmul.f32 %v7550, %v370
    %v7555 = vmul.f32 %v7550, %v371
    %v7556 = vmul.f32 %v7550, %v372
    %v7557 = vadd.f32 %v7515, %v7551
    %v7558 = vadd.f32 %v7516, %v7552
    %v7559 = vadd.f32 %v7517, %v7553
    %v7560 = vadd.f32 %v7518, %v7554
    %v7561 = vadd.f32 %v7519, %v7555
    %v7562 = vadd.f32 %v7520, %v7556
    %s7563 = sld [smem:[#allocation7 + $0x74]]
    %v7564 = vstv %s7563
    %v7565 = vmul.f32 %v7564, %v367
    %v7566 = vmul.f32 %v7564, %v368
    %v7567 = vmul.f32 %v7564, %v369
    %v7568 = vmul.f32 %v7564, %v370
    %v7569 = vmul.f32 %v7564, %v371
    %v7570 = vmul.f32 %v7564, %v372
    %v7571 = vadd.f32 %v7529, %v7565
    %v7572 = vadd.f32 %v7530, %v7566
    %v7573 = vadd.f32 %v7531, %v7567
    %v7574 = vadd.f32 %v7532, %v7568
    %v7575 = vadd.f32 %v7533, %v7569
    %v7576 = vadd.f32 %v7534, %v7570
    %s7577 = sld [smem:[#allocation7 + $0x75]]
    %v7578 = vstv %s7577
    %v7579 = vmul.f32 %v7578, %v416
    %v7580 = vmul.f32 %v7578, %v417
    %v7581 = vmul.f32 %v7578, %v418
    %v7582 = vmul.f32 %v7578, %v419
    %v7583 = vmul.f32 %v7578, %v420
    %v7584 = vmul.f32 %v7578, %v421
    %v7585 = vadd.f32 %v7543, %v7579
    %v7586 = vadd.f32 %v7544, %v7580
    %v7587 = vadd.f32 %v7545, %v7581
    %v7588 = vadd.f32 %v7546, %v7582
    %v7589 = vadd.f32 %v7547, %v7583
    %v7590 = vadd.f32 %v7548, %v7584
    %s7591 = sld [smem:[#allocation7 + $0x76]]
    %v7592 = vstv %s7591
    %v7593 = vmul.f32 %v7592, %v416
    %v7594 = vmul.f32 %v7592, %v417
    %v7595 = vmul.f32 %v7592, %v418
    %v7596 = vmul.f32 %v7592, %v419
    %v7597 = vmul.f32 %v7592, %v420
    %v7598 = vmul.f32 %v7592, %v421
    %v7599 = vadd.f32 %v7557, %v7593
    %v7600 = vadd.f32 %v7558, %v7594
    %v7601 = vadd.f32 %v7559, %v7595
    %v7602 = vadd.f32 %v7560, %v7596
    %v7603 = vadd.f32 %v7561, %v7597
    %v7604 = vadd.f32 %v7562, %v7598
    %s7605 = sld [smem:[#allocation7 + $0x77]]
    %v7606 = vstv %s7605
    %v7607 = vmul.f32 %v7606, %v416
    %v7608 = vmul.f32 %v7606, %v417
    %v7609 = vmul.f32 %v7606, %v418
    %v7610 = vmul.f32 %v7606, %v419
    %v7611 = vmul.f32 %v7606, %v420
    %v7612 = vmul.f32 %v7606, %v421
    %v7613 = vadd.f32 %v7571, %v7607
    %v7614 = vadd.f32 %v7572, %v7608
    %v7615 = vadd.f32 %v7573, %v7609
    %v7616 = vadd.f32 %v7574, %v7610
    %v7617 = vadd.f32 %v7575, %v7611
    %v7618 = vadd.f32 %v7576, %v7612
    %s7619 = sld [smem:[#allocation7 + $0x78]]
    %v7620 = vstv %s7619
    %v7621 = vmul.f32 %v7620, %v464
    %v7622 = vmul.f32 %v7620, %v465
    %v7623 = vmul.f32 %v7620, %v466
    %v7624 = vmul.f32 %v7620, %v467
    %v7625 = vmul.f32 %v7620, %v468
    %v7626 = vmul.f32 %v7620, %v469
    %v7627 = vadd.f32 %v7585, %v7621
    %v7628 = vadd.f32 %v7586, %v7622
    %v7629 = vadd.f32 %v7587, %v7623
    %v7630 = vadd.f32 %v7588, %v7624
    %v7631 = vadd.f32 %v7589, %v7625
    %v7632 = vadd.f32 %v7590, %v7626
    %s7633 = sld [smem:[#allocation7 + $0x79]]
    %v7634 = vstv %s7633
    %v7635 = vmul.f32 %v7634, %v464
    %v7636 = vmul.f32 %v7634, %v465
    %v7637 = vmul.f32 %v7634, %v466
    %v7638 = vmul.f32 %v7634, %v467
    %v7639 = vmul.f32 %v7634, %v468
    %v7640 = vmul.f32 %v7634, %v469
    %v7641 = vadd.f32 %v7599, %v7635
    %v7642 = vadd.f32 %v7600, %v7636
    %v7643 = vadd.f32 %v7601, %v7637
    %v7644 = vadd.f32 %v7602, %v7638
    %v7645 = vadd.f32 %v7603, %v7639
    %v7646 = vadd.f32 %v7604, %v7640
    %s7647 = sld [smem:[#allocation7 + $0x7a]]
    %v7648 = vstv %s7647
    %v7649 = vmul.f32 %v7648, %v464
    %v7650 = vmul.f32 %v7648, %v465
    %v7651 = vmul.f32 %v7648, %v466
    %v7652 = vmul.f32 %v7648, %v467
    %v7653 = vmul.f32 %v7648, %v468
    %v7654 = vmul.f32 %v7648, %v469
    %v7655 = vadd.f32 %v7613, %v7649
    %v7656 = vadd.f32 %v7614, %v7650
    %v7657 = vadd.f32 %v7615, %v7651
    %v7658 = vadd.f32 %v7616, %v7652
    %v7659 = vadd.f32 %v7617, %v7653
    %v7660 = vadd.f32 %v7618, %v7654
    %s7661 = sld [smem:[#allocation7 + $0x7b]]
    %v7662 = vstv %s7661
    %v7663 = vmul.f32 %v7662, %v512
    %v7664 = vmul.f32 %v7662, %v513
    %v7665 = vmul.f32 %v7662, %v514
    %v7666 = vmul.f32 %v7662, %v515
    %v7667 = vmul.f32 %v7662, %v516
    %v7668 = vmul.f32 %v7662, %v517
    %v7669 = vadd.f32 %v7627, %v7663
    %v7670 = vadd.f32 %v7628, %v7664
    %v7671 = vadd.f32 %v7629, %v7665
    %v7672 = vadd.f32 %v7630, %v7666
    %v7673 = vadd.f32 %v7631, %v7667
    %v7674 = vadd.f32 %v7632, %v7668
    %s7675 = sld [smem:[#allocation7 + $0x7c]]
    %v7676 = vstv %s7675
    %v7677 = vmul.f32 %v7676, %v512
    %v7678 = vmul.f32 %v7676, %v513
    %v7679 = vmul.f32 %v7676, %v514
    %v7680 = vmul.f32 %v7676, %v515
    %v7681 = vmul.f32 %v7676, %v516
    %v7682 = vmul.f32 %v7676, %v517
    %v7683 = vadd.f32 %v7641, %v7677
    %v7684 = vadd.f32 %v7642, %v7678
    %v7685 = vadd.f32 %v7643, %v7679
    %v7686 = vadd.f32 %v7644, %v7680
    %v7687 = vadd.f32 %v7645, %v7681
    %v7688 = vadd.f32 %v7646, %v7682
    %s7689 = sld [smem:[#allocation7 + $0x7d]]
    %v7690 = vstv %s7689
    %v7691 = vmul.f32 %v7690, %v512
    %v7692 = vmul.f32 %v7690, %v513
    %v7693 = vmul.f32 %v7690, %v514
    %v7694 = vmul.f32 %v7690, %v515
    %v7695 = vmul.f32 %v7690, %v516
    %v7696 = vmul.f32 %v7690, %v517
    %v7697 = vadd.f32 %v7655, %v7691
    %v7698 = vadd.f32 %v7656, %v7692
    %v7699 = vadd.f32 %v7657, %v7693
    %v7700 = vadd.f32 %v7658, %v7694
    %v7701 = vadd.f32 %v7659, %v7695
    %v7702 = vadd.f32 %v7660, %v7696
    %s7703 = sld [smem:[#allocation7 + $0x7e]]
    %v7704 = vstv %s7703
    %v7705 = vmul.f32 %v7704, %v561
    %v7706 = vmul.f32 %v7704, %v562
    %v7707 = vmul.f32 %v7704, %v563
    %v7708 = vmul.f32 %v7704, %v564
    %v7709 = vmul.f32 %v7704, %v565
    %v7710 = vmul.f32 %v7704, %v566
    %v7711 = vadd.f32 %v7669, %v7705
    %v7712 = vadd.f32 %v7670, %v7706
    %v7713 = vadd.f32 %v7671, %v7707
    %v7714 = vadd.f32 %v7672, %v7708
    %v7715 = vadd.f32 %v7673, %v7709
    %v7716 = vadd.f32 %v7674, %v7710
    %s7717 = sld [smem:[#allocation7 + $0x7f]]
    %v7718 = vstv %s7717
    %v7719 = vmul.f32 %v7718, %v561
    %v7720 = vmul.f32 %v7718, %v562
    %v7721 = vmul.f32 %v7718, %v563
    %v7722 = vmul.f32 %v7718, %v564
    %v7723 = vmul.f32 %v7718, %v565
    %v7724 = vmul.f32 %v7718, %v566
    %v7725 = vadd.f32 %v7683, %v7719
    %v7726 = vadd.f32 %v7684, %v7720
    %v7727 = vadd.f32 %v7685, %v7721
    %v7728 = vadd.f32 %v7686, %v7722
    %v7729 = vadd.f32 %v7687, %v7723
    %v7730 = vadd.f32 %v7688, %v7724
    %s7731 = sld [smem:[#allocation7 + $0x80]]
    %v7732 = vstv %s7731
    %v7733 = vmul.f32 %v7732, %v561
    %v7734 = vmul.f32 %v7732, %v562
    %v7735 = vmul.f32 %v7732, %v563
    %v7736 = vmul.f32 %v7732, %v564
    %v7737 = vmul.f32 %v7732, %v565
    %v7738 = vmul.f32 %v7732, %v566
    %v7739 = vadd.f32 %v7697, %v7733
    %v7740 = vadd.f32 %v7698, %v7734
    %v7741 = vadd.f32 %v7699, %v7735
    %v7742 = vadd.f32 %v7700, %v7736
    %v7743 = vadd.f32 %v7701, %v7737
    %v7744 = vadd.f32 %v7702, %v7738
    %s7745 = sld [smem:[#allocation7 + $0x81]]
    %v7746 = vstv %s7745
    %v7747 = vmul.f32 %v7746, %v609
    %v7748 = vmul.f32 %v7746, %v610
    %v7749 = vmul.f32 %v7746, %v611
    %v7750 = vmul.f32 %v7746, %v612
    %v7751 = vmul.f32 %v7746, %v613
    %v7752 = vmul.f32 %v7746, %v614
    %v7753 = vadd.f32 %v7711, %v7747
    %v7754 = vadd.f32 %v7712, %v7748
    %v7755 = vadd.f32 %v7713, %v7749
    %v7756 = vadd.f32 %v7714, %v7750
    %v7757 = vadd.f32 %v7715, %v7751
    %v7758 = vadd.f32 %v7716, %v7752
    %s7759 = sld [smem:[#allocation7 + $0x82]]
    %v7760 = vstv %s7759
    %v7761 = vmul.f32 %v7760, %v609
    %v7762 = vmul.f32 %v7760, %v610
    %v7763 = vmul.f32 %v7760, %v611
    %v7764 = vmul.f32 %v7760, %v612
    %v7765 = vmul.f32 %v7760, %v613
    %v7766 = vmul.f32 %v7760, %v614
    %v7767 = vadd.f32 %v7725, %v7761
    %v7768 = vadd.f32 %v7726, %v7762
    %v7769 = vadd.f32 %v7727, %v7763
    %v7770 = vadd.f32 %v7728, %v7764
    %v7771 = vadd.f32 %v7729, %v7765
    %v7772 = vadd.f32 %v7730, %v7766
    %s7773 = sld [smem:[#allocation7 + $0x83]]
    %v7774 = vstv %s7773
    %v7775 = vmul.f32 %v7774, %v609
    %v7776 = vmul.f32 %v7774, %v610
    %v7777 = vmul.f32 %v7774, %v611
    %v7778 = vmul.f32 %v7774, %v612
    %v7779 = vmul.f32 %v7774, %v613
    %v7780 = vmul.f32 %v7774, %v614
    %v7781 = vadd.f32 %v7739, %v7775
    %v7782 = vadd.f32 %v7740, %v7776
    %v7783 = vadd.f32 %v7741, %v7777
    %v7784 = vadd.f32 %v7742, %v7778
    %v7785 = vadd.f32 %v7743, %v7779
    %v7786 = vadd.f32 %v7744, %v7780
    %s7787 = sld [smem:[#allocation7 + $0x84]]
    %v7788 = vstv %s7787
    %v7789 = vmul.f32 %v7788, %v657
    %v7790 = vmul.f32 %v7788, %v658
    %v7791 = vmul.f32 %v7788, %v659
    %v7792 = vmul.f32 %v7788, %v660
    %v7793 = vmul.f32 %v7788, %v661
    %v7794 = vmul.f32 %v7788, %v662
    %v7795 = vadd.f32 %v7753, %v7789
    %v7796 = vadd.f32 %v7754, %v7790
    %v7797 = vadd.f32 %v7755, %v7791
    %v7798 = vadd.f32 %v7756, %v7792
    %v7799 = vadd.f32 %v7757, %v7793
    %v7800 = vadd.f32 %v7758, %v7794
    %s7801 = sld [smem:[#allocation7 + $0x85]]
    %v7802 = vstv %s7801
    %v7803 = vmul.f32 %v7802, %v657
    %v7804 = vmul.f32 %v7802, %v658
    %v7805 = vmul.f32 %v7802, %v659
    %v7806 = vmul.f32 %v7802, %v660
    %v7807 = vmul.f32 %v7802, %v661
    %v7808 = vmul.f32 %v7802, %v662
    %v7809 = vadd.f32 %v7767, %v7803
    %v7810 = vadd.f32 %v7768, %v7804
    %v7811 = vadd.f32 %v7769, %v7805
    %v7812 = vadd.f32 %v7770, %v7806
    %v7813 = vadd.f32 %v7771, %v7807
    %v7814 = vadd.f32 %v7772, %v7808
    %s7815 = sld [smem:[#allocation7 + $0x86]]
    %v7816 = vstv %s7815
    %v7817 = vmul.f32 %v7816, %v657
    %v7818 = vmul.f32 %v7816, %v658
    %v7819 = vmul.f32 %v7816, %v659
    %v7820 = vmul.f32 %v7816, %v660
    %v7821 = vmul.f32 %v7816, %v661
    %v7822 = vmul.f32 %v7816, %v662
    %v7823 = vadd.f32 %v7781, %v7817
    %v7824 = vadd.f32 %v7782, %v7818
    %v7825 = vadd.f32 %v7783, %v7819
    %v7826 = vadd.f32 %v7784, %v7820
    %v7827 = vadd.f32 %v7785, %v7821
    %v7828 = vadd.f32 %v7786, %v7822
    %s7829 = sld [smem:[#allocation7 + $0x87]]
    %v7830 = vstv %s7829
    %v7831 = vmul.f32 %v7830, %v706
    %v7832 = vmul.f32 %v7830, %v707
    %v7833 = vmul.f32 %v7830, %v708
    %v7834 = vmul.f32 %v7830, %v709
    %v7835 = vmul.f32 %v7830, %v710
    %v7836 = vmul.f32 %v7830, %v711
    %v7837 = vadd.f32 %v7795, %v7831
    %v7838 = vadd.f32 %v7796, %v7832
    %v7839 = vadd.f32 %v7797, %v7833
    %v7840 = vadd.f32 %v7798, %v7834
    %v7841 = vadd.f32 %v7799, %v7835
    %v7842 = vadd.f32 %v7800, %v7836
    %s7843 = sld [smem:[#allocation7 + $0x88]]
    %v7844 = vstv %s7843
    %v7845 = vmul.f32 %v7844, %v706
    %v7846 = vmul.f32 %v7844, %v707
    %v7847 = vmul.f32 %v7844, %v708
    %v7848 = vmul.f32 %v7844, %v709
    %v7849 = vmul.f32 %v7844, %v710
    %v7850 = vmul.f32 %v7844, %v711
    %v7851 = vadd.f32 %v7809, %v7845
    %v7852 = vadd.f32 %v7810, %v7846
    %v7853 = vadd.f32 %v7811, %v7847
    %v7854 = vadd.f32 %v7812, %v7848
    %v7855 = vadd.f32 %v7813, %v7849
    %v7856 = vadd.f32 %v7814, %v7850
    %s7857 = sld [smem:[#allocation7 + $0x89]]
    %v7858 = vstv %s7857
    %v7859 = vmul.f32 %v7858, %v706
    %v7860 = vmul.f32 %v7858, %v707
    %v7861 = vmul.f32 %v7858, %v708
    %v7862 = vmul.f32 %v7858, %v709
    %v7863 = vmul.f32 %v7858, %v710
    %v7864 = vmul.f32 %v7858, %v711
    %v7865 = vadd.f32 %v7823, %v7859
    %v7866 = vadd.f32 %v7824, %v7860
    %v7867 = vadd.f32 %v7825, %v7861
    %v7868 = vadd.f32 %v7826, %v7862
    %v7869 = vadd.f32 %v7827, %v7863
    %v7870 = vadd.f32 %v7828, %v7864
    %s7871 = sld [smem:[#allocation7 + $0x8a]]
    %v7872 = vstv %s7871
    %v7873 = vmul.f32 %v7872, %v754
    %v7874 = vmul.f32 %v7872, %v755
    %v7875 = vmul.f32 %v7872, %v756
    %v7876 = vmul.f32 %v7872, %v757
    %v7877 = vmul.f32 %v7872, %v758
    %v7878 = vmul.f32 %v7872, %v759
    %v7879 = vadd.f32 %v7837, %v7873
    %v7880 = vadd.f32 %v7838, %v7874
    %v7881 = vadd.f32 %v7839, %v7875
    %v7882 = vadd.f32 %v7840, %v7876
    %v7883 = vadd.f32 %v7841, %v7877
    %v7884 = vadd.f32 %v7842, %v7878
    %s7885 = sld [smem:[#allocation7 + $0x8b]]
    %v7886 = vstv %s7885
    %v7887 = vmul.f32 %v7886, %v754
    %v7888 = vmul.f32 %v7886, %v755
    %v7889 = vmul.f32 %v7886, %v756
    %v7890 = vmul.f32 %v7886, %v757
    %v7891 = vmul.f32 %v7886, %v758
    %v7892 = vmul.f32 %v7886, %v759
    %v7893 = vadd.f32 %v7851, %v7887
    %v7894 = vadd.f32 %v7852, %v7888
    %v7895 = vadd.f32 %v7853, %v7889
    %v7896 = vadd.f32 %v7854, %v7890
    %v7897 = vadd.f32 %v7855, %v7891
    %v7898 = vadd.f32 %v7856, %v7892
    %s7899 = sld [smem:[#allocation7 + $0x8c]]
    %v7900 = vstv %s7899
    %v7901 = vmul.f32 %v7900, %v754
    %v7902 = vmul.f32 %v7900, %v755
    %v7903 = vmul.f32 %v7900, %v756
    %v7904 = vmul.f32 %v7900, %v757
    %v7905 = vmul.f32 %v7900, %v758
    %v7906 = vmul.f32 %v7900, %v759
    %v7907 = vadd.f32 %v7865, %v7901
    %v7908 = vadd.f32 %v7866, %v7902
    %v7909 = vadd.f32 %v7867, %v7903
    %v7910 = vadd.f32 %v7868, %v7904
    %v7911 = vadd.f32 %v7869, %v7905
    %v7912 = vadd.f32 %v7870, %v7906
    %s7913 = sld [smem:[#allocation7 + $0x8d]]
    %v7914 = vstv %s7913
    %v7915 = vmul.f32 %v7914, %v802
    %v7916 = vmul.f32 %v7914, %v803
    %v7917 = vmul.f32 %v7914, %v804
    %v7918 = vmul.f32 %v7914, %v805
    %v7919 = vmul.f32 %v7914, %v806
    %v7920 = vmul.f32 %v7914, %v807
    %v7921 = vadd.f32 %v7879, %v7915
    %v7922 = vadd.f32 %v7880, %v7916
    %v7923 = vadd.f32 %v7881, %v7917
    %v7924 = vadd.f32 %v7882, %v7918
    %v7925 = vadd.f32 %v7883, %v7919
    %v7926 = vadd.f32 %v7884, %v7920
    %s7927 = sld [smem:[#allocation7 + $0x8e]]
    %v7928 = vstv %s7927
    %v7929 = vmul.f32 %v7928, %v802
    %v7930 = vmul.f32 %v7928, %v803
    %v7931 = vmul.f32 %v7928, %v804
    %v7932 = vmul.f32 %v7928, %v805
    %v7933 = vmul.f32 %v7928, %v806
    %v7934 = vmul.f32 %v7928, %v807
    %v7935 = vadd.f32 %v7893, %v7929
    %v7936 = vadd.f32 %v7894, %v7930
    %v7937 = vadd.f32 %v7895, %v7931
    %v7938 = vadd.f32 %v7896, %v7932
    %v7939 = vadd.f32 %v7897, %v7933
    %v7940 = vadd.f32 %v7898, %v7934
    %s7941 = sld [smem:[#allocation7 + $0x8f]]
    %v7942 = vstv %s7941
    %v7943 = vmul.f32 %v7942, %v802
    %v7944 = vmul.f32 %v7942, %v803
    %v7945 = vmul.f32 %v7942, %v804
    %v7946 = vmul.f32 %v7942, %v805
    %v7947 = vmul.f32 %v7942, %v806
    %v7948 = vmul.f32 %v7942, %v807
    %v7949 = vadd.f32 %v7907, %v7943
    %v7950 = vadd.f32 %v7908, %v7944
    %v7951 = vadd.f32 %v7909, %v7945
    %v7952 = vadd.f32 %v7910, %v7946
    %v7953 = vadd.f32 %v7911, %v7947
    %v7954 = vadd.f32 %v7912, %v7948
    %s7955 = sld [smem:[#allocation8 + $0x3]]
    %v7956 = vld [vmem:[#allocation12 + $0x870] sm:$0xff]
    %v7957 = vld [vmem:[#allocation12 + $0x878] sm:$0xff]
    %v7958 = vld [vmem:[#allocation12 + $0x880] sm:$0xff]
    %v7959 = vld [vmem:[#allocation12 + $0x888] sm:$0xff]
    %v7960 = vld [vmem:[#allocation12 + $0x890] sm:$0xff]
    %v7961 = vld [vmem:[#allocation12 + $0x898] sm:$0xff]
    %v7962 = vld [vmem:[#allocation12 + $0x8a0] sm:$0xff]
    %v7963 = vld [vmem:[#allocation12 + $0x8a8] sm:$0xff]
    %v7964 = vld [vmem:[#allocation12 + $0x8b0] sm:$0xff]
    %v7965 = vld [vmem:[#allocation12 + $0x8b8] sm:$0xff]
    %v7966 = vld [vmem:[#allocation12 + $0x8c0] sm:$0xff]
    %v7967 = vld [vmem:[#allocation12 + $0x8c8] sm:$0xff]
    %v7968 = vld [vmem:[#allocation12 + $0x8d0] sm:$0xff]
    %v7969 = vld [vmem:[#allocation12 + $0x8d8] sm:$0xff]
    %v7970 = vld [vmem:[#allocation12 + $0x8e0] sm:$0xff]
    %v7971 = vld [vmem:[#allocation12 + $0x8e8] sm:$0xff]
    %v7972 = vld [vmem:[#allocation12 + $0x8f0] sm:$0xff]
    %v7973 = vld [vmem:[#allocation12 + $0x8f8] sm:$0xff]
    %v7974 = vld [vmem:[#allocation12 + $0x900] sm:$0xff]
    %v7975 = vld [vmem:[#allocation12 + $0x908] sm:$0xff]
    %v7976 = vld [vmem:[#allocation12 + $0x910] sm:$0xff]
    %v7977 = vld [vmem:[#allocation12 + $0x918] sm:$0xff]
    %v7978 = vld [vmem:[#allocation12 + $0x920] sm:$0xff]
    %v7979 = vld [vmem:[#allocation12 + $0x928] sm:$0xff]
    %v7980 = vld [vmem:[#allocation12 + $0x930] sm:$0xff]
    %v7981 = vld [vmem:[#allocation12 + $0x938] sm:$0xff]
    %v7982 = vld [vmem:[#allocation12 + $0x940] sm:$0xff]
    %v7983 = vld [vmem:[#allocation12 + $0x948] sm:$0xff]
    %v7984 = vld [vmem:[#allocation12 + $0x950] sm:$0xff]
    %v7985 = vld [vmem:[#allocation12 + $0x958] sm:$0xff]
    %v7986 = vld [vmem:[#allocation12 + $0x960] sm:$0xff]
    %v7987 = vld [vmem:[#allocation12 + $0x968] sm:$0xff]
    %v7988 = vld [vmem:[#allocation12 + $0x970] sm:$0xff]
    %v7989 = vld [vmem:[#allocation12 + $0x978] sm:$0xff]
    %v7990 = vld [vmem:[#allocation12 + $0x980] sm:$0xff]
    %v7991 = vld [vmem:[#allocation12 + $0x988] sm:$0xff]
    %v7992 = vld [vmem:[#allocation12 + $0x990] sm:$0xff]
    %v7993 = vld [vmem:[#allocation12 + $0x998] sm:$0xff]
    %v7994 = vld [vmem:[#allocation12 + $0x9a0] sm:$0xff]
    %v7995 = vld [vmem:[#allocation12 + $0x9a8] sm:$0xff]
    %v7996 = vld [vmem:[#allocation12 + $0x9b0] sm:$0xff]
    %v7997 = vld [vmem:[#allocation12 + $0x9b8] sm:$0xff]
    %v7998 = vld [vmem:[#allocation12 + $0x9c0] sm:$0xff]
    %v7999 = vld [vmem:[#allocation12 + $0x9c8] sm:$0xff]
    %v8000 = vld [vmem:[#allocation12 + $0x9d0] sm:$0xff]
    %v8001 = vld [vmem:[#allocation12 + $0x9d8] sm:$0xff]
    %v8002 = vld [vmem:[#allocation12 + $0x9e0] sm:$0xff]
    %v8003 = vld [vmem:[#allocation12 + $0x9e8] sm:$0xff]
    %v8004 = vld [vmem:[#allocation12 + $0x9f0] sm:$0xff]
    %v8005 = vld [vmem:[#allocation12 + $0x9f8] sm:$0xff]
    %v8006 = vld [vmem:[#allocation12 + $0xa00] sm:$0xff]
    %v8007 = vld [vmem:[#allocation12 + $0xa08] sm:$0xff]
    %v8008 = vld [vmem:[#allocation12 + $0xa10] sm:$0xff]
    %v8009 = vld [vmem:[#allocation12 + $0xa18] sm:$0xff]
    %v8010 = vld [vmem:[#allocation12 + $0xa20] sm:$0xff]
    %v8011 = vld [vmem:[#allocation12 + $0xa28] sm:$0xff]
    %v8012 = vld [vmem:[#allocation12 + $0xa30] sm:$0xff]
    %v8013 = vld [vmem:[#allocation12 + $0xa38] sm:$0xff]
    %v8014 = vld [vmem:[#allocation12 + $0xa40] sm:$0xff]
    %v8015 = vld [vmem:[#allocation12 + $0xa48] sm:$0xff]
    %v8016 = vld [vmem:[#allocation12 + $0xa50] sm:$0xff]
    %v8017 = vld [vmem:[#allocation12 + $0xa58] sm:$0xff]
    %v8018 = vld [vmem:[#allocation12 + $0xa60] sm:$0xff]
    %v8019 = vld [vmem:[#allocation12 + $0xa68] sm:$0xff]
    %v8020 = vld [vmem:[#allocation12 + $0xa70] sm:$0xff]
    %v8021 = vld [vmem:[#allocation12 + $0xa78] sm:$0xff]
    %v8022 = vld [vmem:[#allocation12 + $0xa80] sm:$0xff]
    %v8023 = vld [vmem:[#allocation12 + $0xa88] sm:$0xff]
    %v8024 = vld [vmem:[#allocation12 + $0xa90] sm:$0xff]
    %v8025 = vld [vmem:[#allocation12 + $0xa98] sm:$0xff]
    %v8026 = vld [vmem:[#allocation12 + $0xaa0] sm:$0xff]
    %v8027 = vld [vmem:[#allocation12 + $0xaa8] sm:$0xff]
    %v8028 = vld [vmem:[#allocation12 + $0xab0] sm:$0xff]
    %v8029 = vld [vmem:[#allocation12 + $0xab8] sm:$0xff]
    %v8030 = vld [vmem:[#allocation12 + $0xac0] sm:$0xff]
    %v8031 = vld [vmem:[#allocation12 + $0xac8] sm:$0xff]
    %v8032 = vld [vmem:[#allocation12 + $0xad0] sm:$0xff]
    %v8033 = vld [vmem:[#allocation12 + $0xad8] sm:$0xff]
    %v8034 = vld [vmem:[#allocation12 + $0xae0] sm:$0xff]
    %v8035 = vld [vmem:[#allocation12 + $0xae8] sm:$0xff]
    %v8036 = vld [vmem:[#allocation12 + $0xaf0] sm:$0xff]
    %v8037 = vld [vmem:[#allocation12 + $0xaf8] sm:$0xff]
    %v8038 = vld [vmem:[#allocation12 + $0xb00] sm:$0xff]
    %v8039 = vld [vmem:[#allocation12 + $0xb08] sm:$0xff]
    %v8040 = vld [vmem:[#allocation12 + $0xb10] sm:$0xff]
    %v8041 = vld [vmem:[#allocation12 + $0xb18] sm:$0xff]
    %v8042 = vld [vmem:[#allocation12 + $0xb20] sm:$0xff]
    %v8043 = vld [vmem:[#allocation12 + $0xb28] sm:$0xff]
    %v8044 = vld [vmem:[#allocation12 + $0xb30] sm:$0xff]
    %v8045 = vld [vmem:[#allocation12 + $0xb38] sm:$0xff]
    %v8047 = vsel %vm941, %v7935, 0
    %v8050 = vsel %vm941, %v7936, 0
    %v8053 = vsel %vm941, %v7937, 0
    %8055 = vmatprep.subr.mxu0 0.0
    %8056 = vmatpush1.msra.mxu0 0.0
    %8057 = vmatprep.subr.mxu0 0.0
    %8058 = vmatpush1.msra.mxu0 0.0
    %8059 = vmatprep.subr.mxu0 0.0
    %8060 = vmatpush1.msra.mxu0 0.0
    %8061 = vmatprep.subr.mxu0 0.0
    %8062 = vmatpush1.msra.mxu0 0.0
    %8063 = vmatprep.subr.mxu0 0.0
    %8064 = vmatpush1.msra.mxu0 0.0
    %8065 = vmatprep.subr.mxu0 0.0
    %8066 = vmatpush1.msra.mxu0 0.0
    %8067 = vmatprep.subr.mxu0 0.0
    %8068 = vmatpush1.msra.mxu0 0.0
    %8069 = vmatprep.subr.mxu0 0.0
    %8070 = vmatpush1.msra.mxu0 0.0
    %8071 = vmatprep.subr.mxu0 0.0
    %8072 = vmatpush1.msra.mxu0 0.0
    %8073 = vmatprep.subr.mxu0 0.0
    %8074 = vmatpush1.msra.mxu0 0.0
    %8075 = vmatprep.subr.mxu0 0.0
    %8076 = vmatpush1.msra.mxu0 0.0
    %8077 = vmatprep.subr.mxu0 0.0
    %8078 = vmatpush1.msra.mxu0 0.0
    %8079 = vmatprep.subr.mxu0 0.0
    %8080 = vmatpush1.msra.mxu0 0.0
    %8081 = vmatprep.subr.mxu0 0.0
    %8082 = vmatpush1.msra.mxu0 %v146
    %8083 = vmatprep.subr.mxu0 0.0
    %8084 = vmatpush1.msra.mxu0 %v145
    %8085 = vmatprep.subr.mxu0 0.0
    %8086 = vmatpush1.msra.mxu0 %v144
    %8087 = vmatprep.subr.mxu0 0.0
    %8088 = vmatpush2.msra.mxu0 0.0
    %8089 = vmatprep.subr.mxu0 0.0
    %8090 = vmatpush2.msra.mxu0 0.0
    %8091 = vmatprep.subr.mxu0 0.0
    %8092 = vmatpush2.msra.mxu0 0.0
    %8093 = vmatprep.subr.mxu0 0.0
    %8094 = vmatpush2.msra.mxu0 0.0
    %8095 = vmatprep.subr.mxu0 0.0
    %8096 = vmatpush2.msra.mxu0 0.0
    %8097 = vmatprep.subr.mxu0 0.0
    %8098 = vmatpush2.msra.mxu0 0.0
    %8099 = vmatprep.subr.mxu0 0.0
    %8100 = vmatpush2.msra.mxu0 0.0
    %8101 = vmatprep.subr.mxu0 0.0
    %8102 = vmatpush2.msra.mxu0 0.0
    %8103 = vmatprep.subr.mxu0 0.0
    %8104 = vmatpush2.msra.mxu0 0.0
    %8105 = vmatprep.subr.mxu0 0.0
    %8106 = vmatpush2.msra.mxu0 0.0
    %8107 = vmatprep.subr.mxu0 0.0
    %8108 = vmatpush2.msra.mxu0 0.0
    %8109 = vmatprep.subr.mxu0 0.0
    %8110 = vmatpush2.msra.mxu0 0.0
    %8111 = vmatprep.subr.mxu0 0.0
    %8112 = vmatpush2.msra.mxu0 0.0
    %8113 = vmatprep.subr.mxu0 0.0
    %8114 = vmatpush2.msra.mxu0 0.0
    %8115 = vmatprep.subr.mxu0 0.0
    %8116 = vmatpush2.msra.mxu0 0.0
    %8117 = vmatprep.subr.mxu0 0.0
    %8118 = vmatpush2.msra.mxu0 0.0
    %8119 = vmatprep.mubr.f32.mxu0 0.0
    %8120 = vmatmul.mubr.f32.gmra.mxu0 %v8047
    %v8121 = vpop.f32.mrf.mxu0
    %v8122 = vadd.f32 0.0, %v8121
    %v8123 = vpop.f32.mrf.mxu0
    %8124 = vmatprep.mubr.f32.mxu0 0.0
    %8125 = vmatmul.mubr.f32.gmra.mxu0 %v8050
    %v8126 = vpop.f32.mrf.mxu0
    %v8127 = vadd.f32 0.0, %v8126
    %v8128 = vpop.f32.mrf.mxu0
    %8129 = vmatprep.mubr.f32.mxu0 0.0
    %8130 = vmatmul.mubr.f32.gmra.mxu0 %v8053
    %v8131 = vpop.f32.mrf.mxu0
    %v8132 = vadd.f32 0.0, %v8131
    %v8133 = vpop.f32.mrf.mxu0
    %8134 = vdwg.mxu0
    %v8135 = vadd.f32 %v7921, %v8122
    %v8136 = vadd.f32 %v7922, %v8127
    %v8137 = vadd.f32 %v7923, %v8132
    %v8139 = vsel %vm941, %v7949, 0
    %v8142 = vsel %vm941, %v7950, 0
    %v8145 = vsel %vm941, %v7951, 0
    %8147 = vmatprep.subr.mxu0 0.0
    %8148 = vmatpush1.msra.mxu0 0.0
    %8149 = vmatprep.subr.mxu0 0.0
    %8150 = vmatpush1.msra.mxu0 0.0
    %8151 = vmatprep.subr.mxu0 0.0
    %8152 = vmatpush1.msra.mxu0 0.0
    %8153 = vmatprep.subr.mxu0 0.0
    %8154 = vmatpush1.msra.mxu0 0.0
    %8155 = vmatprep.subr.mxu0 0.0
    %8156 = vmatpush1.msra.mxu0 0.0
    %8157 = vmatprep.subr.mxu0 0.0
    %8158 = vmatpush1.msra.mxu0 0.0
    %8159 = vmatprep.subr.mxu0 0.0
    %8160 = vmatpush1.msra.mxu0 0.0
    %8161 = vmatprep.subr.mxu0 0.0
    %8162 = vmatpush1.msra.mxu0 0.0
    %8163 = vmatprep.subr.mxu0 0.0
    %8164 = vmatpush1.msra.mxu0 0.0
    %8165 = vmatprep.subr.mxu0 0.0
    %8166 = vmatpush1.msra.mxu0 0.0
    %8167 = vmatprep.subr.mxu0 0.0
    %8168 = vmatpush1.msra.mxu0 0.0
    %8169 = vmatprep.subr.mxu0 0.0
    %8170 = vmatpush1.msra.mxu0 0.0
    %8171 = vmatprep.subr.mxu0 0.0
    %8172 = vmatpush1.msra.mxu0 0.0
    %8173 = vmatprep.subr.mxu0 0.0
    %8174 = vmatpush1.msra.mxu0 %v153
    %8175 = vmatprep.subr.mxu0 0.0
    %8176 = vmatpush1.msra.mxu0 %v152
    %8177 = vmatprep.subr.mxu0 0.0
    %8178 = vmatpush1.msra.mxu0 %v151
    %8179 = vmatprep.subr.mxu0 0.0
    %8180 = vmatpush2.msra.mxu0 0.0
    %8181 = vmatprep.subr.mxu0 0.0
    %8182 = vmatpush2.msra.mxu0 0.0
    %8183 = vmatprep.subr.mxu0 0.0
    %8184 = vmatpush2.msra.mxu0 0.0
    %8185 = vmatprep.subr.mxu0 0.0
    %8186 = vmatpush2.msra.mxu0 0.0
    %8187 = vmatprep.subr.mxu0 0.0
    %8188 = vmatpush2.msra.mxu0 0.0
    %8189 = vmatprep.subr.mxu0 0.0
    %8190 = vmatpush2.msra.mxu0 0.0
    %8191 = vmatprep.subr.mxu0 0.0
    %8192 = vmatpush2.msra.mxu0 0.0
    %8193 = vmatprep.subr.mxu0 0.0
    %8194 = vmatpush2.msra.mxu0 0.0
    %8195 = vmatprep.subr.mxu0 0.0
    %8196 = vmatpush2.msra.mxu0 0.0
    %8197 = vmatprep.subr.mxu0 0.0
    %8198 = vmatpush2.msra.mxu0 0.0
    %8199 = vmatprep.subr.mxu0 0.0
    %8200 = vmatpush2.msra.mxu0 0.0
    %8201 = vmatprep.subr.mxu0 0.0
    %8202 = vmatpush2.msra.mxu0 0.0
    %8203 = vmatprep.subr.mxu0 0.0
    %8204 = vmatpush2.msra.mxu0 0.0
    %8205 = vmatprep.subr.mxu0 0.0
    %8206 = vmatpush2.msra.mxu0 0.0
    %8207 = vmatprep.subr.mxu0 0.0
    %8208 = vmatpush2.msra.mxu0 0.0
    %8209 = vmatprep.subr.mxu0 0.0
    %8210 = vmatpush2.msra.mxu0 0.0
    %8211 = vmatprep.mubr.f32.mxu0 0.0
    %8212 = vmatmul.mubr.f32.gmra.mxu0 %v8139
    %v8213 = vpop.f32.mrf.mxu0
    %v8214 = vadd.f32 0.0, %v8213
    %v8215 = vpop.f32.mrf.mxu0
    %8216 = vmatprep.mubr.f32.mxu0 0.0
    %8217 = vmatmul.mubr.f32.gmra.mxu0 %v8142
    %v8218 = vpop.f32.mrf.mxu0
    %v8219 = vadd.f32 0.0, %v8218
    %v8220 = vpop.f32.mrf.mxu0
    %8221 = vmatprep.mubr.f32.mxu0 0.0
    %8222 = vmatmul.mubr.f32.gmra.mxu0 %v8145
    %v8223 = vpop.f32.mrf.mxu0
    %v8224 = vadd.f32 0.0, %v8223
    %v8225 = vpop.f32.mrf.mxu0
    %8226 = vdwg.mxu0
    %v8227 = vadd.f32 %v8135, %v8214
    %v8228 = vadd.f32 %v8136, %v8219
    %v8229 = vadd.f32 %v8137, %v8224
    %v8230 = vstv %s7955
    %v8231 = vadd.f32 %v8227, %v8230
    %v8232 = vadd.f32 %v8228, %v8230
    %v8233 = vadd.f32 %v8229, %v8230
    %v8234 = vmax.f32 %v8231, 0.0
    %v8235 = vmax.f32 %v8232, 0.0
    %v8236 = vmax.f32 %v8233, 0.0
    %v8238 = vsel %vm941, %v8234, 0
    %v8241 = vsel %vm941, %v8235, 0
    %v8244 = vsel %vm941, %v8236, 0
    %8246 = vmatprep.subr.mxu0 0.0
    %8247 = vmatpush1.msra.mxu0 0.0
    %8248 = vmatprep.subr.mxu0 0.0
    %8249 = vmatpush1.msra.mxu0 0.0
    %8250 = vmatprep.subr.mxu0 0.0
    %8251 = vmatpush1.msra.mxu0 0.0
    %8252 = vmatprep.subr.mxu0 0.0
    %8253 = vmatpush1.msra.mxu0 0.0
    %8254 = vmatprep.subr.mxu0 0.0
    %8255 = vmatpush1.msra.mxu0 0.0
    %8256 = vmatprep.subr.mxu0 0.0
    %8257 = vmatpush1.msra.mxu0 0.0
    %8258 = vmatprep.subr.mxu0 0.0
    %8259 = vmatpush1.msra.mxu0 0.0
    %8260 = vmatprep.subr.mxu0 0.0
    %8261 = vmatpush1.msra.mxu0 0.0
    %8262 = vmatprep.subr.mxu0 0.0
    %8263 = vmatpush1.msra.mxu0 0.0
    %8264 = vmatprep.subr.mxu0 0.0
    %8265 = vmatpush1.msra.mxu0 0.0
    %8266 = vmatprep.subr.mxu0 0.0
    %8267 = vmatpush1.msra.mxu0 0.0
    %8268 = vmatprep.subr.mxu0 0.0
    %8269 = vmatpush1.msra.mxu0 0.0
    %8270 = vmatprep.subr.mxu0 0.0
    %8271 = vmatpush1.msra.mxu0 0.0
    %8272 = vmatprep.subr.mxu0 0.0
    %8273 = vmatpush1.msra.mxu0 %v167
    %8274 = vmatprep.subr.mxu0 0.0
    %8275 = vmatpush1.msra.mxu0 %v166
    %8276 = vmatprep.subr.mxu0 0.0
    %8277 = vmatpush1.msra.mxu0 %v165
    %8278 = vmatprep.subr.mxu0 0.0
    %8279 = vmatpush2.msra.mxu0 0.0
    %8280 = vmatprep.subr.mxu0 0.0
    %8281 = vmatpush2.msra.mxu0 0.0
    %8282 = vmatprep.subr.mxu0 0.0
    %8283 = vmatpush2.msra.mxu0 0.0
    %8284 = vmatprep.subr.mxu0 0.0
    %8285 = vmatpush2.msra.mxu0 0.0
    %8286 = vmatprep.subr.mxu0 0.0
    %8287 = vmatpush2.msra.mxu0 0.0
    %8288 = vmatprep.subr.mxu0 0.0
    %8289 = vmatpush2.msra.mxu0 0.0
    %8290 = vmatprep.subr.mxu0 0.0
    %8291 = vmatpush2.msra.mxu0 0.0
    %8292 = vmatprep.subr.mxu0 0.0
    %8293 = vmatpush2.msra.mxu0 0.0
    %8294 = vmatprep.subr.mxu0 0.0
    %8295 = vmatpush2.msra.mxu0 0.0
    %8296 = vmatprep.subr.mxu0 0.0
    %8297 = vmatpush2.msra.mxu0 0.0
    %8298 = vmatprep.subr.mxu0 0.0
    %8299 = vmatpush2.msra.mxu0 0.0
    %8300 = vmatprep.subr.mxu0 0.0
    %8301 = vmatpush2.msra.mxu0 0.0
    %8302 = vmatprep.subr.mxu0 0.0
    %8303 = vmatpush2.msra.mxu0 0.0
    %8304 = vmatprep.subr.mxu0 0.0
    %8305 = vmatpush2.msra.mxu0 0.0
    %8306 = vmatprep.subr.mxu0 0.0
    %8307 = vmatpush2.msra.mxu0 0.0
    %8308 = vmatprep.subr.mxu0 0.0
    %8309 = vmatpush2.msra.mxu0 0.0
    %8310 = vmatprep.mubr.f32.mxu0 0.0
    %8311 = vmatmul.mubr.f32.gmra.mxu0 %v8238
    %v8312 = vpop.f32.mrf.mxu0
    %v8313 = vadd.f32 0.0, %v8312
    %v8314 = vpop.f32.mrf.mxu0
    %8315 = vmatprep.mubr.f32.mxu0 0.0
    %8316 = vmatmul.mubr.f32.gmra.mxu0 %v8241
    %v8317 = vpop.f32.mrf.mxu0
    %v8318 = vadd.f32 0.0, %v8317
    %v8319 = vpop.f32.mrf.mxu0
    %8320 = vmatprep.mubr.f32.mxu0 0.0
    %8321 = vmatmul.mubr.f32.gmra.mxu0 %v8244
    %v8322 = vpop.f32.mrf.mxu0
    %v8323 = vadd.f32 0.0, %v8322
    %v8324 = vpop.f32.mrf.mxu0
    %8325 = vdwg.mxu0
    %8326 = vmatprep.subr.mxu0 0.0
    %8327 = vmatpush1.msra.mxu0 0.0
    %8328 = vmatprep.subr.mxu0 0.0
    %8329 = vmatpush1.msra.mxu0 0.0
    %8330 = vmatprep.subr.mxu0 0.0
    %8331 = vmatpush1.msra.mxu0 0.0
    %8332 = vmatprep.subr.mxu0 0.0
    %8333 = vmatpush1.msra.mxu0 0.0
    %8334 = vmatprep.subr.mxu0 0.0
    %8335 = vmatpush1.msra.mxu0 0.0
    %8336 = vmatprep.subr.mxu0 0.0
    %8337 = vmatpush1.msra.mxu0 0.0
    %8338 = vmatprep.subr.mxu0 0.0
    %8339 = vmatpush1.msra.mxu0 0.0
    %8340 = vmatprep.subr.mxu0 0.0
    %8341 = vmatpush1.msra.mxu0 0.0
    %8342 = vmatprep.subr.mxu0 0.0
    %8343 = vmatpush1.msra.mxu0 0.0
    %8344 = vmatprep.subr.mxu0 0.0
    %8345 = vmatpush1.msra.mxu0 0.0
    %8346 = vmatprep.subr.mxu0 0.0
    %8347 = vmatpush1.msra.mxu0 0.0
    %8348 = vmatprep.subr.mxu0 0.0
    %8349 = vmatpush1.msra.mxu0 0.0
    %8350 = vmatprep.subr.mxu0 0.0
    %8351 = vmatpush1.msra.mxu0 0.0
    %8352 = vmatprep.subr.mxu0 0.0
    %8353 = vmatpush1.msra.mxu0 %v176
    %8354 = vmatprep.subr.mxu0 0.0
    %8355 = vmatpush1.msra.mxu0 %v175
    %8356 = vmatprep.subr.mxu0 0.0
    %8357 = vmatpush1.msra.mxu0 %v174
    %8358 = vmatprep.subr.mxu0 0.0
    %8359 = vmatpush2.msra.mxu0 0.0
    %8360 = vmatprep.subr.mxu0 0.0
    %8361 = vmatpush2.msra.mxu0 0.0
    %8362 = vmatprep.subr.mxu0 0.0
    %8363 = vmatpush2.msra.mxu0 0.0
    %8364 = vmatprep.subr.mxu0 0.0
    %8365 = vmatpush2.msra.mxu0 0.0
    %8366 = vmatprep.subr.mxu0 0.0
    %8367 = vmatpush2.msra.mxu0 0.0
    %8368 = vmatprep.subr.mxu0 0.0
    %8369 = vmatpush2.msra.mxu0 0.0
    %8370 = vmatprep.subr.mxu0 0.0
    %8371 = vmatpush2.msra.mxu0 0.0
    %8372 = vmatprep.subr.mxu0 0.0
    %8373 = vmatpush2.msra.mxu0 0.0
    %8374 = vmatprep.subr.mxu0 0.0
    %8375 = vmatpush2.msra.mxu0 0.0
    %8376 = vmatprep.subr.mxu0 0.0
    %8377 = vmatpush2.msra.mxu0 0.0
    %8378 = vmatprep.subr.mxu0 0.0
    %8379 = vmatpush2.msra.mxu0 0.0
    %8380 = vmatprep.subr.mxu0 0.0
    %8381 = vmatpush2.msra.mxu0 0.0
    %8382 = vmatprep.subr.mxu0 0.0
    %8383 = vmatpush2.msra.mxu0 0.0
    %8384 = vmatprep.subr.mxu0 0.0
    %8385 = vmatpush2.msra.mxu0 0.0
    %8386 = vmatprep.subr.mxu0 0.0
    %8387 = vmatpush2.msra.mxu0 0.0
    %8388 = vmatprep.subr.mxu0 0.0
    %8389 = vmatpush2.msra.mxu0 0.0
    %8390 = vmatprep.mubr.f32.mxu0 0.0
    %8391 = vmatmul.mubr.f32.gmra.mxu0 %v8238
    %v8392 = vpop.f32.mrf.mxu0
    %v8393 = vadd.f32 0.0, %v8392
    %v8394 = vpop.f32.mrf.mxu0
    %8395 = vmatprep.mubr.f32.mxu0 0.0
    %8396 = vmatmul.mubr.f32.gmra.mxu0 %v8241
    %v8397 = vpop.f32.mrf.mxu0
    %v8398 = vadd.f32 0.0, %v8397
    %v8399 = vpop.f32.mrf.mxu0
    %8400 = vmatprep.mubr.f32.mxu0 0.0
    %8401 = vmatmul.mubr.f32.gmra.mxu0 %v8244
    %v8402 = vpop.f32.mrf.mxu0
    %v8403 = vadd.f32 0.0, %v8402
    %v8404 = vpop.f32.mrf.mxu0
    %8405 = vdwg.mxu0
    %v8406 = vmax.f32 %v8313, %v8393
    %v8407 = vmax.f32 %v8318, %v8398
    %v8408 = vmax.f32 %v8323, %v8403
    %v8410 = vsel %vm1312, %v8408, 0
    %8412 = vmatprep.subr.mxu0 0.0
    %8413 = vmatpush1.msra.mxu0 0.0
    %8414 = vmatprep.subr.mxu0 0.0
    %8415 = vmatpush1.msra.mxu0 0.0
    %8416 = vmatprep.subr.mxu0 0.0
    %8417 = vmatpush1.msra.mxu0 0.0
    %8418 = vmatprep.subr.mxu0 0.0
    %8419 = vmatpush1.msra.mxu0 0.0
    %8420 = vmatprep.subr.mxu0 0.0
    %8421 = vmatpush1.msra.mxu0 0.0
    %8422 = vmatprep.subr.mxu0 0.0
    %8423 = vmatpush1.msra.mxu0 0.0
    %8424 = vmatprep.subr.mxu0 0.0
    %8425 = vmatpush1.msra.mxu0 0.0
    %8426 = vmatprep.subr.mxu0 0.0
    %8427 = vmatpush1.msra.mxu0 0.0
    %8428 = vmatprep.subr.mxu0 0.0
    %8429 = vmatpush1.msra.mxu0 0.0
    %8430 = vmatprep.subr.mxu0 0.0
    %8431 = vmatpush1.msra.mxu0 0.0
    %8432 = vmatprep.subr.mxu0 0.0
    %8433 = vmatpush1.msra.mxu0 0.0
    %8434 = vmatprep.subr.mxu0 0.0
    %8435 = vmatpush1.msra.mxu0 0.0
    %8436 = vmatprep.subr.mxu0 0.0
    %8437 = vmatpush1.msra.mxu0 0.0
    %8438 = vmatprep.subr.mxu0 0.0
    %8439 = vmatpush1.msra.mxu0 %v8410
    %8440 = vmatprep.subr.mxu0 0.0
    %8441 = vmatpush1.msra.mxu0 %v8407
    %8442 = vmatprep.subr.mxu0 0.0
    %8443 = vmatpush1.msra.mxu0 %v8406
    %8444 = vmatprep.subr.mxu0 0.0
    %8445 = vmatpush2.msra.mxu0 0.0
    %8446 = vmatprep.subr.mxu0 0.0
    %8447 = vmatpush2.msra.mxu0 0.0
    %8448 = vmatprep.subr.mxu0 0.0
    %8449 = vmatpush2.msra.mxu0 0.0
    %8450 = vmatprep.subr.mxu0 0.0
    %8451 = vmatpush2.msra.mxu0 0.0
    %8452 = vmatprep.subr.mxu0 0.0
    %8453 = vmatpush2.msra.mxu0 0.0
    %8454 = vmatprep.subr.mxu0 0.0
    %8455 = vmatpush2.msra.mxu0 0.0
    %8456 = vmatprep.subr.mxu0 0.0
    %8457 = vmatpush2.msra.mxu0 0.0
    %8458 = vmatprep.subr.mxu0 0.0
    %8459 = vmatpush2.msra.mxu0 0.0
    %8460 = vmatprep.subr.mxu0 0.0
    %8461 = vmatpush2.msra.mxu0 0.0
    %8462 = vmatprep.subr.mxu0 0.0
    %8463 = vmatpush2.msra.mxu0 0.0
    %8464 = vmatprep.subr.mxu0 0.0
    %8465 = vmatpush2.msra.mxu0 0.0
    %8466 = vmatprep.subr.mxu0 0.0
    %8467 = vmatpush2.msra.mxu0 0.0
    %8468 = vmatprep.subr.mxu0 0.0
    %8469 = vmatpush2.msra.mxu0 0.0
    %8470 = vmatprep.subr.mxu0 0.0
    %8471 = vmatpush2.msra.mxu0 0.0
    %8472 = vmatprep.subr.mxu0 0.0
    %8473 = vmatpush2.msra.mxu0 0.0
    %8474 = vmatprep.subr.mxu0 0.0
    %8475 = vmatpush2.msra.mxu0 0.0
    %8476 = vmatprep.mubr.f32.mxu0 0.0
    %8477 = vmatmul.mubr.f32.gmra.mxu0 %v1307
    %v8478 = vpop.f32.mrf.mxu0
    %v8479 = vadd.f32 0.0, %v8478
    %v8480 = vpop.f32.mrf.mxu0
    %8481 = vmatprep.mubr.f32.mxu0 0.0
    %8482 = vmatmul.mubr.f32.gmra.mxu0 %v1310
    %v8483 = vpop.f32.mrf.mxu0
    %v8484 = vadd.f32 0.0, %v8483
    %v8485 = vpop.f32.mrf.mxu0
    %8486 = vdwg.mxu0
    %8487 = vmatprep.subr.mxu0 0.0
    %8488 = vmatpush1.msra.mxu0 0.0
    %8489 = vmatprep.subr.mxu0 0.0
    %8490 = vmatpush1.msra.mxu0 0.0
    %8491 = vmatprep.subr.mxu0 0.0
    %8492 = vmatpush1.msra.mxu0 0.0
    %8493 = vmatprep.subr.mxu0 0.0
    %8494 = vmatpush1.msra.mxu0 0.0
    %8495 = vmatprep.subr.mxu0 0.0
    %8496 = vmatpush1.msra.mxu0 0.0
    %8497 = vmatprep.subr.mxu0 0.0
    %8498 = vmatpush1.msra.mxu0 0.0
    %8499 = vmatprep.subr.mxu0 0.0
    %8500 = vmatpush1.msra.mxu0 0.0
    %8501 = vmatprep.subr.mxu0 0.0
    %8502 = vmatpush1.msra.mxu0 0.0
    %8503 = vmatprep.subr.mxu0 0.0
    %8504 = vmatpush1.msra.mxu0 0.0
    %8505 = vmatprep.subr.mxu0 0.0
    %8506 = vmatpush1.msra.mxu0 0.0
    %8507 = vmatprep.subr.mxu0 0.0
    %8508 = vmatpush1.msra.mxu0 0.0
    %8509 = vmatprep.subr.mxu0 0.0
    %8510 = vmatpush1.msra.mxu0 0.0
    %8511 = vmatprep.subr.mxu0 0.0
    %8512 = vmatpush1.msra.mxu0 0.0
    %8513 = vmatprep.subr.mxu0 0.0
    %8514 = vmatpush1.msra.mxu0 %v8410
    %8515 = vmatprep.subr.mxu0 0.0
    %8516 = vmatpush1.msra.mxu0 %v8407
    %8517 = vmatprep.subr.mxu0 0.0
    %8518 = vmatpush1.msra.mxu0 %v8406
    %8519 = vmatprep.subr.mxu0 0.0
    %8520 = vmatpush2.msra.mxu0 0.0
    %8521 = vmatprep.subr.mxu0 0.0
    %8522 = vmatpush2.msra.mxu0 0.0
    %8523 = vmatprep.subr.mxu0 0.0
    %8524 = vmatpush2.msra.mxu0 0.0
    %8525 = vmatprep.subr.mxu0 0.0
    %8526 = vmatpush2.msra.mxu0 0.0
    %8527 = vmatprep.subr.mxu0 0.0
    %8528 = vmatpush2.msra.mxu0 0.0
    %8529 = vmatprep.subr.mxu0 0.0
    %8530 = vmatpush2.msra.mxu0 0.0
    %8531 = vmatprep.subr.mxu0 0.0
    %8532 = vmatpush2.msra.mxu0 0.0
    %8533 = vmatprep.subr.mxu0 0.0
    %8534 = vmatpush2.msra.mxu0 0.0
    %8535 = vmatprep.subr.mxu0 0.0
    %8536 = vmatpush2.msra.mxu0 0.0
    %8537 = vmatprep.subr.mxu0 0.0
    %8538 = vmatpush2.msra.mxu0 0.0
    %8539 = vmatprep.subr.mxu0 0.0
    %8540 = vmatpush2.msra.mxu0 0.0
    %8541 = vmatprep.subr.mxu0 0.0
    %8542 = vmatpush2.msra.mxu0 0.0
    %8543 = vmatprep.subr.mxu0 0.0
    %8544 = vmatpush2.msra.mxu0 0.0
    %8545 = vmatprep.subr.mxu0 0.0
    %8546 = vmatpush2.msra.mxu0 0.0
    %8547 = vmatprep.subr.mxu0 0.0
    %8548 = vmatpush2.msra.mxu0 0.0
    %8549 = vmatprep.subr.mxu0 0.0
    %8550 = vmatpush2.msra.mxu0 0.0
    %8551 = vmatprep.mubr.f32.mxu0 0.0
    %8552 = vmatmul.mubr.f32.gmra.mxu0 %v1392
    %v8553 = vpop.f32.mrf.mxu0
    %v8554 = vadd.f32 0.0, %v8553
    %v8555 = vpop.f32.mrf.mxu0
    %8556 = vmatprep.mubr.f32.mxu0 0.0
    %8557 = vmatmul.mubr.f32.gmra.mxu0 %v1395
    %v8558 = vpop.f32.mrf.mxu0
    %v8559 = vadd.f32 0.0, %v8558
    %v8560 = vpop.f32.mrf.mxu0
    %8561 = vdwg.mxu0
    %v8562 = vmax.f32 %v8479, %v8554
    %v8563 = vmax.f32 %v8484, %v8559
    %v8565 = vsel %vm1474, %v8562, 0
    %v8568 = vsel %vm1474, %v8563, 0
    %8570 = vmatprep.subr.mxu0 0.0
    %8571 = vmatpush1.msra.mxu0 0.0
    %8572 = vmatprep.subr.mxu0 0.0
    %8573 = vmatpush1.msra.mxu0 0.0
    %8574 = vmatprep.subr.mxu0 0.0
    %8575 = vmatpush1.msra.mxu0 0.0
    %8576 = vmatprep.subr.mxu0 0.0
    %8577 = vmatpush1.msra.mxu0 0.0
    %8578 = vmatprep.subr.mxu0 0.0
    %8579 = vmatpush1.msra.mxu0 0.0
    %8580 = vmatprep.subr.mxu0 0.0
    %8581 = vmatpush1.msra.mxu0 0.0
    %8582 = vmatprep.subr.mxu0 0.0
    %8583 = vmatpush1.msra.mxu0 0.0
    %8584 = vmatprep.subr.mxu0 0.0
    %8585 = vmatpush1.msra.mxu0 0.0
    %8586 = vmatprep.subr.mxu0 0.0
    %8587 = vmatpush1.msra.mxu0 0.0
    %8588 = vmatprep.subr.mxu0 0.0
    %8589 = vmatpush1.msra.mxu0 0.0
    %8590 = vmatprep.subr.mxu0 0.0
    %8591 = vmatpush1.msra.mxu0 0.0
    %8592 = vmatprep.subr.mxu0 0.0
    %8593 = vmatpush1.msra.mxu0 0.0
    %8594 = vmatprep.subr.mxu0 0.0
    %8595 = vmatpush1.msra.mxu0 0.0
    %8596 = vmatprep.subr.mxu0 0.0
    %8597 = vmatpush1.msra.mxu0 0.0
    %8598 = vmatprep.subr.mxu0 %v1486
    %8599 = vmatpush1.msra.mxu0 %v1483
    %8600 = vmatprep.subr.mxu0 %v190
    %8601 = vmatpush1.msra.mxu0 %v189
    %8602 = vmatprep.subr.mxu0 0.0
    %8603 = vmatpush2.msra.mxu0 0.0
    %8604 = vmatprep.subr.mxu0 0.0
    %8605 = vmatpush2.msra.mxu0 0.0
    %8606 = vmatprep.subr.mxu0 0.0
    %8607 = vmatpush2.msra.mxu0 0.0
    %8608 = vmatprep.subr.mxu0 0.0
    %8609 = vmatpush2.msra.mxu0 0.0
    %8610 = vmatprep.subr.mxu0 0.0
    %8611 = vmatpush2.msra.mxu0 0.0
    %8612 = vmatprep.subr.mxu0 0.0
    %8613 = vmatpush2.msra.mxu0 0.0
    %8614 = vmatprep.subr.mxu0 0.0
    %8615 = vmatpush2.msra.mxu0 0.0
    %8616 = vmatprep.subr.mxu0 0.0
    %8617 = vmatpush2.msra.mxu0 0.0
    %8618 = vmatprep.subr.mxu0 0.0
    %8619 = vmatpush2.msra.mxu0 0.0
    %8620 = vmatprep.subr.mxu0 0.0
    %8621 = vmatpush2.msra.mxu0 0.0
    %8622 = vmatprep.subr.mxu0 0.0
    %8623 = vmatpush2.msra.mxu0 0.0
    %8624 = vmatprep.subr.mxu0 0.0
    %8625 = vmatpush2.msra.mxu0 0.0
    %8626 = vmatprep.subr.mxu0 0.0
    %8627 = vmatpush2.msra.mxu0 0.0
    %8628 = vmatprep.subr.mxu0 0.0
    %8629 = vmatpush2.msra.mxu0 0.0
    %8630 = vmatprep.subr.mxu0 0.0
    %8631 = vmatpush2.msra.mxu0 0.0
    %8632 = vmatprep.subr.mxu0 0.0
    %8633 = vmatpush2.msra.mxu0 0.0
    %8634 = vmatprep.mubr.f32.mxu0 0.0
    %8635 = vmatmul.mubr.f32.gmra.mxu0 %v8565
    %v8636 = vpop.f32.mrf.mxu0
    %v8637 = vadd.f32 0.0, %v8636
    %v8638 = vpop.f32.mrf.mxu0
    %v8639 = vadd.f32 0.0, %v8638
    %8640 = vmatprep.mubr.f32.mxu0 0.0
    %8641 = vmatmul.mubr.f32.gmra.mxu0 %v8568
    %v8642 = vpop.f32.mrf.mxu0
    %v8643 = vadd.f32 0.0, %v8642
    %v8644 = vpop.f32.mrf.mxu0
    %v8645 = vadd.f32 0.0, %v8644
    %8646 = vdwg.mxu0
    %v8647 = vmul.f32 %v8637, %v193
    %v8648 = vmul.f32 %v8639, %v194
    %v8649 = vmul.f32 %v8643, %v195
    %v8650 = vmul.f32 %v8645, %v196
    %v8651 = vsel %vm1481, %v8649, 0.0
    %v8652 = vadd.f32 %v8647, %v8651
    %v8653 = vrot.slane %v8652, 4
    %v8654 = vadd.f32 %v8652, %v8653
    %v8655 = vrot.slane %v8654, 2
    %v8656 = vadd.f32 %v8654, %v8655
    %v8657 = vrot.slane %v8656, 1
    %v8658 = vadd.f32 %v8656, %v8657
    %v8659 = vsel %vm1577, %v8648, 0.0
    %v8660 = vsel %vm1579, %v8650, 0.0
    %v8661 = vadd.f32 %v8659, %v8660
    %v8662 = vrot.slane %v8661, 4
    %v8663 = vadd.f32 %v8661, %v8662
    %v8664 = vrot.slane %v8663, 2
    %v8665 = vadd.f32 %v8663, %v8664
    %v8666 = vrot.slane %v8665, 1
    %v8667 = vadd.f32 %v8665, %v8666
    %v8669 = vsel %vm1577, %v8667, 0
    %8671 = vmatprep.subr.mxu0 %v8032
    %8672 = vmatpush1.msra.mxu0 %v8031
    %8673 = vmatprep.subr.mxu0 %v8027
    %8674 = vmatpush1.msra.mxu0 %v8026
    %8675 = vmatprep.subr.mxu0 %v8022
    %8676 = vmatpush1.msra.mxu0 %v8021
    %8677 = vmatprep.subr.mxu0 %v8017
    %8678 = vmatpush1.msra.mxu0 %v8016
    %8679 = vmatprep.subr.mxu0 %v8012
    %8680 = vmatpush1.msra.mxu0 %v8011
    %8681 = vmatprep.subr.mxu0 %v8007
    %8682 = vmatpush1.msra.mxu0 %v8006
    %8683 = vmatprep.subr.mxu0 %v8002
    %8684 = vmatpush1.msra.mxu0 %v8001
    %8685 = vmatprep.subr.mxu0 %v7997
    %8686 = vmatpush1.msra.mxu0 %v7996
    %8687 = vmatprep.subr.mxu0 %v7992
    %8688 = vmatpush1.msra.mxu0 %v7991
    %8689 = vmatprep.subr.mxu0 %v7987
    %8690 = vmatpush1.msra.mxu0 %v7986
    %8691 = vmatprep.subr.mxu0 %v7982
    %8692 = vmatpush1.msra.mxu0 %v7981
    %8693 = vmatprep.subr.mxu0 %v7977
    %8694 = vmatpush1.msra.mxu0 %v7976
    %8695 = vmatprep.subr.mxu0 %v7972
    %8696 = vmatpush1.msra.mxu0 %v7971
    %8697 = vmatprep.subr.mxu0 %v7967
    %8698 = vmatpush1.msra.mxu0 %v7966
    %8699 = vmatprep.subr.mxu0 %v7962
    %8700 = vmatpush1.msra.mxu0 %v7961
    %8701 = vmatprep.subr.mxu0 %v7957
    %8702 = vmatpush1.msra.mxu0 %v7956
    %8703 = vmatprep.subr.mxu0 0.0
    %8704 = vmatpush2.msra.mxu0 0.0
    %8705 = vmatprep.subr.mxu0 0.0
    %8706 = vmatpush2.msra.mxu0 0.0
    %8707 = vmatprep.subr.mxu0 0.0
    %8708 = vmatpush2.msra.mxu0 0.0
    %8709 = vmatprep.subr.mxu0 0.0
    %8710 = vmatpush2.msra.mxu0 0.0
    %8711 = vmatprep.subr.mxu0 0.0
    %8712 = vmatpush2.msra.mxu0 0.0
    %8713 = vmatprep.subr.mxu0 0.0
    %8714 = vmatpush2.msra.mxu0 0.0
    %8715 = vmatprep.subr.mxu0 0.0
    %8716 = vmatpush2.msra.mxu0 0.0
    %8717 = vmatprep.subr.mxu0 0.0
    %8718 = vmatpush2.msra.mxu0 0.0
    %8719 = vmatprep.subr.mxu0 0.0
    %8720 = vmatpush2.msra.mxu0 0.0
    %8721 = vmatprep.subr.mxu0 0.0
    %8722 = vmatpush2.msra.mxu0 0.0
    %8723 = vmatprep.subr.mxu0 0.0
    %8724 = vmatpush2.msra.mxu0 0.0
    %8725 = vmatprep.subr.mxu0 0.0
    %8726 = vmatpush2.msra.mxu0 0.0
    %8727 = vmatprep.subr.mxu0 0.0
    %8728 = vmatpush2.msra.mxu0 0.0
    %8729 = vmatprep.subr.mxu0 0.0
    %8730 = vmatpush2.msra.mxu0 0.0
    %8731 = vmatprep.subr.mxu0 %v8042
    %8732 = vmatpush2.msra.mxu0 %v8041
    %8733 = vmatprep.subr.mxu0 %v8037
    %8734 = vmatpush2.msra.mxu0 %v8036
    %8735 = vmatprep.mubr.f32.mxu0 %v8669
    %8736 = vmatmul.mubr.f32.gmra.mxu0 %v8658
    %v8737 = vpop.f32.mrf.mxu0
    %v8738 = vadd.f32 0.0, %v8737
    %v8739 = vpop.f32.mrf.mxu0
    %v8740 = vadd.f32 0.0, %v8739
    %8741 = vdwg.mxu0
    %8742 = vmatprep.subr.mxu0 %v8034
    %8743 = vmatpush1.msra.mxu0 %v8033
    %8744 = vmatprep.subr.mxu0 %v8029
    %8745 = vmatpush1.msra.mxu0 %v8028
    %8746 = vmatprep.subr.mxu0 %v8024
    %8747 = vmatpush1.msra.mxu0 %v8023
    %8748 = vmatprep.subr.mxu0 %v8019
    %8749 = vmatpush1.msra.mxu0 %v8018
    %8750 = vmatprep.subr.mxu0 %v8014
    %8751 = vmatpush1.msra.mxu0 %v8013
    %8752 = vmatprep.subr.mxu0 %v8009
    %8753 = vmatpush1.msra.mxu0 %v8008
    %8754 = vmatprep.subr.mxu0 %v8004
    %8755 = vmatpush1.msra.mxu0 %v8003
    %8756 = vmatprep.subr.mxu0 %v7999
    %8757 = vmatpush1.msra.mxu0 %v7998
    %8758 = vmatprep.subr.mxu0 %v7994
    %8759 = vmatpush1.msra.mxu0 %v7993
    %8760 = vmatprep.subr.mxu0 %v7989
    %8761 = vmatpush1.msra.mxu0 %v7988
    %8762 = vmatprep.subr.mxu0 %v7984
    %8763 = vmatpush1.msra.mxu0 %v7983
    %8764 = vmatprep.subr.mxu0 %v7979
    %8765 = vmatpush1.msra.mxu0 %v7978
    %8766 = vmatprep.subr.mxu0 %v7974
    %8767 = vmatpush1.msra.mxu0 %v7973
    %8768 = vmatprep.subr.mxu0 %v7969
    %8769 = vmatpush1.msra.mxu0 %v7968
    %8770 = vmatprep.subr.mxu0 %v7964
    %8771 = vmatpush1.msra.mxu0 %v7963
    %8772 = vmatprep.subr.mxu0 %v7959
    %8773 = vmatpush1.msra.mxu0 %v7958
    %8774 = vmatprep.subr.mxu0 0.0
    %8775 = vmatpush2.msra.mxu0 0.0
    %8776 = vmatprep.subr.mxu0 0.0
    %8777 = vmatpush2.msra.mxu0 0.0
    %8778 = vmatprep.subr.mxu0 0.0
    %8779 = vmatpush2.msra.mxu0 0.0
    %8780 = vmatprep.subr.mxu0 0.0
    %8781 = vmatpush2.msra.mxu0 0.0
    %8782 = vmatprep.subr.mxu0 0.0
    %8783 = vmatpush2.msra.mxu0 0.0
    %8784 = vmatprep.subr.mxu0 0.0
    %8785 = vmatpush2.msra.mxu0 0.0
    %8786 = vmatprep.subr.mxu0 0.0
    %8787 = vmatpush2.msra.mxu0 0.0
    %8788 = vmatprep.subr.mxu0 0.0
    %8789 = vmatpush2.msra.mxu0 0.0
    %8790 = vmatprep.subr.mxu0 0.0
    %8791 = vmatpush2.msra.mxu0 0.0
    %8792 = vmatprep.subr.mxu0 0.0
    %8793 = vmatpush2.msra.mxu0 0.0
    %8794 = vmatprep.subr.mxu0 0.0
    %8795 = vmatpush2.msra.mxu0 0.0
    %8796 = vmatprep.subr.mxu0 0.0
    %8797 = vmatpush2.msra.mxu0 0.0
    %8798 = vmatprep.subr.mxu0 0.0
    %8799 = vmatpush2.msra.mxu0 0.0
    %8800 = vmatprep.subr.mxu0 0.0
    %8801 = vmatpush2.msra.mxu0 0.0
    %8802 = vmatprep.subr.mxu0 %v8044
    %8803 = vmatpush2.msra.mxu0 %v8043
    %8804 = vmatprep.subr.mxu0 %v8039
    %8805 = vmatpush2.msra.mxu0 %v8038
    %8806 = vmatprep.mubr.f32.mxu0 %v8669
    %8807 = vmatmul.mubr.f32.gmra.mxu0 %v8658
    %v8808 = vpop.f32.mrf.mxu0
    %v8809 = vadd.f32 0.0, %v8808
    %v8810 = vpop.f32.mrf.mxu0
    %v8811 = vadd.f32 0.0, %v8810
    %8812 = vdwg.mxu0
    %8813 = vmatprep.subr.mxu0 0.0
    %8814 = vmatpush1.msra.mxu0 %v8035
    %8815 = vmatprep.subr.mxu0 0.0
    %8816 = vmatpush1.msra.mxu0 %v8030
    %8817 = vmatprep.subr.mxu0 0.0
    %8818 = vmatpush1.msra.mxu0 %v8025
    %8819 = vmatprep.subr.mxu0 0.0
    %8820 = vmatpush1.msra.mxu0 %v8020
    %8821 = vmatprep.subr.mxu0 0.0
    %8822 = vmatpush1.msra.mxu0 %v8015
    %8823 = vmatprep.subr.mxu0 0.0
    %8824 = vmatpush1.msra.mxu0 %v8010
    %8825 = vmatprep.subr.mxu0 0.0
    %8826 = vmatpush1.msra.mxu0 %v8005
    %8827 = vmatprep.subr.mxu0 0.0
    %8828 = vmatpush1.msra.mxu0 %v8000
    %8829 = vmatprep.subr.mxu0 0.0
    %8830 = vmatpush1.msra.mxu0 %v7995
    %8831 = vmatprep.subr.mxu0 0.0
    %8832 = vmatpush1.msra.mxu0 %v7990
    %8833 = vmatprep.subr.mxu0 0.0
    %8834 = vmatpush1.msra.mxu0 %v7985
    %8835 = vmatprep.subr.mxu0 0.0
    %8836 = vmatpush1.msra.mxu0 %v7980
    %8837 = vmatprep.subr.mxu0 0.0
    %8838 = vmatpush1.msra.mxu0 %v7975
    %8839 = vmatprep.subr.mxu0 0.0
    %8840 = vmatpush1.msra.mxu0 %v7970
    %8841 = vmatprep.subr.mxu0 0.0
    %8842 = vmatpush1.msra.mxu0 %v7965
    %8843 = vmatprep.subr.mxu0 0.0
    %8844 = vmatpush1.msra.mxu0 %v7960
    %8845 = vmatprep.subr.mxu0 0.0
    %8846 = vmatpush2.msra.mxu0 0.0
    %8847 = vmatprep.subr.mxu0 0.0
    %8848 = vmatpush2.msra.mxu0 0.0
    %8849 = vmatprep.subr.mxu0 0.0
    %8850 = vmatpush2.msra.mxu0 0.0
    %8851 = vmatprep.subr.mxu0 0.0
    %8852 = vmatpush2.msra.mxu0 0.0
    %8853 = vmatprep.subr.mxu0 0.0
    %8854 = vmatpush2.msra.mxu0 0.0
    %8855 = vmatprep.subr.mxu0 0.0
    %8856 = vmatpush2.msra.mxu0 0.0
    %8857 = vmatprep.subr.mxu0 0.0
    %8858 = vmatpush2.msra.mxu0 0.0
    %8859 = vmatprep.subr.mxu0 0.0
    %8860 = vmatpush2.msra.mxu0 0.0
    %8861 = vmatprep.subr.mxu0 0.0
    %8862 = vmatpush2.msra.mxu0 0.0
    %8863 = vmatprep.subr.mxu0 0.0
    %8864 = vmatpush2.msra.mxu0 0.0
    %8865 = vmatprep.subr.mxu0 0.0
    %8866 = vmatpush2.msra.mxu0 0.0
    %8867 = vmatprep.subr.mxu0 0.0
    %8868 = vmatpush2.msra.mxu0 0.0
    %8869 = vmatprep.subr.mxu0 0.0
    %8870 = vmatpush2.msra.mxu0 0.0
    %8871 = vmatprep.subr.mxu0 0.0
    %8872 = vmatpush2.msra.mxu0 0.0
    %8873 = vmatprep.subr.mxu0 0.0
    %8874 = vmatpush2.msra.mxu0 %v8045
    %8875 = vmatprep.subr.mxu0 0.0
    %8876 = vmatpush2.msra.mxu0 %v8040
    %8877 = vmatprep.mubr.f32.mxu0 %v8669
    %8878 = vmatmul.mubr.f32.gmra.mxu0 %v8658
    %v8879 = vpop.f32.mrf.mxu0
    %v8880 = vadd.f32 0.0, %v8879
    %v8881 = vpop.f32.mrf.mxu0
    %8882 = vdwg.mxu0
    %v8888 = vcombine.low %v8738, %v8740
    %v8889 = vcombine.low %v8809, %v8811
    %v8891 = vunpack.c.l.s4 1966171168
    %v8892 = vunpack.c.0.s8 %v8891
    %v8893 = vlaneseq
    %v8894 = vshrl.u32 %v8893, 7
    %v8895 = vsub.s32 %v8892, %v8894
    %v8896 = vrot.slane %v8888, %v8895
    %v8898 = vunpack.c.l.s4 1966171168
    %v8899 = vunpack.c.0.s8 %v8898
    %v8900 = vlaneseq
    %v8901 = vshrl.u32 %v8900, 7
    %v8902 = vsub.s32 %v8899, %v8901
    %v8903 = vrot.slane %v8889, %v8902
    %v8905 = vunpack.c.l.s4 1966171168
    %v8906 = vunpack.c.0.s8 %v8905
    %v8907 = vlaneseq
    %v8908 = vshrl.u32 %v8907, 7
    %v8909 = vsub.s32 %v8906, %v8908
    %v8910 = vrot.slane %v8880, %v8909
    %v8911 = vcombine.low %v8896, %v8903
    %v8913 = vunpack.c.l.s4 1966171168
    %v8914 = vunpack.c.0.s8 %v8913
    %v8915 = vlaneseq
    %v8916 = vshrl.u32 %v8915, 7
    %v8917 = vsub.s32 %v8914, %v8916
    %v8918 = vrot.slane %v8911, %v8917
    %v8920 = vunpack.c.l.s4 1966171168
    %v8921 = vunpack.c.0.s8 %v8920
    %v8922 = vlaneseq
    %v8923 = vshrl.u32 %v8922, 7
    %v8924 = vsub.s32 %v8921, %v8923
    %v8925 = vrot.slane %v8910, %v8924
    %v8926 = vcombine.low %v8918, %v8925
    %v8928 = vadd.f32 %v6568, %v8926
    %v8930 = vsel %vm941, %v7938, 0
    %v8933 = vsel %vm941, %v7939, 0
    %v8936 = vsel %vm941, %v7940, 0
    %8938 = vmatprep.subr.mxu0 0.0
    %8939 = vmatpush1.msra.mxu0 0.0
    %8940 = vmatprep.subr.mxu0 0.0
    %8941 = vmatpush1.msra.mxu0 0.0
    %8942 = vmatprep.subr.mxu0 0.0
    %8943 = vmatpush1.msra.mxu0 0.0
    %8944 = vmatprep.subr.mxu0 0.0
    %8945 = vmatpush1.msra.mxu0 0.0
    %8946 = vmatprep.subr.mxu0 0.0
    %8947 = vmatpush1.msra.mxu0 0.0
    %8948 = vmatprep.subr.mxu0 0.0
    %8949 = vmatpush1.msra.mxu0 0.0
    %8950 = vmatprep.subr.mxu0 0.0
    %8951 = vmatpush1.msra.mxu0 0.0
    %8952 = vmatprep.subr.mxu0 0.0
    %8953 = vmatpush1.msra.mxu0 0.0
    %8954 = vmatprep.subr.mxu0 0.0
    %8955 = vmatpush1.msra.mxu0 0.0
    %8956 = vmatprep.subr.mxu0 0.0
    %8957 = vmatpush1.msra.mxu0 0.0
    %8958 = vmatprep.subr.mxu0 0.0
    %8959 = vmatpush1.msra.mxu0 0.0
    %8960 = vmatprep.subr.mxu0 0.0
    %8961 = vmatpush1.msra.mxu0 0.0
    %8962 = vmatprep.subr.mxu0 0.0
    %8963 = vmatpush1.msra.mxu0 0.0
    %8964 = vmatprep.subr.mxu0 0.0
    %8965 = vmatpush1.msra.mxu0 %v146
    %8966 = vmatprep.subr.mxu0 0.0
    %8967 = vmatpush1.msra.mxu0 %v145
    %8968 = vmatprep.subr.mxu0 0.0
    %8969 = vmatpush1.msra.mxu0 %v144
    %8970 = vmatprep.subr.mxu0 0.0
    %8971 = vmatpush2.msra.mxu0 0.0
    %8972 = vmatprep.subr.mxu0 0.0
    %8973 = vmatpush2.msra.mxu0 0.0
    %8974 = vmatprep.subr.mxu0 0.0
    %8975 = vmatpush2.msra.mxu0 0.0
    %8976 = vmatprep.subr.mxu0 0.0
    %8977 = vmatpush2.msra.mxu0 0.0
    %8978 = vmatprep.subr.mxu0 0.0
    %8979 = vmatpush2.msra.mxu0 0.0
    %8980 = vmatprep.subr.mxu0 0.0
    %8981 = vmatpush2.msra.mxu0 0.0
    %8982 = vmatprep.subr.mxu0 0.0
    %8983 = vmatpush2.msra.mxu0 0.0
    %8984 = vmatprep.subr.mxu0 0.0
    %8985 = vmatpush2.msra.mxu0 0.0
    %8986 = vmatprep.subr.mxu0 0.0
    %8987 = vmatpush2.msra.mxu0 0.0
    %8988 = vmatprep.subr.mxu0 0.0
    %8989 = vmatpush2.msra.mxu0 0.0
    %8990 = vmatprep.subr.mxu0 0.0
    %8991 = vmatpush2.msra.mxu0 0.0
    %8992 = vmatprep.subr.mxu0 0.0
    %8993 = vmatpush2.msra.mxu0 0.0
    %8994 = vmatprep.subr.mxu0 0.0
    %8995 = vmatpush2.msra.mxu0 0.0
    %8996 = vmatprep.subr.mxu0 0.0
    %8997 = vmatpush2.msra.mxu0 0.0
    %8998 = vmatprep.subr.mxu0 0.0
    %8999 = vmatpush2.msra.mxu0 0.0
    %9000 = vmatprep.subr.mxu0 0.0
    %9001 = vmatpush2.msra.mxu0 0.0
    %9002 = vmatprep.mubr.f32.mxu0 0.0
    %9003 = vmatmul.mubr.f32.gmra.mxu0 %v8930
    %v9004 = vpop.f32.mrf.mxu0
    %v9005 = vadd.f32 0.0, %v9004
    %v9006 = vpop.f32.mrf.mxu0
    %9007 = vmatprep.mubr.f32.mxu0 0.0
    %9008 = vmatmul.mubr.f32.gmra.mxu0 %v8933
    %v9009 = vpop.f32.mrf.mxu0
    %v9010 = vadd.f32 0.0, %v9009
    %v9011 = vpop.f32.mrf.mxu0
    %9012 = vmatprep.mubr.f32.mxu0 0.0
    %9013 = vmatmul.mubr.f32.gmra.mxu0 %v8936
    %v9014 = vpop.f32.mrf.mxu0
    %v9015 = vadd.f32 0.0, %v9014
    %v9016 = vpop.f32.mrf.mxu0
    %9017 = vdwg.mxu0
    %v9018 = vadd.f32 %v7924, %v9005
    %v9019 = vadd.f32 %v7925, %v9010
    %v9020 = vadd.f32 %v7926, %v9015
    %v9022 = vsel %vm941, %v7952, 0
    %v9025 = vsel %vm941, %v7953, 0
    %v9028 = vsel %vm941, %v7954, 0
    %9030 = vmatprep.subr.mxu0 0.0
    %9031 = vmatpush1.msra.mxu0 0.0
    %9032 = vmatprep.subr.mxu0 0.0
    %9033 = vmatpush1.msra.mxu0 0.0
    %9034 = vmatprep.subr.mxu0 0.0
    %9035 = vmatpush1.msra.mxu0 0.0
    %9036 = vmatprep.subr.mxu0 0.0
    %9037 = vmatpush1.msra.mxu0 0.0
    %9038 = vmatprep.subr.mxu0 0.0
    %9039 = vmatpush1.msra.mxu0 0.0
    %9040 = vmatprep.subr.mxu0 0.0
    %9041 = vmatpush1.msra.mxu0 0.0
    %9042 = vmatprep.subr.mxu0 0.0
    %9043 = vmatpush1.msra.mxu0 0.0
    %9044 = vmatprep.subr.mxu0 0.0
    %9045 = vmatpush1.msra.mxu0 0.0
    %9046 = vmatprep.subr.mxu0 0.0
    %9047 = vmatpush1.msra.mxu0 0.0
    %9048 = vmatprep.subr.mxu0 0.0
    %9049 = vmatpush1.msra.mxu0 0.0
    %9050 = vmatprep.subr.mxu0 0.0
    %9051 = vmatpush1.msra.mxu0 0.0
    %9052 = vmatprep.subr.mxu0 0.0
    %9053 = vmatpush1.msra.mxu0 0.0
    %9054 = vmatprep.subr.mxu0 0.0
    %9055 = vmatpush1.msra.mxu0 0.0
    %9056 = vmatprep.subr.mxu0 0.0
    %9057 = vmatpush1.msra.mxu0 %v153
    %9058 = vmatprep.subr.mxu0 0.0
    %9059 = vmatpush1.msra.mxu0 %v152
    %9060 = vmatprep.subr.mxu0 0.0
    %9061 = vmatpush1.msra.mxu0 %v151
    %9062 = vmatprep.subr.mxu0 0.0
    %9063 = vmatpush2.msra.mxu0 0.0
    %9064 = vmatprep.subr.mxu0 0.0
    %9065 = vmatpush2.msra.mxu0 0.0
    %9066 = vmatprep.subr.mxu0 0.0
    %9067 = vmatpush2.msra.mxu0 0.0
    %9068 = vmatprep.subr.mxu0 0.0
    %9069 = vmatpush2.msra.mxu0 0.0
    %9070 = vmatprep.subr.mxu0 0.0
    %9071 = vmatpush2.msra.mxu0 0.0
    %9072 = vmatprep.subr.mxu0 0.0
    %9073 = vmatpush2.msra.mxu0 0.0
    %9074 = vmatprep.subr.mxu0 0.0
    %9075 = vmatpush2.msra.mxu0 0.0
    %9076 = vmatprep.subr.mxu0 0.0
    %9077 = vmatpush2.msra.mxu0 0.0
    %9078 = vmatprep.subr.mxu0 0.0
    %9079 = vmatpush2.msra.mxu0 0.0
    %9080 = vmatprep.subr.mxu0 0.0
    %9081 = vmatpush2.msra.mxu0 0.0
    %9082 = vmatprep.subr.mxu0 0.0
    %9083 = vmatpush2.msra.mxu0 0.0
    %9084 = vmatprep.subr.mxu0 0.0
    %9085 = vmatpush2.msra.mxu0 0.0
    %9086 = vmatprep.subr.mxu0 0.0
    %9087 = vmatpush2.msra.mxu0 0.0
    %9088 = vmatprep.subr.mxu0 0.0
    %9089 = vmatpush2.msra.mxu0 0.0
    %9090 = vmatprep.subr.mxu0 0.0
    %9091 = vmatpush2.msra.mxu0 0.0
    %9092 = vmatprep.subr.mxu0 0.0
    %9093 = vmatpush2.msra.mxu0 0.0
    %9094 = vmatprep.mubr.f32.mxu0 0.0
    %9095 = vmatmul.mubr.f32.gmra.mxu0 %v9022
    %v9096 = vpop.f32.mrf.mxu0
    %v9097 = vadd.f32 0.0, %v9096
    %v9098 = vpop.f32.mrf.mxu0
    %9099 = vmatprep.mubr.f32.mxu0 0.0
    %9100 = vmatmul.mubr.f32.gmra.mxu0 %v9025
    %v9101 = vpop.f32.mrf.mxu0
    %v9102 = vadd.f32 0.0, %v9101
    %v9103 = vpop.f32.mrf.mxu0
    %9104 = vmatprep.mubr.f32.mxu0 0.0
    %9105 = vmatmul.mubr.f32.gmra.mxu0 %v9028
    %v9106 = vpop.f32.mrf.mxu0
    %v9107 = vadd.f32 0.0, %v9106
    %v9108 = vpop.f32.mrf.mxu0
    %9109 = vdwg.mxu0
    %v9110 = vadd.f32 %v9018, %v9097
    %v9111 = vadd.f32 %v9019, %v9102
    %v9112 = vadd.f32 %v9020, %v9107
    %v9113 = vadd.f32 %v9110, %v8230
    %v9114 = vadd.f32 %v9111, %v8230
    %v9115 = vadd.f32 %v9112, %v8230
    %v9116 = vmax.f32 %v9113, 0.0
    %v9117 = vmax.f32 %v9114, 0.0
    %v9118 = vmax.f32 %v9115, 0.0
    %v9120 = vsel %vm941, %v9116, 0
    %v9123 = vsel %vm941, %v9117, 0
    %v9126 = vsel %vm941, %v9118, 0
    %9128 = vmatprep.subr.mxu0 0.0
    %9129 = vmatpush1.msra.mxu0 0.0
    %9130 = vmatprep.subr.mxu0 0.0
    %9131 = vmatpush1.msra.mxu0 0.0
    %9132 = vmatprep.subr.mxu0 0.0
    %9133 = vmatpush1.msra.mxu0 0.0
    %9134 = vmatprep.subr.mxu0 0.0
    %9135 = vmatpush1.msra.mxu0 0.0
    %9136 = vmatprep.subr.mxu0 0.0
    %9137 = vmatpush1.msra.mxu0 0.0
    %9138 = vmatprep.subr.mxu0 0.0
    %9139 = vmatpush1.msra.mxu0 0.0
    %9140 = vmatprep.subr.mxu0 0.0
    %9141 = vmatpush1.msra.mxu0 0.0
    %9142 = vmatprep.subr.mxu0 0.0
    %9143 = vmatpush1.msra.mxu0 0.0
    %9144 = vmatprep.subr.mxu0 0.0
    %9145 = vmatpush1.msra.mxu0 0.0
    %9146 = vmatprep.subr.mxu0 0.0
    %9147 = vmatpush1.msra.mxu0 0.0
    %9148 = vmatprep.subr.mxu0 0.0
    %9149 = vmatpush1.msra.mxu0 0.0
    %9150 = vmatprep.subr.mxu0 0.0
    %9151 = vmatpush1.msra.mxu0 0.0
    %9152 = vmatprep.subr.mxu0 0.0
    %9153 = vmatpush1.msra.mxu0 0.0
    %9154 = vmatprep.subr.mxu0 0.0
    %9155 = vmatpush1.msra.mxu0 %v167
    %9156 = vmatprep.subr.mxu0 0.0
    %9157 = vmatpush1.msra.mxu0 %v166
    %9158 = vmatprep.subr.mxu0 0.0
    %9159 = vmatpush1.msra.mxu0 %v165
    %9160 = vmatprep.subr.mxu0 0.0
    %9161 = vmatpush2.msra.mxu0 0.0
    %9162 = vmatprep.subr.mxu0 0.0
    %9163 = vmatpush2.msra.mxu0 0.0
    %9164 = vmatprep.subr.mxu0 0.0
    %9165 = vmatpush2.msra.mxu0 0.0
    %9166 = vmatprep.subr.mxu0 0.0
    %9167 = vmatpush2.msra.mxu0 0.0
    %9168 = vmatprep.subr.mxu0 0.0
    %9169 = vmatpush2.msra.mxu0 0.0
    %9170 = vmatprep.subr.mxu0 0.0
    %9171 = vmatpush2.msra.mxu0 0.0
    %9172 = vmatprep.subr.mxu0 0.0
    %9173 = vmatpush2.msra.mxu0 0.0
    %9174 = vmatprep.subr.mxu0 0.0
    %9175 = vmatpush2.msra.mxu0 0.0
    %9176 = vmatprep.subr.mxu0 0.0
    %9177 = vmatpush2.msra.mxu0 0.0
    %9178 = vmatprep.subr.mxu0 0.0
    %9179 = vmatpush2.msra.mxu0 0.0
    %9180 = vmatprep.subr.mxu0 0.0
    %9181 = vmatpush2.msra.mxu0 0.0
    %9182 = vmatprep.subr.mxu0 0.0
    %9183 = vmatpush2.msra.mxu0 0.0
    %9184 = vmatprep.subr.mxu0 0.0
    %9185 = vmatpush2.msra.mxu0 0.0
    %9186 = vmatprep.subr.mxu0 0.0
    %9187 = vmatpush2.msra.mxu0 0.0
    %9188 = vmatprep.subr.mxu0 0.0
    %9189 = vmatpush2.msra.mxu0 0.0
    %9190 = vmatprep.subr.mxu0 0.0
    %9191 = vmatpush2.msra.mxu0 0.0
    %9192 = vmatprep.mubr.f32.mxu0 0.0
    %9193 = vmatmul.mubr.f32.gmra.mxu0 %v9120
    %v9194 = vpop.f32.mrf.mxu0
    %v9195 = vadd.f32 0.0, %v9194
    %v9196 = vpop.f32.mrf.mxu0
    %9197 = vmatprep.mubr.f32.mxu0 0.0
    %9198 = vmatmul.mubr.f32.gmra.mxu0 %v9123
    %v9199 = vpop.f32.mrf.mxu0
    %v9200 = vadd.f32 0.0, %v9199
    %v9201 = vpop.f32.mrf.mxu0
    %9202 = vmatprep.mubr.f32.mxu0 0.0
    %9203 = vmatmul.mubr.f32.gmra.mxu0 %v9126
    %v9204 = vpop.f32.mrf.mxu0
    %v9205 = vadd.f32 0.0, %v9204
    %v9206 = vpop.f32.mrf.mxu0
    %9207 = vdwg.mxu0
    %9208 = vmatprep.subr.mxu0 0.0
    %9209 = vmatpush1.msra.mxu0 0.0
    %9210 = vmatprep.subr.mxu0 0.0
    %9211 = vmatpush1.msra.mxu0 0.0
    %9212 = vmatprep.subr.mxu0 0.0
    %9213 = vmatpush1.msra.mxu0 0.0
    %9214 = vmatprep.subr.mxu0 0.0
    %9215 = vmatpush1.msra.mxu0 0.0
    %9216 = vmatprep.subr.mxu0 0.0
    %9217 = vmatpush1.msra.mxu0 0.0
    %9218 = vmatprep.subr.mxu0 0.0
    %9219 = vmatpush1.msra.mxu0 0.0
    %9220 = vmatprep.subr.mxu0 0.0
    %9221 = vmatpush1.msra.mxu0 0.0
    %9222 = vmatprep.subr.mxu0 0.0
    %9223 = vmatpush1.msra.mxu0 0.0
    %9224 = vmatprep.subr.mxu0 0.0
    %9225 = vmatpush1.msra.mxu0 0.0
    %9226 = vmatprep.subr.mxu0 0.0
    %9227 = vmatpush1.msra.mxu0 0.0
    %9228 = vmatprep.subr.mxu0 0.0
    %9229 = vmatpush1.msra.mxu0 0.0
    %9230 = vmatprep.subr.mxu0 0.0
    %9231 = vmatpush1.msra.mxu0 0.0
    %9232 = vmatprep.subr.mxu0 0.0
    %9233 = vmatpush1.msra.mxu0 0.0
    %9234 = vmatprep.subr.mxu0 0.0
    %9235 = vmatpush1.msra.mxu0 %v176
    %9236 = vmatprep.subr.mxu0 0.0
    %9237 = vmatpush1.msra.mxu0 %v175
    %9238 = vmatprep.subr.mxu0 0.0
    %9239 = vmatpush1.msra.mxu0 %v174
    %9240 = vmatprep.subr.mxu0 0.0
    %9241 = vmatpush2.msra.mxu0 0.0
    %9242 = vmatprep.subr.mxu0 0.0
    %9243 = vmatpush2.msra.mxu0 0.0
    %9244 = vmatprep.subr.mxu0 0.0
    %9245 = vmatpush2.msra.mxu0 0.0
    %9246 = vmatprep.subr.mxu0 0.0
    %9247 = vmatpush2.msra.mxu0 0.0
    %9248 = vmatprep.subr.mxu0 0.0
    %9249 = vmatpush2.msra.mxu0 0.0
    %9250 = vmatprep.subr.mxu0 0.0
    %9251 = vmatpush2.msra.mxu0 0.0
    %9252 = vmatprep.subr.mxu0 0.0
    %9253 = vmatpush2.msra.mxu0 0.0
    %9254 = vmatprep.subr.mxu0 0.0
    %9255 = vmatpush2.msra.mxu0 0.0
    %9256 = vmatprep.subr.mxu0 0.0
    %9257 = vmatpush2.msra.mxu0 0.0
    %9258 = vmatprep.subr.mxu0 0.0
    %9259 = vmatpush2.msra.mxu0 0.0
    %9260 = vmatprep.subr.mxu0 0.0
    %9261 = vmatpush2.msra.mxu0 0.0
    %9262 = vmatprep.subr.mxu0 0.0
    %9263 = vmatpush2.msra.mxu0 0.0
    %9264 = vmatprep.subr.mxu0 0.0
    %9265 = vmatpush2.msra.mxu0 0.0
    %9266 = vmatprep.subr.mxu0 0.0
    %9267 = vmatpush2.msra.mxu0 0.0
    %9268 = vmatprep.subr.mxu0 0.0
    %9269 = vmatpush2.msra.mxu0 0.0
    %9270 = vmatprep.subr.mxu0 0.0
    %9271 = vmatpush2.msra.mxu0 0.0
    %9272 = vmatprep.mubr.f32.mxu0 0.0
    %9273 = vmatmul.mubr.f32.gmra.mxu0 %v9120
    %v9274 = vpop.f32.mrf.mxu0
    %v9275 = vadd.f32 0.0, %v9274
    %v9276 = vpop.f32.mrf.mxu0
    %9277 = vmatprep.mubr.f32.mxu0 0.0
    %9278 = vmatmul.mubr.f32.gmra.mxu0 %v9123
    %v9279 = vpop.f32.mrf.mxu0
    %v9280 = vadd.f32 0.0, %v9279
    %v9281 = vpop.f32.mrf.mxu0
    %9282 = vmatprep.mubr.f32.mxu0 0.0
    %9283 = vmatmul.mubr.f32.gmra.mxu0 %v9126
    %v9284 = vpop.f32.mrf.mxu0
    %v9285 = vadd.f32 0.0, %v9284
    %v9286 = vpop.f32.mrf.mxu0
    %9287 = vdwg.mxu0
    %v9288 = vmax.f32 %v9195, %v9275
    %v9289 = vmax.f32 %v9200, %v9280
    %v9290 = vmax.f32 %v9205, %v9285
    %v9292 = vsel %vm1312, %v9290, 0
    %9294 = vmatprep.subr.mxu0 0.0
    %9295 = vmatpush1.msra.mxu0 0.0
    %9296 = vmatprep.subr.mxu0 0.0
    %9297 = vmatpush1.msra.mxu0 0.0
    %9298 = vmatprep.subr.mxu0 0.0
    %9299 = vmatpush1.msra.mxu0 0.0
    %9300 = vmatprep.subr.mxu0 0.0
    %9301 = vmatpush1.msra.mxu0 0.0
    %9302 = vmatprep.subr.mxu0 0.0
    %9303 = vmatpush1.msra.mxu0 0.0
    %9304 = vmatprep.subr.mxu0 0.0
    %9305 = vmatpush1.msra.mxu0 0.0
    %9306 = vmatprep.subr.mxu0 0.0
    %9307 = vmatpush1.msra.mxu0 0.0
    %9308 = vmatprep.subr.mxu0 0.0
    %9309 = vmatpush1.msra.mxu0 0.0
    %9310 = vmatprep.subr.mxu0 0.0
    %9311 = vmatpush1.msra.mxu0 0.0
    %9312 = vmatprep.subr.mxu0 0.0
    %9313 = vmatpush1.msra.mxu0 0.0
    %9314 = vmatprep.subr.mxu0 0.0
    %9315 = vmatpush1.msra.mxu0 0.0
    %9316 = vmatprep.subr.mxu0 0.0
    %9317 = vmatpush1.msra.mxu0 0.0
    %9318 = vmatprep.subr.mxu0 0.0
    %9319 = vmatpush1.msra.mxu0 0.0
    %9320 = vmatprep.subr.mxu0 0.0
    %9321 = vmatpush1.msra.mxu0 %v9292
    %9322 = vmatprep.subr.mxu0 0.0
    %9323 = vmatpush1.msra.mxu0 %v9289
    %9324 = vmatprep.subr.mxu0 0.0
    %9325 = vmatpush1.msra.mxu0 %v9288
    %9326 = vmatprep.subr.mxu0 0.0
    %9327 = vmatpush2.msra.mxu0 0.0
    %9328 = vmatprep.subr.mxu0 0.0
    %9329 = vmatpush2.msra.mxu0 0.0
    %9330 = vmatprep.subr.mxu0 0.0
    %9331 = vmatpush2.msra.mxu0 0.0
    %9332 = vmatprep.subr.mxu0 0.0
    %9333 = vmatpush2.msra.mxu0 0.0
    %9334 = vmatprep.subr.mxu0 0.0
    %9335 = vmatpush2.msra.mxu0 0.0
    %9336 = vmatprep.subr.mxu0 0.0
    %9337 = vmatpush2.msra.mxu0 0.0
    %9338 = vmatprep.subr.mxu0 0.0
    %9339 = vmatpush2.msra.mxu0 0.0
    %9340 = vmatprep.subr.mxu0 0.0
    %9341 = vmatpush2.msra.mxu0 0.0
    %9342 = vmatprep.subr.mxu0 0.0
    %9343 = vmatpush2.msra.mxu0 0.0
    %9344 = vmatprep.subr.mxu0 0.0
    %9345 = vmatpush2.msra.mxu0 0.0
    %9346 = vmatprep.subr.mxu0 0.0
    %9347 = vmatpush2.msra.mxu0 0.0
    %9348 = vmatprep.subr.mxu0 0.0
    %9349 = vmatpush2.msra.mxu0 0.0
    %9350 = vmatprep.subr.mxu0 0.0
    %9351 = vmatpush2.msra.mxu0 0.0
    %9352 = vmatprep.subr.mxu0 0.0
    %9353 = vmatpush2.msra.mxu0 0.0
    %9354 = vmatprep.subr.mxu0 0.0
    %9355 = vmatpush2.msra.mxu0 0.0
    %9356 = vmatprep.subr.mxu0 0.0
    %9357 = vmatpush2.msra.mxu0 0.0
    %9358 = vmatprep.mubr.f32.mxu0 0.0
    %9359 = vmatmul.mubr.f32.gmra.mxu0 %v1307
    %v9360 = vpop.f32.mrf.mxu0
    %v9361 = vadd.f32 0.0, %v9360
    %v9362 = vpop.f32.mrf.mxu0
    %9363 = vmatprep.mubr.f32.mxu0 0.0
    %9364 = vmatmul.mubr.f32.gmra.mxu0 %v1310
    %v9365 = vpop.f32.mrf.mxu0
    %v9366 = vadd.f32 0.0, %v9365
    %v9367 = vpop.f32.mrf.mxu0
    %9368 = vdwg.mxu0
    %9369 = vmatprep.subr.mxu0 0.0
    %9370 = vmatpush1.msra.mxu0 0.0
    %9371 = vmatprep.subr.mxu0 0.0
    %9372 = vmatpush1.msra.mxu0 0.0
    %9373 = vmatprep.subr.mxu0 0.0
    %9374 = vmatpush1.msra.mxu0 0.0
    %9375 = vmatprep.subr.mxu0 0.0
    %9376 = vmatpush1.msra.mxu0 0.0
    %9377 = vmatprep.subr.mxu0 0.0
    %9378 = vmatpush1.msra.mxu0 0.0
    %9379 = vmatprep.subr.mxu0 0.0
    %9380 = vmatpush1.msra.mxu0 0.0
    %9381 = vmatprep.subr.mxu0 0.0
    %9382 = vmatpush1.msra.mxu0 0.0
    %9383 = vmatprep.subr.mxu0 0.0
    %9384 = vmatpush1.msra.mxu0 0.0
    %9385 = vmatprep.subr.mxu0 0.0
    %9386 = vmatpush1.msra.mxu0 0.0
    %9387 = vmatprep.subr.mxu0 0.0
    %9388 = vmatpush1.msra.mxu0 0.0
    %9389 = vmatprep.subr.mxu0 0.0
    %9390 = vmatpush1.msra.mxu0 0.0
    %9391 = vmatprep.subr.mxu0 0.0
    %9392 = vmatpush1.msra.mxu0 0.0
    %9393 = vmatprep.subr.mxu0 0.0
    %9394 = vmatpush1.msra.mxu0 0.0
    %9395 = vmatprep.subr.mxu0 0.0
    %9396 = vmatpush1.msra.mxu0 %v9292
    %9397 = vmatprep.subr.mxu0 0.0
    %9398 = vmatpush1.msra.mxu0 %v9289
    %9399 = vmatprep.subr.mxu0 0.0
    %9400 = vmatpush1.msra.mxu0 %v9288
    %9401 = vmatprep.subr.mxu0 0.0
    %9402 = vmatpush2.msra.mxu0 0.0
    %9403 = vmatprep.subr.mxu0 0.0
    %9404 = vmatpush2.msra.mxu0 0.0
    %9405 = vmatprep.subr.mxu0 0.0
    %9406 = vmatpush2.msra.mxu0 0.0
    %9407 = vmatprep.subr.mxu0 0.0
    %9408 = vmatpush2.msra.mxu0 0.0
    %9409 = vmatprep.subr.mxu0 0.0
    %9410 = vmatpush2.msra.mxu0 0.0
    %9411 = vmatprep.subr.mxu0 0.0
    %9412 = vmatpush2.msra.mxu0 0.0
    %9413 = vmatprep.subr.mxu0 0.0
    %9414 = vmatpush2.msra.mxu0 0.0
    %9415 = vmatprep.subr.mxu0 0.0
    %9416 = vmatpush2.msra.mxu0 0.0
    %9417 = vmatprep.subr.mxu0 0.0
    %9418 = vmatpush2.msra.mxu0 0.0
    %9419 = vmatprep.subr.mxu0 0.0
    %9420 = vmatpush2.msra.mxu0 0.0
    %9421 = vmatprep.subr.mxu0 0.0
    %9422 = vmatpush2.msra.mxu0 0.0
    %9423 = vmatprep.subr.mxu0 0.0
    %9424 = vmatpush2.msra.mxu0 0.0
    %9425 = vmatprep.subr.mxu0 0.0
    %9426 = vmatpush2.msra.mxu0 0.0
    %9427 = vmatprep.subr.mxu0 0.0
    %9428 = vmatpush2.msra.mxu0 0.0
    %9429 = vmatprep.subr.mxu0 0.0
    %9430 = vmatpush2.msra.mxu0 0.0
    %9431 = vmatprep.subr.mxu0 0.0
    %9432 = vmatpush2.msra.mxu0 0.0
    %9433 = vmatprep.mubr.f32.mxu0 0.0
    %9434 = vmatmul.mubr.f32.gmra.mxu0 %v1392
    %v9435 = vpop.f32.mrf.mxu0
    %v9436 = vadd.f32 0.0, %v9435
    %v9437 = vpop.f32.mrf.mxu0
    %9438 = vmatprep.mubr.f32.mxu0 0.0
    %9439 = vmatmul.mubr.f32.gmra.mxu0 %v1395
    %v9440 = vpop.f32.mrf.mxu0
    %v9441 = vadd.f32 0.0, %v9440
    %v9442 = vpop.f32.mrf.mxu0
    %9443 = vdwg.mxu0
    %v9444 = vmax.f32 %v9361, %v9436
    %v9445 = vmax.f32 %v9366, %v9441
    %v9447 = vsel %vm1474, %v9444, 0
    %v9450 = vsel %vm1474, %v9445, 0
    %9452 = vmatprep.subr.mxu0 0.0
    %9453 = vmatpush1.msra.mxu0 0.0
    %9454 = vmatprep.subr.mxu0 0.0
    %9455 = vmatpush1.msra.mxu0 0.0
    %9456 = vmatprep.subr.mxu0 0.0
    %9457 = vmatpush1.msra.mxu0 0.0
    %9458 = vmatprep.subr.mxu0 0.0
    %9459 = vmatpush1.msra.mxu0 0.0
    %9460 = vmatprep.subr.mxu0 0.0
    %9461 = vmatpush1.msra.mxu0 0.0
    %9462 = vmatprep.subr.mxu0 0.0
    %9463 = vmatpush1.msra.mxu0 0.0
    %9464 = vmatprep.subr.mxu0 0.0
    %9465 = vmatpush1.msra.mxu0 0.0
    %9466 = vmatprep.subr.mxu0 0.0
    %9467 = vmatpush1.msra.mxu0 0.0
    %9468 = vmatprep.subr.mxu0 0.0
    %9469 = vmatpush1.msra.mxu0 0.0
    %9470 = vmatprep.subr.mxu0 0.0
    %9471 = vmatpush1.msra.mxu0 0.0
    %9472 = vmatprep.subr.mxu0 0.0
    %9473 = vmatpush1.msra.mxu0 0.0
    %9474 = vmatprep.subr.mxu0 0.0
    %9475 = vmatpush1.msra.mxu0 0.0
    %9476 = vmatprep.subr.mxu0 0.0
    %9477 = vmatpush1.msra.mxu0 0.0
    %9478 = vmatprep.subr.mxu0 0.0
    %9479 = vmatpush1.msra.mxu0 0.0
    %9480 = vmatprep.subr.mxu0 %v1486
    %9481 = vmatpush1.msra.mxu0 %v1483
    %9482 = vmatprep.subr.mxu0 %v190
    %9483 = vmatpush1.msra.mxu0 %v189
    %9484 = vmatprep.subr.mxu0 0.0
    %9485 = vmatpush2.msra.mxu0 0.0
    %9486 = vmatprep.subr.mxu0 0.0
    %9487 = vmatpush2.msra.mxu0 0.0
    %9488 = vmatprep.subr.mxu0 0.0
    %9489 = vmatpush2.msra.mxu0 0.0
    %9490 = vmatprep.subr.mxu0 0.0
    %9491 = vmatpush2.msra.mxu0 0.0
    %9492 = vmatprep.subr.mxu0 0.0
    %9493 = vmatpush2.msra.mxu0 0.0
    %9494 = vmatprep.subr.mxu0 0.0
    %9495 = vmatpush2.msra.mxu0 0.0
    %9496 = vmatprep.subr.mxu0 0.0
    %9497 = vmatpush2.msra.mxu0 0.0
    %9498 = vmatprep.subr.mxu0 0.0
    %9499 = vmatpush2.msra.mxu0 0.0
    %9500 = vmatprep.subr.mxu0 0.0
    %9501 = vmatpush2.msra.mxu0 0.0
    %9502 = vmatprep.subr.mxu0 0.0
    %9503 = vmatpush2.msra.mxu0 0.0
    %9504 = vmatprep.subr.mxu0 0.0
    %9505 = vmatpush2.msra.mxu0 0.0
    %9506 = vmatprep.subr.mxu0 0.0
    %9507 = vmatpush2.msra.mxu0 0.0
    %9508 = vmatprep.subr.mxu0 0.0
    %9509 = vmatpush2.msra.mxu0 0.0
    %9510 = vmatprep.subr.mxu0 0.0
    %9511 = vmatpush2.msra.mxu0 0.0
    %9512 = vmatprep.subr.mxu0 0.0
    %9513 = vmatpush2.msra.mxu0 0.0
    %9514 = vmatprep.subr.mxu0 0.0
    %9515 = vmatpush2.msra.mxu0 0.0
    %9516 = vmatprep.mubr.f32.mxu0 0.0
    %9517 = vmatmul.mubr.f32.gmra.mxu0 %v9447
    %v9518 = vpop.f32.mrf.mxu0
    %v9519 = vadd.f32 0.0, %v9518
    %v9520 = vpop.f32.mrf.mxu0
    %v9521 = vadd.f32 0.0, %v9520
    %9522 = vmatprep.mubr.f32.mxu0 0.0
    %9523 = vmatmul.mubr.f32.gmra.mxu0 %v9450
    %v9524 = vpop.f32.mrf.mxu0
    %v9525 = vadd.f32 0.0, %v9524
    %v9526 = vpop.f32.mrf.mxu0
    %v9527 = vadd.f32 0.0, %v9526
    %9528 = vdwg.mxu0
    %v9529 = vmul.f32 %v9519, %v193
    %v9530 = vmul.f32 %v9521, %v194
    %v9531 = vmul.f32 %v9525, %v195
    %v9532 = vmul.f32 %v9527, %v196
    %v9533 = vsel %vm1481, %v9531, 0.0
    %v9534 = vadd.f32 %v9529, %v9533
    %v9535 = vrot.slane %v9534, 4
    %v9536 = vadd.f32 %v9534, %v9535
    %v9537 = vrot.slane %v9536, 2
    %v9538 = vadd.f32 %v9536, %v9537
    %v9539 = vrot.slane %v9538, 1
    %v9540 = vadd.f32 %v9538, %v9539
    %v9541 = vsel %vm1577, %v9530, 0.0
    %v9542 = vsel %vm1579, %v9532, 0.0
    %v9543 = vadd.f32 %v9541, %v9542
    %v9544 = vrot.slane %v9543, 4
    %v9545 = vadd.f32 %v9543, %v9544
    %v9546 = vrot.slane %v9545, 2
    %v9547 = vadd.f32 %v9545, %v9546
    %v9548 = vrot.slane %v9547, 1
    %v9549 = vadd.f32 %v9547, %v9548
    %v9551 = vsel %vm1577, %v9549, 0
    %9553 = vmatprep.subr.mxu0 %v8032
    %9554 = vmatpush1.msra.mxu0 %v8031
    %9555 = vmatprep.subr.mxu0 %v8027
    %9556 = vmatpush1.msra.mxu0 %v8026
    %9557 = vmatprep.subr.mxu0 %v8022
    %9558 = vmatpush1.msra.mxu0 %v8021
    %9559 = vmatprep.subr.mxu0 %v8017
    %9560 = vmatpush1.msra.mxu0 %v8016
    %9561 = vmatprep.subr.mxu0 %v8012
    %9562 = vmatpush1.msra.mxu0 %v8011
    %9563 = vmatprep.subr.mxu0 %v8007
    %9564 = vmatpush1.msra.mxu0 %v8006
    %9565 = vmatprep.subr.mxu0 %v8002
    %9566 = vmatpush1.msra.mxu0 %v8001
    %9567 = vmatprep.subr.mxu0 %v7997
    %9568 = vmatpush1.msra.mxu0 %v7996
    %9569 = vmatprep.subr.mxu0 %v7992
    %9570 = vmatpush1.msra.mxu0 %v7991
    %9571 = vmatprep.subr.mxu0 %v7987
    %9572 = vmatpush1.msra.mxu0 %v7986
    %9573 = vmatprep.subr.mxu0 %v7982
    %9574 = vmatpush1.msra.mxu0 %v7981
    %9575 = vmatprep.subr.mxu0 %v7977
    %9576 = vmatpush1.msra.mxu0 %v7976
    %9577 = vmatprep.subr.mxu0 %v7972
    %9578 = vmatpush1.msra.mxu0 %v7971
    %9579 = vmatprep.subr.mxu0 %v7967
    %9580 = vmatpush1.msra.mxu0 %v7966
    %9581 = vmatprep.subr.mxu0 %v7962
    %9582 = vmatpush1.msra.mxu0 %v7961
    %9583 = vmatprep.subr.mxu0 %v7957
    %9584 = vmatpush1.msra.mxu0 %v7956
    %9585 = vmatprep.subr.mxu0 0.0
    %9586 = vmatpush2.msra.mxu0 0.0
    %9587 = vmatprep.subr.mxu0 0.0
    %9588 = vmatpush2.msra.mxu0 0.0
    %9589 = vmatprep.subr.mxu0 0.0
    %9590 = vmatpush2.msra.mxu0 0.0
    %9591 = vmatprep.subr.mxu0 0.0
    %9592 = vmatpush2.msra.mxu0 0.0
    %9593 = vmatprep.subr.mxu0 0.0
    %9594 = vmatpush2.msra.mxu0 0.0
    %9595 = vmatprep.subr.mxu0 0.0
    %9596 = vmatpush2.msra.mxu0 0.0
    %9597 = vmatprep.subr.mxu0 0.0
    %9598 = vmatpush2.msra.mxu0 0.0
    %9599 = vmatprep.subr.mxu0 0.0
    %9600 = vmatpush2.msra.mxu0 0.0
    %9601 = vmatprep.subr.mxu0 0.0
    %9602 = vmatpush2.msra.mxu0 0.0
    %9603 = vmatprep.subr.mxu0 0.0
    %9604 = vmatpush2.msra.mxu0 0.0
    %9605 = vmatprep.subr.mxu0 0.0
    %9606 = vmatpush2.msra.mxu0 0.0
    %9607 = vmatprep.subr.mxu0 0.0
    %9608 = vmatpush2.msra.mxu0 0.0
    %9609 = vmatprep.subr.mxu0 0.0
    %9610 = vmatpush2.msra.mxu0 0.0
    %9611 = vmatprep.subr.mxu0 0.0
    %9612 = vmatpush2.msra.mxu0 0.0
    %9613 = vmatprep.subr.mxu0 %v8042
    %9614 = vmatpush2.msra.mxu0 %v8041
    %9615 = vmatprep.subr.mxu0 %v8037
    %9616 = vmatpush2.msra.mxu0 %v8036
    %9617 = vmatprep.mubr.f32.mxu0 %v9551
    %9618 = vmatmul.mubr.f32.gmra.mxu0 %v9540
    %v9619 = vpop.f32.mrf.mxu0
    %v9620 = vadd.f32 0.0, %v9619
    %v9621 = vpop.f32.mrf.mxu0
    %v9622 = vadd.f32 0.0, %v9621
    %9623 = vdwg.mxu0
    %9624 = vmatprep.subr.mxu0 %v8034
    %9625 = vmatpush1.msra.mxu0 %v8033
    %9626 = vmatprep.subr.mxu0 %v8029
    %9627 = vmatpush1.msra.mxu0 %v8028
    %9628 = vmatprep.subr.mxu0 %v8024
    %9629 = vmatpush1.msra.mxu0 %v8023
    %9630 = vmatprep.subr.mxu0 %v8019
    %9631 = vmatpush1.msra.mxu0 %v8018
    %9632 = vmatprep.subr.mxu0 %v8014
    %9633 = vmatpush1.msra.mxu0 %v8013
    %9634 = vmatprep.subr.mxu0 %v8009
    %9635 = vmatpush1.msra.mxu0 %v8008
    %9636 = vmatprep.subr.mxu0 %v8004
    %9637 = vmatpush1.msra.mxu0 %v8003
    %9638 = vmatprep.subr.mxu0 %v7999
    %9639 = vmatpush1.msra.mxu0 %v7998
    %9640 = vmatprep.subr.mxu0 %v7994
    %9641 = vmatpush1.msra.mxu0 %v7993
    %9642 = vmatprep.subr.mxu0 %v7989
    %9643 = vmatpush1.msra.mxu0 %v7988
    %9644 = vmatprep.subr.mxu0 %v7984
    %9645 = vmatpush1.msra.mxu0 %v7983
    %9646 = vmatprep.subr.mxu0 %v7979
    %9647 = vmatpush1.msra.mxu0 %v7978
    %9648 = vmatprep.subr.mxu0 %v7974
    %9649 = vmatpush1.msra.mxu0 %v7973
    %9650 = vmatprep.subr.mxu0 %v7969
    %9651 = vmatpush1.msra.mxu0 %v7968
    %9652 = vmatprep.subr.mxu0 %v7964
    %9653 = vmatpush1.msra.mxu0 %v7963
    %9654 = vmatprep.subr.mxu0 %v7959
    %9655 = vmatpush1.msra.mxu0 %v7958
    %9656 = vmatprep.subr.mxu0 0.0
    %9657 = vmatpush2.msra.mxu0 0.0
    %9658 = vmatprep.subr.mxu0 0.0
    %9659 = vmatpush2.msra.mxu0 0.0
    %9660 = vmatprep.subr.mxu0 0.0
    %9661 = vmatpush2.msra.mxu0 0.0
    %9662 = vmatprep.subr.mxu0 0.0
    %9663 = vmatpush2.msra.mxu0 0.0
    %9664 = vmatprep.subr.mxu0 0.0
    %9665 = vmatpush2.msra.mxu0 0.0
    %9666 = vmatprep.subr.mxu0 0.0
    %9667 = vmatpush2.msra.mxu0 0.0
    %9668 = vmatprep.subr.mxu0 0.0
    %9669 = vmatpush2.msra.mxu0 0.0
    %9670 = vmatprep.subr.mxu0 0.0
    %9671 = vmatpush2.msra.mxu0 0.0
    %9672 = vmatprep.subr.mxu0 0.0
    %9673 = vmatpush2.msra.mxu0 0.0
    %9674 = vmatprep.subr.mxu0 0.0
    %9675 = vmatpush2.msra.mxu0 0.0
    %9676 = vmatprep.subr.mxu0 0.0
    %9677 = vmatpush2.msra.mxu0 0.0
    %9678 = vmatprep.subr.mxu0 0.0
    %9679 = vmatpush2.msra.mxu0 0.0
    %9680 = vmatprep.subr.mxu0 0.0
    %9681 = vmatpush2.msra.mxu0 0.0
    %9682 = vmatprep.subr.mxu0 0.0
    %9683 = vmatpush2.msra.mxu0 0.0
    %9684 = vmatprep.subr.mxu0 %v8044
    %9685 = vmatpush2.msra.mxu0 %v8043
    %9686 = vmatprep.subr.mxu0 %v8039
    %9687 = vmatpush2.msra.mxu0 %v8038
    %9688 = vmatprep.mubr.f32.mxu0 %v9551
    %9689 = vmatmul.mubr.f32.gmra.mxu0 %v9540
    %v9690 = vpop.f32.mrf.mxu0
    %v9691 = vadd.f32 0.0, %v9690
    %v9692 = vpop.f32.mrf.mxu0
    %v9693 = vadd.f32 0.0, %v9692
    %9694 = vdwg.mxu0
    %9695 = vmatprep.subr.mxu0 0.0
    %9696 = vmatpush1.msra.mxu0 %v8035
    %9697 = vmatprep.subr.mxu0 0.0
    %9698 = vmatpush1.msra.mxu0 %v8030
    %9699 = vmatprep.subr.mxu0 0.0
    %9700 = vmatpush1.msra.mxu0 %v8025
    %9701 = vmatprep.subr.mxu0 0.0
    %9702 = vmatpush1.msra.mxu0 %v8020
    %9703 = vmatprep.subr.mxu0 0.0
    %9704 = vmatpush1.msra.mxu0 %v8015
    %9705 = vmatprep.subr.mxu0 0.0
    %9706 = vmatpush1.msra.mxu0 %v8010
    %9707 = vmatprep.subr.mxu0 0.0
    %9708 = vmatpush1.msra.mxu0 %v8005
    %9709 = vmatprep.subr.mxu0 0.0
    %9710 = vmatpush1.msra.mxu0 %v8000
    %9711 = vmatprep.subr.mxu0 0.0
    %9712 = vmatpush1.msra.mxu0 %v7995
    %9713 = vmatprep.subr.mxu0 0.0
    %9714 = vmatpush1.msra.mxu0 %v7990
    %9715 = vmatprep.subr.mxu0 0.0
    %9716 = vmatpush1.msra.mxu0 %v7985
    %9717 = vmatprep.subr.mxu0 0.0
    %9718 = vmatpush1.msra.mxu0 %v7980
    %9719 = vmatprep.subr.mxu0 0.0
    %9720 = vmatpush1.msra.mxu0 %v7975
    %9721 = vmatprep.subr.mxu0 0.0
    %9722 = vmatpush1.msra.mxu0 %v7970
    %9723 = vmatprep.subr.mxu0 0.0
    %9724 = vmatpush1.msra.mxu0 %v7965
    %9725 = vmatprep.subr.mxu0 0.0
    %9726 = vmatpush1.msra.mxu0 %v7960
    %9727 = vmatprep.subr.mxu0 0.0
    %9728 = vmatpush2.msra.mxu0 0.0
    %9729 = vmatprep.subr.mxu0 0.0
    %9730 = vmatpush2.msra.mxu0 0.0
    %9731 = vmatprep.subr.mxu0 0.0
    %9732 = vmatpush2.msra.mxu0 0.0
    %9733 = vmatprep.subr.mxu0 0.0
    %9734 = vmatpush2.msra.mxu0 0.0
    %9735 = vmatprep.subr.mxu0 0.0
    %9736 = vmatpush2.msra.mxu0 0.0
    %9737 = vmatprep.subr.mxu0 0.0
    %9738 = vmatpush2.msra.mxu0 0.0
    %9739 = vmatprep.subr.mxu0 0.0
    %9740 = vmatpush2.msra.mxu0 0.0
    %9741 = vmatprep.subr.mxu0 0.0
    %9742 = vmatpush2.msra.mxu0 0.0
    %9743 = vmatprep.subr.mxu0 0.0
    %9744 = vmatpush2.msra.mxu0 0.0
    %9745 = vmatprep.subr.mxu0 0.0
    %9746 = vmatpush2.msra.mxu0 0.0
    %9747 = vmatprep.subr.mxu0 0.0
    %9748 = vmatpush2.msra.mxu0 0.0
    %9749 = vmatprep.subr.mxu0 0.0
    %9750 = vmatpush2.msra.mxu0 0.0
    %9751 = vmatprep.subr.mxu0 0.0
    %9752 = vmatpush2.msra.mxu0 0.0
    %9753 = vmatprep.subr.mxu0 0.0
    %9754 = vmatpush2.msra.mxu0 0.0
    %9755 = vmatprep.subr.mxu0 0.0
    %9756 = vmatpush2.msra.mxu0 %v8045
    %9757 = vmatprep.subr.mxu0 0.0
    %9758 = vmatpush2.msra.mxu0 %v8040
    %9759 = vmatprep.mubr.f32.mxu0 %v9551
    %9760 = vmatmul.mubr.f32.gmra.mxu0 %v9540
    %v9761 = vpop.f32.mrf.mxu0
    %v9762 = vadd.f32 0.0, %v9761
    %v9763 = vpop.f32.mrf.mxu0
    %9764 = vdwg.mxu0
    %v9770 = vcombine.low %v9620, %v9622
    %v9771 = vcombine.low %v9691, %v9693
    %v9773 = vunpack.c.l.s4 1966171168
    %v9774 = vunpack.c.0.s8 %v9773
    %v9775 = vlaneseq
    %v9776 = vshrl.u32 %v9775, 7
    %v9777 = vsub.s32 %v9774, %v9776
    %v9778 = vrot.slane %v9770, %v9777
    %v9780 = vunpack.c.l.s4 1966171168
    %v9781 = vunpack.c.0.s8 %v9780
    %v9782 = vlaneseq
    %v9783 = vshrl.u32 %v9782, 7
    %v9784 = vsub.s32 %v9781, %v9783
    %v9785 = vrot.slane %v9771, %v9784
    %v9787 = vunpack.c.l.s4 1966171168
    %v9788 = vunpack.c.0.s8 %v9787
    %v9789 = vlaneseq
    %v9790 = vshrl.u32 %v9789, 7
    %v9791 = vsub.s32 %v9788, %v9790
    %v9792 = vrot.slane %v9762, %v9791
    %v9793 = vcombine.low %v9778, %v9785
    %v9795 = vunpack.c.l.s4 1966171168
    %v9796 = vunpack.c.0.s8 %v9795
    %v9797 = vlaneseq
    %v9798 = vshrl.u32 %v9797, 7
    %v9799 = vsub.s32 %v9796, %v9798
    %v9800 = vrot.slane %v9793, %v9799
    %v9802 = vunpack.c.l.s4 1966171168
    %v9803 = vunpack.c.0.s8 %v9802
    %v9804 = vlaneseq
    %v9805 = vshrl.u32 %v9804, 7
    %v9806 = vsub.s32 %v9803, %v9805
    %v9807 = vrot.slane %v9792, %v9806
    %v9808 = vcombine.low %v9800, %v9807
    %v9810 = vadd.f32 %v7450, %v9808
    %v9812 = vlaneseq
    %v9813 = vshrl.u32 %v9812, 7
    %v9814 = vsub.s32 0, %v9813
    %v9815 = vrot.slane %v8928, %v9814
    %v9816 = vlaneseq
    %v9817 = vshrl.u32 %v9816, 7
    %v9818 = vsub.s32 1, %v9817
    %v9819 = vrot.slane %v8928, %v9818
    %v9820 = vlaneseq
    %v9821 = vshrl.u32 %v9820, 7
    %v9822 = vsub.s32 2, %v9821
    %v9823 = vrot.slane %v8928, %v9822
    %v9824 = vlaneseq
    %v9825 = vshrl.u32 %v9824, 7
    %v9826 = vsub.s32 3, %v9825
    %v9827 = vrot.slane %v8928, %v9826
    %v9828 = vlaneseq
    %v9829 = vshrl.u32 %v9828, 7
    %v9830 = vsub.s32 4, %v9829
    %v9831 = vrot.slane %v8928, %v9830
    %vm9836 = vcmask 523264
    %v9837 = vsel %vm9836, %v9831, 0
    %9839 = vmatprep.subr.mxu0 0.0
    %9840 = vmatpush1.msra.mxu0 %v213
    %9841 = vmatprep.subr.mxu0 0.0
    %9842 = vmatpush1.msra.mxu0 %v212
    %9843 = vmatprep.subr.mxu0 0.0
    %9844 = vmatpush1.msra.mxu0 %v211
    %9845 = vmatprep.subr.mxu0 0.0
    %9846 = vmatpush1.msra.mxu0 %v210
    %9847 = vmatprep.subr.mxu0 0.0
    %9848 = vmatpush1.msra.mxu0 %v209
    %9849 = vmatprep.subr.mxu0 0.0
    %9850 = vmatpush1.msra.mxu0 %v208
    %9851 = vmatprep.subr.mxu0 0.0
    %9852 = vmatpush1.msra.mxu0 %v207
    %9853 = vmatprep.subr.mxu0 0.0
    %9854 = vmatpush1.msra.mxu0 %v206
    %9855 = vmatprep.subr.mxu0 0.0
    %9856 = vmatpush1.msra.mxu0 %v205
    %9857 = vmatprep.subr.mxu0 0.0
    %9858 = vmatpush1.msra.mxu0 %v204
    %9859 = vmatprep.subr.mxu0 0.0
    %9860 = vmatpush1.msra.mxu0 %v203
    %9861 = vmatprep.subr.mxu0 0.0
    %9862 = vmatpush1.msra.mxu0 %v202
    %9863 = vmatprep.subr.mxu0 0.0
    %9864 = vmatpush1.msra.mxu0 %v201
    %9865 = vmatprep.subr.mxu0 0.0
    %9866 = vmatpush1.msra.mxu0 %v200
    %9867 = vmatprep.subr.mxu0 0.0
    %9868 = vmatpush1.msra.mxu0 %v199
    %9869 = vmatprep.subr.mxu0 0.0
    %9870 = vmatpush1.msra.mxu0 %v198
    %9871 = vmatprep.subr.mxu0 0.0
    %9872 = vmatpush2.msra.mxu0 %v229
    %9873 = vmatprep.subr.mxu0 0.0
    %9874 = vmatpush2.msra.mxu0 %v228
    %9875 = vmatprep.subr.mxu0 0.0
    %9876 = vmatpush2.msra.mxu0 %v227
    %9877 = vmatprep.subr.mxu0 0.0
    %9878 = vmatpush2.msra.mxu0 %v226
    %9879 = vmatprep.subr.mxu0 0.0
    %9880 = vmatpush2.msra.mxu0 %v225
    %9881 = vmatprep.subr.mxu0 0.0
    %9882 = vmatpush2.msra.mxu0 %v224
    %9883 = vmatprep.subr.mxu0 0.0
    %9884 = vmatpush2.msra.mxu0 %v223
    %9885 = vmatprep.subr.mxu0 0.0
    %9886 = vmatpush2.msra.mxu0 %v222
    %9887 = vmatprep.subr.mxu0 0.0
    %9888 = vmatpush2.msra.mxu0 %v221
    %9889 = vmatprep.subr.mxu0 0.0
    %9890 = vmatpush2.msra.mxu0 %v220
    %9891 = vmatprep.subr.mxu0 0.0
    %9892 = vmatpush2.msra.mxu0 %v219
    %9893 = vmatprep.subr.mxu0 0.0
    %9894 = vmatpush2.msra.mxu0 %v218
    %9895 = vmatprep.subr.mxu0 0.0
    %9896 = vmatpush2.msra.mxu0 %v217
    %9897 = vmatprep.subr.mxu0 0.0
    %9898 = vmatpush2.msra.mxu0 %v216
    %9899 = vmatprep.subr.mxu0 0.0
    %9900 = vmatpush2.msra.mxu0 %v215
    %9901 = vmatprep.subr.mxu0 0.0
    %9902 = vmatpush2.msra.mxu0 %v214
    %9903 = vmatprep.mubr.f32.mxu0 %v9819
    %9904 = vmatmul.mubr.f32.gmra.mxu0 %v9815
    %v9905 = vpop.f32.mrf.mxu0
    %v9906 = vadd.f32 %v270, %v9905
    %v9907 = vpop.f32.mrf.mxu0
    %9908 = vdwg.mxu0
    %9909 = vmatprep.subr.mxu0 0.0
    %9910 = vmatpush1.msra.mxu0 %v245
    %9911 = vmatprep.subr.mxu0 0.0
    %9912 = vmatpush1.msra.mxu0 %v244
    %9913 = vmatprep.subr.mxu0 0.0
    %9914 = vmatpush1.msra.mxu0 %v243
    %9915 = vmatprep.subr.mxu0 0.0
    %9916 = vmatpush1.msra.mxu0 %v242
    %9917 = vmatprep.subr.mxu0 0.0
    %9918 = vmatpush1.msra.mxu0 %v241
    %9919 = vmatprep.subr.mxu0 0.0
    %9920 = vmatpush1.msra.mxu0 %v240
    %9921 = vmatprep.subr.mxu0 0.0
    %9922 = vmatpush1.msra.mxu0 %v239
    %9923 = vmatprep.subr.mxu0 0.0
    %9924 = vmatpush1.msra.mxu0 %v238
    %9925 = vmatprep.subr.mxu0 0.0
    %9926 = vmatpush1.msra.mxu0 %v237
    %9927 = vmatprep.subr.mxu0 0.0
    %9928 = vmatpush1.msra.mxu0 %v236
    %9929 = vmatprep.subr.mxu0 0.0
    %9930 = vmatpush1.msra.mxu0 %v235
    %9931 = vmatprep.subr.mxu0 0.0
    %9932 = vmatpush1.msra.mxu0 %v234
    %9933 = vmatprep.subr.mxu0 0.0
    %9934 = vmatpush1.msra.mxu0 %v233
    %9935 = vmatprep.subr.mxu0 0.0
    %9936 = vmatpush1.msra.mxu0 %v232
    %9937 = vmatprep.subr.mxu0 0.0
    %9938 = vmatpush1.msra.mxu0 %v231
    %9939 = vmatprep.subr.mxu0 0.0
    %9940 = vmatpush1.msra.mxu0 %v230
    %9941 = vmatprep.subr.mxu0 0.0
    %9942 = vmatpush2.msra.mxu0 %v261
    %9943 = vmatprep.subr.mxu0 0.0
    %9944 = vmatpush2.msra.mxu0 %v260
    %9945 = vmatprep.subr.mxu0 0.0
    %9946 = vmatpush2.msra.mxu0 %v259
    %9947 = vmatprep.subr.mxu0 0.0
    %9948 = vmatpush2.msra.mxu0 %v258
    %9949 = vmatprep.subr.mxu0 0.0
    %9950 = vmatpush2.msra.mxu0 %v257
    %9951 = vmatprep.subr.mxu0 0.0
    %9952 = vmatpush2.msra.mxu0 %v256
    %9953 = vmatprep.subr.mxu0 0.0
    %9954 = vmatpush2.msra.mxu0 %v255
    %9955 = vmatprep.subr.mxu0 0.0
    %9956 = vmatpush2.msra.mxu0 %v254
    %9957 = vmatprep.subr.mxu0 0.0
    %9958 = vmatpush2.msra.mxu0 %v253
    %9959 = vmatprep.subr.mxu0 0.0
    %9960 = vmatpush2.msra.mxu0 %v252
    %9961 = vmatprep.subr.mxu0 0.0
    %9962 = vmatpush2.msra.mxu0 %v251
    %9963 = vmatprep.subr.mxu0 0.0
    %9964 = vmatpush2.msra.mxu0 %v250
    %9965 = vmatprep.subr.mxu0 0.0
    %9966 = vmatpush2.msra.mxu0 %v249
    %9967 = vmatprep.subr.mxu0 0.0
    %9968 = vmatpush2.msra.mxu0 %v248
    %9969 = vmatprep.subr.mxu0 0.0
    %9970 = vmatpush2.msra.mxu0 %v247
    %9971 = vmatprep.subr.mxu0 0.0
    %9972 = vmatpush2.msra.mxu0 %v246
    %9973 = vmatprep.mubr.f32.mxu0 %v9827
    %9974 = vmatmul.mubr.f32.gmra.mxu0 %v9823
    %v9975 = vpop.f32.mrf.mxu0
    %v9976 = vadd.f32 %v9906, %v9975
    %v9977 = vpop.f32.mrf.mxu0
    %9978 = vdwg.mxu0
    %9979 = vmatprep.subr.mxu0 0.0
    %9980 = vmatpush1.msra.mxu0 0.0
    %9981 = vmatprep.subr.mxu0 0.0
    %9982 = vmatpush1.msra.mxu0 0.0
    %9983 = vmatprep.subr.mxu0 0.0
    %9984 = vmatpush1.msra.mxu0 0.0
    %9985 = vmatprep.subr.mxu0 0.0
    %9986 = vmatpush1.msra.mxu0 0.0
    %9987 = vmatprep.subr.mxu0 0.0
    %9988 = vmatpush1.msra.mxu0 0.0
    %9989 = vmatprep.subr.mxu0 0.0
    %9990 = vmatpush1.msra.mxu0 0.0
    %9991 = vmatprep.subr.mxu0 0.0
    %9992 = vmatpush1.msra.mxu0 0.0
    %9993 = vmatprep.subr.mxu0 0.0
    %9994 = vmatpush1.msra.mxu0 0.0
    %9995 = vmatprep.subr.mxu0 0.0
    %9996 = vmatpush1.msra.mxu0 %v269
    %9997 = vmatprep.subr.mxu0 0.0
    %9998 = vmatpush1.msra.mxu0 %v268
    %9999 = vmatprep.subr.mxu0 0.0
    %10000 = vmatpush1.msra.mxu0 %v267
    %10001 = vmatprep.subr.mxu0 0.0
    %10002 = vmatpush1.msra.mxu0 %v266
    %10003 = vmatprep.subr.mxu0 0.0
    %10004 = vmatpush1.msra.mxu0 %v265
    %10005 = vmatprep.subr.mxu0 0.0
    %10006 = vmatpush1.msra.mxu0 %v264
    %10007 = vmatprep.subr.mxu0 0.0
    %10008 = vmatpush1.msra.mxu0 %v263
    %10009 = vmatprep.subr.mxu0 0.0
    %10010 = vmatpush1.msra.mxu0 %v262
    %10011 = vmatprep.subr.mxu0 0.0
    %10012 = vmatpush2.msra.mxu0 0.0
    %10013 = vmatprep.subr.mxu0 0.0
    %10014 = vmatpush2.msra.mxu0 0.0
    %10015 = vmatprep.subr.mxu0 0.0
    %10016 = vmatpush2.msra.mxu0 0.0
    %10017 = vmatprep.subr.mxu0 0.0
    %10018 = vmatpush2.msra.mxu0 0.0
    %10019 = vmatprep.subr.mxu0 0.0
    %10020 = vmatpush2.msra.mxu0 0.0
    %10021 = vmatprep.subr.mxu0 0.0
    %10022 = vmatpush2.msra.mxu0 0.0
    %10023 = vmatprep.subr.mxu0 0.0
    %10024 = vmatpush2.msra.mxu0 0.0
    %10025 = vmatprep.subr.mxu0 0.0
    %10026 = vmatpush2.msra.mxu0 0.0
    %10027 = vmatprep.subr.mxu0 0.0
    %10028 = vmatpush2.msra.mxu0 0.0
    %10029 = vmatprep.subr.mxu0 0.0
    %10030 = vmatpush2.msra.mxu0 0.0
    %10031 = vmatprep.subr.mxu0 0.0
    %10032 = vmatpush2.msra.mxu0 0.0
    %10033 = vmatprep.subr.mxu0 0.0
    %10034 = vmatpush2.msra.mxu0 0.0
    %10035 = vmatprep.subr.mxu0 0.0
    %10036 = vmatpush2.msra.mxu0 0.0
    %10037 = vmatprep.subr.mxu0 0.0
    %10038 = vmatpush2.msra.mxu0 0.0
    %10039 = vmatprep.subr.mxu0 0.0
    %10040 = vmatpush2.msra.mxu0 0.0
    %10041 = vmatprep.subr.mxu0 0.0
    %10042 = vmatpush2.msra.mxu0 0.0
    %10043 = vmatprep.mubr.f32.mxu0 0.0
    %10044 = vmatmul.mubr.f32.gmra.mxu0 %v9837
    %v10045 = vpop.f32.mrf.mxu0
    %v10046 = vadd.f32 %v9976, %v10045
    %v10047 = vpop.f32.mrf.mxu0
    %10048 = vdwg.mxu0
    %vm10049 = vcmask 49152
    %v10050 = vsel %vm10049, %v10046, -inf
    %10051 = vmax.xlane.f32.xlu0 %v10050
    %v10052 = vpop.xlane.xlu0 %10051
    %v10053 = vsub.f32 %v10046, %v10052
    %v10054 = vmul.f32 %v10053, 1.442695
    %v10055 = vpow.pop %v10054
    %v10056 = vsel %vm10049, %v10055, 0.0
    %10057 = vadd.xlane.f32.xlu0 %v10056
    %v10058 = vpop.xlane.xlu0 %10057
    %v10059 = vlog2.pop %v10058
    %v10060 = vmul.f32 %v10059, 0.6931472
    %v10061 = vsub.f32 %v10053, %v10060
    %10062 = vst.msk [vmem:[#allocation17] sm:$0x1] %vm10049, %v10061
    %v10064 = vlaneseq
    %v10065 = vshrl.u32 %v10064, 7
    %v10066 = vsub.s32 0, %v10065
    %v10067 = vrot.slane %v9810, %v10066
    %v10068 = vlaneseq
    %v10069 = vshrl.u32 %v10068, 7
    %v10070 = vsub.s32 1, %v10069
    %v10071 = vrot.slane %v9810, %v10070
    %v10072 = vlaneseq
    %v10073 = vshrl.u32 %v10072, 7
    %v10074 = vsub.s32 2, %v10073
    %v10075 = vrot.slane %v9810, %v10074
    %v10076 = vlaneseq
    %v10077 = vshrl.u32 %v10076, 7
    %v10078 = vsub.s32 3, %v10077
    %v10079 = vrot.slane %v9810, %v10078
    %v10080 = vlaneseq
    %v10081 = vshrl.u32 %v10080, 7
    %v10082 = vsub.s32 4, %v10081
    %v10083 = vrot.slane %v9810, %v10082
    %v10088 = vsel %vm9836, %v10083, 0
    %10090 = vmatprep.subr.mxu0 0.0
    %10091 = vmatpush1.msra.mxu0 %v213
    %10092 = vmatprep.subr.mxu0 0.0
    %10093 = vmatpush1.msra.mxu0 %v212
    %10094 = vmatprep.subr.mxu0 0.0
    %10095 = vmatpush1.msra.mxu0 %v211
    %10096 = vmatprep.subr.mxu0 0.0
    %10097 = vmatpush1.msra.mxu0 %v210
    %10098 = vmatprep.subr.mxu0 0.0
    %10099 = vmatpush1.msra.mxu0 %v209
    %10100 = vmatprep.subr.mxu0 0.0
    %10101 = vmatpush1.msra.mxu0 %v208
    %10102 = vmatprep.subr.mxu0 0.0
    %10103 = vmatpush1.msra.mxu0 %v207
    %10104 = vmatprep.subr.mxu0 0.0
    %10105 = vmatpush1.msra.mxu0 %v206
    %10106 = vmatprep.subr.mxu0 0.0
    %10107 = vmatpush1.msra.mxu0 %v205
    %10108 = vmatprep.subr.mxu0 0.0
    %10109 = vmatpush1.msra.mxu0 %v204
    %10110 = vmatprep.subr.mxu0 0.0
    %10111 = vmatpush1.msra.mxu0 %v203
    %10112 = vmatprep.subr.mxu0 0.0
    %10113 = vmatpush1.msra.mxu0 %v202
    %10114 = vmatprep.subr.mxu0 0.0
    %10115 = vmatpush1.msra.mxu0 %v201
    %10116 = vmatprep.subr.mxu0 0.0
    %10117 = vmatpush1.msra.mxu0 %v200
    %10118 = vmatprep.subr.mxu0 0.0
    %10119 = vmatpush1.msra.mxu0 %v199
    %10120 = vmatprep.subr.mxu0 0.0
    %10121 = vmatpush1.msra.mxu0 %v198
    %10122 = vmatprep.subr.mxu0 0.0
    %10123 = vmatpush2.msra.mxu0 %v229
    %10124 = vmatprep.subr.mxu0 0.0
    %10125 = vmatpush2.msra.mxu0 %v228
    %10126 = vmatprep.subr.mxu0 0.0
    %10127 = vmatpush2.msra.mxu0 %v227
    %10128 = vmatprep.subr.mxu0 0.0
    %10129 = vmatpush2.msra.mxu0 %v226
    %10130 = vmatprep.subr.mxu0 0.0
    %10131 = vmatpush2.msra.mxu0 %v225
    %10132 = vmatprep.subr.mxu0 0.0
    %10133 = vmatpush2.msra.mxu0 %v224
    %10134 = vmatprep.subr.mxu0 0.0
    %10135 = vmatpush2.msra.mxu0 %v223
    %10136 = vmatprep.subr.mxu0 0.0
    %10137 = vmatpush2.msra.mxu0 %v222
    %10138 = vmatprep.subr.mxu0 0.0
    %10139 = vmatpush2.msra.mxu0 %v221
    %10140 = vmatprep.subr.mxu0 0.0
    %10141 = vmatpush2.msra.mxu0 %v220
    %10142 = vmatprep.subr.mxu0 0.0
    %10143 = vmatpush2.msra.mxu0 %v219
    %10144 = vmatprep.subr.mxu0 0.0
    %10145 = vmatpush2.msra.mxu0 %v218
    %10146 = vmatprep.subr.mxu0 0.0
    %10147 = vmatpush2.msra.mxu0 %v217
    %10148 = vmatprep.subr.mxu0 0.0
    %10149 = vmatpush2.msra.mxu0 %v216
    %10150 = vmatprep.subr.mxu0 0.0
    %10151 = vmatpush2.msra.mxu0 %v215
    %10152 = vmatprep.subr.mxu0 0.0
    %10153 = vmatpush2.msra.mxu0 %v214
    %10154 = vmatprep.mubr.f32.mxu0 %v10071
    %10155 = vmatmul.mubr.f32.gmra.mxu0 %v10067
    %v10156 = vpop.f32.mrf.mxu0
    %v10157 = vadd.f32 %v270, %v10156
    %v10158 = vpop.f32.mrf.mxu0
    %10159 = vdwg.mxu0
    %10160 = vmatprep.subr.mxu0 0.0
    %10161 = vmatpush1.msra.mxu0 %v245
    %10162 = vmatprep.subr.mxu0 0.0
    %10163 = vmatpush1.msra.mxu0 %v244
    %10164 = vmatprep.subr.mxu0 0.0
    %10165 = vmatpush1.msra.mxu0 %v243
    %10166 = vmatprep.subr.mxu0 0.0
    %10167 = vmatpush1.msra.mxu0 %v242
    %10168 = vmatprep.subr.mxu0 0.0
    %10169 = vmatpush1.msra.mxu0 %v241
    %10170 = vmatprep.subr.mxu0 0.0
    %10171 = vmatpush1.msra.mxu0 %v240
    %10172 = vmatprep.subr.mxu0 0.0
    %10173 = vmatpush1.msra.mxu0 %v239
    %10174 = vmatprep.subr.mxu0 0.0
    %10175 = vmatpush1.msra.mxu0 %v238
    %10176 = vmatprep.subr.mxu0 0.0
    %10177 = vmatpush1.msra.mxu0 %v237
    %10178 = vmatprep.subr.mxu0 0.0
    %10179 = vmatpush1.msra.mxu0 %v236
    %10180 = vmatprep.subr.mxu0 0.0
    %10181 = vmatpush1.msra.mxu0 %v235
    %10182 = vmatprep.subr.mxu0 0.0
    %10183 = vmatpush1.msra.mxu0 %v234
    %10184 = vmatprep.subr.mxu0 0.0
    %10185 = vmatpush1.msra.mxu0 %v233
    %10186 = vmatprep.subr.mxu0 0.0
    %10187 = vmatpush1.msra.mxu0 %v232
    %10188 = vmatprep.subr.mxu0 0.0
    %10189 = vmatpush1.msra.mxu0 %v231
    %10190 = vmatprep.subr.mxu0 0.0
    %10191 = vmatpush1.msra.mxu0 %v230
    %10192 = vmatprep.subr.mxu0 0.0
    %10193 = vmatpush2.msra.mxu0 %v261
    %10194 = vmatprep.subr.mxu0 0.0
    %10195 = vmatpush2.msra.mxu0 %v260
    %10196 = vmatprep.subr.mxu0 0.0
    %10197 = vmatpush2.msra.mxu0 %v259
    %10198 = vmatprep.subr.mxu0 0.0
    %10199 = vmatpush2.msra.mxu0 %v258
    %10200 = vmatprep.subr.mxu0 0.0
    %10201 = vmatpush2.msra.mxu0 %v257
    %10202 = vmatprep.subr.mxu0 0.0
    %10203 = vmatpush2.msra.mxu0 %v256
    %10204 = vmatprep.subr.mxu0 0.0
    %10205 = vmatpush2.msra.mxu0 %v255
    %10206 = vmatprep.subr.mxu0 0.0
    %10207 = vmatpush2.msra.mxu0 %v254
    %10208 = vmatprep.subr.mxu0 0.0
    %10209 = vmatpush2.msra.mxu0 %v253
    %10210 = vmatprep.subr.mxu0 0.0
    %10211 = vmatpush2.msra.mxu0 %v252
    %10212 = vmatprep.subr.mxu0 0.0
    %10213 = vmatpush2.msra.mxu0 %v251
    %10214 = vmatprep.subr.mxu0 0.0
    %10215 = vmatpush2.msra.mxu0 %v250
    %10216 = vmatprep.subr.mxu0 0.0
    %10217 = vmatpush2.msra.mxu0 %v249
    %10218 = vmatprep.subr.mxu0 0.0
    %10219 = vmatpush2.msra.mxu0 %v248
    %10220 = vmatprep.subr.mxu0 0.0
    %10221 = vmatpush2.msra.mxu0 %v247
    %10222 = vmatprep.subr.mxu0 0.0
    %10223 = vmatpush2.msra.mxu0 %v246
    %10224 = vmatprep.mubr.f32.mxu0 %v10079
    %10225 = vmatmul.mubr.f32.gmra.mxu0 %v10075
    %v10226 = vpop.f32.mrf.mxu0
    %v10227 = vadd.f32 %v10157, %v10226
    %v10228 = vpop.f32.mrf.mxu0
    %10229 = vdwg.mxu0
    %10230 = vmatprep.subr.mxu0 0.0
    %10231 = vmatpush1.msra.mxu0 0.0
    %10232 = vmatprep.subr.mxu0 0.0
    %10233 = vmatpush1.msra.mxu0 0.0
    %10234 = vmatprep.subr.mxu0 0.0
    %10235 = vmatpush1.msra.mxu0 0.0
    %10236 = vmatprep.subr.mxu0 0.0
    %10237 = vmatpush1.msra.mxu0 0.0
    %10238 = vmatprep.subr.mxu0 0.0
    %10239 = vmatpush1.msra.mxu0 0.0
    %10240 = vmatprep.subr.mxu0 0.0
    %10241 = vmatpush1.msra.mxu0 0.0
    %10242 = vmatprep.subr.mxu0 0.0
    %10243 = vmatpush1.msra.mxu0 0.0
    %10244 = vmatprep.subr.mxu0 0.0
    %10245 = vmatpush1.msra.mxu0 0.0
    %10246 = vmatprep.subr.mxu0 0.0
    %10247 = vmatpush1.msra.mxu0 %v269
    %10248 = vmatprep.subr.mxu0 0.0
    %10249 = vmatpush1.msra.mxu0 %v268
    %10250 = vmatprep.subr.mxu0 0.0
    %10251 = vmatpush1.msra.mxu0 %v267
    %10252 = vmatprep.subr.mxu0 0.0
    %10253 = vmatpush1.msra.mxu0 %v266
    %10254 = vmatprep.subr.mxu0 0.0
    %10255 = vmatpush1.msra.mxu0 %v265
    %10256 = vmatprep.subr.mxu0 0.0
    %10257 = vmatpush1.msra.mxu0 %v264
    %10258 = vmatprep.subr.mxu0 0.0
    %10259 = vmatpush1.msra.mxu0 %v263
    %10260 = vmatprep.subr.mxu0 0.0
    %10261 = vmatpush1.msra.mxu0 %v262
    %10262 = vmatprep.subr.mxu0 0.0
    %10263 = vmatpush2.msra.mxu0 0.0
    %10264 = vmatprep.subr.mxu0 0.0
    %10265 = vmatpush2.msra.mxu0 0.0
    %10266 = vmatprep.subr.mxu0 0.0
    %10267 = vmatpush2.msra.mxu0 0.0
    %10268 = vmatprep.subr.mxu0 0.0
    %10269 = vmatpush2.msra.mxu0 0.0
    %10270 = vmatprep.subr.mxu0 0.0
    %10271 = vmatpush2.msra.mxu0 0.0
    %10272 = vmatprep.subr.mxu0 0.0
    %10273 = vmatpush2.msra.mxu0 0.0
    %10274 = vmatprep.subr.mxu0 0.0
    %10275 = vmatpush2.msra.mxu0 0.0
    %10276 = vmatprep.subr.mxu0 0.0
    %10277 = vmatpush2.msra.mxu0 0.0
    %10278 = vmatprep.subr.mxu0 0.0
    %10279 = vmatpush2.msra.mxu0 0.0
    %10280 = vmatprep.subr.mxu0 0.0
    %10281 = vmatpush2.msra.mxu0 0.0
    %10282 = vmatprep.subr.mxu0 0.0
    %10283 = vmatpush2.msra.mxu0 0.0
    %10284 = vmatprep.subr.mxu0 0.0
    %10285 = vmatpush2.msra.mxu0 0.0
    %10286 = vmatprep.subr.mxu0 0.0
    %10287 = vmatpush2.msra.mxu0 0.0
    %10288 = vmatprep.subr.mxu0 0.0
    %10289 = vmatpush2.msra.mxu0 0.0
    %10290 = vmatprep.subr.mxu0 0.0
    %10291 = vmatpush2.msra.mxu0 0.0
    %10292 = vmatprep.subr.mxu0 0.0
    %10293 = vmatpush2.msra.mxu0 0.0
    %10294 = vmatprep.mubr.f32.mxu0 0.0
    %10295 = vmatmul.mubr.f32.gmra.mxu0 %v10088
    %v10296 = vpop.f32.mrf.mxu0
    %v10297 = vadd.f32 %v10227, %v10296
    %v10298 = vpop.f32.mrf.mxu0
    %10299 = vdwg.mxu0
    %v10300 = vsel %vm10049, %v10297, -inf
    %10301 = vmax.xlane.f32.xlu0 %v10300
    %v10302 = vpop.xlane.xlu0 %10301
    %v10303 = vsub.f32 %v10297, %v10302
    %v10304 = vmul.f32 %v10303, 1.442695
    %v10305 = vpow.pop %v10304
    %v10306 = vsel %vm10049, %v10305, 0.0
    %10307 = vadd.xlane.f32.xlu0 %v10306
    %v10308 = vpop.xlane.xlu0 %10307
    %v10309 = vlog2.pop %v10308
    %v10310 = vmul.f32 %v10309, 0.6931472
    %v10311 = vsub.f32 %v10303, %v10310
    %10312 = vst.msk [vmem:[#allocation17 + $0x1] sm:$0x1] %vm10049, %v10311
    // Predicated region
    $region70: #{face_classifier_forward.1} parent=1 // pred_check
      _
    $region71: #{face_classifier_forward.1} parent=1 // pred_check_branch
      %10314 = sbr.rel (0) target = $region73
    $region72: #{face_classifier_forward.1} parent=1 // pred_region
      %s10316 = ssub.s32 32, 32
      %10317 = vsyncadd [#allocation4], %s10316
      %s10319 = sshll.u32 [#allocation17], 4
      %s10320 = int_to_ptr.vmem [resolvable:$true] %s10319
      %10322 = dma.vmem_to_hbm [thread:$0]  %s10320, 32, %s9, [#allocation4]
    $region73: #{face_classifier_forward.1} parent=1 // pred_fallthru
      _
    // Predicated region
    $region74: #{face_classifier_forward.1} parent=1 // pred_check
      _
    $region75: #{face_classifier_forward.1} parent=1 // pred_check_branch
      %10324 = sbr.rel (0) target = $region77
    $region76: #{face_classifier_forward.1} parent=1 // pred_region
      %10325 = dma.done [#allocation4], 32
    $region77: #{face_classifier_forward.1} parent=1 // pred_fallthru
      _
    %10326 = vsyncpa [#allocation3], 1
    %10327 = vsyncpa [#allocation10], 1
    %10328 = vsyncpa [#allocation13], 1
    %10329 = vsyncpa [#allocation16], 1
    %10330 = vsyncpa [#allocation4], 1
    %10331 = vsyncpa [#allocation5], 1
    %10332 = vsyncpa [#allocation6], 1

</llo_original>
